<compile_context>
chip_gen: v6e
topology: v6e:2x2x1
jax: 0.10.0
libtpu: 0.0.40
codegen_flags: <defaults>
</compile_context>

<pallas_src>
import functools

import jax
import jax.numpy as jnp
from jax.experimental import pallas as pl
from jax.experimental.pallas import tpu as pltpu


def _ceil_to(x, m):
    return ((x + m - 1) // m) * m


def _conv3x3_into(src_ref, w_bf16, acc_ref, n_imgs, H, W, band_rows):
    """3x3 'SAME' conv of a zero-padded NHWC ref via banded im2col matmuls.

    src_ref : (n_imgs, H+2, W+2, C)   zero-padded input (any float dtype)
    w_bf16  : (9*C, Cout_p) bf16      weight rows ordered (dy, dx, cin)-major
    acc_ref : (n_imgs*H*W, Cout_p) f32  output accumulator (VMEM scratch)

    One bf16 matmul with K = 9*C per row band (f32 accumulation on the MXU)
    instead of 9 tiny K=C matmuls.
    """
    C = src_ref.shape[-1]
    for n in range(n_imgs):
        r = 0
        while r < H:
            th = min(band_rows, H - r)
            # im2col: 9 shifted windows concatenated on the lane-dense,
            # 128-aligned channel axis -> (th*W, 9*C) bf16.
            cols = [
                src_ref[n, r + dy:r + dy + th, dx:dx + W, :]
                .astype(jnp.bfloat16).reshape(th * W, C)
                for dy in range(3) for dx in range(3)
            ]
            patch = jnp.concatenate(cols, axis=-1)
            row0 = n * H * W + r * W
            acc_ref[row0:row0 + th * W, :] = jnp.dot(
                patch, w_bf16, preferred_element_type=jnp.float32)
            r += th


def _bn_relu(acc, gamma, beta, eps, count):
    """Training-mode BatchNorm (biased batch stats) + affine + ReLU.

    One-pass statistics (sum, sum-of-squares) and one fused multiply-add for
    normalize+affine, instead of three full passes over `acc`.
    """
    s = jnp.sum(acc, axis=0, keepdims=True)
    ss = jnp.sum(acc * acc, axis=0, keepdims=True)
    mean = s * (1.0 / count)
    var = jnp.maximum(ss * (1.0 / count) - mean * mean, 0.0)
    scale = gamma * jax.lax.rsqrt(var + eps)
    shift = beta - mean * scale
    return jnp.maximum(acc * scale + shift, 0.0)


def double_conv_kernel(xpad_ref, w1_ref, g1_ref, be1_ref,
                       w2_ref, g2_ref, be2_ref, out_ref,
                       acc_ref, mid_ref,
                       *, N, H, W, CP, eps, band_rows):
    """Fused (Conv3x3 -> BN -> ReLU) x 2; intermediate never leaves VMEM.

    xpad_ref : (N, H+2, W+2, CPI) bf16   zero-padded, channel-padded input
    w1_ref   : (9*CPI, CP) bf16
    w2_ref   : (9*CP,  CP) bf16
    g*/be*   : (1, CP) f32               BN gamma / beta (zero-padded)
    out_ref  : (N, H, W, CP) f32
    acc_ref  : (N*H*W, CP) f32           conv accumulator (reused by both blocks)
    mid_ref  : (N, H+2, W+2, CP) f32     halo-padded intermediate activation
    """
    cnt = float(N * H * W)

    # ---- block 1: conv (bf16 im2col matmul) -> BN(batch stats) -> ReLU ----
    # Conv bias omitted on purpose: exactly cancelled by the BN mean subtraction.
    _conv3x3_into(xpad_ref, w1_ref[...], acc_ref, N, H, W, band_rows)
    y1 = _bn_relu(acc_ref[...], g1_ref[...], be1_ref[...], eps, cnt)

    # Halo-pad the intermediate in VMEM (no HBM round trip, no host-side pad).
    mid_ref[...] = jnp.zeros_like(mid_ref)
    mid_ref[:, 1:H + 1, 1:W + 1, :] = y1.reshape(N, H, W, CP)

    # ---- block 2: conv -> BN -> ReLU ----
    _conv3x3_into(mid_ref, w2_ref[...], acc_ref, N, H, W, band_rows)
    y2 = _bn_relu(acc_ref[...], g2_ref[...], be2_ref[...], eps, cnt)

    out_ref[...] = y2.reshape(N, H, W, CP)


def _prep_weight(w_oihw, cin_pad, cout_pad):
    """PyTorch (Cout, Cin, 3, 3) -> (9*cin_pad, cout_pad) bf16, rows ordered
    (dy, dx, cin)-major to match the im2col column order."""
    cout, cin = w_oihw.shape[0], w_oihw.shape[1]
    w = jnp.transpose(w_oihw, (2, 3, 1, 0))                       # (3,3,Cin,Cout)
    w = jnp.pad(w, ((0, 0), (0, 0), (0, cin_pad - cin), (0, cout_pad - cout)))
    return w.reshape(9 * cin_pad, cout_pad).astype(jnp.bfloat16)


def double_conv(x_nchw, params, eps=1e-5):
    """Forward of DoubleConv. Input/output are NCHW (PyTorch convention)."""
    N, Cin, H, W = x_nchw.shape
    Cout = params["w1"].shape[0]
    CPI = _ceil_to(max(Cin, 1), 128)    # padded input-channel count (lane-dense)
    CP = _ceil_to(max(Cout, 1), 128)    # padded output-channel count

    # NCHW -> NHWC (channels on the lane axis), bf16 halves the input DMA.
    x = jnp.transpose(x_nchw, (0, 2, 3, 1)).astype(jnp.bfloat16)
    xpad = jnp.pad(x, ((0, 0), (1, 1), (1, 1), (0, CPI - Cin)))   # spatial+chan pad

    w1 = _prep_weight(params["w1"], CPI, CP)                      # (9*CPI, CP)
    w2 = _prep_weight(params["w2"], CP, CP)                       # (9*CP,  CP)

    def pad_vec(v):
        return jnp.pad(v.astype(jnp.float32), (0, CP - Cout)).reshape(1, CP)

    g1, be1 = pad_vec(params["g1"]), pad_vec(params["be1"])
    g2, be2 = pad_vec(params["g2"]), pad_vec(params["be2"])
    # NOTE: conv biases b1/b2 are NOT passed to the kernel -- under
    # training-mode BatchNorm they are exactly cancelled by the mean
    # subtraction, so dropping them is bit-equivalent.

    # Row band for the im2col buffer (~4 MiB of bf16 per band).
    band_rows = max(1, min(H, (4 * 1024 * 1024) // (W * 9 * max(CPI, CP) * 2)))

    kernel = functools.partial(double_conv_kernel, N=N, H=H, W=W, CP=CP,
                               eps=eps, band_rows=band_rows)
    y = pl.pallas_call(
        kernel,
        out_shape=jax.ShapeDtypeStruct((N, H, W, CP), jnp.float32),
        scratch_shapes=[
            pltpu.VMEM((N * H * W, CP), jnp.float32),             # conv accumulator
            pltpu.VMEM((N, H + 2, W + 2, CP), jnp.float32),       # halo'd intermediate
        ],
        compiler_params=pltpu.CompilerParams(
            vmem_limit_bytes=32 * 1024 * 1024),
    )(xpad, w1, g1, be1, w2, g2, be2)

    y = y[..., :Cout]                          # drop channel padding
    return jnp.transpose(y, (0, 3, 1, 2))      # -> NCHW


def reference_double_conv(x_nchw, params, eps=1e-5, bf16_matmul=False):
    """Pure-JAX (lax.conv) reference. bf16_matmul=True mimics the kernel's
    bf16 MXU operands (f32 accumulation) for a tight apples-to-apples check."""
    def block(x, w, b, g, be):
        if bf16_matmul:
            x, w = x.astype(jnp.bfloat16), w.astype(jnp.bfloat16)
        y = jax.lax.conv_general_dilated(
            x, w, window_strides=(1, 1), padding="SAME",
            dimension_numbers=("NCHW", "OIHW", "NCHW"),
            preferred_element_type=jnp.float32,
            precision=jax.lax.Precision.HIGHEST)
        y = y + b[None, :, None, None]
        mean = jnp.mean(y, axis=(0, 2, 3), keepdims=True)
        var = jnp.mean((y - mean) ** 2, axis=(0, 2, 3), keepdims=True)
        y = (y - mean) * jax.lax.rsqrt(var + eps)
        y = y * g[None, :, None, None] + be[None, :, None, None]
        return jnp.maximum(y, 0.0)

    y = block(x_nchw.astype(jnp.float32),
              params["w1"], params["b1"], params["g1"], params["be1"])
    return block(y, params["w2"], params["b2"], params["g2"], params["be2"])


def init_params(key, in_channels, out_channels):
    k1, k2, k3, k4 = jax.random.split(key, 4)
    scale1 = 1.0 / jnp.sqrt(in_channels * 9)
    scale2 = 1.0 / jnp.sqrt(out_channels * 9)
    return {
        # nn.Conv2d(in, out, 3, padding=1): weight (out, in, 3, 3), bias (out,)
        "w1": jax.random.uniform(k1, (out_channels, in_channels, 3, 3),
                                 jnp.float32, -scale1, scale1),
        "b1": jax.random.uniform(k2, (out_channels,), jnp.float32,
                                 -scale1, scale1),
        # nn.BatchNorm2d default init: gamma=1, beta=0
        "g1": jnp.ones((out_channels,), jnp.float32),
        "be1": jnp.zeros((out_channels,), jnp.float32),
        "w2": jax.random.uniform(k3, (out_channels, out_channels, 3, 3),
                                 jnp.float32, -scale2, scale2),
        "b2": jax.random.uniform(k4, (out_channels,), jnp.float32,
                                 -scale2, scale2),
        "g2": jnp.ones((out_channels,), jnp.float32),
        "be2": jnp.zeros((out_channels,), jnp.float32),
    }


if __name__ == "__main__":
    key = jax.random.PRNGKey(0)
    k_x, k_p = jax.random.split(key)

    N, Cin, Cout, H, W = 2, 4, 8, 16, 16
    x = jax.random.normal(k_x, (N, Cin, H, W), jnp.float32)   # NCHW like PyTorch
    params = init_params(k_p, Cin, Cout)

    fwd = jax.jit(double_conv)
    out = jax.block_until_ready(fwd(x, params))
    assert out.shape == (N, Cout, H, W), out.shape

    # Tight check: reference with the same bf16 MXU-operand quantization.
    ref_bf16 = jax.block_until_ready(
        reference_double_conv(x, params, bf16_matmul=True))
    assert jnp.allclose(out, ref_bf16, rtol=1e-2, atol=1e-2), (
        float(jnp.max(jnp.abs(out - ref_bf16))))

    # Loose check against the exact f32 module semantics (difference is purely
    # the bf16 quantization of the MXU operands).
    ref_f32 = jax.block_until_ready(reference_double_conv(x, params))
    assert jnp.allclose(out, ref_f32, rtol=5e-2, atol=5e-2), (
        float(jnp.max(jnp.abs(out - ref_f32))))

    print("KERNEL_OK")
</pallas_src>

<mosaic_0001>
module attributes {stable_mosaic.version = 11 : i64} {
  func.func @double_conv_kernel(%arg0: memref<2x18x18x128xbf16, #tpu.memory_space<vmem>>, %arg1: memref<1152x128xbf16, #tpu.memory_space<vmem>>, %arg2: memref<1x128xf32, #tpu.memory_space<vmem>>, %arg3: memref<1x128xf32, #tpu.memory_space<vmem>>, %arg4: memref<1152x128xbf16, #tpu.memory_space<vmem>>, %arg5: memref<1x128xf32, #tpu.memory_space<vmem>>, %arg6: memref<1x128xf32, #tpu.memory_space<vmem>>, %arg7: memref<2x16x16x128xf32, #tpu.memory_space<vmem>>, %arg8: memref<512x128xf32, #tpu.memory_space<vmem>>, %arg9: memref<2x18x18x128xf32, #tpu.memory_space<vmem>>) attributes {dimension_semantics = [], scalar_prefetch = 0 : i64, scratch_operands = 2 : i64, tpu.core_type = #tpu.core_type<tc>} {
    %c0 = arith.constant 0 : index
    %c0_0 = arith.constant 0 : index
    %0 = vector.load %arg1[%c0, %c0_0] : memref<1152x128xbf16, #tpu.memory_space<vmem>>, vector<1152x128xbf16>
    %c0_1 = arith.constant 0 : index
    %c0_2 = arith.constant 0 : index
    %c0_3 = arith.constant 0 : index
    %c0_4 = arith.constant 0 : index
    %1 = vector.load %arg0[%c0_1, %c0_2, %c0_3, %c0_4] : memref<2x18x18x128xbf16, #tpu.memory_space<vmem>>, vector<1x16x16x128xbf16>
    %2 = vector.shape_cast %1 : vector<1x16x16x128xbf16> to vector<16x16x128xbf16>
    %3 = vector.shape_cast %2 : vector<16x16x128xbf16> to vector<256x128xbf16>
    %c0_5 = arith.constant 0 : index
    %c0_6 = arith.constant 0 : index
    %c1 = arith.constant 1 : index
    %c0_7 = arith.constant 0 : index
    %4 = vector.load %arg0[%c0_5, %c0_6, %c1, %c0_7] : memref<2x18x18x128xbf16, #tpu.memory_space<vmem>>, vector<1x16x16x128xbf16>
    %5 = vector.shape_cast %4 : vector<1x16x16x128xbf16> to vector<16x16x128xbf16>
    %6 = vector.shape_cast %5 : vector<16x16x128xbf16> to vector<256x128xbf16>
    %c0_8 = arith.constant 0 : index
    %c0_9 = arith.constant 0 : index
    %c2 = arith.constant 2 : index
    %c0_10 = arith.constant 0 : index
    %7 = vector.load %arg0[%c0_8, %c0_9, %c2, %c0_10] : memref<2x18x18x128xbf16, #tpu.memory_space<vmem>>, vector<1x16x16x128xbf16>
    %8 = vector.shape_cast %7 : vector<1x16x16x128xbf16> to vector<16x16x128xbf16>
    %9 = vector.shape_cast %8 : vector<16x16x128xbf16> to vector<256x128xbf16>
    %c0_11 = arith.constant 0 : index
    %c1_12 = arith.constant 1 : index
    %c0_13 = arith.constant 0 : index
    %c0_14 = arith.constant 0 : index
    %10 = vector.load %arg0[%c0_11, %c1_12, %c0_13, %c0_14] : memref<2x18x18x128xbf16, #tpu.memory_space<vmem>>, vector<1x16x16x128xbf16>
    %11 = vector.shape_cast %10 : vector<1x16x16x128xbf16> to vector<16x16x128xbf16>
    %12 = vector.shape_cast %11 : vector<16x16x128xbf16> to vector<256x128xbf16>
    %c0_15 = arith.constant 0 : index
    %c1_16 = arith.constant 1 : index
    %c1_17 = arith.constant 1 : index
    %c0_18 = arith.constant 0 : index
    %13 = vector.load %arg0[%c0_15, %c1_16, %c1_17, %c0_18] : memref<2x18x18x128xbf16, #tpu.memory_space<vmem>>, vector<1x16x16x128xbf16>
    %14 = vector.shape_cast %13 : vector<1x16x16x128xbf16> to vector<16x16x128xbf16>
    %15 = vector.shape_cast %14 : vector<16x16x128xbf16> to vector<256x128xbf16>
    %c0_19 = arith.constant 0 : index
    %c1_20 = arith.constant 1 : index
    %c2_21 = arith.constant 2 : index
    %c0_22 = arith.constant 0 : index
    %16 = vector.load %arg0[%c0_19, %c1_20, %c2_21, %c0_22] : memref<2x18x18x128xbf16, #tpu.memory_space<vmem>>, vector<1x16x16x128xbf16>
    %17 = vector.shape_cast %16 : vector<1x16x16x128xbf16> to vector<16x16x128xbf16>
    %18 = vector.shape_cast %17 : vector<16x16x128xbf16> to vector<256x128xbf16>
    %c0_23 = arith.constant 0 : index
    %c2_24 = arith.constant 2 : index
    %c0_25 = arith.constant 0 : index
    %c0_26 = arith.constant 0 : index
    %19 = vector.load %arg0[%c0_23, %c2_24, %c0_25, %c0_26] : memref<2x18x18x128xbf16, #tpu.memory_space<vmem>>, vector<1x16x16x128xbf16>
    %20 = vector.shape_cast %19 : vector<1x16x16x128xbf16> to vector<16x16x128xbf16>
    %21 = vector.shape_cast %20 : vector<16x16x128xbf16> to vector<256x128xbf16>
    %c0_27 = arith.constant 0 : index
    %c2_28 = arith.constant 2 : index
    %c1_29 = arith.constant 1 : index
    %c0_30 = arith.constant 0 : index
    %22 = vector.load %arg0[%c0_27, %c2_28, %c1_29, %c0_30] : memref<2x18x18x128xbf16, #tpu.memory_space<vmem>>, vector<1x16x16x128xbf16>
    %23 = vector.shape_cast %22 : vector<1x16x16x128xbf16> to vector<16x16x128xbf16>
    %24 = vector.shape_cast %23 : vector<16x16x128xbf16> to vector<256x128xbf16>
    %c0_31 = arith.constant 0 : index
    %c2_32 = arith.constant 2 : index
    %c2_33 = arith.constant 2 : index
    %c0_34 = arith.constant 0 : index
    %25 = vector.load %arg0[%c0_31, %c2_32, %c2_33, %c0_34] : memref<2x18x18x128xbf16, #tpu.memory_space<vmem>>, vector<1x16x16x128xbf16>
    %26 = vector.shape_cast %25 : vector<1x16x16x128xbf16> to vector<16x16x128xbf16>
    %27 = vector.shape_cast %26 : vector<16x16x128xbf16> to vector<256x128xbf16>
    %28 = tpu.concatenate %3, %6, %9, %12, %15, %18, %21, %24, %27 in 1 : vector<256x128xbf16>, vector<256x128xbf16>, vector<256x128xbf16>, vector<256x128xbf16>, vector<256x128xbf16>, vector<256x128xbf16>, vector<256x128xbf16>, vector<256x128xbf16>, vector<256x128xbf16> -> vector<256x1152xbf16>
    %cst = arith.constant dense<0.000000e+00> : vector<256x128xf32>
    %29 = tpu.matmul %28, %0, %cst {dimension_numbers = #tpu.dot_dimension_numbers<[1], [0], [0], [1], [0, 0, 1, 1], [], []>} : vector<256x1152xbf16>, vector<1152x128xbf16>, vector<256x128xf32> -> vector<256x128xf32>
    %c0_35 = arith.constant 0 : index
    %c0_36 = arith.constant 0 : index
    %30 = vector.load %arg8[%c0_35, %c0_36] : memref<512x128xf32, #tpu.memory_space<vmem>>, vector<256x128xf32>
    tpu.vector_store %arg8[%c0_35, %c0_36], %29 {strides = array<i32>} : memref<512x128xf32, #tpu.memory_space<vmem>>, vector<256x128xf32>,
    %c1_37 = arith.constant 1 : index
    %c0_38 = arith.constant 0 : index
    %c0_39 = arith.constant 0 : index
    %c0_40 = arith.constant 0 : index
    %31 = vector.load %arg0[%c1_37, %c0_38, %c0_39, %c0_40] : memref<2x18x18x128xbf16, #tpu.memory_space<vmem>>, vector<1x16x16x128xbf16>
    %32 = vector.shape_cast %31 : vector<1x16x16x128xbf16> to vector<16x16x128xbf16>
    %33 = vector.shape_cast %32 : vector<16x16x128xbf16> to vector<256x128xbf16>
    %c1_41 = arith.constant 1 : index
    %c0_42 = arith.constant 0 : index
    %c1_43 = arith.constant 1 : index
    %c0_44 = arith.constant 0 : index
    %34 = vector.load %arg0[%c1_41, %c0_42, %c1_43, %c0_44] : memref<2x18x18x128xbf16, #tpu.memory_space<vmem>>, vector<1x16x16x128xbf16>
    %35 = vector.shape_cast %34 : vector<1x16x16x128xbf16> to vector<16x16x128xbf16>
    %36 = vector.shape_cast %35 : vector<16x16x128xbf16> to vector<256x128xbf16>
    %c1_45 = arith.constant 1 : index
    %c0_46 = arith.constant 0 : index
    %c2_47 = arith.constant 2 : index
    %c0_48 = arith.constant 0 : index
    %37 = vector.load %arg0[%c1_45, %c0_46, %c2_47, %c0_48] : memref<2x18x18x128xbf16, #tpu.memory_space<vmem>>, vector<1x16x16x128xbf16>
    %38 = vector.shape_cast %37 : vector<1x16x16x128xbf16> to vector<16x16x128xbf16>
    %39 = vector.shape_cast %38 : vector<16x16x128xbf16> to vector<256x128xbf16>
    %c1_49 = arith.constant 1 : index
    %c1_50 = arith.constant 1 : index
    %c0_51 = arith.constant 0 : index
    %c0_52 = arith.constant 0 : index
    %40 = vector.load %arg0[%c1_49, %c1_50, %c0_51, %c0_52] : memref<2x18x18x128xbf16, #tpu.memory_space<vmem>>, vector<1x16x16x128xbf16>
    %41 = vector.shape_cast %40 : vector<1x16x16x128xbf16> to vector<16x16x128xbf16>
    %42 = vector.shape_cast %41 : vector<16x16x128xbf16> to vector<256x128xbf16>
    %c1_53 = arith.constant 1 : index
    %c1_54 = arith.constant 1 : index
    %c1_55 = arith.constant 1 : index
    %c0_56 = arith.constant 0 : index
    %43 = vector.load %arg0[%c1_53, %c1_54, %c1_55, %c0_56] : memref<2x18x18x128xbf16, #tpu.memory_space<vmem>>, vector<1x16x16x128xbf16>
    %44 = vector.shape_cast %43 : vector<1x16x16x128xbf16> to vector<16x16x128xbf16>
    %45 = vector.shape_cast %44 : vector<16x16x128xbf16> to vector<256x128xbf16>
    %c1_57 = arith.constant 1 : index
    %c1_58 = arith.constant 1 : index
    %c2_59 = arith.constant 2 : index
    %c0_60 = arith.constant 0 : index
    %46 = vector.load %arg0[%c1_57, %c1_58, %c2_59, %c0_60] : memref<2x18x18x128xbf16, #tpu.memory_space<vmem>>, vector<1x16x16x128xbf16>
    %47 = vector.shape_cast %46 : vector<1x16x16x128xbf16> to vector<16x16x128xbf16>
    %48 = vector.shape_cast %47 : vector<16x16x128xbf16> to vector<256x128xbf16>
    %c1_61 = arith.constant 1 : index
    %c2_62 = arith.constant 2 : index
    %c0_63 = arith.constant 0 : index
    %c0_64 = arith.constant 0 : index
    %49 = vector.load %arg0[%c1_61, %c2_62, %c0_63, %c0_64] : memref<2x18x18x128xbf16, #tpu.memory_space<vmem>>, vector<1x16x16x128xbf16>
    %50 = vector.shape_cast %49 : vector<1x16x16x128xbf16> to vector<16x16x128xbf16>
    %51 = vector.shape_cast %50 : vector<16x16x128xbf16> to vector<256x128xbf16>
    %c1_65 = arith.constant 1 : index
    %c2_66 = arith.constant 2 : index
    %c1_67 = arith.constant 1 : index
    %c0_68 = arith.constant 0 : index
    %52 = vector.load %arg0[%c1_65, %c2_66, %c1_67, %c0_68] : memref<2x18x18x128xbf16, #tpu.memory_space<vmem>>, vector<1x16x16x128xbf16>
    %53 = vector.shape_cast %52 : vector<1x16x16x128xbf16> to vector<16x16x128xbf16>
    %54 = vector.shape_cast %53 : vector<16x16x128xbf16> to vector<256x128xbf16>
    %c1_69 = arith.constant 1 : index
    %c2_70 = arith.constant 2 : index
    %c2_71 = arith.constant 2 : index
    %c0_72 = arith.constant 0 : index
    %55 = vector.load %arg0[%c1_69, %c2_70, %c2_71, %c0_72] : memref<2x18x18x128xbf16, #tpu.memory_space<vmem>>, vector<1x16x16x128xbf16>
    %56 = vector.shape_cast %55 : vector<1x16x16x128xbf16> to vector<16x16x128xbf16>
    %57 = vector.shape_cast %56 : vector<16x16x128xbf16> to vector<256x128xbf16>
    %58 = tpu.concatenate %33, %36, %39, %42, %45, %48, %51, %54, %57 in 1 : vector<256x128xbf16>, vector<256x128xbf16>, vector<256x128xbf16>, vector<256x128xbf16>, vector<256x128xbf16>, vector<256x128xbf16>, vector<256x128xbf16>, vector<256x128xbf16>, vector<256x128xbf16> -> vector<256x1152xbf16>
    %cst_73 = arith.constant dense<0.000000e+00> : vector<256x128xf32>
    %59 = tpu.matmul %58, %0, %cst_73 {dimension_numbers = #tpu.dot_dimension_numbers<[1], [0], [0], [1], [0, 0, 1, 1], [], []>} : vector<256x1152xbf16>, vector<1152x128xbf16>, vector<256x128xf32> -> vector<256x128xf32>
    %c256 = arith.constant 256 : index
    %c0_74 = arith.constant 0 : index
    %60 = vector.load %arg8[%c256, %c0_74] : memref<512x128xf32, #tpu.memory_space<vmem>>, vector<256x128xf32>
    tpu.vector_store %arg8[%c256, %c0_74], %59 {strides = array<i32>} : memref<512x128xf32, #tpu.memory_space<vmem>>, vector<256x128xf32>,
    %c0_75 = arith.constant 0 : index
    %c0_76 = arith.constant 0 : index
    %61 = vector.load %arg8[%c0_75, %c0_76] : memref<512x128xf32, #tpu.memory_space<vmem>>, vector<512x128xf32>
    %c0_77 = arith.constant 0 : index
    %c0_78 = arith.constant 0 : index
    %62 = vector.load %arg2[%c0_77, %c0_78] : memref<1x128xf32, #tpu.memory_space<vmem>>, vector<1x128xf32>
    %c0_79 = arith.constant 0 : index
    %c0_80 = arith.constant 0 : index
    %63 = vector.load %arg3[%c0_79, %c0_80] : memref<1x128xf32, #tpu.memory_space<vmem>>, vector<1x128xf32>
    %cst_81 = arith.constant dense<0.000000e+00> : vector<128xf32>
    %64 = vector.multi_reduction <add>, %61, %cst_81 [0] : vector<512x128xf32> to vector<128xf32>
    %65 = vector.shape_cast %64 : vector<128xf32> to vector<1x128xf32>
    %66 = arith.mulf %61, %61 : vector<512x128xf32>
    %cst_82 = arith.constant dense<0.000000e+00> : vector<128xf32>
    %67 = vector.multi_reduction <add>, %66, %cst_82 [0] : vector<512x128xf32> to vector<128xf32>
    %68 = vector.shape_cast %67 : vector<128xf32> to vector<1x128xf32>
    %cst_83 = arith.constant 0.001953125 : f32
    %69 = vector.broadcast %cst_83 : f32 to vector<1x128xf32>
    %70 = arith.mulf %65, %69 : vector<1x128xf32>
    %cst_84 = arith.constant 0.001953125 : f32
    %71 = vector.broadcast %cst_84 : f32 to vector<1x128xf32>
    %72 = arith.mulf %68, %71 : vector<1x128xf32>
    %73 = arith.mulf %70, %70 : vector<1x128xf32>
    %74 = arith.subf %72, %73 : vector<1x128xf32>
    %cst_85 = arith.constant 0.000000e+00 : f32
    %75 = vector.broadcast %cst_85 : f32 to vector<1x128xf32>
    %76 = arith.maximumf %74, %75 : vector<1x128xf32>
    %cst_86 = arith.constant 9.99999974E-6 : f32
    %77 = vector.broadcast %cst_86 : f32 to vector<1x128xf32>
    %78 = arith.addf %76, %77 : vector<1x128xf32>
    %79 = math.rsqrt %78 : vector<1x128xf32>
    %80 = arith.mulf %62, %79 : vector<1x128xf32>
    %81 = arith.mulf %70, %80 : vector<1x128xf32>
    %82 = arith.subf %63, %81 : vector<1x128xf32>
    %83 = vector.broadcast %80 : vector<1x128xf32> to vector<512x128xf32>
    %84 = arith.mulf %61, %83 : vector<512x128xf32>
    %85 = vector.broadcast %82 : vector<1x128xf32> to vector<512x128xf32>
    %86 = arith.addf %84, %85 : vector<512x128xf32>
    %cst_87 = arith.constant 0.000000e+00 : f32
    %87 = vector.broadcast %cst_87 : f32 to vector<512x128xf32>
    %88 = arith.maximumf %86, %87 : vector<512x128xf32>
    %cst_88 = arith.constant 0.000000e+00 : f32
    %89 = vector.broadcast %cst_88 : f32 to vector<2x18x18x128xf32>
    %c0_89 = arith.constant 0 : index
    %c0_90 = arith.constant 0 : index
    %c0_91 = arith.constant 0 : index
    %c0_92 = arith.constant 0 : index
    %90 = vector.load %arg9[%c0_89, %c0_90, %c0_91, %c0_92] : memref<2x18x18x128xf32, #tpu.memory_space<vmem>>, vector<2x18x18x128xf32>
    tpu.vector_store %arg9[%c0_89, %c0_90, %c0_91, %c0_92], %89 {strides = array<i32>} : memref<2x18x18x128xf32, #tpu.memory_space<vmem>>, vector<2x18x18x128xf32>,
    %91 = vector.shape_cast %88 : vector<512x128xf32> to vector<2x16x16x128xf32>
    %c0_93 = arith.constant 0 : index
    %c1_94 = arith.constant 1 : index
    %c1_95 = arith.constant 1 : index
    %c0_96 = arith.constant 0 : index
    %92 = vector.load %arg9[%c0_93, %c1_94, %c1_95, %c0_96] : memref<2x18x18x128xf32, #tpu.memory_space<vmem>>, vector<2x16x16x128xf32>
    tpu.vector_store %arg9[%c0_93, %c1_94, %c1_95, %c0_96], %91 {strides = array<i32>} : memref<2x18x18x128xf32, #tpu.memory_space<vmem>>, vector<2x16x16x128xf32>,
    %c0_97 = arith.constant 0 : index
    %c0_98 = arith.constant 0 : index
    %93 = vector.load %arg4[%c0_97, %c0_98] : memref<1152x128xbf16, #tpu.memory_space<vmem>>, vector<1152x128xbf16>
    %c0_99 = arith.constant 0 : index
    %c0_100 = arith.constant 0 : index
    %c0_101 = arith.constant 0 : index
    %c0_102 = arith.constant 0 : index
    %94 = vector.load %arg9[%c0_99, %c0_100, %c0_101, %c0_102] : memref<2x18x18x128xf32, #tpu.memory_space<vmem>>, vector<1x16x16x128xf32>
    %95 = vector.shape_cast %94 : vector<1x16x16x128xf32> to vector<16x16x128xf32>
    %96 = arith.truncf %95 : vector<16x16x128xf32> to vector<16x16x128xbf16>
    %97 = vector.shape_cast %96 : vector<16x16x128xbf16> to vector<256x128xbf16>
    %c0_103 = arith.constant 0 : index
    %c0_104 = arith.constant 0 : index
    %c1_105 = arith.constant 1 : index
    %c0_106 = arith.constant 0 : index
    %98 = vector.load %arg9[%c0_103, %c0_104, %c1_105, %c0_106] : memref<2x18x18x128xf32, #tpu.memory_space<vmem>>, vector<1x16x16x128xf32>
    %99 = vector.shape_cast %98 : vector<1x16x16x128xf32> to vector<16x16x128xf32>
    %100 = arith.truncf %99 : vector<16x16x128xf32> to vector<16x16x128xbf16>
    %101 = vector.shape_cast %100 : vector<16x16x128xbf16> to vector<256x128xbf16>
    %c0_107 = arith.constant 0 : index
    %c0_108 = arith.constant 0 : index
    %c2_109 = arith.constant 2 : index
    %c0_110 = arith.constant 0 : index
    %102 = vector.load %arg9[%c0_107, %c0_108, %c2_109, %c0_110] : memref<2x18x18x128xf32, #tpu.memory_space<vmem>>, vector<1x16x16x128xf32>
    %103 = vector.shape_cast %102 : vector<1x16x16x128xf32> to vector<16x16x128xf32>
    %104 = arith.truncf %103 : vector<16x16x128xf32> to vector<16x16x128xbf16>
    %105 = vector.shape_cast %104 : vector<16x16x128xbf16> to vector<256x128xbf16>
    %c0_111 = arith.constant 0 : index
    %c1_112 = arith.constant 1 : index
    %c0_113 = arith.constant 0 : index
    %c0_114 = arith.constant 0 : index
    %106 = vector.load %arg9[%c0_111, %c1_112, %c0_113, %c0_114] : memref<2x18x18x128xf32, #tpu.memory_space<vmem>>, vector<1x16x16x128xf32>
    %107 = vector.shape_cast %106 : vector<1x16x16x128xf32> to vector<16x16x128xf32>
    %108 = arith.truncf %107 : vector<16x16x128xf32> to vector<16x16x128xbf16>
    %109 = vector.shape_cast %108 : vector<16x16x128xbf16> to vector<256x128xbf16>
    %c0_115 = arith.constant 0 : index
    %c1_116 = arith.constant 1 : index
    %c1_117 = arith.constant 1 : index
    %c0_118 = arith.constant 0 : index
    %110 = vector.load %arg9[%c0_115, %c1_116, %c1_117, %c0_118] : memref<2x18x18x128xf32, #tpu.memory_space<vmem>>, vector<1x16x16x128xf32>
    %111 = vector.shape_cast %110 : vector<1x16x16x128xf32> to vector<16x16x128xf32>
    %112 = arith.truncf %111 : vector<16x16x128xf32> to vector<16x16x128xbf16>
    %113 = vector.shape_cast %112 : vector<16x16x128xbf16> to vector<256x128xbf16>
    %c0_119 = arith.constant 0 : index
    %c1_120 = arith.constant 1 : index
    %c2_121 = arith.constant 2 : index
    %c0_122 = arith.constant 0 : index
    %114 = vector.load %arg9[%c0_119, %c1_120, %c2_121, %c0_122] : memref<2x18x18x128xf32, #tpu.memory_space<vmem>>, vector<1x16x16x128xf32>
    %115 = vector.shape_cast %114 : vector<1x16x16x128xf32> to vector<16x16x128xf32>
    %116 = arith.truncf %115 : vector<16x16x128xf32> to vector<16x16x128xbf16>
    %117 = vector.shape_cast %116 : vector<16x16x128xbf16> to vector<256x128xbf16>
    %c0_123 = arith.constant 0 : index
    %c2_124 = arith.constant 2 : index
    %c0_125 = arith.constant 0 : index
    %c0_126 = arith.constant 0 : index
    %118 = vector.load %arg9[%c0_123, %c2_124, %c0_125, %c0_126] : memref<2x18x18x128xf32, #tpu.memory_space<vmem>>, vector<1x16x16x128xf32>
    %119 = vector.shape_cast %118 : vector<1x16x16x128xf32> to vector<16x16x128xf32>
    %120 = arith.truncf %119 : vector<16x16x128xf32> to vector<16x16x128xbf16>
    %121 = vector.shape_cast %120 : vector<16x16x128xbf16> to vector<256x128xbf16>
    %c0_127 = arith.constant 0 : index
    %c2_128 = arith.constant 2 : index
    %c1_129 = arith.constant 1 : index
    %c0_130 = arith.constant 0 : index
    %122 = vector.load %arg9[%c0_127, %c2_128, %c1_129, %c0_130] : memref<2x18x18x128xf32, #tpu.memory_space<vmem>>, vector<1x16x16x128xf32>
    %123 = vector.shape_cast %122 : vector<1x16x16x128xf32> to vector<16x16x128xf32>
    %124 = arith.truncf %123 : vector<16x16x128xf32> to vector<16x16x128xbf16>
    %125 = vector.shape_cast %124 : vector<16x16x128xbf16> to vector<256x128xbf16>
    %c0_131 = arith.constant 0 : index
    %c2_132 = arith.constant 2 : index
    %c2_133 = arith.constant 2 : index
    %c0_134 = arith.constant 0 : index
    %126 = vector.load %arg9[%c0_131, %c2_132, %c2_133, %c0_134] : memref<2x18x18x128xf32, #tpu.memory_space<vmem>>, vector<1x16x16x128xf32>
    %127 = vector.shape_cast %126 : vector<1x16x16x128xf32> to vector<16x16x128xf32>
    %128 = arith.truncf %127 : vector<16x16x128xf32> to vector<16x16x128xbf16>
    %129 = vector.shape_cast %128 : vector<16x16x128xbf16> to vector<256x128xbf16>
    %130 = tpu.concatenate %97, %101, %105, %109, %113, %117, %121, %125, %129 in 1 : vector<256x128xbf16>, vector<256x128xbf16>, vector<256x128xbf16>, vector<256x128xbf16>, vector<256x128xbf16>, vector<256x128xbf16>, vector<256x128xbf16>, vector<256x128xbf16>, vector<256x128xbf16> -> vector<256x1152xbf16>
    %cst_135 = arith.constant dense<0.000000e+00> : vector<256x128xf32>
    %131 = tpu.matmul %130, %93, %cst_135 {dimension_numbers = #tpu.dot_dimension_numbers<[1], [0], [0], [1], [0, 0, 1, 1], [], []>} : vector<256x1152xbf16>, vector<1152x128xbf16>, vector<256x128xf32> -> vector<256x128xf32>
    %c0_136 = arith.constant 0 : index
    %c0_137 = arith.constant 0 : index
    %132 = vector.load %arg8[%c0_136, %c0_137] : memref<512x128xf32, #tpu.memory_space<vmem>>, vector<256x128xf32>
    tpu.vector_store %arg8[%c0_136, %c0_137], %131 {strides = array<i32>} : memref<512x128xf32, #tpu.memory_space<vmem>>, vector<256x128xf32>,
    %c1_138 = arith.constant 1 : index
    %c0_139 = arith.constant 0 : index
    %c0_140 = arith.constant 0 : index
    %c0_141 = arith.constant 0 : index
    %133 = vector.load %arg9[%c1_138, %c0_139, %c0_140, %c0_141] : memref<2x18x18x128xf32, #tpu.memory_space<vmem>>, vector<1x16x16x128xf32>
    %134 = vector.shape_cast %133 : vector<1x16x16x128xf32> to vector<16x16x128xf32>
    %135 = arith.truncf %134 : vector<16x16x128xf32> to vector<16x16x128xbf16>
    %136 = vector.shape_cast %135 : vector<16x16x128xbf16> to vector<256x128xbf16>
    %c1_142 = arith.constant 1 : index
    %c0_143 = arith.constant 0 : index
    %c1_144 = arith.constant 1 : index
    %c0_145 = arith.constant 0 : index
    %137 = vector.load %arg9[%c1_142, %c0_143, %c1_144, %c0_145] : memref<2x18x18x128xf32, #tpu.memory_space<vmem>>, vector<1x16x16x128xf32>
    %138 = vector.shape_cast %137 : vector<1x16x16x128xf32> to vector<16x16x128xf32>
    %139 = arith.truncf %138 : vector<16x16x128xf32> to vector<16x16x128xbf16>
    %140 = vector.shape_cast %139 : vector<16x16x128xbf16> to vector<256x128xbf16>
    %c1_146 = arith.constant 1 : index
    %c0_147 = arith.constant 0 : index
    %c2_148 = arith.constant 2 : index
    %c0_149 = arith.constant 0 : index
    %141 = vector.load %arg9[%c1_146, %c0_147, %c2_148, %c0_149] : memref<2x18x18x128xf32, #tpu.memory_space<vmem>>, vector<1x16x16x128xf32>
    %142 = vector.shape_cast %141 : vector<1x16x16x128xf32> to vector<16x16x128xf32>
    %143 = arith.truncf %142 : vector<16x16x128xf32> to vector<16x16x128xbf16>
    %144 = vector.shape_cast %143 : vector<16x16x128xbf16> to vector<256x128xbf16>
    %c1_150 = arith.constant 1 : index
    %c1_151 = arith.constant 1 : index
    %c0_152 = arith.constant 0 : index
    %c0_153 = arith.constant 0 : index
    %145 = vector.load %arg9[%c1_150, %c1_151, %c0_152, %c0_153] : memref<2x18x18x128xf32, #tpu.memory_space<vmem>>, vector<1x16x16x128xf32>
    %146 = vector.shape_cast %145 : vector<1x16x16x128xf32> to vector<16x16x128xf32>
    %147 = arith.truncf %146 : vector<16x16x128xf32> to vector<16x16x128xbf16>
    %148 = vector.shape_cast %147 : vector<16x16x128xbf16> to vector<256x128xbf16>
    %c1_154 = arith.constant 1 : index
    %c1_155 = arith.constant 1 : index
    %c1_156 = arith.constant 1 : index
    %c0_157 = arith.constant 0 : index
    %149 = vector.load %arg9[%c1_154, %c1_155, %c1_156, %c0_157] : memref<2x18x18x128xf32, #tpu.memory_space<vmem>>, vector<1x16x16x128xf32>
    %150 = vector.shape_cast %149 : vector<1x16x16x128xf32> to vector<16x16x128xf32>
    %151 = arith.truncf %150 : vector<16x16x128xf32> to vector<16x16x128xbf16>
    %152 = vector.shape_cast %151 : vector<16x16x128xbf16> to vector<256x128xbf16>
    %c1_158 = arith.constant 1 : index
    %c1_159 = arith.constant 1 : index
    %c2_160 = arith.constant 2 : index
    %c0_161 = arith.constant 0 : index
    %153 = vector.load %arg9[%c1_158, %c1_159, %c2_160, %c0_161] : memref<2x18x18x128xf32, #tpu.memory_space<vmem>>, vector<1x16x16x128xf32>
    %154 = vector.shape_cast %153 : vector<1x16x16x128xf32> to vector<16x16x128xf32>
    %155 = arith.truncf %154 : vector<16x16x128xf32> to vector<16x16x128xbf16>
    %156 = vector.shape_cast %155 : vector<16x16x128xbf16> to vector<256x128xbf16>
    %c1_162 = arith.constant 1 : index
    %c2_163 = arith.constant 2 : index
    %c0_164 = arith.constant 0 : index
    %c0_165 = arith.constant 0 : index
    %157 = vector.load %arg9[%c1_162, %c2_163, %c0_164, %c0_165] : memref<2x18x18x128xf32, #tpu.memory_space<vmem>>, vector<1x16x16x128xf32>
    %158 = vector.shape_cast %157 : vector<1x16x16x128xf32> to vector<16x16x128xf32>
    %159 = arith.truncf %158 : vector<16x16x128xf32> to vector<16x16x128xbf16>
    %160 = vector.shape_cast %159 : vector<16x16x128xbf16> to vector<256x128xbf16>
    %c1_166 = arith.constant 1 : index
    %c2_167 = arith.constant 2 : index
    %c1_168 = arith.constant 1 : index
    %c0_169 = arith.constant 0 : index
    %161 = vector.load %arg9[%c1_166, %c2_167, %c1_168, %c0_169] : memref<2x18x18x128xf32, #tpu.memory_space<vmem>>, vector<1x16x16x128xf32>
    %162 = vector.shape_cast %161 : vector<1x16x16x128xf32> to vector<16x16x128xf32>
    %163 = arith.truncf %162 : vector<16x16x128xf32> to vector<16x16x128xbf16>
    %164 = vector.shape_cast %163 : vector<16x16x128xbf16> to vector<256x128xbf16>
    %c1_170 = arith.constant 1 : index
    %c2_171 = arith.constant 2 : index
    %c2_172 = arith.constant 2 : index
    %c0_173 = arith.constant 0 : index
    %165 = vector.load %arg9[%c1_170, %c2_171, %c2_172, %c0_173] : memref<2x18x18x128xf32, #tpu.memory_space<vmem>>, vector<1x16x16x128xf32>
    %166 = vector.shape_cast %165 : vector<1x16x16x128xf32> to vector<16x16x128xf32>
    %167 = arith.truncf %166 : vector<16x16x128xf32> to vector<16x16x128xbf16>
    %168 = vector.shape_cast %167 : vector<16x16x128xbf16> to vector<256x128xbf16>
    %169 = tpu.concatenate %136, %140, %144, %148, %152, %156, %160, %164, %168 in 1 : vector<256x128xbf16>, vector<256x128xbf16>, vector<256x128xbf16>, vector<256x128xbf16>, vector<256x128xbf16>, vector<256x128xbf16>, vector<256x128xbf16>, vector<256x128xbf16>, vector<256x128xbf16> -> vector<256x1152xbf16>
    %cst_174 = arith.constant dense<0.000000e+00> : vector<256x128xf32>
    %170 = tpu.matmul %169, %93, %cst_174 {dimension_numbers = #tpu.dot_dimension_numbers<[1], [0], [0], [1], [0, 0, 1, 1], [], []>} : vector<256x1152xbf16>, vector<1152x128xbf16>, vector<256x128xf32> -> vector<256x128xf32>
    %c256_175 = arith.constant 256 : index
    %c0_176 = arith.constant 0 : index
    %171 = vector.load %arg8[%c256_175, %c0_176] : memref<512x128xf32, #tpu.memory_space<vmem>>, vector<256x128xf32>
    tpu.vector_store %arg8[%c256_175, %c0_176], %170 {strides = array<i32>} : memref<512x128xf32, #tpu.memory_space<vmem>>, vector<256x128xf32>,
    %c0_177 = arith.constant 0 : index
    %c0_178 = arith.constant 0 : index
    %172 = vector.load %arg8[%c0_177, %c0_178] : memref<512x128xf32, #tpu.memory_space<vmem>>, vector<512x128xf32>
    %c0_179 = arith.constant 0 : index
    %c0_180 = arith.constant 0 : index
    %173 = vector.load %arg5[%c0_179, %c0_180] : memref<1x128xf32, #tpu.memory_space<vmem>>, vector<1x128xf32>
    %c0_181 = arith.constant 0 : index
    %c0_182 = arith.constant 0 : index
    %174 = vector.load %arg6[%c0_181, %c0_182] : memref<1x128xf32, #tpu.memory_space<vmem>>, vector<1x128xf32>
    %cst_183 = arith.constant dense<0.000000e+00> : vector<128xf32>
    %175 = vector.multi_reduction <add>, %172, %cst_183 [0] : vector<512x128xf32> to vector<128xf32>
    %176 = vector.shape_cast %175 : vector<128xf32> to vector<1x128xf32>
    %177 = arith.mulf %172, %172 : vector<512x128xf32>
    %cst_184 = arith.constant dense<0.000000e+00> : vector<128xf32>
    %178 = vector.multi_reduction <add>, %177, %cst_184 [0] : vector<512x128xf32> to vector<128xf32>
    %179 = vector.shape_cast %178 : vector<128xf32> to vector<1x128xf32>
    %cst_185 = arith.constant 0.001953125 : f32
    %180 = vector.broadcast %cst_185 : f32 to vector<1x128xf32>
    %181 = arith.mulf %176, %180 : vector<1x128xf32>
    %cst_186 = arith.constant 0.001953125 : f32
    %182 = vector.broadcast %cst_186 : f32 to vector<1x128xf32>
    %183 = arith.mulf %179, %182 : vector<1x128xf32>
    %184 = arith.mulf %181, %181 : vector<1x128xf32>
    %185 = arith.subf %183, %184 : vector<1x128xf32>
    %cst_187 = arith.constant 0.000000e+00 : f32
    %186 = vector.broadcast %cst_187 : f32 to vector<1x128xf32>
    %187 = arith.maximumf %185, %186 : vector<1x128xf32>
    %cst_188 = arith.constant 9.99999974E-6 : f32
    %188 = vector.broadcast %cst_188 : f32 to vector<1x128xf32>
    %189 = arith.addf %187, %188 : vector<1x128xf32>
    %190 = math.rsqrt %189 : vector<1x128xf32>
    %191 = arith.mulf %173, %190 : vector<1x128xf32>
    %192 = arith.mulf %181, %191 : vector<1x128xf32>
    %193 = arith.subf %174, %192 : vector<1x128xf32>
    %194 = vector.broadcast %191 : vector<1x128xf32> to vector<512x128xf32>
    %195 = arith.mulf %172, %194 : vector<512x128xf32>
    %196 = vector.broadcast %193 : vector<1x128xf32> to vector<512x128xf32>
    %197 = arith.addf %195, %196 : vector<512x128xf32>
    %cst_189 = arith.constant 0.000000e+00 : f32
    %198 = vector.broadcast %cst_189 : f32 to vector<512x128xf32>
    %199 = arith.maximumf %197, %198 : vector<512x128xf32>
    %200 = vector.shape_cast %199 : vector<512x128xf32> to vector<2x16x16x128xf32>
    %c0_190 = arith.constant 0 : index
    %c0_191 = arith.constant 0 : index
    %c0_192 = arith.constant 0 : index
    %c0_193 = arith.constant 0 : index
    %201 = vector.load %arg7[%c0_190, %c0_191, %c0_192, %c0_193] : memref<2x16x16x128xf32, #tpu.memory_space<vmem>>, vector<2x16x16x128xf32>
    tpu.vector_store %arg7[%c0_190, %c0_191, %c0_192, %c0_193], %200 {strides = array<i32>} : memref<2x16x16x128xf32, #tpu.memory_space<vmem>>, vector<2x16x16x128xf32>,
    return
  }
}

</mosaic_0001>

<llo_original>
// kernel: double_conv.1
$region0: #{double_conv.1}
  #allocation0 [shape = 'u32[]', space=smem, size = 0x4, offset = 0x4, fixed_abs, tag = 'smem constant byte address 0x4 - core index']
  #allocation1 [shape = 'u32[144,128]{1,0:T(1,128)}', space=vmem, size = 0x12000, scoped, tag = 'internal scratch']
  #allocation2 [shape = 'f32[512,128]{1,0:T(8,128)}', space=vmem, size = 0x40000, scoped, tag = 'scratch operand']
  #allocation3 [shape = 'f32[2,18,18,128]{3,2,1,0:T(8,128)}', space=vmem, size = 0x6c000, scoped, tag = 'scratch operand']
  %s0 = inlined_call_operand.vmem [shape: bf16[2,18,18,128], index: 0, kind: input, shape index: {}]
  %s1 = inlined_call_operand.vmem [shape: bf16[1152,128], index: 1, kind: input, shape index: {}]
  %s2 = inlined_call_operand.vmem [shape: f32[1,128], index: 2, kind: input, shape index: {}]
  %s3 = inlined_call_operand.vmem [shape: f32[1,128], index: 3, kind: input, shape index: {}]
  %s4 = inlined_call_operand.vmem [shape: bf16[1152,128], index: 4, kind: input, shape index: {}]
  %s5 = inlined_call_operand.vmem [shape: f32[1,128], index: 5, kind: input, shape index: {}]
  %s6 = inlined_call_operand.vmem [shape: f32[1,128], index: 6, kind: input, shape index: {}]
  %s7 = inlined_call_operand.vmem [shape: f32[2,16,16,128], index: 7, kind: output, shape index: {}]
  %s8 = sld [smem:[#allocation0]]
  $region38: #{double_conv.1} parent=0
    _
  %s10 = ssub.s32 1, %s8
  %s11 = scalar_select 0, %s10, %s8
  // Predicated region
  $region2: #{double_conv.1} parent=0 // pred_check
    _
  $region3: #{double_conv.1} parent=0 // pred_check_branch
    %13 = sbr.rel (0) target = $region5
  $region4: #{double_conv.1} parent=0 // pred_region
    _
  $region5: #{double_conv.1} parent=0 // pred_fallthru
    _
  // Predicated region
  $region6: #{double_conv.1} parent=0 // pred_check
    _
  $region7: #{double_conv.1} parent=0 // pred_check_branch
    %15 = sbr.rel (0) target = $region9
  $region8: #{double_conv.1} parent=0 // pred_region
    _
  $region9: #{double_conv.1} parent=0 // pred_fallthru
    _
  // Predicated region
  $region10: #{double_conv.1} parent=0 // pred_check
    _
  $region11: #{double_conv.1} parent=0 // pred_check_branch
    %17 = sbr.rel (0) target = $region13
  $region12: #{double_conv.1} parent=0 // pred_region
    _
  $region13: #{double_conv.1} parent=0 // pred_fallthru
    _
  // Predicated region
  $region14: #{double_conv.1} parent=0 // pred_check
    _
  $region15: #{double_conv.1} parent=0 // pred_check_branch
    %19 = sbr.rel (0) target = $region17
  $region16: #{double_conv.1} parent=0 // pred_region
    _
  $region17: #{double_conv.1} parent=0 // pred_fallthru
    _
  // Predicated region
  $region18: #{double_conv.1} parent=0 // pred_check
    _
  $region19: #{double_conv.1} parent=0 // pred_check_branch
    %21 = sbr.rel (0) target = $region21
  $region20: #{double_conv.1} parent=0 // pred_region
    _
  $region21: #{double_conv.1} parent=0 // pred_fallthru
    _
  // Predicated region
  $region22: #{double_conv.1} parent=0 // pred_check
    _
  $region23: #{double_conv.1} parent=0 // pred_check_branch
    %23 = sbr.rel (0) target = $region25
  $region24: #{double_conv.1} parent=0 // pred_region
    _
  $region25: #{double_conv.1} parent=0 // pred_fallthru
    _
  // Predicated region
  $region26: #{double_conv.1} parent=0 // pred_check
    _
  $region27: #{double_conv.1} parent=0 // pred_check_branch
    %25 = sbr.rel (0) target = $region29
  $region28: #{double_conv.1} parent=0 // pred_region
    _
  $region29: #{double_conv.1} parent=0 // pred_fallthru
    _
  %v27 = vld [vmem:[%s1] sm:$0xf]
  %v28 = vld [vmem:[%s1 + $0x4] sm:$0xf]
  %v29 = vld [vmem:[%s1 + $0x8] sm:$0xf]
  %v30 = vld [vmem:[%s1 + $0xc] sm:$0xf]
  %v31 = vld [vmem:[%s1 + $0x10] sm:$0xf]
  %v32 = vld [vmem:[%s1 + $0x14] sm:$0xf]
  %v33 = vld [vmem:[%s1 + $0x18] sm:$0xf]
  %v34 = vld [vmem:[%s1 + $0x1c] sm:$0xf]
  %v35 = vld [vmem:[%s1 + $0x20] sm:$0xf]
  %v36 = vld [vmem:[%s1 + $0x24] sm:$0xf]
  %v37 = vld [vmem:[%s1 + $0x28] sm:$0xf]
  %v38 = vld [vmem:[%s1 + $0x2c] sm:$0xf]
  %v39 = vld [vmem:[%s1 + $0x30] sm:$0xf]
  %v40 = vld [vmem:[%s1 + $0x34] sm:$0xf]
  %v41 = vld [vmem:[%s1 + $0x38] sm:$0xf]
  %v42 = vld [vmem:[%s1 + $0x3c] sm:$0xf]
  %v43 = vld [vmem:[%s1 + $0x40] sm:$0xf]
  %v44 = vld [vmem:[%s1 + $0x44] sm:$0xf]
  %v45 = vld [vmem:[%s1 + $0x48] sm:$0xf]
  %v46 = vld [vmem:[%s1 + $0x4c] sm:$0xf]
  %v47 = vld [vmem:[%s1 + $0x50] sm:$0xf]
  %v48 = vld [vmem:[%s1 + $0x54] sm:$0xf]
  %v49 = vld [vmem:[%s1 + $0x58] sm:$0xf]
  %v50 = vld [vmem:[%s1 + $0x5c] sm:$0xf]
  %v51 = vld [vmem:[%s1 + $0x60] sm:$0xf]
  %v52 = vld [vmem:[%s1 + $0x64] sm:$0xf]
  %v53 = vld [vmem:[%s1 + $0x68] sm:$0xf]
  %v54 = vld [vmem:[%s1 + $0x6c] sm:$0xf]
  %v55 = vld [vmem:[%s1 + $0x70] sm:$0xf]
  %v56 = vld [vmem:[%s1 + $0x74] sm:$0xf]
  %v57 = vld [vmem:[%s1 + $0x78] sm:$0xf]
  %v58 = vld [vmem:[%s1 + $0x7c] sm:$0xf]
  %v59 = vld [vmem:[%s1 + $0x80] sm:$0xf]
  %v60 = vld [vmem:[%s1 + $0x84] sm:$0xf]
  %v61 = vld [vmem:[%s1 + $0x88] sm:$0xf]
  %v62 = vld [vmem:[%s1 + $0x8c] sm:$0xf]
  %v63 = vld [vmem:[%s1 + $0x90] sm:$0xf]
  %v64 = vld [vmem:[%s1 + $0x94] sm:$0xf]
  %v65 = vld [vmem:[%s1 + $0x98] sm:$0xf]
  %v66 = vld [vmem:[%s1 + $0x9c] sm:$0xf]
  %v67 = vld [vmem:[%s1 + $0xa0] sm:$0xf]
  %v68 = vld [vmem:[%s1 + $0xa4] sm:$0xf]
  %v69 = vld [vmem:[%s1 + $0xa8] sm:$0xf]
  %v70 = vld [vmem:[%s1 + $0xac] sm:$0xf]
  %v71 = vld [vmem:[%s1 + $0xb0] sm:$0xf]
  %v72 = vld [vmem:[%s1 + $0xb4] sm:$0xf]
  %v73 = vld [vmem:[%s1 + $0xb8] sm:$0xf]
  %v74 = vld [vmem:[%s1 + $0xbc] sm:$0xf]
  %v75 = vld [vmem:[%s1 + $0xc0] sm:$0xf]
  %v76 = vld [vmem:[%s1 + $0xc4] sm:$0xf]
  %v77 = vld [vmem:[%s1 + $0xc8] sm:$0xf]
  %v78 = vld [vmem:[%s1 + $0xcc] sm:$0xf]
  %v79 = vld [vmem:[%s1 + $0xd0] sm:$0xf]
  %v80 = vld [vmem:[%s1 + $0xd4] sm:$0xf]
  %v81 = vld [vmem:[%s1 + $0xd8] sm:$0xf]
  %v82 = vld [vmem:[%s1 + $0xdc] sm:$0xf]
  %v83 = vld [vmem:[%s1 + $0xe0] sm:$0xf]
  %v84 = vld [vmem:[%s1 + $0xe4] sm:$0xf]
  %v85 = vld [vmem:[%s1 + $0xe8] sm:$0xf]
  %v86 = vld [vmem:[%s1 + $0xec] sm:$0xf]
  %v87 = vld [vmem:[%s1 + $0xf0] sm:$0xf]
  %v88 = vld [vmem:[%s1 + $0xf4] sm:$0xf]
  %v89 = vld [vmem:[%s1 + $0xf8] sm:$0xf]
  %v90 = vld [vmem:[%s1 + $0xfc] sm:$0xf]
  %v91 = vld [vmem:[%s1 + $0x100] sm:$0xf]
  %v92 = vld [vmem:[%s1 + $0x104] sm:$0xf]
  %v93 = vld [vmem:[%s1 + $0x108] sm:$0xf]
  %v94 = vld [vmem:[%s1 + $0x10c] sm:$0xf]
  %v95 = vld [vmem:[%s1 + $0x110] sm:$0xf]
  %v96 = vld [vmem:[%s1 + $0x114] sm:$0xf]
  %v97 = vld [vmem:[%s1 + $0x118] sm:$0xf]
  %v98 = vld [vmem:[%s1 + $0x11c] sm:$0xf]
  %v99 = vld [vmem:[%s1 + $0x120] sm:$0xf]
  %v100 = vld [vmem:[%s1 + $0x124] sm:$0xf]
  %v101 = vld [vmem:[%s1 + $0x128] sm:$0xf]
  %v102 = vld [vmem:[%s1 + $0x12c] sm:$0xf]
  %v103 = vld [vmem:[%s1 + $0x130] sm:$0xf]
  %v104 = vld [vmem:[%s1 + $0x134] sm:$0xf]
  %v105 = vld [vmem:[%s1 + $0x138] sm:$0xf]
  %v106 = vld [vmem:[%s1 + $0x13c] sm:$0xf]
  %v107 = vld [vmem:[%s1 + $0x140] sm:$0xf]
  %v108 = vld [vmem:[%s1 + $0x144] sm:$0xf]
  %v109 = vld [vmem:[%s1 + $0x148] sm:$0xf]
  %v110 = vld [vmem:[%s1 + $0x14c] sm:$0xf]
  %v111 = vld [vmem:[%s1 + $0x150] sm:$0xf]
  %v112 = vld [vmem:[%s1 + $0x154] sm:$0xf]
  %v113 = vld [vmem:[%s1 + $0x158] sm:$0xf]
  %v114 = vld [vmem:[%s1 + $0x15c] sm:$0xf]
  %v115 = vld [vmem:[%s1 + $0x160] sm:$0xf]
  %v116 = vld [vmem:[%s1 + $0x164] sm:$0xf]
  %v117 = vld [vmem:[%s1 + $0x168] sm:$0xf]
  %v118 = vld [vmem:[%s1 + $0x16c] sm:$0xf]
  %v119 = vld [vmem:[%s1 + $0x170] sm:$0xf]
  %v120 = vld [vmem:[%s1 + $0x174] sm:$0xf]
  %v121 = vld [vmem:[%s1 + $0x178] sm:$0xf]
  %v122 = vld [vmem:[%s1 + $0x17c] sm:$0xf]
  %v123 = vld [vmem:[%s1 + $0x180] sm:$0xf]
  %v124 = vld [vmem:[%s1 + $0x184] sm:$0xf]
  %v125 = vld [vmem:[%s1 + $0x188] sm:$0xf]
  %v126 = vld [vmem:[%s1 + $0x18c] sm:$0xf]
  %v127 = vld [vmem:[%s1 + $0x190] sm:$0xf]
  %v128 = vld [vmem:[%s1 + $0x194] sm:$0xf]
  %v129 = vld [vmem:[%s1 + $0x198] sm:$0xf]
  %v130 = vld [vmem:[%s1 + $0x19c] sm:$0xf]
  %v131 = vld [vmem:[%s1 + $0x1a0] sm:$0xf]
  %v132 = vld [vmem:[%s1 + $0x1a4] sm:$0xf]
  %v133 = vld [vmem:[%s1 + $0x1a8] sm:$0xf]
  %v134 = vld [vmem:[%s1 + $0x1ac] sm:$0xf]
  %v135 = vld [vmem:[%s1 + $0x1b0] sm:$0xf]
  %v136 = vld [vmem:[%s1 + $0x1b4] sm:$0xf]
  %v137 = vld [vmem:[%s1 + $0x1b8] sm:$0xf]
  %v138 = vld [vmem:[%s1 + $0x1bc] sm:$0xf]
  %v139 = vld [vmem:[%s1 + $0x1c0] sm:$0xf]
  %v140 = vld [vmem:[%s1 + $0x1c4] sm:$0xf]
  %v141 = vld [vmem:[%s1 + $0x1c8] sm:$0xf]
  %v142 = vld [vmem:[%s1 + $0x1cc] sm:$0xf]
  %v143 = vld [vmem:[%s1 + $0x1d0] sm:$0xf]
  %v144 = vld [vmem:[%s1 + $0x1d4] sm:$0xf]
  %v145 = vld [vmem:[%s1 + $0x1d8] sm:$0xf]
  %v146 = vld [vmem:[%s1 + $0x1dc] sm:$0xf]
  %v147 = vld [vmem:[%s1 + $0x1e0] sm:$0xf]
  %v148 = vld [vmem:[%s1 + $0x1e4] sm:$0xf]
  %v149 = vld [vmem:[%s1 + $0x1e8] sm:$0xf]
  %v150 = vld [vmem:[%s1 + $0x1ec] sm:$0xf]
  %v151 = vld [vmem:[%s1 + $0x1f0] sm:$0xf]
  %v152 = vld [vmem:[%s1 + $0x1f4] sm:$0xf]
  %v153 = vld [vmem:[%s1 + $0x1f8] sm:$0xf]
  %v154 = vld [vmem:[%s1 + $0x1fc] sm:$0xf]
  %v155 = vld [vmem:[%s1 + $0x200] sm:$0xf]
  %v156 = vld [vmem:[%s1 + $0x204] sm:$0xf]
  %v157 = vld [vmem:[%s1 + $0x208] sm:$0xf]
  %v158 = vld [vmem:[%s1 + $0x20c] sm:$0xf]
  %v159 = vld [vmem:[%s1 + $0x210] sm:$0xf]
  %v160 = vld [vmem:[%s1 + $0x214] sm:$0xf]
  %v161 = vld [vmem:[%s1 + $0x218] sm:$0xf]
  %v162 = vld [vmem:[%s1 + $0x21c] sm:$0xf]
  %v163 = vld [vmem:[%s1 + $0x220] sm:$0xf]
  %v164 = vld [vmem:[%s1 + $0x224] sm:$0xf]
  %v165 = vld [vmem:[%s1 + $0x228] sm:$0xf]
  %v166 = vld [vmem:[%s1 + $0x22c] sm:$0xf]
  %v167 = vld [vmem:[%s1 + $0x230] sm:$0xf]
  %v168 = vld [vmem:[%s1 + $0x234] sm:$0xf]
  %v169 = vld [vmem:[%s1 + $0x238] sm:$0xf]
  %v170 = vld [vmem:[%s1 + $0x23c] sm:$0xf]
  %v171 = vld [vmem:[%s0] sm:$0xf]
  %v172 = vld [vmem:[%s0 + $0x4] sm:$0xf]
  %v173 = vld [vmem:[%s0 + $0xc] sm:$0xf]
  %v174 = vld [vmem:[%s0 + $0x10] sm:$0xf]
  %v175 = vld [vmem:[%s0 + $0x18] sm:$0xf]
  %v176 = vld [vmem:[%s0 + $0x1c] sm:$0xf]
  %v177 = vld [vmem:[%s0 + $0x24] sm:$0xf]
  %v178 = vld [vmem:[%s0 + $0x28] sm:$0xf]
  %v179 = vld [vmem:[%s0 + $0x30] sm:$0xf]
  %v180 = vld [vmem:[%s0 + $0x34] sm:$0xf]
  %v181 = vld [vmem:[%s0 + $0x3c] sm:$0xf]
  %v182 = vld [vmem:[%s0 + $0x40] sm:$0xf]
  %v183 = vld [vmem:[%s0 + $0x48] sm:$0xf]
  %v184 = vld [vmem:[%s0 + $0x4c] sm:$0xf]
  %v185 = vld [vmem:[%s0 + $0x54] sm:$0xf]
  %v186 = vld [vmem:[%s0 + $0x58] sm:$0xf]
  %v187 = vld [vmem:[%s0 + $0x60] sm:$0xf]
  %v188 = vld [vmem:[%s0 + $0x64] sm:$0xf]
  %v189 = vld [vmem:[%s0 + $0x6c] sm:$0xf]
  %v190 = vld [vmem:[%s0 + $0x70] sm:$0xf]
  %v191 = vld [vmem:[%s0 + $0x78] sm:$0xf]
  %v192 = vld [vmem:[%s0 + $0x7c] sm:$0xf]
  %v193 = vld [vmem:[%s0 + $0x84] sm:$0xf]
  %v194 = vld [vmem:[%s0 + $0x88] sm:$0xf]
  %v195 = vld [vmem:[%s0 + $0x90] sm:$0xf]
  %v196 = vld [vmem:[%s0 + $0x94] sm:$0xf]
  %v197 = vld [vmem:[%s0 + $0x9c] sm:$0xf]
  %v198 = vld [vmem:[%s0 + $0xa0] sm:$0xf]
  %v199 = vld [vmem:[%s0 + $0xa8] sm:$0xf]
  %v200 = vld [vmem:[%s0 + $0xac] sm:$0xf]
  %v201 = vld [vmem:[%s0 + $0xb4] sm:$0xf]
  %v202 = vld [vmem:[%s0 + $0xb8] sm:$0xf]
  %v203 = vld [vmem:[%s0 + $0x8] sm:$0x1]
  %v204 = vld [vmem:[%s0 + $0x14] sm:$0x1]
  %v205 = vld [vmem:[%s0 + $0x20] sm:$0x1]
  %v206 = vld [vmem:[%s0 + $0x2c] sm:$0x1]
  %v207 = vld [vmem:[%s0 + $0x38] sm:$0x1]
  %v208 = vld [vmem:[%s0 + $0x44] sm:$0x1]
  %v209 = vld [vmem:[%s0 + $0x50] sm:$0x1]
  %v210 = vld [vmem:[%s0 + $0x5c] sm:$0x1]
  %v211 = vld [vmem:[%s0 + $0x68] sm:$0x1]
  %v212 = vld [vmem:[%s0 + $0x74] sm:$0x1]
  %v213 = vld [vmem:[%s0 + $0x80] sm:$0x1]
  %v214 = vld [vmem:[%s0 + $0x8c] sm:$0x1]
  %v215 = vld [vmem:[%s0 + $0x98] sm:$0x1]
  %v216 = vld [vmem:[%s0 + $0xa4] sm:$0x1]
  %v217 = vld [vmem:[%s0 + $0xb0] sm:$0x1]
  %v218 = vld [vmem:[%s0 + $0xbc] sm:$0x1]
  %vm219 = vsmask.f32 3328
  %vm220 = vsmask.f32 7440
  %vm221 = vmor %vm219, %vm220
  %v223 = vshrl.u32 %v171, 16
  %v225 = vrot.slane %v223, 4
  %v226 = vshll.u32 %v171, 16
  %v228 = vrot.slane %v226, 5
  %v229 = vor.u32 %v225, %v228
  %v230 = vrot.slane %v229, 4
  %v232 = vshll.u32 %v172, 16
  %v234 = vrot.slane %v232, 5
  %v235 = vsel %vm221, %v230, %v234
  %v236 = vshrl.u32 %v172, 16
  %v238 = vrot.slane %v236, 4
  %v239 = vor.u32 %v238, %v234
  %v240 = vrot.slane %v239, 4
  %v242 = vshll.u32 %v203, 16
  %v244 = vrot.slane %v242, 5
  %v245 = vsel %vm221, %v240, %v244
  %v247 = vshrl.u32 %v173, 16
  %v249 = vrot.slane %v247, 4
  %v250 = vshll.u32 %v173, 16
  %v252 = vrot.slane %v250, 5
  %v253 = vor.u32 %v249, %v252
  %v254 = vrot.slane %v253, 4
  %v256 = vshll.u32 %v174, 16
  %v258 = vrot.slane %v256, 5
  %v259 = vsel %vm221, %v254, %v258
  %v260 = vshrl.u32 %v174, 16
  %v262 = vrot.slane %v260, 4
  %v263 = vor.u32 %v262, %v258
  %v264 = vrot.slane %v263, 4
  %v266 = vshll.u32 %v204, 16
  %v268 = vrot.slane %v266, 5
  %v269 = vsel %vm221, %v264, %v268
  %v271 = vshrl.u32 %v175, 16
  %v273 = vrot.slane %v271, 4
  %v274 = vshll.u32 %v175, 16
  %v276 = vrot.slane %v274, 5
  %v277 = vor.u32 %v273, %v276
  %v278 = vrot.slane %v277, 4
  %v280 = vshll.u32 %v176, 16
  %v282 = vrot.slane %v280, 5
  %v283 = vsel %vm221, %v278, %v282
  %v284 = vshrl.u32 %v176, 16
  %v286 = vrot.slane %v284, 4
  %v287 = vor.u32 %v286, %v282
  %v288 = vrot.slane %v287, 4
  %v290 = vshll.u32 %v205, 16
  %v292 = vrot.slane %v290, 5
  %v293 = vsel %vm221, %v288, %v292
  %v295 = vshrl.u32 %v177, 16
  %v297 = vrot.slane %v295, 4
  %v298 = vshll.u32 %v177, 16
  %v300 = vrot.slane %v298, 5
  %v301 = vor.u32 %v297, %v300
  %v302 = vrot.slane %v301, 4
  %v304 = vshll.u32 %v178, 16
  %v306 = vrot.slane %v304, 5
  %v307 = vsel %vm221, %v302, %v306
  %v308 = vshrl.u32 %v178, 16
  %v310 = vrot.slane %v308, 4
  %v311 = vor.u32 %v310, %v306
  %v312 = vrot.slane %v311, 4
  %v314 = vshll.u32 %v206, 16
  %v316 = vrot.slane %v314, 5
  %v317 = vsel %vm221, %v312, %v316
  %v319 = vshrl.u32 %v179, 16
  %v321 = vrot.slane %v319, 4
  %v322 = vshll.u32 %v179, 16
  %v324 = vrot.slane %v322, 5
  %v325 = vor.u32 %v321, %v324
  %v326 = vrot.slane %v325, 4
  %v328 = vshll.u32 %v180, 16
  %v330 = vrot.slane %v328, 5
  %v331 = vsel %vm221, %v326, %v330
  %v332 = vshrl.u32 %v180, 16
  %v334 = vrot.slane %v332, 4
  %v335 = vor.u32 %v334, %v330
  %v336 = vrot.slane %v335, 4
  %v338 = vshll.u32 %v207, 16
  %v340 = vrot.slane %v338, 5
  %v341 = vsel %vm221, %v336, %v340
  %v343 = vshrl.u32 %v181, 16
  %v345 = vrot.slane %v343, 4
  %v346 = vshll.u32 %v181, 16
  %v348 = vrot.slane %v346, 5
  %v349 = vor.u32 %v345, %v348
  %v350 = vrot.slane %v349, 4
  %v352 = vshll.u32 %v182, 16
  %v354 = vrot.slane %v352, 5
  %v355 = vsel %vm221, %v350, %v354
  %v356 = vshrl.u32 %v182, 16
  %v358 = vrot.slane %v356, 4
  %v359 = vor.u32 %v358, %v354
  %v360 = vrot.slane %v359, 4
  %v362 = vshll.u32 %v208, 16
  %v364 = vrot.slane %v362, 5
  %v365 = vsel %vm221, %v360, %v364
  %v367 = vshrl.u32 %v183, 16
  %v369 = vrot.slane %v367, 4
  %v370 = vshll.u32 %v183, 16
  %v372 = vrot.slane %v370, 5
  %v373 = vor.u32 %v369, %v372
  %v374 = vrot.slane %v373, 4
  %v376 = vshll.u32 %v184, 16
  %v378 = vrot.slane %v376, 5
  %v379 = vsel %vm221, %v374, %v378
  %v380 = vshrl.u32 %v184, 16
  %v382 = vrot.slane %v380, 4
  %v383 = vor.u32 %v382, %v378
  %v384 = vrot.slane %v383, 4
  %v386 = vshll.u32 %v209, 16
  %v388 = vrot.slane %v386, 5
  %v389 = vsel %vm221, %v384, %v388
  %v391 = vshrl.u32 %v185, 16
  %v393 = vrot.slane %v391, 4
  %v394 = vshll.u32 %v185, 16
  %v396 = vrot.slane %v394, 5
  %v397 = vor.u32 %v393, %v396
  %v398 = vrot.slane %v397, 4
  %v400 = vshll.u32 %v186, 16
  %v402 = vrot.slane %v400, 5
  %v403 = vsel %vm221, %v398, %v402
  %v404 = vshrl.u32 %v186, 16
  %v406 = vrot.slane %v404, 4
  %v407 = vor.u32 %v406, %v402
  %v408 = vrot.slane %v407, 4
  %v410 = vshll.u32 %v210, 16
  %v412 = vrot.slane %v410, 5
  %v413 = vsel %vm221, %v408, %v412
  %v415 = vshrl.u32 %v187, 16
  %v417 = vrot.slane %v415, 4
  %v418 = vshll.u32 %v187, 16
  %v420 = vrot.slane %v418, 5
  %v421 = vor.u32 %v417, %v420
  %v422 = vrot.slane %v421, 4
  %v424 = vshll.u32 %v188, 16
  %v426 = vrot.slane %v424, 5
  %v427 = vsel %vm221, %v422, %v426
  %v428 = vshrl.u32 %v188, 16
  %v430 = vrot.slane %v428, 4
  %v431 = vor.u32 %v430, %v426
  %v432 = vrot.slane %v431, 4
  %v434 = vshll.u32 %v211, 16
  %v436 = vrot.slane %v434, 5
  %v437 = vsel %vm221, %v432, %v436
  %v439 = vshrl.u32 %v189, 16
  %v441 = vrot.slane %v439, 4
  %v442 = vshll.u32 %v189, 16
  %v444 = vrot.slane %v442, 5
  %v445 = vor.u32 %v441, %v444
  %v446 = vrot.slane %v445, 4
  %v448 = vshll.u32 %v190, 16
  %v450 = vrot.slane %v448, 5
  %v451 = vsel %vm221, %v446, %v450
  %v452 = vshrl.u32 %v190, 16
  %v454 = vrot.slane %v452, 4
  %v455 = vor.u32 %v454, %v450
  %v456 = vrot.slane %v455, 4
  %v458 = vshll.u32 %v212, 16
  %v460 = vrot.slane %v458, 5
  %v461 = vsel %vm221, %v456, %v460
  %v463 = vshrl.u32 %v191, 16
  %v465 = vrot.slane %v463, 4
  %v466 = vshll.u32 %v191, 16
  %v468 = vrot.slane %v466, 5
  %v469 = vor.u32 %v465, %v468
  %v470 = vrot.slane %v469, 4
  %v472 = vshll.u32 %v192, 16
  %v474 = vrot.slane %v472, 5
  %v475 = vsel %vm221, %v470, %v474
  %v476 = vshrl.u32 %v192, 16
  %v478 = vrot.slane %v476, 4
  %v479 = vor.u32 %v478, %v474
  %v480 = vrot.slane %v479, 4
  %v482 = vshll.u32 %v213, 16
  %v484 = vrot.slane %v482, 5
  %v485 = vsel %vm221, %v480, %v484
  %v487 = vshrl.u32 %v193, 16
  %v489 = vrot.slane %v487, 4
  %v490 = vshll.u32 %v193, 16
  %v492 = vrot.slane %v490, 5
  %v493 = vor.u32 %v489, %v492
  %v494 = vrot.slane %v493, 4
  %v496 = vshll.u32 %v194, 16
  %v498 = vrot.slane %v496, 5
  %v499 = vsel %vm221, %v494, %v498
  %v500 = vshrl.u32 %v194, 16
  %v502 = vrot.slane %v500, 4
  %v503 = vor.u32 %v502, %v498
  %v504 = vrot.slane %v503, 4
  %v506 = vshll.u32 %v214, 16
  %v508 = vrot.slane %v506, 5
  %v509 = vsel %vm221, %v504, %v508
  %v511 = vshrl.u32 %v195, 16
  %v513 = vrot.slane %v511, 4
  %v514 = vshll.u32 %v195, 16
  %v516 = vrot.slane %v514, 5
  %v517 = vor.u32 %v513, %v516
  %v518 = vrot.slane %v517, 4
  %v520 = vshll.u32 %v196, 16
  %v522 = vrot.slane %v520, 5
  %v523 = vsel %vm221, %v518, %v522
  %v524 = vshrl.u32 %v196, 16
  %v526 = vrot.slane %v524, 4
  %v527 = vor.u32 %v526, %v522
  %v528 = vrot.slane %v527, 4
  %v530 = vshll.u32 %v215, 16
  %v532 = vrot.slane %v530, 5
  %v533 = vsel %vm221, %v528, %v532
  %v535 = vshrl.u32 %v197, 16
  %v537 = vrot.slane %v535, 4
  %v538 = vshll.u32 %v197, 16
  %v540 = vrot.slane %v538, 5
  %v541 = vor.u32 %v537, %v540
  %v542 = vrot.slane %v541, 4
  %v544 = vshll.u32 %v198, 16
  %v546 = vrot.slane %v544, 5
  %v547 = vsel %vm221, %v542, %v546
  %v548 = vshrl.u32 %v198, 16
  %v550 = vrot.slane %v548, 4
  %v551 = vor.u32 %v550, %v546
  %v552 = vrot.slane %v551, 4
  %v554 = vshll.u32 %v216, 16
  %v556 = vrot.slane %v554, 5
  %v557 = vsel %vm221, %v552, %v556
  %v559 = vshrl.u32 %v199, 16
  %v561 = vrot.slane %v559, 4
  %v562 = vshll.u32 %v199, 16
  %v564 = vrot.slane %v562, 5
  %v565 = vor.u32 %v561, %v564
  %v566 = vrot.slane %v565, 4
  %v568 = vshll.u32 %v200, 16
  %v570 = vrot.slane %v568, 5
  %v571 = vsel %vm221, %v566, %v570
  %v572 = vshrl.u32 %v200, 16
  %v574 = vrot.slane %v572, 4
  %v575 = vor.u32 %v574, %v570
  %v576 = vrot.slane %v575, 4
  %v578 = vshll.u32 %v217, 16
  %v580 = vrot.slane %v578, 5
  %v581 = vsel %vm221, %v576, %v580
  %v583 = vshrl.u32 %v201, 16
  %v585 = vrot.slane %v583, 4
  %v586 = vshll.u32 %v201, 16
  %v588 = vrot.slane %v586, 5
  %v589 = vor.u32 %v585, %v588
  %v590 = vrot.slane %v589, 4
  %v592 = vshll.u32 %v202, 16
  %v594 = vrot.slane %v592, 5
  %v595 = vsel %vm221, %v590, %v594
  %v596 = vshrl.u32 %v202, 16
  %v598 = vrot.slane %v596, 4
  %v599 = vor.u32 %v598, %v594
  %v600 = vrot.slane %v599, 4
  %v602 = vshll.u32 %v218, 16
  %v604 = vrot.slane %v602, 5
  %v605 = vsel %vm221, %v600, %v604
  %v606 = vld [vmem:[%s0] sm:$0xe]
  %v607 = vld [vmem:[%s0 + $0xc] sm:$0xe]
  %v608 = vld [vmem:[%s0 + $0x18] sm:$0xe]
  %v609 = vld [vmem:[%s0 + $0x24] sm:$0xe]
  %v610 = vld [vmem:[%s0 + $0x30] sm:$0xe]
  %v611 = vld [vmem:[%s0 + $0x3c] sm:$0xe]
  %v612 = vld [vmem:[%s0 + $0x48] sm:$0xe]
  %v613 = vld [vmem:[%s0 + $0x54] sm:$0xe]
  %v614 = vld [vmem:[%s0 + $0x60] sm:$0xe]
  %v615 = vld [vmem:[%s0 + $0x6c] sm:$0xe]
  %v616 = vld [vmem:[%s0 + $0x78] sm:$0xe]
  %v617 = vld [vmem:[%s0 + $0x84] sm:$0xe]
  %v618 = vld [vmem:[%s0 + $0x90] sm:$0xe]
  %v619 = vld [vmem:[%s0 + $0x9c] sm:$0xe]
  %v620 = vld [vmem:[%s0 + $0xa8] sm:$0xe]
  %v621 = vld [vmem:[%s0 + $0xb4] sm:$0xe]
  %vm670 = vcmask 1042432
  %vm671 = vcmask 1046532
  %vm672 = vmor %vm670, %vm671
  %v673 = vrot.slane %v606, 5
  %v674 = vrot.slane %v673, 4
  %v675 = vrot.slane %v172, 5
  %v676 = vsel %vm672, %v674, %v675
  %v677 = vrot.slane %v675, 4
  %v678 = vrot.slane %v203, 5
  %v679 = vsel %vm672, %v677, %v678
  %v680 = vrot.slane %v607, 5
  %v681 = vrot.slane %v680, 4
  %v682 = vrot.slane %v174, 5
  %v683 = vsel %vm672, %v681, %v682
  %v684 = vrot.slane %v682, 4
  %v685 = vrot.slane %v204, 5
  %v686 = vsel %vm672, %v684, %v685
  %v687 = vrot.slane %v608, 5
  %v688 = vrot.slane %v687, 4
  %v689 = vrot.slane %v176, 5
  %v690 = vsel %vm672, %v688, %v689
  %v691 = vrot.slane %v689, 4
  %v692 = vrot.slane %v205, 5
  %v693 = vsel %vm672, %v691, %v692
  %v694 = vrot.slane %v609, 5
  %v695 = vrot.slane %v694, 4
  %v696 = vrot.slane %v178, 5
  %v697 = vsel %vm672, %v695, %v696
  %v698 = vrot.slane %v696, 4
  %v699 = vrot.slane %v206, 5
  %v700 = vsel %vm672, %v698, %v699
  %v701 = vrot.slane %v610, 5
  %v702 = vrot.slane %v701, 4
  %v703 = vrot.slane %v180, 5
  %v704 = vsel %vm672, %v702, %v703
  %v705 = vrot.slane %v703, 4
  %v706 = vrot.slane %v207, 5
  %v707 = vsel %vm672, %v705, %v706
  %v708 = vrot.slane %v611, 5
  %v709 = vrot.slane %v708, 4
  %v710 = vrot.slane %v182, 5
  %v711 = vsel %vm672, %v709, %v710
  %v712 = vrot.slane %v710, 4
  %v713 = vrot.slane %v208, 5
  %v714 = vsel %vm672, %v712, %v713
  %v715 = vrot.slane %v612, 5
  %v716 = vrot.slane %v715, 4
  %v717 = vrot.slane %v184, 5
  %v718 = vsel %vm672, %v716, %v717
  %v719 = vrot.slane %v717, 4
  %v720 = vrot.slane %v209, 5
  %v721 = vsel %vm672, %v719, %v720
  %v722 = vrot.slane %v613, 5
  %v723 = vrot.slane %v722, 4
  %v724 = vrot.slane %v186, 5
  %v725 = vsel %vm672, %v723, %v724
  %v726 = vrot.slane %v724, 4
  %v727 = vrot.slane %v210, 5
  %v728 = vsel %vm672, %v726, %v727
  %v729 = vrot.slane %v614, 5
  %v730 = vrot.slane %v729, 4
  %v731 = vrot.slane %v188, 5
  %v732 = vsel %vm672, %v730, %v731
  %v733 = vrot.slane %v731, 4
  %v734 = vrot.slane %v211, 5
  %v735 = vsel %vm672, %v733, %v734
  %v736 = vrot.slane %v615, 5
  %v737 = vrot.slane %v736, 4
  %v738 = vrot.slane %v190, 5
  %v739 = vsel %vm672, %v737, %v738
  %v740 = vrot.slane %v738, 4
  %v741 = vrot.slane %v212, 5
  %v742 = vsel %vm672, %v740, %v741
  %v743 = vrot.slane %v616, 5
  %v744 = vrot.slane %v743, 4
  %v745 = vrot.slane %v192, 5
  %v746 = vsel %vm672, %v744, %v745
  %v747 = vrot.slane %v745, 4
  %v748 = vrot.slane %v213, 5
  %v749 = vsel %vm672, %v747, %v748
  %v750 = vrot.slane %v617, 5
  %v751 = vrot.slane %v750, 4
  %v752 = vrot.slane %v194, 5
  %v753 = vsel %vm672, %v751, %v752
  %v754 = vrot.slane %v752, 4
  %v755 = vrot.slane %v214, 5
  %v756 = vsel %vm672, %v754, %v755
  %v757 = vrot.slane %v618, 5
  %v758 = vrot.slane %v757, 4
  %v759 = vrot.slane %v196, 5
  %v760 = vsel %vm672, %v758, %v759
  %v761 = vrot.slane %v759, 4
  %v762 = vrot.slane %v215, 5
  %v763 = vsel %vm672, %v761, %v762
  %v764 = vrot.slane %v619, 5
  %v765 = vrot.slane %v764, 4
  %v766 = vrot.slane %v198, 5
  %v767 = vsel %vm672, %v765, %v766
  %v768 = vrot.slane %v766, 4
  %v769 = vrot.slane %v216, 5
  %v770 = vsel %vm672, %v768, %v769
  %v771 = vrot.slane %v620, 5
  %v772 = vrot.slane %v771, 4
  %v773 = vrot.slane %v200, 5
  %v774 = vsel %vm672, %v772, %v773
  %v775 = vrot.slane %v773, 4
  %v776 = vrot.slane %v217, 5
  %v777 = vsel %vm672, %v775, %v776
  %v778 = vrot.slane %v621, 5
  %v779 = vrot.slane %v778, 4
  %v780 = vrot.slane %v202, 5
  %v781 = vsel %vm672, %v779, %v780
  %v782 = vrot.slane %v780, 4
  %v783 = vrot.slane %v218, 5
  %v784 = vsel %vm672, %v782, %v783
  %s785 = scalar_lea.vmem %s0, 12
  %v786 = vld [vmem:[%s785] sm:$0xf]
  %v787 = vld [vmem:[%s785 + $0x4] sm:$0xf]
  %v788 = vld [vmem:[%s785 + $0xc] sm:$0xf]
  %v789 = vld [vmem:[%s785 + $0x10] sm:$0xf]
  %v790 = vld [vmem:[%s785 + $0x18] sm:$0xf]
  %v791 = vld [vmem:[%s785 + $0x1c] sm:$0xf]
  %v792 = vld [vmem:[%s785 + $0x24] sm:$0xf]
  %v793 = vld [vmem:[%s785 + $0x28] sm:$0xf]
  %v794 = vld [vmem:[%s785 + $0x30] sm:$0xf]
  %v795 = vld [vmem:[%s785 + $0x34] sm:$0xf]
  %v796 = vld [vmem:[%s785 + $0x3c] sm:$0xf]
  %v797 = vld [vmem:[%s785 + $0x40] sm:$0xf]
  %v798 = vld [vmem:[%s785 + $0x48] sm:$0xf]
  %v799 = vld [vmem:[%s785 + $0x4c] sm:$0xf]
  %v800 = vld [vmem:[%s785 + $0x54] sm:$0xf]
  %v801 = vld [vmem:[%s785 + $0x58] sm:$0xf]
  %v802 = vld [vmem:[%s785 + $0x60] sm:$0xf]
  %v803 = vld [vmem:[%s785 + $0x64] sm:$0xf]
  %v804 = vld [vmem:[%s785 + $0x6c] sm:$0xf]
  %v805 = vld [vmem:[%s785 + $0x70] sm:$0xf]
  %v806 = vld [vmem:[%s785 + $0x78] sm:$0xf]
  %v807 = vld [vmem:[%s785 + $0x7c] sm:$0xf]
  %v808 = vld [vmem:[%s785 + $0x84] sm:$0xf]
  %v809 = vld [vmem:[%s785 + $0x88] sm:$0xf]
  %v810 = vld [vmem:[%s785 + $0x90] sm:$0xf]
  %v811 = vld [vmem:[%s785 + $0x94] sm:$0xf]
  %v812 = vld [vmem:[%s785 + $0x9c] sm:$0xf]
  %v813 = vld [vmem:[%s785 + $0xa0] sm:$0xf]
  %v814 = vld [vmem:[%s785 + $0xa8] sm:$0xf]
  %v815 = vld [vmem:[%s785 + $0xac] sm:$0xf]
  %v816 = vld [vmem:[%s785 + $0xb4] sm:$0xf]
  %v817 = vld [vmem:[%s785 + $0xb8] sm:$0xf]
  %v818 = vld [vmem:[%s785 + $0x8] sm:$0x1]
  %v819 = vld [vmem:[%s785 + $0x14] sm:$0x1]
  %v820 = vld [vmem:[%s785 + $0x20] sm:$0x1]
  %v821 = vld [vmem:[%s785 + $0x2c] sm:$0x1]
  %v822 = vld [vmem:[%s785 + $0x38] sm:$0x1]
  %v823 = vld [vmem:[%s785 + $0x44] sm:$0x1]
  %v824 = vld [vmem:[%s785 + $0x50] sm:$0x1]
  %v825 = vld [vmem:[%s785 + $0x5c] sm:$0x1]
  %v826 = vld [vmem:[%s785 + $0x68] sm:$0x1]
  %v827 = vld [vmem:[%s785 + $0x74] sm:$0x1]
  %v828 = vld [vmem:[%s785 + $0x80] sm:$0x1]
  %v829 = vld [vmem:[%s785 + $0x8c] sm:$0x1]
  %v830 = vld [vmem:[%s785 + $0x98] sm:$0x1]
  %v831 = vld [vmem:[%s785 + $0xa4] sm:$0x1]
  %v832 = vld [vmem:[%s785 + $0xb0] sm:$0x1]
  %v833 = vld [vmem:[%s785 + $0xbc] sm:$0x1]
  %v835 = vshrl.u32 %v786, 16
  %v837 = vrot.slane %v835, 4
  %v838 = vshll.u32 %v786, 16
  %v840 = vrot.slane %v838, 5
  %v841 = vor.u32 %v837, %v840
  %v842 = vrot.slane %v841, 4
  %v844 = vshll.u32 %v787, 16
  %v846 = vrot.slane %v844, 5
  %v847 = vsel %vm221, %v842, %v846
  %v848 = vshrl.u32 %v787, 16
  %v850 = vrot.slane %v848, 4
  %v851 = vor.u32 %v850, %v846
  %v852 = vrot.slane %v851, 4
  %v854 = vshll.u32 %v818, 16
  %v856 = vrot.slane %v854, 5
  %v857 = vsel %vm221, %v852, %v856
  %v859 = vshrl.u32 %v788, 16
  %v861 = vrot.slane %v859, 4
  %v862 = vshll.u32 %v788, 16
  %v864 = vrot.slane %v862, 5
  %v865 = vor.u32 %v861, %v864
  %v866 = vrot.slane %v865, 4
  %v868 = vshll.u32 %v789, 16
  %v870 = vrot.slane %v868, 5
  %v871 = vsel %vm221, %v866, %v870
  %v872 = vshrl.u32 %v789, 16
  %v874 = vrot.slane %v872, 4
  %v875 = vor.u32 %v874, %v870
  %v876 = vrot.slane %v875, 4
  %v878 = vshll.u32 %v819, 16
  %v880 = vrot.slane %v878, 5
  %v881 = vsel %vm221, %v876, %v880
  %v883 = vshrl.u32 %v790, 16
  %v885 = vrot.slane %v883, 4
  %v886 = vshll.u32 %v790, 16
  %v888 = vrot.slane %v886, 5
  %v889 = vor.u32 %v885, %v888
  %v890 = vrot.slane %v889, 4
  %v892 = vshll.u32 %v791, 16
  %v894 = vrot.slane %v892, 5
  %v895 = vsel %vm221, %v890, %v894
  %v896 = vshrl.u32 %v791, 16
  %v898 = vrot.slane %v896, 4
  %v899 = vor.u32 %v898, %v894
  %v900 = vrot.slane %v899, 4
  %v902 = vshll.u32 %v820, 16
  %v904 = vrot.slane %v902, 5
  %v905 = vsel %vm221, %v900, %v904
  %v907 = vshrl.u32 %v792, 16
  %v909 = vrot.slane %v907, 4
  %v910 = vshll.u32 %v792, 16
  %v912 = vrot.slane %v910, 5
  %v913 = vor.u32 %v909, %v912
  %v914 = vrot.slane %v913, 4
  %v916 = vshll.u32 %v793, 16
  %v918 = vrot.slane %v916, 5
  %v919 = vsel %vm221, %v914, %v918
  %v920 = vshrl.u32 %v793, 16
  %v922 = vrot.slane %v920, 4
  %v923 = vor.u32 %v922, %v918
  %v924 = vrot.slane %v923, 4
  %v926 = vshll.u32 %v821, 16
  %v928 = vrot.slane %v926, 5
  %v929 = vsel %vm221, %v924, %v928
  %v931 = vshrl.u32 %v794, 16
  %v933 = vrot.slane %v931, 4
  %v934 = vshll.u32 %v794, 16
  %v936 = vrot.slane %v934, 5
  %v937 = vor.u32 %v933, %v936
  %v938 = vrot.slane %v937, 4
  %v940 = vshll.u32 %v795, 16
  %v942 = vrot.slane %v940, 5
  %v943 = vsel %vm221, %v938, %v942
  %v944 = vshrl.u32 %v795, 16
  %v946 = vrot.slane %v944, 4
  %v947 = vor.u32 %v946, %v942
  %v948 = vrot.slane %v947, 4
  %v950 = vshll.u32 %v822, 16
  %v952 = vrot.slane %v950, 5
  %v953 = vsel %vm221, %v948, %v952
  %v955 = vshrl.u32 %v796, 16
  %v957 = vrot.slane %v955, 4
  %v958 = vshll.u32 %v796, 16
  %v960 = vrot.slane %v958, 5
  %v961 = vor.u32 %v957, %v960
  %v962 = vrot.slane %v961, 4
  %v964 = vshll.u32 %v797, 16
  %v966 = vrot.slane %v964, 5
  %v967 = vsel %vm221, %v962, %v966
  %v968 = vshrl.u32 %v797, 16
  %v970 = vrot.slane %v968, 4
  %v971 = vor.u32 %v970, %v966
  %v972 = vrot.slane %v971, 4
  %v974 = vshll.u32 %v823, 16
  %v976 = vrot.slane %v974, 5
  %v977 = vsel %vm221, %v972, %v976
  %v979 = vshrl.u32 %v798, 16
  %v981 = vrot.slane %v979, 4
  %v982 = vshll.u32 %v798, 16
  %v984 = vrot.slane %v982, 5
  %v985 = vor.u32 %v981, %v984
  %v986 = vrot.slane %v985, 4
  %v988 = vshll.u32 %v799, 16
  %v990 = vrot.slane %v988, 5
  %v991 = vsel %vm221, %v986, %v990
  %v992 = vshrl.u32 %v799, 16
  %v994 = vrot.slane %v992, 4
  %v995 = vor.u32 %v994, %v990
  %v996 = vrot.slane %v995, 4
  %v998 = vshll.u32 %v824, 16
  %v1000 = vrot.slane %v998, 5
  %v1001 = vsel %vm221, %v996, %v1000
  %v1003 = vshrl.u32 %v800, 16
  %v1005 = vrot.slane %v1003, 4
  %v1006 = vshll.u32 %v800, 16
  %v1008 = vrot.slane %v1006, 5
  %v1009 = vor.u32 %v1005, %v1008
  %v1010 = vrot.slane %v1009, 4
  %v1012 = vshll.u32 %v801, 16
  %v1014 = vrot.slane %v1012, 5
  %v1015 = vsel %vm221, %v1010, %v1014
  %v1016 = vshrl.u32 %v801, 16
  %v1018 = vrot.slane %v1016, 4
  %v1019 = vor.u32 %v1018, %v1014
  %v1020 = vrot.slane %v1019, 4
  %v1022 = vshll.u32 %v825, 16
  %v1024 = vrot.slane %v1022, 5
  %v1025 = vsel %vm221, %v1020, %v1024
  %v1027 = vshrl.u32 %v802, 16
  %v1029 = vrot.slane %v1027, 4
  %v1030 = vshll.u32 %v802, 16
  %v1032 = vrot.slane %v1030, 5
  %v1033 = vor.u32 %v1029, %v1032
  %v1034 = vrot.slane %v1033, 4
  %v1036 = vshll.u32 %v803, 16
  %v1038 = vrot.slane %v1036, 5
  %v1039 = vsel %vm221, %v1034, %v1038
  %v1040 = vshrl.u32 %v803, 16
  %v1042 = vrot.slane %v1040, 4
  %v1043 = vor.u32 %v1042, %v1038
  %v1044 = vrot.slane %v1043, 4
  %v1046 = vshll.u32 %v826, 16
  %v1048 = vrot.slane %v1046, 5
  %v1049 = vsel %vm221, %v1044, %v1048
  %v1051 = vshrl.u32 %v804, 16
  %v1053 = vrot.slane %v1051, 4
  %v1054 = vshll.u32 %v804, 16
  %v1056 = vrot.slane %v1054, 5
  %v1057 = vor.u32 %v1053, %v1056
  %v1058 = vrot.slane %v1057, 4
  %v1060 = vshll.u32 %v805, 16
  %v1062 = vrot.slane %v1060, 5
  %v1063 = vsel %vm221, %v1058, %v1062
  %v1064 = vshrl.u32 %v805, 16
  %v1066 = vrot.slane %v1064, 4
  %v1067 = vor.u32 %v1066, %v1062
  %v1068 = vrot.slane %v1067, 4
  %v1070 = vshll.u32 %v827, 16
  %v1072 = vrot.slane %v1070, 5
  %v1073 = vsel %vm221, %v1068, %v1072
  %v1075 = vshrl.u32 %v806, 16
  %v1077 = vrot.slane %v1075, 4
  %v1078 = vshll.u32 %v806, 16
  %v1080 = vrot.slane %v1078, 5
  %v1081 = vor.u32 %v1077, %v1080
  %v1082 = vrot.slane %v1081, 4
  %v1084 = vshll.u32 %v807, 16
  %v1086 = vrot.slane %v1084, 5
  %v1087 = vsel %vm221, %v1082, %v1086
  %v1088 = vshrl.u32 %v807, 16
  %v1090 = vrot.slane %v1088, 4
  %v1091 = vor.u32 %v1090, %v1086
  %v1092 = vrot.slane %v1091, 4
  %v1094 = vshll.u32 %v828, 16
  %v1096 = vrot.slane %v1094, 5
  %v1097 = vsel %vm221, %v1092, %v1096
  %v1099 = vshrl.u32 %v808, 16
  %v1101 = vrot.slane %v1099, 4
  %v1102 = vshll.u32 %v808, 16
  %v1104 = vrot.slane %v1102, 5
  %v1105 = vor.u32 %v1101, %v1104
  %v1106 = vrot.slane %v1105, 4
  %v1108 = vshll.u32 %v809, 16
  %v1110 = vrot.slane %v1108, 5
  %v1111 = vsel %vm221, %v1106, %v1110
  %v1112 = vshrl.u32 %v809, 16
  %v1114 = vrot.slane %v1112, 4
  %v1115 = vor.u32 %v1114, %v1110
  %v1116 = vrot.slane %v1115, 4
  %v1118 = vshll.u32 %v829, 16
  %v1120 = vrot.slane %v1118, 5
  %v1121 = vsel %vm221, %v1116, %v1120
  %v1123 = vshrl.u32 %v810, 16
  %v1125 = vrot.slane %v1123, 4
  %v1126 = vshll.u32 %v810, 16
  %v1128 = vrot.slane %v1126, 5
  %v1129 = vor.u32 %v1125, %v1128
  %v1130 = vrot.slane %v1129, 4
  %v1132 = vshll.u32 %v811, 16
  %v1134 = vrot.slane %v1132, 5
  %v1135 = vsel %vm221, %v1130, %v1134
  %v1136 = vshrl.u32 %v811, 16
  %v1138 = vrot.slane %v1136, 4
  %v1139 = vor.u32 %v1138, %v1134
  %v1140 = vrot.slane %v1139, 4
  %v1142 = vshll.u32 %v830, 16
  %v1144 = vrot.slane %v1142, 5
  %v1145 = vsel %vm221, %v1140, %v1144
  %v1147 = vshrl.u32 %v812, 16
  %v1149 = vrot.slane %v1147, 4
  %v1150 = vshll.u32 %v812, 16
  %v1152 = vrot.slane %v1150, 5
  %v1153 = vor.u32 %v1149, %v1152
  %v1154 = vrot.slane %v1153, 4
  %v1156 = vshll.u32 %v813, 16
  %v1158 = vrot.slane %v1156, 5
  %v1159 = vsel %vm221, %v1154, %v1158
  %v1160 = vshrl.u32 %v813, 16
  %v1162 = vrot.slane %v1160, 4
  %v1163 = vor.u32 %v1162, %v1158
  %v1164 = vrot.slane %v1163, 4
  %v1166 = vshll.u32 %v831, 16
  %v1168 = vrot.slane %v1166, 5
  %v1169 = vsel %vm221, %v1164, %v1168
  %v1171 = vshrl.u32 %v814, 16
  %v1173 = vrot.slane %v1171, 4
  %v1174 = vshll.u32 %v814, 16
  %v1176 = vrot.slane %v1174, 5
  %v1177 = vor.u32 %v1173, %v1176
  %v1178 = vrot.slane %v1177, 4
  %v1180 = vshll.u32 %v815, 16
  %v1182 = vrot.slane %v1180, 5
  %v1183 = vsel %vm221, %v1178, %v1182
  %v1184 = vshrl.u32 %v815, 16
  %v1186 = vrot.slane %v1184, 4
  %v1187 = vor.u32 %v1186, %v1182
  %v1188 = vrot.slane %v1187, 4
  %v1190 = vshll.u32 %v832, 16
  %v1192 = vrot.slane %v1190, 5
  %v1193 = vsel %vm221, %v1188, %v1192
  %v1195 = vshrl.u32 %v816, 16
  %v1197 = vrot.slane %v1195, 4
  %v1198 = vshll.u32 %v816, 16
  %v1200 = vrot.slane %v1198, 5
  %v1201 = vor.u32 %v1197, %v1200
  %v1202 = vrot.slane %v1201, 4
  %v1204 = vshll.u32 %v817, 16
  %v1206 = vrot.slane %v1204, 5
  %v1207 = vsel %vm221, %v1202, %v1206
  %v1208 = vshrl.u32 %v817, 16
  %v1210 = vrot.slane %v1208, 4
  %v1211 = vor.u32 %v1210, %v1206
  %v1212 = vrot.slane %v1211, 4
  %v1214 = vshll.u32 %v833, 16
  %v1216 = vrot.slane %v1214, 5
  %v1217 = vsel %vm221, %v1212, %v1216
  %v1218 = vld [vmem:[%s785] sm:$0xe]
  %v1219 = vld [vmem:[%s785 + $0xc] sm:$0xe]
  %v1220 = vld [vmem:[%s785 + $0x18] sm:$0xe]
  %v1221 = vld [vmem:[%s785 + $0x24] sm:$0xe]
  %v1222 = vld [vmem:[%s785 + $0x30] sm:$0xe]
  %v1223 = vld [vmem:[%s785 + $0x3c] sm:$0xe]
  %v1224 = vld [vmem:[%s785 + $0x48] sm:$0xe]
  %v1225 = vld [vmem:[%s785 + $0x54] sm:$0xe]
  %v1226 = vld [vmem:[%s785 + $0x60] sm:$0xe]
  %v1227 = vld [vmem:[%s785 + $0x6c] sm:$0xe]
  %v1228 = vld [vmem:[%s785 + $0x78] sm:$0xe]
  %v1229 = vld [vmem:[%s785 + $0x84] sm:$0xe]
  %v1230 = vld [vmem:[%s785 + $0x90] sm:$0xe]
  %v1231 = vld [vmem:[%s785 + $0x9c] sm:$0xe]
  %v1232 = vld [vmem:[%s785 + $0xa8] sm:$0xe]
  %v1233 = vld [vmem:[%s785 + $0xb4] sm:$0xe]
  %v1282 = vrot.slane %v1218, 5
  %v1283 = vrot.slane %v1282, 4
  %v1284 = vrot.slane %v787, 5
  %v1285 = vsel %vm672, %v1283, %v1284
  %v1286 = vrot.slane %v1284, 4
  %v1287 = vrot.slane %v818, 5
  %v1288 = vsel %vm672, %v1286, %v1287
  %v1289 = vrot.slane %v1219, 5
  %v1290 = vrot.slane %v1289, 4
  %v1291 = vrot.slane %v789, 5
  %v1292 = vsel %vm672, %v1290, %v1291
  %v1293 = vrot.slane %v1291, 4
  %v1294 = vrot.slane %v819, 5
  %v1295 = vsel %vm672, %v1293, %v1294
  %v1296 = vrot.slane %v1220, 5
  %v1297 = vrot.slane %v1296, 4
  %v1298 = vrot.slane %v791, 5
  %v1299 = vsel %vm672, %v1297, %v1298
  %v1300 = vrot.slane %v1298, 4
  %v1301 = vrot.slane %v820, 5
  %v1302 = vsel %vm672, %v1300, %v1301
  %v1303 = vrot.slane %v1221, 5
  %v1304 = vrot.slane %v1303, 4
  %v1305 = vrot.slane %v793, 5
  %v1306 = vsel %vm672, %v1304, %v1305
  %v1307 = vrot.slane %v1305, 4
  %v1308 = vrot.slane %v821, 5
  %v1309 = vsel %vm672, %v1307, %v1308
  %v1310 = vrot.slane %v1222, 5
  %v1311 = vrot.slane %v1310, 4
  %v1312 = vrot.slane %v795, 5
  %v1313 = vsel %vm672, %v1311, %v1312
  %v1314 = vrot.slane %v1312, 4
  %v1315 = vrot.slane %v822, 5
  %v1316 = vsel %vm672, %v1314, %v1315
  %v1317 = vrot.slane %v1223, 5
  %v1318 = vrot.slane %v1317, 4
  %v1319 = vrot.slane %v797, 5
  %v1320 = vsel %vm672, %v1318, %v1319
  %v1321 = vrot.slane %v1319, 4
  %v1322 = vrot.slane %v823, 5
  %v1323 = vsel %vm672, %v1321, %v1322
  %v1324 = vrot.slane %v1224, 5
  %v1325 = vrot.slane %v1324, 4
  %v1326 = vrot.slane %v799, 5
  %v1327 = vsel %vm672, %v1325, %v1326
  %v1328 = vrot.slane %v1326, 4
  %v1329 = vrot.slane %v824, 5
  %v1330 = vsel %vm672, %v1328, %v1329
  %v1331 = vrot.slane %v1225, 5
  %v1332 = vrot.slane %v1331, 4
  %v1333 = vrot.slane %v801, 5
  %v1334 = vsel %vm672, %v1332, %v1333
  %v1335 = vrot.slane %v1333, 4
  %v1336 = vrot.slane %v825, 5
  %v1337 = vsel %vm672, %v1335, %v1336
  %v1338 = vrot.slane %v1226, 5
  %v1339 = vrot.slane %v1338, 4
  %v1340 = vrot.slane %v803, 5
  %v1341 = vsel %vm672, %v1339, %v1340
  %v1342 = vrot.slane %v1340, 4
  %v1343 = vrot.slane %v826, 5
  %v1344 = vsel %vm672, %v1342, %v1343
  %v1345 = vrot.slane %v1227, 5
  %v1346 = vrot.slane %v1345, 4
  %v1347 = vrot.slane %v805, 5
  %v1348 = vsel %vm672, %v1346, %v1347
  %v1349 = vrot.slane %v1347, 4
  %v1350 = vrot.slane %v827, 5
  %v1351 = vsel %vm672, %v1349, %v1350
  %v1352 = vrot.slane %v1228, 5
  %v1353 = vrot.slane %v1352, 4
  %v1354 = vrot.slane %v807, 5
  %v1355 = vsel %vm672, %v1353, %v1354
  %v1356 = vrot.slane %v1354, 4
  %v1357 = vrot.slane %v828, 5
  %v1358 = vsel %vm672, %v1356, %v1357
  %v1359 = vrot.slane %v1229, 5
  %v1360 = vrot.slane %v1359, 4
  %v1361 = vrot.slane %v809, 5
  %v1362 = vsel %vm672, %v1360, %v1361
  %v1363 = vrot.slane %v1361, 4
  %v1364 = vrot.slane %v829, 5
  %v1365 = vsel %vm672, %v1363, %v1364
  %v1366 = vrot.slane %v1230, 5
  %v1367 = vrot.slane %v1366, 4
  %v1368 = vrot.slane %v811, 5
  %v1369 = vsel %vm672, %v1367, %v1368
  %v1370 = vrot.slane %v1368, 4
  %v1371 = vrot.slane %v830, 5
  %v1372 = vsel %vm672, %v1370, %v1371
  %v1373 = vrot.slane %v1231, 5
  %v1374 = vrot.slane %v1373, 4
  %v1375 = vrot.slane %v813, 5
  %v1376 = vsel %vm672, %v1374, %v1375
  %v1377 = vrot.slane %v1375, 4
  %v1378 = vrot.slane %v831, 5
  %v1379 = vsel %vm672, %v1377, %v1378
  %v1380 = vrot.slane %v1232, 5
  %v1381 = vrot.slane %v1380, 4
  %v1382 = vrot.slane %v815, 5
  %v1383 = vsel %vm672, %v1381, %v1382
  %v1384 = vrot.slane %v1382, 4
  %v1385 = vrot.slane %v832, 5
  %v1386 = vsel %vm672, %v1384, %v1385
  %v1387 = vrot.slane %v1233, 5
  %v1388 = vrot.slane %v1387, 4
  %v1389 = vrot.slane %v817, 5
  %v1390 = vsel %vm672, %v1388, %v1389
  %v1391 = vrot.slane %v1389, 4
  %v1392 = vrot.slane %v833, 5
  %v1393 = vsel %vm672, %v1391, %v1392
  %s1394 = scalar_lea.vmem %s0, 24
  %v1395 = vld [vmem:[%s1394] sm:$0xf]
  %v1396 = vld [vmem:[%s1394 + $0x4] sm:$0xf]
  %v1397 = vld [vmem:[%s1394 + $0xc] sm:$0xf]
  %v1398 = vld [vmem:[%s1394 + $0x10] sm:$0xf]
  %v1399 = vld [vmem:[%s1394 + $0x18] sm:$0xf]
  %v1400 = vld [vmem:[%s1394 + $0x1c] sm:$0xf]
  %v1401 = vld [vmem:[%s1394 + $0x24] sm:$0xf]
  %v1402 = vld [vmem:[%s1394 + $0x28] sm:$0xf]
  %v1403 = vld [vmem:[%s1394 + $0x30] sm:$0xf]
  %v1404 = vld [vmem:[%s1394 + $0x34] sm:$0xf]
  %v1405 = vld [vmem:[%s1394 + $0x3c] sm:$0xf]
  %v1406 = vld [vmem:[%s1394 + $0x40] sm:$0xf]
  %v1407 = vld [vmem:[%s1394 + $0x48] sm:$0xf]
  %v1408 = vld [vmem:[%s1394 + $0x4c] sm:$0xf]
  %v1409 = vld [vmem:[%s1394 + $0x54] sm:$0xf]
  %v1410 = vld [vmem:[%s1394 + $0x58] sm:$0xf]
  %v1411 = vld [vmem:[%s1394 + $0x60] sm:$0xf]
  %v1412 = vld [vmem:[%s1394 + $0x64] sm:$0xf]
  %v1413 = vld [vmem:[%s1394 + $0x6c] sm:$0xf]
  %v1414 = vld [vmem:[%s1394 + $0x70] sm:$0xf]
  %v1415 = vld [vmem:[%s1394 + $0x78] sm:$0xf]
  %v1416 = vld [vmem:[%s1394 + $0x7c] sm:$0xf]
  %v1417 = vld [vmem:[%s1394 + $0x84] sm:$0xf]
  %v1418 = vld [vmem:[%s1394 + $0x88] sm:$0xf]
  %v1419 = vld [vmem:[%s1394 + $0x90] sm:$0xf]
  %v1420 = vld [vmem:[%s1394 + $0x94] sm:$0xf]
  %v1421 = vld [vmem:[%s1394 + $0x9c] sm:$0xf]
  %v1422 = vld [vmem:[%s1394 + $0xa0] sm:$0xf]
  %v1423 = vld [vmem:[%s1394 + $0xa8] sm:$0xf]
  %v1424 = vld [vmem:[%s1394 + $0xac] sm:$0xf]
  %v1425 = vld [vmem:[%s1394 + $0xb4] sm:$0xf]
  %v1426 = vld [vmem:[%s1394 + $0xb8] sm:$0xf]
  %v1427 = vld [vmem:[%s1394 + $0x8] sm:$0x1]
  %v1428 = vld [vmem:[%s1394 + $0x14] sm:$0x1]
  %v1429 = vld [vmem:[%s1394 + $0x20] sm:$0x1]
  %v1430 = vld [vmem:[%s1394 + $0x2c] sm:$0x1]
  %v1431 = vld [vmem:[%s1394 + $0x38] sm:$0x1]
  %v1432 = vld [vmem:[%s1394 + $0x44] sm:$0x1]
  %v1433 = vld [vmem:[%s1394 + $0x50] sm:$0x1]
  %v1434 = vld [vmem:[%s1394 + $0x5c] sm:$0x1]
  %v1435 = vld [vmem:[%s1394 + $0x68] sm:$0x1]
  %v1436 = vld [vmem:[%s1394 + $0x74] sm:$0x1]
  %v1437 = vld [vmem:[%s1394 + $0x80] sm:$0x1]
  %v1438 = vld [vmem:[%s1394 + $0x8c] sm:$0x1]
  %v1439 = vld [vmem:[%s1394 + $0x98] sm:$0x1]
  %v1440 = vld [vmem:[%s1394 + $0xa4] sm:$0x1]
  %v1441 = vld [vmem:[%s1394 + $0xb0] sm:$0x1]
  %v1442 = vld [vmem:[%s1394 + $0xbc] sm:$0x1]
  %v1444 = vshrl.u32 %v1395, 16
  %v1446 = vrot.slane %v1444, 4
  %v1447 = vshll.u32 %v1395, 16
  %v1449 = vrot.slane %v1447, 5
  %v1450 = vor.u32 %v1446, %v1449
  %v1451 = vrot.slane %v1450, 4
  %v1453 = vshll.u32 %v1396, 16
  %v1455 = vrot.slane %v1453, 5
  %v1456 = vsel %vm221, %v1451, %v1455
  %v1457 = vshrl.u32 %v1396, 16
  %v1459 = vrot.slane %v1457, 4
  %v1460 = vor.u32 %v1459, %v1455
  %v1461 = vrot.slane %v1460, 4
  %v1463 = vshll.u32 %v1427, 16
  %v1465 = vrot.slane %v1463, 5
  %v1466 = vsel %vm221, %v1461, %v1465
  %v1468 = vshrl.u32 %v1397, 16
  %v1470 = vrot.slane %v1468, 4
  %v1471 = vshll.u32 %v1397, 16
  %v1473 = vrot.slane %v1471, 5
  %v1474 = vor.u32 %v1470, %v1473
  %v1475 = vrot.slane %v1474, 4
  %v1477 = vshll.u32 %v1398, 16
  %v1479 = vrot.slane %v1477, 5
  %v1480 = vsel %vm221, %v1475, %v1479
  %v1481 = vshrl.u32 %v1398, 16
  %v1483 = vrot.slane %v1481, 4
  %v1484 = vor.u32 %v1483, %v1479
  %v1485 = vrot.slane %v1484, 4
  %v1487 = vshll.u32 %v1428, 16
  %v1489 = vrot.slane %v1487, 5
  %v1490 = vsel %vm221, %v1485, %v1489
  %v1492 = vshrl.u32 %v1399, 16
  %v1494 = vrot.slane %v1492, 4
  %v1495 = vshll.u32 %v1399, 16
  %v1497 = vrot.slane %v1495, 5
  %v1498 = vor.u32 %v1494, %v1497
  %v1499 = vrot.slane %v1498, 4
  %v1501 = vshll.u32 %v1400, 16
  %v1503 = vrot.slane %v1501, 5
  %v1504 = vsel %vm221, %v1499, %v1503
  %v1505 = vshrl.u32 %v1400, 16
  %v1507 = vrot.slane %v1505, 4
  %v1508 = vor.u32 %v1507, %v1503
  %v1509 = vrot.slane %v1508, 4
  %v1511 = vshll.u32 %v1429, 16
  %v1513 = vrot.slane %v1511, 5
  %v1514 = vsel %vm221, %v1509, %v1513
  %v1516 = vshrl.u32 %v1401, 16
  %v1518 = vrot.slane %v1516, 4
  %v1519 = vshll.u32 %v1401, 16
  %v1521 = vrot.slane %v1519, 5
  %v1522 = vor.u32 %v1518, %v1521
  %v1523 = vrot.slane %v1522, 4
  %v1525 = vshll.u32 %v1402, 16
  %v1527 = vrot.slane %v1525, 5
  %v1528 = vsel %vm221, %v1523, %v1527
  %v1529 = vshrl.u32 %v1402, 16
  %v1531 = vrot.slane %v1529, 4
  %v1532 = vor.u32 %v1531, %v1527
  %v1533 = vrot.slane %v1532, 4
  %v1535 = vshll.u32 %v1430, 16
  %v1537 = vrot.slane %v1535, 5
  %v1538 = vsel %vm221, %v1533, %v1537
  %v1540 = vshrl.u32 %v1403, 16
  %v1542 = vrot.slane %v1540, 4
  %v1543 = vshll.u32 %v1403, 16
  %v1545 = vrot.slane %v1543, 5
  %v1546 = vor.u32 %v1542, %v1545
  %v1547 = vrot.slane %v1546, 4
  %v1549 = vshll.u32 %v1404, 16
  %v1551 = vrot.slane %v1549, 5
  %v1552 = vsel %vm221, %v1547, %v1551
  %v1553 = vshrl.u32 %v1404, 16
  %v1555 = vrot.slane %v1553, 4
  %v1556 = vor.u32 %v1555, %v1551
  %v1557 = vrot.slane %v1556, 4
  %v1559 = vshll.u32 %v1431, 16
  %v1561 = vrot.slane %v1559, 5
  %v1562 = vsel %vm221, %v1557, %v1561
  %v1564 = vshrl.u32 %v1405, 16
  %v1566 = vrot.slane %v1564, 4
  %v1567 = vshll.u32 %v1405, 16
  %v1569 = vrot.slane %v1567, 5
  %v1570 = vor.u32 %v1566, %v1569
  %v1571 = vrot.slane %v1570, 4
  %v1573 = vshll.u32 %v1406, 16
  %v1575 = vrot.slane %v1573, 5
  %v1576 = vsel %vm221, %v1571, %v1575
  %v1577 = vshrl.u32 %v1406, 16
  %v1579 = vrot.slane %v1577, 4
  %v1580 = vor.u32 %v1579, %v1575
  %v1581 = vrot.slane %v1580, 4
  %v1583 = vshll.u32 %v1432, 16
  %v1585 = vrot.slane %v1583, 5
  %v1586 = vsel %vm221, %v1581, %v1585
  %v1588 = vshrl.u32 %v1407, 16
  %v1590 = vrot.slane %v1588, 4
  %v1591 = vshll.u32 %v1407, 16
  %v1593 = vrot.slane %v1591, 5
  %v1594 = vor.u32 %v1590, %v1593
  %v1595 = vrot.slane %v1594, 4
  %v1597 = vshll.u32 %v1408, 16
  %v1599 = vrot.slane %v1597, 5
  %v1600 = vsel %vm221, %v1595, %v1599
  %v1601 = vshrl.u32 %v1408, 16
  %v1603 = vrot.slane %v1601, 4
  %v1604 = vor.u32 %v1603, %v1599
  %v1605 = vrot.slane %v1604, 4
  %v1607 = vshll.u32 %v1433, 16
  %v1609 = vrot.slane %v1607, 5
  %v1610 = vsel %vm221, %v1605, %v1609
  %v1612 = vshrl.u32 %v1409, 16
  %v1614 = vrot.slane %v1612, 4
  %v1615 = vshll.u32 %v1409, 16
  %v1617 = vrot.slane %v1615, 5
  %v1618 = vor.u32 %v1614, %v1617
  %v1619 = vrot.slane %v1618, 4
  %v1621 = vshll.u32 %v1410, 16
  %v1623 = vrot.slane %v1621, 5
  %v1624 = vsel %vm221, %v1619, %v1623
  %v1625 = vshrl.u32 %v1410, 16
  %v1627 = vrot.slane %v1625, 4
  %v1628 = vor.u32 %v1627, %v1623
  %v1629 = vrot.slane %v1628, 4
  %v1631 = vshll.u32 %v1434, 16
  %v1633 = vrot.slane %v1631, 5
  %v1634 = vsel %vm221, %v1629, %v1633
  %v1636 = vshrl.u32 %v1411, 16
  %v1638 = vrot.slane %v1636, 4
  %v1639 = vshll.u32 %v1411, 16
  %v1641 = vrot.slane %v1639, 5
  %v1642 = vor.u32 %v1638, %v1641
  %v1643 = vrot.slane %v1642, 4
  %v1645 = vshll.u32 %v1412, 16
  %v1647 = vrot.slane %v1645, 5
  %v1648 = vsel %vm221, %v1643, %v1647
  %v1649 = vshrl.u32 %v1412, 16
  %v1651 = vrot.slane %v1649, 4
  %v1652 = vor.u32 %v1651, %v1647
  %v1653 = vrot.slane %v1652, 4
  %v1655 = vshll.u32 %v1435, 16
  %v1657 = vrot.slane %v1655, 5
  %v1658 = vsel %vm221, %v1653, %v1657
  %v1660 = vshrl.u32 %v1413, 16
  %v1662 = vrot.slane %v1660, 4
  %v1663 = vshll.u32 %v1413, 16
  %v1665 = vrot.slane %v1663, 5
  %v1666 = vor.u32 %v1662, %v1665
  %v1667 = vrot.slane %v1666, 4
  %v1669 = vshll.u32 %v1414, 16
  %v1671 = vrot.slane %v1669, 5
  %v1672 = vsel %vm221, %v1667, %v1671
  %v1673 = vshrl.u32 %v1414, 16
  %v1675 = vrot.slane %v1673, 4
  %v1676 = vor.u32 %v1675, %v1671
  %v1677 = vrot.slane %v1676, 4
  %v1679 = vshll.u32 %v1436, 16
  %v1681 = vrot.slane %v1679, 5
  %v1682 = vsel %vm221, %v1677, %v1681
  %v1684 = vshrl.u32 %v1415, 16
  %v1686 = vrot.slane %v1684, 4
  %v1687 = vshll.u32 %v1415, 16
  %v1689 = vrot.slane %v1687, 5
  %v1690 = vor.u32 %v1686, %v1689
  %v1691 = vrot.slane %v1690, 4
  %v1693 = vshll.u32 %v1416, 16
  %v1695 = vrot.slane %v1693, 5
  %v1696 = vsel %vm221, %v1691, %v1695
  %v1697 = vshrl.u32 %v1416, 16
  %v1699 = vrot.slane %v1697, 4
  %v1700 = vor.u32 %v1699, %v1695
  %v1701 = vrot.slane %v1700, 4
  %v1703 = vshll.u32 %v1437, 16
  %v1705 = vrot.slane %v1703, 5
  %v1706 = vsel %vm221, %v1701, %v1705
  %v1708 = vshrl.u32 %v1417, 16
  %v1710 = vrot.slane %v1708, 4
  %v1711 = vshll.u32 %v1417, 16
  %v1713 = vrot.slane %v1711, 5
  %v1714 = vor.u32 %v1710, %v1713
  %v1715 = vrot.slane %v1714, 4
  %v1717 = vshll.u32 %v1418, 16
  %v1719 = vrot.slane %v1717, 5
  %v1720 = vsel %vm221, %v1715, %v1719
  %v1721 = vshrl.u32 %v1418, 16
  %v1723 = vrot.slane %v1721, 4
  %v1724 = vor.u32 %v1723, %v1719
  %v1725 = vrot.slane %v1724, 4
  %v1727 = vshll.u32 %v1438, 16
  %v1729 = vrot.slane %v1727, 5
  %v1730 = vsel %vm221, %v1725, %v1729
  %v1732 = vshrl.u32 %v1419, 16
  %v1734 = vrot.slane %v1732, 4
  %v1735 = vshll.u32 %v1419, 16
  %v1737 = vrot.slane %v1735, 5
  %v1738 = vor.u32 %v1734, %v1737
  %v1739 = vrot.slane %v1738, 4
  %v1741 = vshll.u32 %v1420, 16
  %v1743 = vrot.slane %v1741, 5
  %v1744 = vsel %vm221, %v1739, %v1743
  %v1745 = vshrl.u32 %v1420, 16
  %v1747 = vrot.slane %v1745, 4
  %v1748 = vor.u32 %v1747, %v1743
  %v1749 = vrot.slane %v1748, 4
  %v1751 = vshll.u32 %v1439, 16
  %v1753 = vrot.slane %v1751, 5
  %v1754 = vsel %vm221, %v1749, %v1753
  %v1756 = vshrl.u32 %v1421, 16
  %v1758 = vrot.slane %v1756, 4
  %v1759 = vshll.u32 %v1421, 16
  %v1761 = vrot.slane %v1759, 5
  %v1762 = vor.u32 %v1758, %v1761
  %v1763 = vrot.slane %v1762, 4
  %v1765 = vshll.u32 %v1422, 16
  %v1767 = vrot.slane %v1765, 5
  %v1768 = vsel %vm221, %v1763, %v1767
  %v1769 = vshrl.u32 %v1422, 16
  %v1771 = vrot.slane %v1769, 4
  %v1772 = vor.u32 %v1771, %v1767
  %v1773 = vrot.slane %v1772, 4
  %v1775 = vshll.u32 %v1440, 16
  %v1777 = vrot.slane %v1775, 5
  %v1778 = vsel %vm221, %v1773, %v1777
  %v1780 = vshrl.u32 %v1423, 16
  %v1782 = vrot.slane %v1780, 4
  %v1783 = vshll.u32 %v1423, 16
  %v1785 = vrot.slane %v1783, 5
  %v1786 = vor.u32 %v1782, %v1785
  %v1787 = vrot.slane %v1786, 4
  %v1789 = vshll.u32 %v1424, 16
  %v1791 = vrot.slane %v1789, 5
  %v1792 = vsel %vm221, %v1787, %v1791
  %v1793 = vshrl.u32 %v1424, 16
  %v1795 = vrot.slane %v1793, 4
  %v1796 = vor.u32 %v1795, %v1791
  %v1797 = vrot.slane %v1796, 4
  %v1799 = vshll.u32 %v1441, 16
  %v1801 = vrot.slane %v1799, 5
  %v1802 = vsel %vm221, %v1797, %v1801
  %v1804 = vshrl.u32 %v1425, 16
  %v1806 = vrot.slane %v1804, 4
  %v1807 = vshll.u32 %v1425, 16
  %v1809 = vrot.slane %v1807, 5
  %v1810 = vor.u32 %v1806, %v1809
  %v1811 = vrot.slane %v1810, 4
  %v1813 = vshll.u32 %v1426, 16
  %v1815 = vrot.slane %v1813, 5
  %v1816 = vsel %vm221, %v1811, %v1815
  %v1817 = vshrl.u32 %v1426, 16
  %v1819 = vrot.slane %v1817, 4
  %v1820 = vor.u32 %v1819, %v1815
  %v1821 = vrot.slane %v1820, 4
  %v1823 = vshll.u32 %v1442, 16
  %v1825 = vrot.slane %v1823, 5
  %v1826 = vsel %vm221, %v1821, %v1825
  %v1827 = vld [vmem:[%s1394] sm:$0xe]
  %v1828 = vld [vmem:[%s1394 + $0xc] sm:$0xe]
  %v1829 = vld [vmem:[%s1394 + $0x18] sm:$0xe]
  %v1830 = vld [vmem:[%s1394 + $0x24] sm:$0xe]
  %v1831 = vld [vmem:[%s1394 + $0x30] sm:$0xe]
  %v1832 = vld [vmem:[%s1394 + $0x3c] sm:$0xe]
  %v1833 = vld [vmem:[%s1394 + $0x48] sm:$0xe]
  %v1834 = vld [vmem:[%s1394 + $0x54] sm:$0xe]
  %v1835 = vld [vmem:[%s1394 + $0x60] sm:$0xe]
  %v1836 = vld [vmem:[%s1394 + $0x6c] sm:$0xe]
  %v1837 = vld [vmem:[%s1394 + $0x78] sm:$0xe]
  %v1838 = vld [vmem:[%s1394 + $0x84] sm:$0xe]
  %v1839 = vld [vmem:[%s1394 + $0x90] sm:$0xe]
  %v1840 = vld [vmem:[%s1394 + $0x9c] sm:$0xe]
  %v1841 = vld [vmem:[%s1394 + $0xa8] sm:$0xe]
  %v1842 = vld [vmem:[%s1394 + $0xb4] sm:$0xe]
  %v1891 = vrot.slane %v1827, 5
  %v1892 = vrot.slane %v1891, 4
  %v1893 = vrot.slane %v1396, 5
  %v1894 = vsel %vm672, %v1892, %v1893
  %v1895 = vrot.slane %v1893, 4
  %v1896 = vrot.slane %v1427, 5
  %v1897 = vsel %vm672, %v1895, %v1896
  %v1898 = vrot.slane %v1828, 5
  %v1899 = vrot.slane %v1898, 4
  %v1900 = vrot.slane %v1398, 5
  %v1901 = vsel %vm672, %v1899, %v1900
  %v1902 = vrot.slane %v1900, 4
  %v1903 = vrot.slane %v1428, 5
  %v1904 = vsel %vm672, %v1902, %v1903
  %v1905 = vrot.slane %v1829, 5
  %v1906 = vrot.slane %v1905, 4
  %v1907 = vrot.slane %v1400, 5
  %v1908 = vsel %vm672, %v1906, %v1907
  %v1909 = vrot.slane %v1907, 4
  %v1910 = vrot.slane %v1429, 5
  %v1911 = vsel %vm672, %v1909, %v1910
  %v1912 = vrot.slane %v1830, 5
  %v1913 = vrot.slane %v1912, 4
  %v1914 = vrot.slane %v1402, 5
  %v1915 = vsel %vm672, %v1913, %v1914
  %v1916 = vrot.slane %v1914, 4
  %v1917 = vrot.slane %v1430, 5
  %v1918 = vsel %vm672, %v1916, %v1917
  %v1919 = vrot.slane %v1831, 5
  %v1920 = vrot.slane %v1919, 4
  %v1921 = vrot.slane %v1404, 5
  %v1922 = vsel %vm672, %v1920, %v1921
  %v1923 = vrot.slane %v1921, 4
  %v1924 = vrot.slane %v1431, 5
  %v1925 = vsel %vm672, %v1923, %v1924
  %v1926 = vrot.slane %v1832, 5
  %v1927 = vrot.slane %v1926, 4
  %v1928 = vrot.slane %v1406, 5
  %v1929 = vsel %vm672, %v1927, %v1928
  %v1930 = vrot.slane %v1928, 4
  %v1931 = vrot.slane %v1432, 5
  %v1932 = vsel %vm672, %v1930, %v1931
  %v1933 = vrot.slane %v1833, 5
  %v1934 = vrot.slane %v1933, 4
  %v1935 = vrot.slane %v1408, 5
  %v1936 = vsel %vm672, %v1934, %v1935
  %v1937 = vrot.slane %v1935, 4
  %v1938 = vrot.slane %v1433, 5
  %v1939 = vsel %vm672, %v1937, %v1938
  %v1940 = vrot.slane %v1834, 5
  %v1941 = vrot.slane %v1940, 4
  %v1942 = vrot.slane %v1410, 5
  %v1943 = vsel %vm672, %v1941, %v1942
  %v1944 = vrot.slane %v1942, 4
  %v1945 = vrot.slane %v1434, 5
  %v1946 = vsel %vm672, %v1944, %v1945
  %v1947 = vrot.slane %v1835, 5
  %v1948 = vrot.slane %v1947, 4
  %v1949 = vrot.slane %v1412, 5
  %v1950 = vsel %vm672, %v1948, %v1949
  %v1951 = vrot.slane %v1949, 4
  %v1952 = vrot.slane %v1435, 5
  %v1953 = vsel %vm672, %v1951, %v1952
  %v1954 = vrot.slane %v1836, 5
  %v1955 = vrot.slane %v1954, 4
  %v1956 = vrot.slane %v1414, 5
  %v1957 = vsel %vm672, %v1955, %v1956
  %v1958 = vrot.slane %v1956, 4
  %v1959 = vrot.slane %v1436, 5
  %v1960 = vsel %vm672, %v1958, %v1959
  %v1961 = vrot.slane %v1837, 5
  %v1962 = vrot.slane %v1961, 4
  %v1963 = vrot.slane %v1416, 5
  %v1964 = vsel %vm672, %v1962, %v1963
  %v1965 = vrot.slane %v1963, 4
  %v1966 = vrot.slane %v1437, 5
  %v1967 = vsel %vm672, %v1965, %v1966
  %v1968 = vrot.slane %v1838, 5
  %v1969 = vrot.slane %v1968, 4
  %v1970 = vrot.slane %v1418, 5
  %v1971 = vsel %vm672, %v1969, %v1970
  %v1972 = vrot.slane %v1970, 4
  %v1973 = vrot.slane %v1438, 5
  %v1974 = vsel %vm672, %v1972, %v1973
  %v1975 = vrot.slane %v1839, 5
  %v1976 = vrot.slane %v1975, 4
  %v1977 = vrot.slane %v1420, 5
  %v1978 = vsel %vm672, %v1976, %v1977
  %v1979 = vrot.slane %v1977, 4
  %v1980 = vrot.slane %v1439, 5
  %v1981 = vsel %vm672, %v1979, %v1980
  %v1982 = vrot.slane %v1840, 5
  %v1983 = vrot.slane %v1982, 4
  %v1984 = vrot.slane %v1422, 5
  %v1985 = vsel %vm672, %v1983, %v1984
  %v1986 = vrot.slane %v1984, 4
  %v1987 = vrot.slane %v1440, 5
  %v1988 = vsel %vm672, %v1986, %v1987
  %v1989 = vrot.slane %v1841, 5
  %v1990 = vrot.slane %v1989, 4
  %v1991 = vrot.slane %v1424, 5
  %v1992 = vsel %vm672, %v1990, %v1991
  %v1993 = vrot.slane %v1991, 4
  %v1994 = vrot.slane %v1441, 5
  %v1995 = vsel %vm672, %v1993, %v1994
  %v1996 = vrot.slane %v1842, 5
  %v1997 = vrot.slane %v1996, 4
  %v1998 = vrot.slane %v1426, 5
  %v1999 = vsel %vm672, %v1997, %v1998
  %v2000 = vrot.slane %v1998, 4
  %v2001 = vrot.slane %v1442, 5
  %v2002 = vsel %vm672, %v2000, %v2001
  %v2019 = vunpack.c.l.b16 %v171
  %v2020 = vunpack.c.l.b16 %v172
  %v2021 = vunpack.c.l.b16 %v173
  %v2022 = vunpack.c.l.b16 %v174
  %v2023 = vunpack.c.l.b16 %v175
  %v2024 = vunpack.c.l.b16 %v176
  %v2025 = vunpack.c.l.b16 %v177
  %v2026 = vunpack.c.l.b16 %v178
  %v2027 = vunpack.c.l.b16 %v179
  %v2028 = vunpack.c.l.b16 %v180
  %v2029 = vunpack.c.l.b16 %v181
  %v2030 = vunpack.c.l.b16 %v182
  %v2031 = vunpack.c.l.b16 %v183
  %v2032 = vunpack.c.l.b16 %v184
  %v2033 = vunpack.c.l.b16 %v185
  %v2034 = vunpack.c.l.b16 %v186
  %v2035 = vunpack.c.l.b16 %v187
  %v2036 = vunpack.c.l.b16 %v188
  %v2037 = vunpack.c.l.b16 %v189
  %v2038 = vunpack.c.l.b16 %v190
  %v2039 = vunpack.c.l.b16 %v191
  %v2040 = vunpack.c.l.b16 %v192
  %v2041 = vunpack.c.l.b16 %v193
  %v2042 = vunpack.c.l.b16 %v194
  %v2043 = vunpack.c.l.b16 %v195
  %v2044 = vunpack.c.l.b16 %v196
  %v2045 = vunpack.c.l.b16 %v197
  %v2046 = vunpack.c.l.b16 %v198
  %v2047 = vunpack.c.l.b16 %v199
  %v2048 = vunpack.c.l.b16 %v200
  %v2049 = vunpack.c.l.b16 %v201
  %v2050 = vunpack.c.l.b16 %v202
  %v2051 = vpack.c.b16 %v2020, %v2019
  %v2052 = vpack.c.b16 %v2022, %v2021
  %v2053 = vpack.c.b16 %v2024, %v2023
  %v2054 = vpack.c.b16 %v2026, %v2025
  %v2055 = vpack.c.b16 %v2028, %v2027
  %v2056 = vpack.c.b16 %v2030, %v2029
  %v2057 = vpack.c.b16 %v2032, %v2031
  %v2058 = vpack.c.b16 %v2034, %v2033
  %v2059 = vpack.c.b16 %v2036, %v2035
  %v2060 = vpack.c.b16 %v2038, %v2037
  %v2061 = vpack.c.b16 %v2040, %v2039
  %v2062 = vpack.c.b16 %v2042, %v2041
  %v2063 = vpack.c.b16 %v2044, %v2043
  %v2064 = vpack.c.b16 %v2046, %v2045
  %v2065 = vpack.c.b16 %v2048, %v2047
  %v2066 = vpack.c.b16 %v2050, %v2049
  %v2083 = vunpack.c.l.b16 %v235
  %v2084 = vunpack.c.l.b16 %v245
  %v2085 = vunpack.c.l.b16 %v259
  %v2086 = vunpack.c.l.b16 %v269
  %v2087 = vunpack.c.l.b16 %v283
  %v2088 = vunpack.c.l.b16 %v293
  %v2089 = vunpack.c.l.b16 %v307
  %v2090 = vunpack.c.l.b16 %v317
  %v2091 = vunpack.c.l.b16 %v331
  %v2092 = vunpack.c.l.b16 %v341
  %v2093 = vunpack.c.l.b16 %v355
  %v2094 = vunpack.c.l.b16 %v365
  %v2095 = vunpack.c.l.b16 %v379
  %v2096 = vunpack.c.l.b16 %v389
  %v2097 = vunpack.c.l.b16 %v403
  %v2098 = vunpack.c.l.b16 %v413
  %v2099 = vunpack.c.l.b16 %v427
  %v2100 = vunpack.c.l.b16 %v437
  %v2101 = vunpack.c.l.b16 %v451
  %v2102 = vunpack.c.l.b16 %v461
  %v2103 = vunpack.c.l.b16 %v475
  %v2104 = vunpack.c.l.b16 %v485
  %v2105 = vunpack.c.l.b16 %v499
  %v2106 = vunpack.c.l.b16 %v509
  %v2107 = vunpack.c.l.b16 %v523
  %v2108 = vunpack.c.l.b16 %v533
  %v2109 = vunpack.c.l.b16 %v547
  %v2110 = vunpack.c.l.b16 %v557
  %v2111 = vunpack.c.l.b16 %v571
  %v2112 = vunpack.c.l.b16 %v581
  %v2113 = vunpack.c.l.b16 %v595
  %v2114 = vunpack.c.l.b16 %v605
  %v2115 = vpack.c.b16 %v2084, %v2083
  %v2116 = vpack.c.b16 %v2086, %v2085
  %v2117 = vpack.c.b16 %v2088, %v2087
  %v2118 = vpack.c.b16 %v2090, %v2089
  %v2119 = vpack.c.b16 %v2092, %v2091
  %v2120 = vpack.c.b16 %v2094, %v2093
  %v2121 = vpack.c.b16 %v2096, %v2095
  %v2122 = vpack.c.b16 %v2098, %v2097
  %v2123 = vpack.c.b16 %v2100, %v2099
  %v2124 = vpack.c.b16 %v2102, %v2101
  %v2125 = vpack.c.b16 %v2104, %v2103
  %v2126 = vpack.c.b16 %v2106, %v2105
  %v2127 = vpack.c.b16 %v2108, %v2107
  %v2128 = vpack.c.b16 %v2110, %v2109
  %v2129 = vpack.c.b16 %v2112, %v2111
  %v2130 = vpack.c.b16 %v2114, %v2113
  %v2147 = vunpack.c.l.b16 %v676
  %v2148 = vunpack.c.l.b16 %v679
  %v2149 = vunpack.c.l.b16 %v683
  %v2150 = vunpack.c.l.b16 %v686
  %v2151 = vunpack.c.l.b16 %v690
  %v2152 = vunpack.c.l.b16 %v693
  %v2153 = vunpack.c.l.b16 %v697
  %v2154 = vunpack.c.l.b16 %v700
  %v2155 = vunpack.c.l.b16 %v704
  %v2156 = vunpack.c.l.b16 %v707
  %v2157 = vunpack.c.l.b16 %v711
  %v2158 = vunpack.c.l.b16 %v714
  %v2159 = vunpack.c.l.b16 %v718
  %v2160 = vunpack.c.l.b16 %v721
  %v2161 = vunpack.c.l.b16 %v725
  %v2162 = vunpack.c.l.b16 %v728
  %v2163 = vunpack.c.l.b16 %v732
  %v2164 = vunpack.c.l.b16 %v735
  %v2165 = vunpack.c.l.b16 %v739
  %v2166 = vunpack.c.l.b16 %v742
  %v2167 = vunpack.c.l.b16 %v746
  %v2168 = vunpack.c.l.b16 %v749
  %v2169 = vunpack.c.l.b16 %v753
  %v2170 = vunpack.c.l.b16 %v756
  %v2171 = vunpack.c.l.b16 %v760
  %v2172 = vunpack.c.l.b16 %v763
  %v2173 = vunpack.c.l.b16 %v767
  %v2174 = vunpack.c.l.b16 %v770
  %v2175 = vunpack.c.l.b16 %v774
  %v2176 = vunpack.c.l.b16 %v777
  %v2177 = vunpack.c.l.b16 %v781
  %v2178 = vunpack.c.l.b16 %v784
  %v2179 = vpack.c.b16 %v2148, %v2147
  %v2180 = vpack.c.b16 %v2150, %v2149
  %v2181 = vpack.c.b16 %v2152, %v2151
  %v2182 = vpack.c.b16 %v2154, %v2153
  %v2183 = vpack.c.b16 %v2156, %v2155
  %v2184 = vpack.c.b16 %v2158, %v2157
  %v2185 = vpack.c.b16 %v2160, %v2159
  %v2186 = vpack.c.b16 %v2162, %v2161
  %v2187 = vpack.c.b16 %v2164, %v2163
  %v2188 = vpack.c.b16 %v2166, %v2165
  %v2189 = vpack.c.b16 %v2168, %v2167
  %v2190 = vpack.c.b16 %v2170, %v2169
  %v2191 = vpack.c.b16 %v2172, %v2171
  %v2192 = vpack.c.b16 %v2174, %v2173
  %v2193 = vpack.c.b16 %v2176, %v2175
  %v2194 = vpack.c.b16 %v2178, %v2177
  %v2227 = vunpack.c.l.b16 %v786
  %v2228 = vunpack.c.l.b16 %v787
  %v2229 = vunpack.c.l.b16 %v788
  %v2230 = vunpack.c.l.b16 %v789
  %v2231 = vunpack.c.l.b16 %v790
  %v2232 = vunpack.c.l.b16 %v791
  %v2233 = vunpack.c.l.b16 %v792
  %v2234 = vunpack.c.l.b16 %v793
  %v2235 = vunpack.c.l.b16 %v794
  %v2236 = vunpack.c.l.b16 %v795
  %v2237 = vunpack.c.l.b16 %v796
  %v2238 = vunpack.c.l.b16 %v797
  %v2239 = vunpack.c.l.b16 %v798
  %v2240 = vunpack.c.l.b16 %v799
  %v2241 = vunpack.c.l.b16 %v800
  %v2242 = vunpack.c.l.b16 %v801
  %v2243 = vunpack.c.l.b16 %v802
  %v2244 = vunpack.c.l.b16 %v803
  %v2245 = vunpack.c.l.b16 %v804
  %v2246 = vunpack.c.l.b16 %v805
  %v2247 = vunpack.c.l.b16 %v806
  %v2248 = vunpack.c.l.b16 %v807
  %v2249 = vunpack.c.l.b16 %v808
  %v2250 = vunpack.c.l.b16 %v809
  %v2251 = vunpack.c.l.b16 %v810
  %v2252 = vunpack.c.l.b16 %v811
  %v2253 = vunpack.c.l.b16 %v812
  %v2254 = vunpack.c.l.b16 %v813
  %v2255 = vunpack.c.l.b16 %v814
  %v2256 = vunpack.c.l.b16 %v815
  %v2257 = vunpack.c.l.b16 %v816
  %v2258 = vunpack.c.l.b16 %v817
  %v2259 = vpack.c.b16 %v2228, %v2227
  %v2260 = vpack.c.b16 %v2230, %v2229
  %v2261 = vpack.c.b16 %v2232, %v2231
  %v2262 = vpack.c.b16 %v2234, %v2233
  %v2263 = vpack.c.b16 %v2236, %v2235
  %v2264 = vpack.c.b16 %v2238, %v2237
  %v2265 = vpack.c.b16 %v2240, %v2239
  %v2266 = vpack.c.b16 %v2242, %v2241
  %v2267 = vpack.c.b16 %v2244, %v2243
  %v2268 = vpack.c.b16 %v2246, %v2245
  %v2269 = vpack.c.b16 %v2248, %v2247
  %v2270 = vpack.c.b16 %v2250, %v2249
  %v2271 = vpack.c.b16 %v2252, %v2251
  %v2272 = vpack.c.b16 %v2254, %v2253
  %v2273 = vpack.c.b16 %v2256, %v2255
  %v2274 = vpack.c.b16 %v2258, %v2257
  %v2291 = vunpack.c.l.b16 %v847
  %v2292 = vunpack.c.l.b16 %v857
  %v2293 = vunpack.c.l.b16 %v871
  %v2294 = vunpack.c.l.b16 %v881
  %v2295 = vunpack.c.l.b16 %v895
  %v2296 = vunpack.c.l.b16 %v905
  %v2297 = vunpack.c.l.b16 %v919
  %v2298 = vunpack.c.l.b16 %v929
  %v2299 = vunpack.c.l.b16 %v943
  %v2300 = vunpack.c.l.b16 %v953
  %v2301 = vunpack.c.l.b16 %v967
  %v2302 = vunpack.c.l.b16 %v977
  %v2303 = vunpack.c.l.b16 %v991
  %v2304 = vunpack.c.l.b16 %v1001
  %v2305 = vunpack.c.l.b16 %v1015
  %v2306 = vunpack.c.l.b16 %v1025
  %v2307 = vunpack.c.l.b16 %v1039
  %v2308 = vunpack.c.l.b16 %v1049
  %v2309 = vunpack.c.l.b16 %v1063
  %v2310 = vunpack.c.l.b16 %v1073
  %v2311 = vunpack.c.l.b16 %v1087
  %v2312 = vunpack.c.l.b16 %v1097
  %v2313 = vunpack.c.l.b16 %v1111
  %v2314 = vunpack.c.l.b16 %v1121
  %v2315 = vunpack.c.l.b16 %v1135
  %v2316 = vunpack.c.l.b16 %v1145
  %v2317 = vunpack.c.l.b16 %v1159
  %v2318 = vunpack.c.l.b16 %v1169
  %v2319 = vunpack.c.l.b16 %v1183
  %v2320 = vunpack.c.l.b16 %v1193
  %v2321 = vunpack.c.l.b16 %v1207
  %v2322 = vunpack.c.l.b16 %v1217
  %v2323 = vpack.c.b16 %v2292, %v2291
  %v2324 = vpack.c.b16 %v2294, %v2293
  %v2325 = vpack.c.b16 %v2296, %v2295
  %v2326 = vpack.c.b16 %v2298, %v2297
  %v2327 = vpack.c.b16 %v2300, %v2299
  %v2328 = vpack.c.b16 %v2302, %v2301
  %v2329 = vpack.c.b16 %v2304, %v2303
  %v2330 = vpack.c.b16 %v2306, %v2305
  %v2331 = vpack.c.b16 %v2308, %v2307
  %v2332 = vpack.c.b16 %v2310, %v2309
  %v2333 = vpack.c.b16 %v2312, %v2311
  %v2334 = vpack.c.b16 %v2314, %v2313
  %v2335 = vpack.c.b16 %v2316, %v2315
  %v2336 = vpack.c.b16 %v2318, %v2317
  %v2337 = vpack.c.b16 %v2320, %v2319
  %v2338 = vpack.c.b16 %v2322, %v2321
  %v2355 = vunpack.c.l.b16 %v1285
  %v2356 = vunpack.c.l.b16 %v1288
  %v2357 = vunpack.c.l.b16 %v1292
  %v2358 = vunpack.c.l.b16 %v1295
  %v2359 = vunpack.c.l.b16 %v1299
  %v2360 = vunpack.c.l.b16 %v1302
  %v2361 = vunpack.c.l.b16 %v1306
  %v2362 = vunpack.c.l.b16 %v1309
  %v2363 = vunpack.c.l.b16 %v1313
  %v2364 = vunpack.c.l.b16 %v1316
  %v2365 = vunpack.c.l.b16 %v1320
  %v2366 = vunpack.c.l.b16 %v1323
  %v2367 = vunpack.c.l.b16 %v1327
  %v2368 = vunpack.c.l.b16 %v1330
  %v2369 = vunpack.c.l.b16 %v1334
  %v2370 = vunpack.c.l.b16 %v1337
  %v2371 = vunpack.c.l.b16 %v1341
  %v2372 = vunpack.c.l.b16 %v1344
  %v2373 = vunpack.c.l.b16 %v1348
  %v2374 = vunpack.c.l.b16 %v1351
  %v2375 = vunpack.c.l.b16 %v1355
  %v2376 = vunpack.c.l.b16 %v1358
  %v2377 = vunpack.c.l.b16 %v1362
  %v2378 = vunpack.c.l.b16 %v1365
  %v2379 = vunpack.c.l.b16 %v1369
  %v2380 = vunpack.c.l.b16 %v1372
  %v2381 = vunpack.c.l.b16 %v1376
  %v2382 = vunpack.c.l.b16 %v1379
  %v2383 = vunpack.c.l.b16 %v1383
  %v2384 = vunpack.c.l.b16 %v1386
  %v2385 = vunpack.c.l.b16 %v1390
  %v2386 = vunpack.c.l.b16 %v1393
  %v2387 = vpack.c.b16 %v2356, %v2355
  %v2388 = vpack.c.b16 %v2358, %v2357
  %v2389 = vpack.c.b16 %v2360, %v2359
  %v2390 = vpack.c.b16 %v2362, %v2361
  %v2391 = vpack.c.b16 %v2364, %v2363
  %v2392 = vpack.c.b16 %v2366, %v2365
  %v2393 = vpack.c.b16 %v2368, %v2367
  %v2394 = vpack.c.b16 %v2370, %v2369
  %v2395 = vpack.c.b16 %v2372, %v2371
  %v2396 = vpack.c.b16 %v2374, %v2373
  %v2397 = vpack.c.b16 %v2376, %v2375
  %v2398 = vpack.c.b16 %v2378, %v2377
  %v2399 = vpack.c.b16 %v2380, %v2379
  %v2400 = vpack.c.b16 %v2382, %v2381
  %v2401 = vpack.c.b16 %v2384, %v2383
  %v2402 = vpack.c.b16 %v2386, %v2385
  %v2435 = vunpack.c.l.b16 %v1395
  %v2436 = vunpack.c.l.b16 %v1396
  %v2437 = vunpack.c.l.b16 %v1397
  %v2438 = vunpack.c.l.b16 %v1398
  %v2439 = vunpack.c.l.b16 %v1399
  %v2440 = vunpack.c.l.b16 %v1400
  %v2441 = vunpack.c.l.b16 %v1401
  %v2442 = vunpack.c.l.b16 %v1402
  %v2443 = vunpack.c.l.b16 %v1403
  %v2444 = vunpack.c.l.b16 %v1404
  %v2445 = vunpack.c.l.b16 %v1405
  %v2446 = vunpack.c.l.b16 %v1406
  %v2447 = vunpack.c.l.b16 %v1407
  %v2448 = vunpack.c.l.b16 %v1408
  %v2449 = vunpack.c.l.b16 %v1409
  %v2450 = vunpack.c.l.b16 %v1410
  %v2451 = vunpack.c.l.b16 %v1411
  %v2452 = vunpack.c.l.b16 %v1412
  %v2453 = vunpack.c.l.b16 %v1413
  %v2454 = vunpack.c.l.b16 %v1414
  %v2455 = vunpack.c.l.b16 %v1415
  %v2456 = vunpack.c.l.b16 %v1416
  %v2457 = vunpack.c.l.b16 %v1417
  %v2458 = vunpack.c.l.b16 %v1418
  %v2459 = vunpack.c.l.b16 %v1419
  %v2460 = vunpack.c.l.b16 %v1420
  %v2461 = vunpack.c.l.b16 %v1421
  %v2462 = vunpack.c.l.b16 %v1422
  %v2463 = vunpack.c.l.b16 %v1423
  %v2464 = vunpack.c.l.b16 %v1424
  %v2465 = vunpack.c.l.b16 %v1425
  %v2466 = vunpack.c.l.b16 %v1426
  %v2467 = vpack.c.b16 %v2436, %v2435
  %v2468 = vpack.c.b16 %v2438, %v2437
  %v2469 = vpack.c.b16 %v2440, %v2439
  %v2470 = vpack.c.b16 %v2442, %v2441
  %v2471 = vpack.c.b16 %v2444, %v2443
  %v2472 = vpack.c.b16 %v2446, %v2445
  %v2473 = vpack.c.b16 %v2448, %v2447
  %v2474 = vpack.c.b16 %v2450, %v2449
  %v2475 = vpack.c.b16 %v2452, %v2451
  %v2476 = vpack.c.b16 %v2454, %v2453
  %v2477 = vpack.c.b16 %v2456, %v2455
  %v2478 = vpack.c.b16 %v2458, %v2457
  %v2479 = vpack.c.b16 %v2460, %v2459
  %v2480 = vpack.c.b16 %v2462, %v2461
  %v2481 = vpack.c.b16 %v2464, %v2463
  %v2482 = vpack.c.b16 %v2466, %v2465
  %v2499 = vunpack.c.l.b16 %v1456
  %v2500 = vunpack.c.l.b16 %v1466
  %v2501 = vunpack.c.l.b16 %v1480
  %v2502 = vunpack.c.l.b16 %v1490
  %v2503 = vunpack.c.l.b16 %v1504
  %v2504 = vunpack.c.l.b16 %v1514
  %v2505 = vunpack.c.l.b16 %v1528
  %v2506 = vunpack.c.l.b16 %v1538
  %v2507 = vunpack.c.l.b16 %v1552
  %v2508 = vunpack.c.l.b16 %v1562
  %v2509 = vunpack.c.l.b16 %v1576
  %v2510 = vunpack.c.l.b16 %v1586
  %v2511 = vunpack.c.l.b16 %v1600
  %v2512 = vunpack.c.l.b16 %v1610
  %v2513 = vunpack.c.l.b16 %v1624
  %v2514 = vunpack.c.l.b16 %v1634
  %v2515 = vunpack.c.l.b16 %v1648
  %v2516 = vunpack.c.l.b16 %v1658
  %v2517 = vunpack.c.l.b16 %v1672
  %v2518 = vunpack.c.l.b16 %v1682
  %v2519 = vunpack.c.l.b16 %v1696
  %v2520 = vunpack.c.l.b16 %v1706
  %v2521 = vunpack.c.l.b16 %v1720
  %v2522 = vunpack.c.l.b16 %v1730
  %v2523 = vunpack.c.l.b16 %v1744
  %v2524 = vunpack.c.l.b16 %v1754
  %v2525 = vunpack.c.l.b16 %v1768
  %v2526 = vunpack.c.l.b16 %v1778
  %v2527 = vunpack.c.l.b16 %v1792
  %v2528 = vunpack.c.l.b16 %v1802
  %v2529 = vunpack.c.l.b16 %v1816
  %v2530 = vunpack.c.l.b16 %v1826
  %v2531 = vpack.c.b16 %v2500, %v2499
  %v2532 = vpack.c.b16 %v2502, %v2501
  %v2533 = vpack.c.b16 %v2504, %v2503
  %v2534 = vpack.c.b16 %v2506, %v2505
  %v2535 = vpack.c.b16 %v2508, %v2507
  %v2536 = vpack.c.b16 %v2510, %v2509
  %v2537 = vpack.c.b16 %v2512, %v2511
  %v2538 = vpack.c.b16 %v2514, %v2513
  %v2539 = vpack.c.b16 %v2516, %v2515
  %v2540 = vpack.c.b16 %v2518, %v2517
  %v2541 = vpack.c.b16 %v2520, %v2519
  %v2542 = vpack.c.b16 %v2522, %v2521
  %v2543 = vpack.c.b16 %v2524, %v2523
  %v2544 = vpack.c.b16 %v2526, %v2525
  %v2545 = vpack.c.b16 %v2528, %v2527
  %v2546 = vpack.c.b16 %v2530, %v2529
  %v2563 = vunpack.c.l.b16 %v1894
  %v2564 = vunpack.c.l.b16 %v1897
  %v2565 = vunpack.c.l.b16 %v1901
  %v2566 = vunpack.c.l.b16 %v1904
  %v2567 = vunpack.c.l.b16 %v1908
  %v2568 = vunpack.c.l.b16 %v1911
  %v2569 = vunpack.c.l.b16 %v1915
  %v2570 = vunpack.c.l.b16 %v1918
  %v2571 = vunpack.c.l.b16 %v1922
  %v2572 = vunpack.c.l.b16 %v1925
  %v2573 = vunpack.c.l.b16 %v1929
  %v2574 = vunpack.c.l.b16 %v1932
  %v2575 = vunpack.c.l.b16 %v1936
  %v2576 = vunpack.c.l.b16 %v1939
  %v2577 = vunpack.c.l.b16 %v1943
  %v2578 = vunpack.c.l.b16 %v1946
  %v2579 = vunpack.c.l.b16 %v1950
  %v2580 = vunpack.c.l.b16 %v1953
  %v2581 = vunpack.c.l.b16 %v1957
  %v2582 = vunpack.c.l.b16 %v1960
  %v2583 = vunpack.c.l.b16 %v1964
  %v2584 = vunpack.c.l.b16 %v1967
  %v2585 = vunpack.c.l.b16 %v1971
  %v2586 = vunpack.c.l.b16 %v1974
  %v2587 = vunpack.c.l.b16 %v1978
  %v2588 = vunpack.c.l.b16 %v1981
  %v2589 = vunpack.c.l.b16 %v1985
  %v2590 = vunpack.c.l.b16 %v1988
  %v2591 = vunpack.c.l.b16 %v1992
  %v2592 = vunpack.c.l.b16 %v1995
  %v2593 = vunpack.c.l.b16 %v1999
  %v2594 = vunpack.c.l.b16 %v2002
  %v2595 = vpack.c.b16 %v2564, %v2563
  %v2596 = vpack.c.b16 %v2566, %v2565
  %v2597 = vpack.c.b16 %v2568, %v2567
  %v2598 = vpack.c.b16 %v2570, %v2569
  %v2599 = vpack.c.b16 %v2572, %v2571
  %v2600 = vpack.c.b16 %v2574, %v2573
  %v2601 = vpack.c.b16 %v2576, %v2575
  %v2602 = vpack.c.b16 %v2578, %v2577
  %v2603 = vpack.c.b16 %v2580, %v2579
  %v2604 = vpack.c.b16 %v2582, %v2581
  %v2605 = vpack.c.b16 %v2584, %v2583
  %v2606 = vpack.c.b16 %v2586, %v2585
  %v2607 = vpack.c.b16 %v2588, %v2587
  %v2608 = vpack.c.b16 %v2590, %v2589
  %v2609 = vpack.c.b16 %v2592, %v2591
  %v2610 = vpack.c.b16 %v2594, %v2593
  %v2771 = vunpack.c.l.b16 %v27
  %v2772 = vunpack.c.l.b16 %v28
  %v2773 = vunpack.c.l.b16 %v29
  %v2774 = vunpack.c.l.b16 %v30
  %v2775 = vunpack.c.l.b16 %v31
  %v2776 = vunpack.c.l.b16 %v32
  %v2777 = vunpack.c.l.b16 %v33
  %v2778 = vunpack.c.l.b16 %v34
  %v2779 = vunpack.c.l.b16 %v35
  %v2780 = vunpack.c.l.b16 %v36
  %v2781 = vunpack.c.l.b16 %v37
  %v2782 = vunpack.c.l.b16 %v38
  %v2783 = vunpack.c.l.b16 %v39
  %v2784 = vunpack.c.l.b16 %v40
  %v2785 = vunpack.c.l.b16 %v41
  %v2786 = vunpack.c.l.b16 %v42
  %v2787 = vunpack.c.l.b16 %v43
  %v2788 = vunpack.c.l.b16 %v44
  %v2789 = vunpack.c.l.b16 %v45
  %v2790 = vunpack.c.l.b16 %v46
  %v2791 = vunpack.c.l.b16 %v47
  %v2792 = vunpack.c.l.b16 %v48
  %v2793 = vunpack.c.l.b16 %v49
  %v2794 = vunpack.c.l.b16 %v50
  %v2795 = vunpack.c.l.b16 %v51
  %v2796 = vunpack.c.l.b16 %v52
  %v2797 = vunpack.c.l.b16 %v53
  %v2798 = vunpack.c.l.b16 %v54
  %v2799 = vunpack.c.l.b16 %v55
  %v2800 = vunpack.c.l.b16 %v56
  %v2801 = vunpack.c.l.b16 %v57
  %v2802 = vunpack.c.l.b16 %v58
  %v2803 = vunpack.c.l.b16 %v59
  %v2804 = vunpack.c.l.b16 %v60
  %v2805 = vunpack.c.l.b16 %v61
  %v2806 = vunpack.c.l.b16 %v62
  %v2807 = vunpack.c.l.b16 %v63
  %v2808 = vunpack.c.l.b16 %v64
  %v2809 = vunpack.c.l.b16 %v65
  %v2810 = vunpack.c.l.b16 %v66
  %v2811 = vunpack.c.l.b16 %v67
  %v2812 = vunpack.c.l.b16 %v68
  %v2813 = vunpack.c.l.b16 %v69
  %v2814 = vunpack.c.l.b16 %v70
  %v2815 = vunpack.c.l.b16 %v71
  %v2816 = vunpack.c.l.b16 %v72
  %v2817 = vunpack.c.l.b16 %v73
  %v2818 = vunpack.c.l.b16 %v74
  %v2819 = vunpack.c.l.b16 %v75
  %v2820 = vunpack.c.l.b16 %v76
  %v2821 = vunpack.c.l.b16 %v77
  %v2822 = vunpack.c.l.b16 %v78
  %v2823 = vunpack.c.l.b16 %v79
  %v2824 = vunpack.c.l.b16 %v80
  %v2825 = vunpack.c.l.b16 %v81
  %v2826 = vunpack.c.l.b16 %v82
  %v2827 = vunpack.c.l.b16 %v83
  %v2828 = vunpack.c.l.b16 %v84
  %v2829 = vunpack.c.l.b16 %v85
  %v2830 = vunpack.c.l.b16 %v86
  %v2831 = vunpack.c.l.b16 %v87
  %v2832 = vunpack.c.l.b16 %v88
  %v2833 = vunpack.c.l.b16 %v89
  %v2834 = vunpack.c.l.b16 %v90
  %v2835 = vunpack.c.l.b16 %v91
  %v2836 = vunpack.c.l.b16 %v92
  %v2837 = vunpack.c.l.b16 %v93
  %v2838 = vunpack.c.l.b16 %v94
  %v2839 = vunpack.c.l.b16 %v95
  %v2840 = vunpack.c.l.b16 %v96
  %v2841 = vunpack.c.l.b16 %v97
  %v2842 = vunpack.c.l.b16 %v98
  %v2843 = vunpack.c.l.b16 %v99
  %v2844 = vunpack.c.l.b16 %v100
  %v2845 = vunpack.c.l.b16 %v101
  %v2846 = vunpack.c.l.b16 %v102
  %v2847 = vunpack.c.l.b16 %v103
  %v2848 = vunpack.c.l.b16 %v104
  %v2849 = vunpack.c.l.b16 %v105
  %v2850 = vunpack.c.l.b16 %v106
  %v2851 = vunpack.c.l.b16 %v107
  %v2852 = vunpack.c.l.b16 %v108
  %v2853 = vunpack.c.l.b16 %v109
  %v2854 = vunpack.c.l.b16 %v110
  %v2855 = vunpack.c.l.b16 %v111
  %v2856 = vunpack.c.l.b16 %v112
  %v2857 = vunpack.c.l.b16 %v113
  %v2858 = vunpack.c.l.b16 %v114
  %v2859 = vunpack.c.l.b16 %v115
  %v2860 = vunpack.c.l.b16 %v116
  %v2861 = vunpack.c.l.b16 %v117
  %v2862 = vunpack.c.l.b16 %v118
  %v2863 = vunpack.c.l.b16 %v119
  %v2864 = vunpack.c.l.b16 %v120
  %v2865 = vunpack.c.l.b16 %v121
  %v2866 = vunpack.c.l.b16 %v122
  %v2867 = vunpack.c.l.b16 %v123
  %v2868 = vunpack.c.l.b16 %v124
  %v2869 = vunpack.c.l.b16 %v125
  %v2870 = vunpack.c.l.b16 %v126
  %v2871 = vunpack.c.l.b16 %v127
  %v2872 = vunpack.c.l.b16 %v128
  %v2873 = vunpack.c.l.b16 %v129
  %v2874 = vunpack.c.l.b16 %v130
  %v2875 = vunpack.c.l.b16 %v131
  %v2876 = vunpack.c.l.b16 %v132
  %v2877 = vunpack.c.l.b16 %v133
  %v2878 = vunpack.c.l.b16 %v134
  %v2879 = vunpack.c.l.b16 %v135
  %v2880 = vunpack.c.l.b16 %v136
  %v2881 = vunpack.c.l.b16 %v137
  %v2882 = vunpack.c.l.b16 %v138
  %v2883 = vunpack.c.l.b16 %v139
  %v2884 = vunpack.c.l.b16 %v140
  %v2885 = vunpack.c.l.b16 %v141
  %v2886 = vunpack.c.l.b16 %v142
  %v2887 = vunpack.c.l.b16 %v143
  %v2888 = vunpack.c.l.b16 %v144
  %v2889 = vunpack.c.l.b16 %v145
  %v2890 = vunpack.c.l.b16 %v146
  %v2891 = vunpack.c.l.b16 %v147
  %v2892 = vunpack.c.l.b16 %v148
  %v2893 = vunpack.c.l.b16 %v149
  %v2894 = vunpack.c.l.b16 %v150
  %v2895 = vunpack.c.l.b16 %v151
  %v2896 = vunpack.c.l.b16 %v152
  %v2897 = vunpack.c.l.b16 %v153
  %v2898 = vunpack.c.l.b16 %v154
  %v2899 = vunpack.c.l.b16 %v155
  %v2900 = vunpack.c.l.b16 %v156
  %v2901 = vunpack.c.l.b16 %v157
  %v2902 = vunpack.c.l.b16 %v158
  %v2903 = vunpack.c.l.b16 %v159
  %v2904 = vunpack.c.l.b16 %v160
  %v2905 = vunpack.c.l.b16 %v161
  %v2906 = vunpack.c.l.b16 %v162
  %v2907 = vunpack.c.l.b16 %v163
  %v2908 = vunpack.c.l.b16 %v164
  %v2909 = vunpack.c.l.b16 %v165
  %v2910 = vunpack.c.l.b16 %v166
  %v2911 = vunpack.c.l.b16 %v167
  %v2912 = vunpack.c.l.b16 %v168
  %v2913 = vunpack.c.l.b16 %v169
  %v2914 = vunpack.c.l.b16 %v170
  %v2915 = vpack.c.b16 %v2772, %v2771
  %v2916 = vpack.c.b16 %v2774, %v2773
  %v2917 = vpack.c.b16 %v2776, %v2775
  %v2918 = vpack.c.b16 %v2778, %v2777
  %v2919 = vpack.c.b16 %v2780, %v2779
  %v2920 = vpack.c.b16 %v2782, %v2781
  %v2921 = vpack.c.b16 %v2784, %v2783
  %v2922 = vpack.c.b16 %v2786, %v2785
  %v2923 = vpack.c.b16 %v2788, %v2787
  %v2924 = vpack.c.b16 %v2790, %v2789
  %v2925 = vpack.c.b16 %v2792, %v2791
  %v2926 = vpack.c.b16 %v2794, %v2793
  %v2927 = vpack.c.b16 %v2796, %v2795
  %v2928 = vpack.c.b16 %v2798, %v2797
  %v2929 = vpack.c.b16 %v2800, %v2799
  %v2930 = vpack.c.b16 %v2802, %v2801
  %v2931 = vpack.c.b16 %v2804, %v2803
  %v2932 = vpack.c.b16 %v2806, %v2805
  %v2933 = vpack.c.b16 %v2808, %v2807
  %v2934 = vpack.c.b16 %v2810, %v2809
  %v2935 = vpack.c.b16 %v2812, %v2811
  %v2936 = vpack.c.b16 %v2814, %v2813
  %v2937 = vpack.c.b16 %v2816, %v2815
  %v2938 = vpack.c.b16 %v2818, %v2817
  %v2939 = vpack.c.b16 %v2820, %v2819
  %v2940 = vpack.c.b16 %v2822, %v2821
  %v2941 = vpack.c.b16 %v2824, %v2823
  %v2942 = vpack.c.b16 %v2826, %v2825
  %v2943 = vpack.c.b16 %v2828, %v2827
  %v2944 = vpack.c.b16 %v2830, %v2829
  %v2945 = vpack.c.b16 %v2832, %v2831
  %v2946 = vpack.c.b16 %v2834, %v2833
  %v2947 = vpack.c.b16 %v2836, %v2835
  %v2948 = vpack.c.b16 %v2838, %v2837
  %v2949 = vpack.c.b16 %v2840, %v2839
  %v2950 = vpack.c.b16 %v2842, %v2841
  %v2951 = vpack.c.b16 %v2844, %v2843
  %v2952 = vpack.c.b16 %v2846, %v2845
  %v2953 = vpack.c.b16 %v2848, %v2847
  %v2954 = vpack.c.b16 %v2850, %v2849
  %v2955 = vpack.c.b16 %v2852, %v2851
  %v2956 = vpack.c.b16 %v2854, %v2853
  %v2957 = vpack.c.b16 %v2856, %v2855
  %v2958 = vpack.c.b16 %v2858, %v2857
  %v2959 = vpack.c.b16 %v2860, %v2859
  %v2960 = vpack.c.b16 %v2862, %v2861
  %v2961 = vpack.c.b16 %v2864, %v2863
  %v2962 = vpack.c.b16 %v2866, %v2865
  %v2963 = vpack.c.b16 %v2868, %v2867
  %v2964 = vpack.c.b16 %v2870, %v2869
  %v2965 = vpack.c.b16 %v2872, %v2871
  %v2966 = vpack.c.b16 %v2874, %v2873
  %v2967 = vpack.c.b16 %v2876, %v2875
  %v2968 = vpack.c.b16 %v2878, %v2877
  %v2969 = vpack.c.b16 %v2880, %v2879
  %v2970 = vpack.c.b16 %v2882, %v2881
  %v2971 = vpack.c.b16 %v2884, %v2883
  %v2972 = vpack.c.b16 %v2886, %v2885
  %v2973 = vpack.c.b16 %v2888, %v2887
  %v2974 = vpack.c.b16 %v2890, %v2889
  %v2975 = vpack.c.b16 %v2892, %v2891
  %v2976 = vpack.c.b16 %v2894, %v2893
  %v2977 = vpack.c.b16 %v2896, %v2895
  %v2978 = vpack.c.b16 %v2898, %v2897
  %v2979 = vpack.c.b16 %v2900, %v2899
  %v2980 = vpack.c.b16 %v2902, %v2901
  %v2981 = vpack.c.b16 %v2904, %v2903
  %v2982 = vpack.c.b16 %v2906, %v2905
  %v2983 = vpack.c.b16 %v2908, %v2907
  %v2984 = vpack.c.b16 %v2910, %v2909
  %v2985 = vpack.c.b16 %v2912, %v2911
  %v2986 = vpack.c.b16 %v2914, %v2913
  %3059 = vmatprep.subr.bf16.mxu0 0
  %3060 = vmatpush1.bf16.msra.mxu0 %v2922
  %3061 = vmatprep.subr.bf16.mxu0 0
  %3062 = vmatpush1.bf16.msra.mxu0 %v2921
  %3063 = vmatprep.subr.bf16.mxu0 0
  %3064 = vmatpush1.bf16.msra.mxu0 %v2920
  %3065 = vmatprep.subr.bf16.mxu0 0
  %3066 = vmatpush1.bf16.msra.mxu0 %v2919
  %3067 = vmatprep.subr.bf16.mxu0 0
  %3068 = vmatpush1.bf16.msra.mxu0 %v2918
  %3069 = vmatprep.subr.bf16.mxu0 0
  %3070 = vmatpush1.bf16.msra.mxu0 %v2917
  %3071 = vmatprep.subr.bf16.mxu0 0
  %3072 = vmatpush1.bf16.msra.mxu0 %v2916
  %3073 = vmatprep.subr.bf16.mxu0 0
  %3074 = vmatpush1.bf16.msra.mxu0 %v2915
  %3075 = vmatprep.subr.bf16.mxu0 0
  %3076 = vmatpush2.bf16.msra.mxu0 %v2930
  %3077 = vmatprep.subr.bf16.mxu0 0
  %3078 = vmatpush2.bf16.msra.mxu0 %v2929
  %3079 = vmatprep.subr.bf16.mxu0 0
  %3080 = vmatpush2.bf16.msra.mxu0 %v2928
  %3081 = vmatprep.subr.bf16.mxu0 0
  %3082 = vmatpush2.bf16.msra.mxu0 %v2927
  %3083 = vmatprep.subr.bf16.mxu0 0
  %3084 = vmatpush2.bf16.msra.mxu0 %v2926
  %3085 = vmatprep.subr.bf16.mxu0 0
  %3086 = vmatpush2.bf16.msra.mxu0 %v2925
  %3087 = vmatprep.subr.bf16.mxu0 0
  %3088 = vmatpush2.bf16.msra.mxu0 %v2924
  %3089 = vmatprep.subr.bf16.mxu0 0
  %3090 = vmatpush2.bf16.msra.mxu0 %v2923
  %3091 = vmatprep.mubr.bf16.mxu0 %v2115
  %3092 = vmatmul.mubr.bf16.gmra.mxu0 %v2051
  %v3093 = vpop.f32.mrf.mxu0
  %v3094 = vadd.f32 0.0, %v3093
  %v3095 = vpop.f32.mrf.mxu0
  %v3096 = vpop.f32.mrf.mxu0
  %v3097 = vadd.f32 0.0, %v3096
  %v3098 = vpop.f32.mrf.mxu0
  %3099 = vmatprep.mubr.bf16.mxu0 %v2116
  %3100 = vmatmul.mubr.bf16.gmra.mxu0 %v2052
  %v3101 = vpop.f32.mrf.mxu0
  %v3102 = vadd.f32 0.0, %v3101
  %v3103 = vpop.f32.mrf.mxu0
  %v3104 = vpop.f32.mrf.mxu0
  %v3105 = vadd.f32 0.0, %v3104
  %v3106 = vpop.f32.mrf.mxu0
  %3107 = vmatprep.mubr.bf16.mxu0 %v2117
  %3108 = vmatmul.mubr.bf16.gmra.mxu0 %v2053
  %v3109 = vpop.f32.mrf.mxu0
  %v3110 = vadd.f32 0.0, %v3109
  %v3111 = vpop.f32.mrf.mxu0
  %v3112 = vpop.f32.mrf.mxu0
  %v3113 = vadd.f32 0.0, %v3112
  %v3114 = vpop.f32.mrf.mxu0
  %3115 = vmatprep.mubr.bf16.mxu0 %v2118
  %3116 = vmatmul.mubr.bf16.gmra.mxu0 %v2054
  %v3117 = vpop.f32.mrf.mxu0
  %v3118 = vadd.f32 0.0, %v3117
  %v3119 = vpop.f32.mrf.mxu0
  %v3120 = vpop.f32.mrf.mxu0
  %v3121 = vadd.f32 0.0, %v3120
  %v3122 = vpop.f32.mrf.mxu0
  %3123 = vmatprep.mubr.bf16.mxu0 %v2119
  %3124 = vmatmul.mubr.bf16.gmra.mxu0 %v2055
  %v3125 = vpop.f32.mrf.mxu0
  %v3126 = vadd.f32 0.0, %v3125
  %v3127 = vpop.f32.mrf.mxu0
  %v3128 = vpop.f32.mrf.mxu0
  %v3129 = vadd.f32 0.0, %v3128
  %v3130 = vpop.f32.mrf.mxu0
  %3131 = vmatprep.mubr.bf16.mxu0 %v2120
  %3132 = vmatmul.mubr.bf16.gmra.mxu0 %v2056
  %v3133 = vpop.f32.mrf.mxu0
  %v3134 = vadd.f32 0.0, %v3133
  %v3135 = vpop.f32.mrf.mxu0
  %v3136 = vpop.f32.mrf.mxu0
  %v3137 = vadd.f32 0.0, %v3136
  %v3138 = vpop.f32.mrf.mxu0
  %3139 = vmatprep.mubr.bf16.mxu0 %v2121
  %3140 = vmatmul.mubr.bf16.gmra.mxu0 %v2057
  %v3141 = vpop.f32.mrf.mxu0
  %v3142 = vadd.f32 0.0, %v3141
  %v3143 = vpop.f32.mrf.mxu0
  %v3144 = vpop.f32.mrf.mxu0
  %v3145 = vadd.f32 0.0, %v3144
  %v3146 = vpop.f32.mrf.mxu0
  %3147 = vmatprep.mubr.bf16.mxu0 %v2122
  %3148 = vmatmul.mubr.bf16.gmra.mxu0 %v2058
  %v3149 = vpop.f32.mrf.mxu0
  %v3150 = vadd.f32 0.0, %v3149
  %v3151 = vpop.f32.mrf.mxu0
  %v3152 = vpop.f32.mrf.mxu0
  %v3153 = vadd.f32 0.0, %v3152
  %v3154 = vpop.f32.mrf.mxu0
  %3155 = vmatprep.mubr.bf16.mxu0 %v2123
  %3156 = vmatmul.mubr.bf16.gmra.mxu0 %v2059
  %v3157 = vpop.f32.mrf.mxu0
  %v3158 = vadd.f32 0.0, %v3157
  %v3159 = vpop.f32.mrf.mxu0
  %v3160 = vpop.f32.mrf.mxu0
  %v3161 = vadd.f32 0.0, %v3160
  %v3162 = vpop.f32.mrf.mxu0
  %3163 = vmatprep.mubr.bf16.mxu0 %v2124
  %3164 = vmatmul.mubr.bf16.gmra.mxu0 %v2060
  %v3165 = vpop.f32.mrf.mxu0
  %v3166 = vadd.f32 0.0, %v3165
  %v3167 = vpop.f32.mrf.mxu0
  %v3168 = vpop.f32.mrf.mxu0
  %v3169 = vadd.f32 0.0, %v3168
  %v3170 = vpop.f32.mrf.mxu0
  %3171 = vmatprep.mubr.bf16.mxu0 %v2125
  %3172 = vmatmul.mubr.bf16.gmra.mxu0 %v2061
  %v3173 = vpop.f32.mrf.mxu0
  %v3174 = vadd.f32 0.0, %v3173
  %v3175 = vpop.f32.mrf.mxu0
  %v3176 = vpop.f32.mrf.mxu0
  %v3177 = vadd.f32 0.0, %v3176
  %v3178 = vpop.f32.mrf.mxu0
  %3179 = vmatprep.mubr.bf16.mxu0 %v2126
  %3180 = vmatmul.mubr.bf16.gmra.mxu0 %v2062
  %v3181 = vpop.f32.mrf.mxu0
  %v3182 = vadd.f32 0.0, %v3181
  %v3183 = vpop.f32.mrf.mxu0
  %v3184 = vpop.f32.mrf.mxu0
  %v3185 = vadd.f32 0.0, %v3184
  %v3186 = vpop.f32.mrf.mxu0
  %3187 = vmatprep.mubr.bf16.mxu0 %v2127
  %3188 = vmatmul.mubr.bf16.gmra.mxu0 %v2063
  %v3189 = vpop.f32.mrf.mxu0
  %v3190 = vadd.f32 0.0, %v3189
  %v3191 = vpop.f32.mrf.mxu0
  %v3192 = vpop.f32.mrf.mxu0
  %v3193 = vadd.f32 0.0, %v3192
  %v3194 = vpop.f32.mrf.mxu0
  %3195 = vmatprep.mubr.bf16.mxu0 %v2128
  %3196 = vmatmul.mubr.bf16.gmra.mxu0 %v2064
  %v3197 = vpop.f32.mrf.mxu0
  %v3198 = vadd.f32 0.0, %v3197
  %v3199 = vpop.f32.mrf.mxu0
  %v3200 = vpop.f32.mrf.mxu0
  %v3201 = vadd.f32 0.0, %v3200
  %v3202 = vpop.f32.mrf.mxu0
  %3203 = vmatprep.mubr.bf16.mxu0 %v2129
  %3204 = vmatmul.mubr.bf16.gmra.mxu0 %v2065
  %v3205 = vpop.f32.mrf.mxu0
  %v3206 = vadd.f32 0.0, %v3205
  %v3207 = vpop.f32.mrf.mxu0
  %v3208 = vpop.f32.mrf.mxu0
  %v3209 = vadd.f32 0.0, %v3208
  %v3210 = vpop.f32.mrf.mxu0
  %3211 = vmatprep.mubr.bf16.mxu0 %v2130
  %3212 = vmatmul.mubr.bf16.gmra.mxu0 %v2066
  %v3213 = vpop.f32.mrf.mxu0
  %v3214 = vadd.f32 0.0, %v3213
  %v3215 = vpop.f32.mrf.mxu0
  %v3216 = vpop.f32.mrf.mxu0
  %v3217 = vadd.f32 0.0, %v3216
  %v3218 = vpop.f32.mrf.mxu0
  %3219 = vdwg.mxu0
  %3220 = vmatprep.subr.bf16.mxu0 0
  %3221 = vmatpush1.bf16.msra.mxu0 %v2938
  %3222 = vmatprep.subr.bf16.mxu0 0
  %3223 = vmatpush1.bf16.msra.mxu0 %v2937
  %3224 = vmatprep.subr.bf16.mxu0 0
  %3225 = vmatpush1.bf16.msra.mxu0 %v2936
  %3226 = vmatprep.subr.bf16.mxu0 0
  %3227 = vmatpush1.bf16.msra.mxu0 %v2935
  %3228 = vmatprep.subr.bf16.mxu0 0
  %3229 = vmatpush1.bf16.msra.mxu0 %v2934
  %3230 = vmatprep.subr.bf16.mxu0 0
  %3231 = vmatpush1.bf16.msra.mxu0 %v2933
  %3232 = vmatprep.subr.bf16.mxu0 0
  %3233 = vmatpush1.bf16.msra.mxu0 %v2932
  %3234 = vmatprep.subr.bf16.mxu0 0
  %3235 = vmatpush1.bf16.msra.mxu0 %v2931
  %3236 = vmatprep.subr.bf16.mxu0 0
  %3237 = vmatpush2.bf16.msra.mxu0 %v2946
  %3238 = vmatprep.subr.bf16.mxu0 0
  %3239 = vmatpush2.bf16.msra.mxu0 %v2945
  %3240 = vmatprep.subr.bf16.mxu0 0
  %3241 = vmatpush2.bf16.msra.mxu0 %v2944
  %3242 = vmatprep.subr.bf16.mxu0 0
  %3243 = vmatpush2.bf16.msra.mxu0 %v2943
  %3244 = vmatprep.subr.bf16.mxu0 0
  %3245 = vmatpush2.bf16.msra.mxu0 %v2942
  %3246 = vmatprep.subr.bf16.mxu0 0
  %3247 = vmatpush2.bf16.msra.mxu0 %v2941
  %3248 = vmatprep.subr.bf16.mxu0 0
  %3249 = vmatpush2.bf16.msra.mxu0 %v2940
  %3250 = vmatprep.subr.bf16.mxu0 0
  %3251 = vmatpush2.bf16.msra.mxu0 %v2939
  %3252 = vmatprep.mubr.bf16.mxu0 %v2259
  %3253 = vmatmul.mubr.bf16.gmra.mxu0 %v2179
  %v3254 = vpop.f32.mrf.mxu0
  %v3255 = vadd.f32 %v3094, %v3254
  %v3256 = vpop.f32.mrf.mxu0
  %v3257 = vpop.f32.mrf.mxu0
  %v3258 = vadd.f32 %v3097, %v3257
  %v3259 = vpop.f32.mrf.mxu0
  %3260 = vmatprep.mubr.bf16.mxu0 %v2260
  %3261 = vmatmul.mubr.bf16.gmra.mxu0 %v2180
  %v3262 = vpop.f32.mrf.mxu0
  %v3263 = vadd.f32 %v3102, %v3262
  %v3264 = vpop.f32.mrf.mxu0
  %v3265 = vpop.f32.mrf.mxu0
  %v3266 = vadd.f32 %v3105, %v3265
  %v3267 = vpop.f32.mrf.mxu0
  %3268 = vmatprep.mubr.bf16.mxu0 %v2261
  %3269 = vmatmul.mubr.bf16.gmra.mxu0 %v2181
  %v3270 = vpop.f32.mrf.mxu0
  %v3271 = vadd.f32 %v3110, %v3270
  %v3272 = vpop.f32.mrf.mxu0
  %v3273 = vpop.f32.mrf.mxu0
  %v3274 = vadd.f32 %v3113, %v3273
  %v3275 = vpop.f32.mrf.mxu0
  %3276 = vmatprep.mubr.bf16.mxu0 %v2262
  %3277 = vmatmul.mubr.bf16.gmra.mxu0 %v2182
  %v3278 = vpop.f32.mrf.mxu0
  %v3279 = vadd.f32 %v3118, %v3278
  %v3280 = vpop.f32.mrf.mxu0
  %v3281 = vpop.f32.mrf.mxu0
  %v3282 = vadd.f32 %v3121, %v3281
  %v3283 = vpop.f32.mrf.mxu0
  %3284 = vmatprep.mubr.bf16.mxu0 %v2263
  %3285 = vmatmul.mubr.bf16.gmra.mxu0 %v2183
  %v3286 = vpop.f32.mrf.mxu0
  %v3287 = vadd.f32 %v3126, %v3286
  %v3288 = vpop.f32.mrf.mxu0
  %v3289 = vpop.f32.mrf.mxu0
  %v3290 = vadd.f32 %v3129, %v3289
  %v3291 = vpop.f32.mrf.mxu0
  %3292 = vmatprep.mubr.bf16.mxu0 %v2264
  %3293 = vmatmul.mubr.bf16.gmra.mxu0 %v2184
  %v3294 = vpop.f32.mrf.mxu0
  %v3295 = vadd.f32 %v3134, %v3294
  %v3296 = vpop.f32.mrf.mxu0
  %v3297 = vpop.f32.mrf.mxu0
  %v3298 = vadd.f32 %v3137, %v3297
  %v3299 = vpop.f32.mrf.mxu0
  %3300 = vmatprep.mubr.bf16.mxu0 %v2265
  %3301 = vmatmul.mubr.bf16.gmra.mxu0 %v2185
  %v3302 = vpop.f32.mrf.mxu0
  %v3303 = vadd.f32 %v3142, %v3302
  %v3304 = vpop.f32.mrf.mxu0
  %v3305 = vpop.f32.mrf.mxu0
  %v3306 = vadd.f32 %v3145, %v3305
  %v3307 = vpop.f32.mrf.mxu0
  %3308 = vmatprep.mubr.bf16.mxu0 %v2266
  %3309 = vmatmul.mubr.bf16.gmra.mxu0 %v2186
  %v3310 = vpop.f32.mrf.mxu0
  %v3311 = vadd.f32 %v3150, %v3310
  %v3312 = vpop.f32.mrf.mxu0
  %v3313 = vpop.f32.mrf.mxu0
  %v3314 = vadd.f32 %v3153, %v3313
  %v3315 = vpop.f32.mrf.mxu0
  %3316 = vmatprep.mubr.bf16.mxu0 %v2267
  %3317 = vmatmul.mubr.bf16.gmra.mxu0 %v2187
  %v3318 = vpop.f32.mrf.mxu0
  %v3319 = vadd.f32 %v3158, %v3318
  %v3320 = vpop.f32.mrf.mxu0
  %v3321 = vpop.f32.mrf.mxu0
  %v3322 = vadd.f32 %v3161, %v3321
  %v3323 = vpop.f32.mrf.mxu0
  %3324 = vmatprep.mubr.bf16.mxu0 %v2268
  %3325 = vmatmul.mubr.bf16.gmra.mxu0 %v2188
  %v3326 = vpop.f32.mrf.mxu0
  %v3327 = vadd.f32 %v3166, %v3326
  %v3328 = vpop.f32.mrf.mxu0
  %v3329 = vpop.f32.mrf.mxu0
  %v3330 = vadd.f32 %v3169, %v3329
  %v3331 = vpop.f32.mrf.mxu0
  %3332 = vmatprep.mubr.bf16.mxu0 %v2269
  %3333 = vmatmul.mubr.bf16.gmra.mxu0 %v2189
  %v3334 = vpop.f32.mrf.mxu0
  %v3335 = vadd.f32 %v3174, %v3334
  %v3336 = vpop.f32.mrf.mxu0
  %v3337 = vpop.f32.mrf.mxu0
  %v3338 = vadd.f32 %v3177, %v3337
  %v3339 = vpop.f32.mrf.mxu0
  %3340 = vmatprep.mubr.bf16.mxu0 %v2270
  %3341 = vmatmul.mubr.bf16.gmra.mxu0 %v2190
  %v3342 = vpop.f32.mrf.mxu0
  %v3343 = vadd.f32 %v3182, %v3342
  %v3344 = vpop.f32.mrf.mxu0
  %v3345 = vpop.f32.mrf.mxu0
  %v3346 = vadd.f32 %v3185, %v3345
  %v3347 = vpop.f32.mrf.mxu0
  %3348 = vmatprep.mubr.bf16.mxu0 %v2271
  %3349 = vmatmul.mubr.bf16.gmra.mxu0 %v2191
  %v3350 = vpop.f32.mrf.mxu0
  %v3351 = vadd.f32 %v3190, %v3350
  %v3352 = vpop.f32.mrf.mxu0
  %v3353 = vpop.f32.mrf.mxu0
  %v3354 = vadd.f32 %v3193, %v3353
  %v3355 = vpop.f32.mrf.mxu0
  %3356 = vmatprep.mubr.bf16.mxu0 %v2272
  %3357 = vmatmul.mubr.bf16.gmra.mxu0 %v2192
  %v3358 = vpop.f32.mrf.mxu0
  %v3359 = vadd.f32 %v3198, %v3358
  %v3360 = vpop.f32.mrf.mxu0
  %v3361 = vpop.f32.mrf.mxu0
  %v3362 = vadd.f32 %v3201, %v3361
  %v3363 = vpop.f32.mrf.mxu0
  %3364 = vmatprep.mubr.bf16.mxu0 %v2273
  %3365 = vmatmul.mubr.bf16.gmra.mxu0 %v2193
  %v3366 = vpop.f32.mrf.mxu0
  %v3367 = vadd.f32 %v3206, %v3366
  %v3368 = vpop.f32.mrf.mxu0
  %v3369 = vpop.f32.mrf.mxu0
  %v3370 = vadd.f32 %v3209, %v3369
  %v3371 = vpop.f32.mrf.mxu0
  %3372 = vmatprep.mubr.bf16.mxu0 %v2274
  %3373 = vmatmul.mubr.bf16.gmra.mxu0 %v2194
  %v3374 = vpop.f32.mrf.mxu0
  %v3375 = vadd.f32 %v3214, %v3374
  %v3376 = vpop.f32.mrf.mxu0
  %v3377 = vpop.f32.mrf.mxu0
  %v3378 = vadd.f32 %v3217, %v3377
  %v3379 = vpop.f32.mrf.mxu0
  %3380 = vdwg.mxu0
  %3381 = vmatprep.subr.bf16.mxu0 0
  %3382 = vmatpush1.bf16.msra.mxu0 %v2954
  %3383 = vmatprep.subr.bf16.mxu0 0
  %3384 = vmatpush1.bf16.msra.mxu0 %v2953
  %3385 = vmatprep.subr.bf16.mxu0 0
  %3386 = vmatpush1.bf16.msra.mxu0 %v2952
  %3387 = vmatprep.subr.bf16.mxu0 0
  %3388 = vmatpush1.bf16.msra.mxu0 %v2951
  %3389 = vmatprep.subr.bf16.mxu0 0
  %3390 = vmatpush1.bf16.msra.mxu0 %v2950
  %3391 = vmatprep.subr.bf16.mxu0 0
  %3392 = vmatpush1.bf16.msra.mxu0 %v2949
  %3393 = vmatprep.subr.bf16.mxu0 0
  %3394 = vmatpush1.bf16.msra.mxu0 %v2948
  %3395 = vmatprep.subr.bf16.mxu0 0
  %3396 = vmatpush1.bf16.msra.mxu0 %v2947
  %3397 = vmatprep.subr.bf16.mxu0 0
  %3398 = vmatpush2.bf16.msra.mxu0 %v2962
  %3399 = vmatprep.subr.bf16.mxu0 0
  %3400 = vmatpush2.bf16.msra.mxu0 %v2961
  %3401 = vmatprep.subr.bf16.mxu0 0
  %3402 = vmatpush2.bf16.msra.mxu0 %v2960
  %3403 = vmatprep.subr.bf16.mxu0 0
  %3404 = vmatpush2.bf16.msra.mxu0 %v2959
  %3405 = vmatprep.subr.bf16.mxu0 0
  %3406 = vmatpush2.bf16.msra.mxu0 %v2958
  %3407 = vmatprep.subr.bf16.mxu0 0
  %3408 = vmatpush2.bf16.msra.mxu0 %v2957
  %3409 = vmatprep.subr.bf16.mxu0 0
  %3410 = vmatpush2.bf16.msra.mxu0 %v2956
  %3411 = vmatprep.subr.bf16.mxu0 0
  %3412 = vmatpush2.bf16.msra.mxu0 %v2955
  %3413 = vmatprep.mubr.bf16.mxu0 %v2387
  %3414 = vmatmul.mubr.bf16.gmra.mxu0 %v2323
  %v3415 = vpop.f32.mrf.mxu0
  %v3416 = vadd.f32 %v3255, %v3415
  %v3417 = vpop.f32.mrf.mxu0
  %v3418 = vpop.f32.mrf.mxu0
  %v3419 = vadd.f32 %v3258, %v3418
  %v3420 = vpop.f32.mrf.mxu0
  %3421 = vmatprep.mubr.bf16.mxu0 %v2388
  %3422 = vmatmul.mubr.bf16.gmra.mxu0 %v2324
  %v3423 = vpop.f32.mrf.mxu0
  %v3424 = vadd.f32 %v3263, %v3423
  %v3425 = vpop.f32.mrf.mxu0
  %v3426 = vpop.f32.mrf.mxu0
  %v3427 = vadd.f32 %v3266, %v3426
  %v3428 = vpop.f32.mrf.mxu0
  %3429 = vmatprep.mubr.bf16.mxu0 %v2389
  %3430 = vmatmul.mubr.bf16.gmra.mxu0 %v2325
  %v3431 = vpop.f32.mrf.mxu0
  %v3432 = vadd.f32 %v3271, %v3431
  %v3433 = vpop.f32.mrf.mxu0
  %v3434 = vpop.f32.mrf.mxu0
  %v3435 = vadd.f32 %v3274, %v3434
  %v3436 = vpop.f32.mrf.mxu0
  %3437 = vmatprep.mubr.bf16.mxu0 %v2390
  %3438 = vmatmul.mubr.bf16.gmra.mxu0 %v2326
  %v3439 = vpop.f32.mrf.mxu0
  %v3440 = vadd.f32 %v3279, %v3439
  %v3441 = vpop.f32.mrf.mxu0
  %v3442 = vpop.f32.mrf.mxu0
  %v3443 = vadd.f32 %v3282, %v3442
  %v3444 = vpop.f32.mrf.mxu0
  %3445 = vmatprep.mubr.bf16.mxu0 %v2391
  %3446 = vmatmul.mubr.bf16.gmra.mxu0 %v2327
  %v3447 = vpop.f32.mrf.mxu0
  %v3448 = vadd.f32 %v3287, %v3447
  %v3449 = vpop.f32.mrf.mxu0
  %v3450 = vpop.f32.mrf.mxu0
  %v3451 = vadd.f32 %v3290, %v3450
  %v3452 = vpop.f32.mrf.mxu0
  %3453 = vmatprep.mubr.bf16.mxu0 %v2392
  %3454 = vmatmul.mubr.bf16.gmra.mxu0 %v2328
  %v3455 = vpop.f32.mrf.mxu0
  %v3456 = vadd.f32 %v3295, %v3455
  %v3457 = vpop.f32.mrf.mxu0
  %v3458 = vpop.f32.mrf.mxu0
  %v3459 = vadd.f32 %v3298, %v3458
  %v3460 = vpop.f32.mrf.mxu0
  %3461 = vmatprep.mubr.bf16.mxu0 %v2393
  %3462 = vmatmul.mubr.bf16.gmra.mxu0 %v2329
  %v3463 = vpop.f32.mrf.mxu0
  %v3464 = vadd.f32 %v3303, %v3463
  %v3465 = vpop.f32.mrf.mxu0
  %v3466 = vpop.f32.mrf.mxu0
  %v3467 = vadd.f32 %v3306, %v3466
  %v3468 = vpop.f32.mrf.mxu0
  %3469 = vmatprep.mubr.bf16.mxu0 %v2394
  %3470 = vmatmul.mubr.bf16.gmra.mxu0 %v2330
  %v3471 = vpop.f32.mrf.mxu0
  %v3472 = vadd.f32 %v3311, %v3471
  %v3473 = vpop.f32.mrf.mxu0
  %v3474 = vpop.f32.mrf.mxu0
  %v3475 = vadd.f32 %v3314, %v3474
  %v3476 = vpop.f32.mrf.mxu0
  %3477 = vmatprep.mubr.bf16.mxu0 %v2395
  %3478 = vmatmul.mubr.bf16.gmra.mxu0 %v2331
  %v3479 = vpop.f32.mrf.mxu0
  %v3480 = vadd.f32 %v3319, %v3479
  %v3481 = vpop.f32.mrf.mxu0
  %v3482 = vpop.f32.mrf.mxu0
  %v3483 = vadd.f32 %v3322, %v3482
  %v3484 = vpop.f32.mrf.mxu0
  %3485 = vmatprep.mubr.bf16.mxu0 %v2396
  %3486 = vmatmul.mubr.bf16.gmra.mxu0 %v2332
  %v3487 = vpop.f32.mrf.mxu0
  %v3488 = vadd.f32 %v3327, %v3487
  %v3489 = vpop.f32.mrf.mxu0
  %v3490 = vpop.f32.mrf.mxu0
  %v3491 = vadd.f32 %v3330, %v3490
  %v3492 = vpop.f32.mrf.mxu0
  %3493 = vmatprep.mubr.bf16.mxu0 %v2397
  %3494 = vmatmul.mubr.bf16.gmra.mxu0 %v2333
  %v3495 = vpop.f32.mrf.mxu0
  %v3496 = vadd.f32 %v3335, %v3495
  %v3497 = vpop.f32.mrf.mxu0
  %v3498 = vpop.f32.mrf.mxu0
  %v3499 = vadd.f32 %v3338, %v3498
  %v3500 = vpop.f32.mrf.mxu0
  %3501 = vmatprep.mubr.bf16.mxu0 %v2398
  %3502 = vmatmul.mubr.bf16.gmra.mxu0 %v2334
  %v3503 = vpop.f32.mrf.mxu0
  %v3504 = vadd.f32 %v3343, %v3503
  %v3505 = vpop.f32.mrf.mxu0
  %v3506 = vpop.f32.mrf.mxu0
  %v3507 = vadd.f32 %v3346, %v3506
  %v3508 = vpop.f32.mrf.mxu0
  %3509 = vmatprep.mubr.bf16.mxu0 %v2399
  %3510 = vmatmul.mubr.bf16.gmra.mxu0 %v2335
  %v3511 = vpop.f32.mrf.mxu0
  %v3512 = vadd.f32 %v3351, %v3511
  %v3513 = vpop.f32.mrf.mxu0
  %v3514 = vpop.f32.mrf.mxu0
  %v3515 = vadd.f32 %v3354, %v3514
  %v3516 = vpop.f32.mrf.mxu0
  %3517 = vmatprep.mubr.bf16.mxu0 %v2400
  %3518 = vmatmul.mubr.bf16.gmra.mxu0 %v2336
  %v3519 = vpop.f32.mrf.mxu0
  %v3520 = vadd.f32 %v3359, %v3519
  %v3521 = vpop.f32.mrf.mxu0
  %v3522 = vpop.f32.mrf.mxu0
  %v3523 = vadd.f32 %v3362, %v3522
  %v3524 = vpop.f32.mrf.mxu0
  %3525 = vmatprep.mubr.bf16.mxu0 %v2401
  %3526 = vmatmul.mubr.bf16.gmra.mxu0 %v2337
  %v3527 = vpop.f32.mrf.mxu0
  %v3528 = vadd.f32 %v3367, %v3527
  %v3529 = vpop.f32.mrf.mxu0
  %v3530 = vpop.f32.mrf.mxu0
  %v3531 = vadd.f32 %v3370, %v3530
  %v3532 = vpop.f32.mrf.mxu0
  %3533 = vmatprep.mubr.bf16.mxu0 %v2402
  %3534 = vmatmul.mubr.bf16.gmra.mxu0 %v2338
  %v3535 = vpop.f32.mrf.mxu0
  %v3536 = vadd.f32 %v3375, %v3535
  %v3537 = vpop.f32.mrf.mxu0
  %v3538 = vpop.f32.mrf.mxu0
  %v3539 = vadd.f32 %v3378, %v3538
  %v3540 = vpop.f32.mrf.mxu0
  %3541 = vdwg.mxu0
  %3542 = vmatprep.subr.bf16.mxu0 0
  %3543 = vmatpush1.bf16.msra.mxu0 %v2970
  %3544 = vmatprep.subr.bf16.mxu0 0
  %3545 = vmatpush1.bf16.msra.mxu0 %v2969
  %3546 = vmatprep.subr.bf16.mxu0 0
  %3547 = vmatpush1.bf16.msra.mxu0 %v2968
  %3548 = vmatprep.subr.bf16.mxu0 0
  %3549 = vmatpush1.bf16.msra.mxu0 %v2967
  %3550 = vmatprep.subr.bf16.mxu0 0
  %3551 = vmatpush1.bf16.msra.mxu0 %v2966
  %3552 = vmatprep.subr.bf16.mxu0 0
  %3553 = vmatpush1.bf16.msra.mxu0 %v2965
  %3554 = vmatprep.subr.bf16.mxu0 0
  %3555 = vmatpush1.bf16.msra.mxu0 %v2964
  %3556 = vmatprep.subr.bf16.mxu0 0
  %3557 = vmatpush1.bf16.msra.mxu0 %v2963
  %3558 = vmatprep.subr.bf16.mxu0 0
  %3559 = vmatpush2.bf16.msra.mxu0 %v2978
  %3560 = vmatprep.subr.bf16.mxu0 0
  %3561 = vmatpush2.bf16.msra.mxu0 %v2977
  %3562 = vmatprep.subr.bf16.mxu0 0
  %3563 = vmatpush2.bf16.msra.mxu0 %v2976
  %3564 = vmatprep.subr.bf16.mxu0 0
  %3565 = vmatpush2.bf16.msra.mxu0 %v2975
  %3566 = vmatprep.subr.bf16.mxu0 0
  %3567 = vmatpush2.bf16.msra.mxu0 %v2974
  %3568 = vmatprep.subr.bf16.mxu0 0
  %3569 = vmatpush2.bf16.msra.mxu0 %v2973
  %3570 = vmatprep.subr.bf16.mxu0 0
  %3571 = vmatpush2.bf16.msra.mxu0 %v2972
  %3572 = vmatprep.subr.bf16.mxu0 0
  %3573 = vmatpush2.bf16.msra.mxu0 %v2971
  %3574 = vmatprep.mubr.bf16.mxu0 %v2531
  %3575 = vmatmul.mubr.bf16.gmra.mxu0 %v2467
  %v3576 = vpop.f32.mrf.mxu0
  %v3577 = vadd.f32 %v3416, %v3576
  %v3578 = vpop.f32.mrf.mxu0
  %v3579 = vpop.f32.mrf.mxu0
  %v3580 = vadd.f32 %v3419, %v3579
  %v3581 = vpop.f32.mrf.mxu0
  %3582 = vmatprep.mubr.bf16.mxu0 %v2532
  %3583 = vmatmul.mubr.bf16.gmra.mxu0 %v2468
  %v3584 = vpop.f32.mrf.mxu0
  %v3585 = vadd.f32 %v3424, %v3584
  %v3586 = vpop.f32.mrf.mxu0
  %v3587 = vpop.f32.mrf.mxu0
  %v3588 = vadd.f32 %v3427, %v3587
  %v3589 = vpop.f32.mrf.mxu0
  %3590 = vmatprep.mubr.bf16.mxu0 %v2533
  %3591 = vmatmul.mubr.bf16.gmra.mxu0 %v2469
  %v3592 = vpop.f32.mrf.mxu0
  %v3593 = vadd.f32 %v3432, %v3592
  %v3594 = vpop.f32.mrf.mxu0
  %v3595 = vpop.f32.mrf.mxu0
  %v3596 = vadd.f32 %v3435, %v3595
  %v3597 = vpop.f32.mrf.mxu0
  %3598 = vmatprep.mubr.bf16.mxu0 %v2534
  %3599 = vmatmul.mubr.bf16.gmra.mxu0 %v2470
  %v3600 = vpop.f32.mrf.mxu0
  %v3601 = vadd.f32 %v3440, %v3600
  %v3602 = vpop.f32.mrf.mxu0
  %v3603 = vpop.f32.mrf.mxu0
  %v3604 = vadd.f32 %v3443, %v3603
  %v3605 = vpop.f32.mrf.mxu0
  %3606 = vmatprep.mubr.bf16.mxu0 %v2535
  %3607 = vmatmul.mubr.bf16.gmra.mxu0 %v2471
  %v3608 = vpop.f32.mrf.mxu0
  %v3609 = vadd.f32 %v3448, %v3608
  %v3610 = vpop.f32.mrf.mxu0
  %v3611 = vpop.f32.mrf.mxu0
  %v3612 = vadd.f32 %v3451, %v3611
  %v3613 = vpop.f32.mrf.mxu0
  %3614 = vmatprep.mubr.bf16.mxu0 %v2536
  %3615 = vmatmul.mubr.bf16.gmra.mxu0 %v2472
  %v3616 = vpop.f32.mrf.mxu0
  %v3617 = vadd.f32 %v3456, %v3616
  %v3618 = vpop.f32.mrf.mxu0
  %v3619 = vpop.f32.mrf.mxu0
  %v3620 = vadd.f32 %v3459, %v3619
  %v3621 = vpop.f32.mrf.mxu0
  %3622 = vmatprep.mubr.bf16.mxu0 %v2537
  %3623 = vmatmul.mubr.bf16.gmra.mxu0 %v2473
  %v3624 = vpop.f32.mrf.mxu0
  %v3625 = vadd.f32 %v3464, %v3624
  %v3626 = vpop.f32.mrf.mxu0
  %v3627 = vpop.f32.mrf.mxu0
  %v3628 = vadd.f32 %v3467, %v3627
  %v3629 = vpop.f32.mrf.mxu0
  %3630 = vmatprep.mubr.bf16.mxu0 %v2538
  %3631 = vmatmul.mubr.bf16.gmra.mxu0 %v2474
  %v3632 = vpop.f32.mrf.mxu0
  %v3633 = vadd.f32 %v3472, %v3632
  %v3634 = vpop.f32.mrf.mxu0
  %v3635 = vpop.f32.mrf.mxu0
  %v3636 = vadd.f32 %v3475, %v3635
  %v3637 = vpop.f32.mrf.mxu0
  %3638 = vmatprep.mubr.bf16.mxu0 %v2539
  %3639 = vmatmul.mubr.bf16.gmra.mxu0 %v2475
  %v3640 = vpop.f32.mrf.mxu0
  %v3641 = vadd.f32 %v3480, %v3640
  %v3642 = vpop.f32.mrf.mxu0
  %v3643 = vpop.f32.mrf.mxu0
  %v3644 = vadd.f32 %v3483, %v3643
  %v3645 = vpop.f32.mrf.mxu0
  %3646 = vmatprep.mubr.bf16.mxu0 %v2540
  %3647 = vmatmul.mubr.bf16.gmra.mxu0 %v2476
  %v3648 = vpop.f32.mrf.mxu0
  %v3649 = vadd.f32 %v3488, %v3648
  %v3650 = vpop.f32.mrf.mxu0
  %v3651 = vpop.f32.mrf.mxu0
  %v3652 = vadd.f32 %v3491, %v3651
  %v3653 = vpop.f32.mrf.mxu0
  %3654 = vmatprep.mubr.bf16.mxu0 %v2541
  %3655 = vmatmul.mubr.bf16.gmra.mxu0 %v2477
  %v3656 = vpop.f32.mrf.mxu0
  %v3657 = vadd.f32 %v3496, %v3656
  %v3658 = vpop.f32.mrf.mxu0
  %v3659 = vpop.f32.mrf.mxu0
  %v3660 = vadd.f32 %v3499, %v3659
  %v3661 = vpop.f32.mrf.mxu0
  %3662 = vmatprep.mubr.bf16.mxu0 %v2542
  %3663 = vmatmul.mubr.bf16.gmra.mxu0 %v2478
  %v3664 = vpop.f32.mrf.mxu0
  %v3665 = vadd.f32 %v3504, %v3664
  %v3666 = vpop.f32.mrf.mxu0
  %v3667 = vpop.f32.mrf.mxu0
  %v3668 = vadd.f32 %v3507, %v3667
  %v3669 = vpop.f32.mrf.mxu0
  %3670 = vmatprep.mubr.bf16.mxu0 %v2543
  %3671 = vmatmul.mubr.bf16.gmra.mxu0 %v2479
  %v3672 = vpop.f32.mrf.mxu0
  %v3673 = vadd.f32 %v3512, %v3672
  %v3674 = vpop.f32.mrf.mxu0
  %v3675 = vpop.f32.mrf.mxu0
  %v3676 = vadd.f32 %v3515, %v3675
  %v3677 = vpop.f32.mrf.mxu0
  %3678 = vmatprep.mubr.bf16.mxu0 %v2544
  %3679 = vmatmul.mubr.bf16.gmra.mxu0 %v2480
  %v3680 = vpop.f32.mrf.mxu0
  %v3681 = vadd.f32 %v3520, %v3680
  %v3682 = vpop.f32.mrf.mxu0
  %v3683 = vpop.f32.mrf.mxu0
  %v3684 = vadd.f32 %v3523, %v3683
  %v3685 = vpop.f32.mrf.mxu0
  %3686 = vmatprep.mubr.bf16.mxu0 %v2545
  %3687 = vmatmul.mubr.bf16.gmra.mxu0 %v2481
  %v3688 = vpop.f32.mrf.mxu0
  %v3689 = vadd.f32 %v3528, %v3688
  %v3690 = vpop.f32.mrf.mxu0
  %v3691 = vpop.f32.mrf.mxu0
  %v3692 = vadd.f32 %v3531, %v3691
  %v3693 = vpop.f32.mrf.mxu0
  %3694 = vmatprep.mubr.bf16.mxu0 %v2546
  %3695 = vmatmul.mubr.bf16.gmra.mxu0 %v2482
  %v3696 = vpop.f32.mrf.mxu0
  %v3697 = vadd.f32 %v3536, %v3696
  %v3698 = vpop.f32.mrf.mxu0
  %v3699 = vpop.f32.mrf.mxu0
  %v3700 = vadd.f32 %v3539, %v3699
  %v3701 = vpop.f32.mrf.mxu0
  %3702 = vdwg.mxu0
  %3703 = vmatprep.subr.bf16.mxu0 0
  %3704 = vmatpush1.bf16.msra.mxu0 %v2986
  %3705 = vmatprep.subr.bf16.mxu0 0
  %3706 = vmatpush1.bf16.msra.mxu0 %v2985
  %3707 = vmatprep.subr.bf16.mxu0 0
  %3708 = vmatpush1.bf16.msra.mxu0 %v2984
  %3709 = vmatprep.subr.bf16.mxu0 0
  %3710 = vmatpush1.bf16.msra.mxu0 %v2983
  %3711 = vmatprep.subr.bf16.mxu0 0
  %3712 = vmatpush1.bf16.msra.mxu0 %v2982
  %3713 = vmatprep.subr.bf16.mxu0 0
  %3714 = vmatpush1.bf16.msra.mxu0 %v2981
  %3715 = vmatprep.subr.bf16.mxu0 0
  %3716 = vmatpush1.bf16.msra.mxu0 %v2980
  %3717 = vmatprep.subr.bf16.mxu0 0
  %3718 = vmatpush1.bf16.msra.mxu0 %v2979
  %3719 = vmatprep.subr.bf16.mxu0 0
  %3720 = vmatpush2.bf16.msra.mxu0 0
  %3721 = vmatprep.subr.bf16.mxu0 0
  %3722 = vmatpush2.bf16.msra.mxu0 0
  %3723 = vmatprep.subr.bf16.mxu0 0
  %3724 = vmatpush2.bf16.msra.mxu0 0
  %3725 = vmatprep.subr.bf16.mxu0 0
  %3726 = vmatpush2.bf16.msra.mxu0 0
  %3727 = vmatprep.subr.bf16.mxu0 0
  %3728 = vmatpush2.bf16.msra.mxu0 0
  %3729 = vmatprep.subr.bf16.mxu0 0
  %3730 = vmatpush2.bf16.msra.mxu0 0
  %3731 = vmatprep.subr.bf16.mxu0 0
  %3732 = vmatpush2.bf16.msra.mxu0 0
  %3733 = vmatprep.subr.bf16.mxu0 0
  %3734 = vmatpush2.bf16.msra.mxu0 0
  %3735 = vmatprep.mubr.bf16.mxu0 0
  %3736 = vmatmul.mubr.bf16.gmra.mxu0 %v2595
  %v3737 = vpop.f32.mrf.mxu0
  %v3738 = vadd.f32 %v3577, %v3737
  %v3739 = vpop.f32.mrf.mxu0
  %v3740 = vpop.f32.mrf.mxu0
  %v3741 = vadd.f32 %v3580, %v3740
  %v3742 = vpop.f32.mrf.mxu0
  %3743 = vmatprep.mubr.bf16.mxu0 0
  %3744 = vmatmul.mubr.bf16.gmra.mxu0 %v2596
  %v3745 = vpop.f32.mrf.mxu0
  %v3746 = vadd.f32 %v3585, %v3745
  %v3747 = vpop.f32.mrf.mxu0
  %v3748 = vpop.f32.mrf.mxu0
  %v3749 = vadd.f32 %v3588, %v3748
  %v3750 = vpop.f32.mrf.mxu0
  %3751 = vmatprep.mubr.bf16.mxu0 0
  %3752 = vmatmul.mubr.bf16.gmra.mxu0 %v2597
  %v3753 = vpop.f32.mrf.mxu0
  %v3754 = vadd.f32 %v3593, %v3753
  %v3755 = vpop.f32.mrf.mxu0
  %v3756 = vpop.f32.mrf.mxu0
  %v3757 = vadd.f32 %v3596, %v3756
  %v3758 = vpop.f32.mrf.mxu0
  %3759 = vmatprep.mubr.bf16.mxu0 0
  %3760 = vmatmul.mubr.bf16.gmra.mxu0 %v2598
  %v3761 = vpop.f32.mrf.mxu0
  %v3762 = vadd.f32 %v3601, %v3761
  %v3763 = vpop.f32.mrf.mxu0
  %v3764 = vpop.f32.mrf.mxu0
  %v3765 = vadd.f32 %v3604, %v3764
  %v3766 = vpop.f32.mrf.mxu0
  %3767 = vmatprep.mubr.bf16.mxu0 0
  %3768 = vmatmul.mubr.bf16.gmra.mxu0 %v2599
  %v3769 = vpop.f32.mrf.mxu0
  %v3770 = vadd.f32 %v3609, %v3769
  %v3771 = vpop.f32.mrf.mxu0
  %v3772 = vpop.f32.mrf.mxu0
  %v3773 = vadd.f32 %v3612, %v3772
  %v3774 = vpop.f32.mrf.mxu0
  %3775 = vmatprep.mubr.bf16.mxu0 0
  %3776 = vmatmul.mubr.bf16.gmra.mxu0 %v2600
  %v3777 = vpop.f32.mrf.mxu0
  %v3778 = vadd.f32 %v3617, %v3777
  %v3779 = vpop.f32.mrf.mxu0
  %v3780 = vpop.f32.mrf.mxu0
  %v3781 = vadd.f32 %v3620, %v3780
  %v3782 = vpop.f32.mrf.mxu0
  %3783 = vmatprep.mubr.bf16.mxu0 0
  %3784 = vmatmul.mubr.bf16.gmra.mxu0 %v2601
  %v3785 = vpop.f32.mrf.mxu0
  %v3786 = vadd.f32 %v3625, %v3785
  %v3787 = vpop.f32.mrf.mxu0
  %v3788 = vpop.f32.mrf.mxu0
  %v3789 = vadd.f32 %v3628, %v3788
  %v3790 = vpop.f32.mrf.mxu0
  %3791 = vmatprep.mubr.bf16.mxu0 0
  %3792 = vmatmul.mubr.bf16.gmra.mxu0 %v2602
  %v3793 = vpop.f32.mrf.mxu0
  %v3794 = vadd.f32 %v3633, %v3793
  %v3795 = vpop.f32.mrf.mxu0
  %v3796 = vpop.f32.mrf.mxu0
  %v3797 = vadd.f32 %v3636, %v3796
  %v3798 = vpop.f32.mrf.mxu0
  %3799 = vmatprep.mubr.bf16.mxu0 0
  %3800 = vmatmul.mubr.bf16.gmra.mxu0 %v2603
  %v3801 = vpop.f32.mrf.mxu0
  %v3802 = vadd.f32 %v3641, %v3801
  %v3803 = vpop.f32.mrf.mxu0
  %v3804 = vpop.f32.mrf.mxu0
  %v3805 = vadd.f32 %v3644, %v3804
  %v3806 = vpop.f32.mrf.mxu0
  %3807 = vmatprep.mubr.bf16.mxu0 0
  %3808 = vmatmul.mubr.bf16.gmra.mxu0 %v2604
  %v3809 = vpop.f32.mrf.mxu0
  %v3810 = vadd.f32 %v3649, %v3809
  %v3811 = vpop.f32.mrf.mxu0
  %v3812 = vpop.f32.mrf.mxu0
  %v3813 = vadd.f32 %v3652, %v3812
  %v3814 = vpop.f32.mrf.mxu0
  %3815 = vmatprep.mubr.bf16.mxu0 0
  %3816 = vmatmul.mubr.bf16.gmra.mxu0 %v2605
  %v3817 = vpop.f32.mrf.mxu0
  %v3818 = vadd.f32 %v3657, %v3817
  %v3819 = vpop.f32.mrf.mxu0
  %v3820 = vpop.f32.mrf.mxu0
  %v3821 = vadd.f32 %v3660, %v3820
  %v3822 = vpop.f32.mrf.mxu0
  %3823 = vmatprep.mubr.bf16.mxu0 0
  %3824 = vmatmul.mubr.bf16.gmra.mxu0 %v2606
  %v3825 = vpop.f32.mrf.mxu0
  %v3826 = vadd.f32 %v3665, %v3825
  %v3827 = vpop.f32.mrf.mxu0
  %v3828 = vpop.f32.mrf.mxu0
  %v3829 = vadd.f32 %v3668, %v3828
  %v3830 = vpop.f32.mrf.mxu0
  %3831 = vmatprep.mubr.bf16.mxu0 0
  %3832 = vmatmul.mubr.bf16.gmra.mxu0 %v2607
  %v3833 = vpop.f32.mrf.mxu0
  %v3834 = vadd.f32 %v3673, %v3833
  %v3835 = vpop.f32.mrf.mxu0
  %v3836 = vpop.f32.mrf.mxu0
  %v3837 = vadd.f32 %v3676, %v3836
  %v3838 = vpop.f32.mrf.mxu0
  %3839 = vmatprep.mubr.bf16.mxu0 0
  %3840 = vmatmul.mubr.bf16.gmra.mxu0 %v2608
  %v3841 = vpop.f32.mrf.mxu0
  %v3842 = vadd.f32 %v3681, %v3841
  %v3843 = vpop.f32.mrf.mxu0
  %v3844 = vpop.f32.mrf.mxu0
  %v3845 = vadd.f32 %v3684, %v3844
  %v3846 = vpop.f32.mrf.mxu0
  %3847 = vmatprep.mubr.bf16.mxu0 0
  %3848 = vmatmul.mubr.bf16.gmra.mxu0 %v2609
  %v3849 = vpop.f32.mrf.mxu0
  %v3850 = vadd.f32 %v3689, %v3849
  %v3851 = vpop.f32.mrf.mxu0
  %v3852 = vpop.f32.mrf.mxu0
  %v3853 = vadd.f32 %v3692, %v3852
  %v3854 = vpop.f32.mrf.mxu0
  %3855 = vmatprep.mubr.bf16.mxu0 0
  %3856 = vmatmul.mubr.bf16.gmra.mxu0 %v2610
  %v3857 = vpop.f32.mrf.mxu0
  %v3858 = vadd.f32 %v3697, %v3857
  %v3859 = vpop.f32.mrf.mxu0
  %v3860 = vpop.f32.mrf.mxu0
  %v3861 = vadd.f32 %v3700, %v3860
  %v3862 = vpop.f32.mrf.mxu0
  %3863 = vdwg.mxu0
  %3864 = vst [vmem:[#allocation2] sm:$0xff] %v3738
  %3865 = vst [vmem:[#allocation2 + $0x8] sm:$0xff] %v3741
  %3866 = vst [vmem:[#allocation2 + $0x10] sm:$0xff] %v3746
  %3867 = vst [vmem:[#allocation2 + $0x18] sm:$0xff] %v3749
  %3868 = vst [vmem:[#allocation2 + $0x20] sm:$0xff] %v3754
  %3869 = vst [vmem:[#allocation2 + $0x28] sm:$0xff] %v3757
  %3870 = vst [vmem:[#allocation2 + $0x30] sm:$0xff] %v3762
  %3871 = vst [vmem:[#allocation2 + $0x38] sm:$0xff] %v3765
  %3872 = vst [vmem:[#allocation2 + $0x40] sm:$0xff] %v3770
  %3873 = vst [vmem:[#allocation2 + $0x48] sm:$0xff] %v3773
  %3874 = vst [vmem:[#allocation2 + $0x50] sm:$0xff] %v3778
  %3875 = vst [vmem:[#allocation2 + $0x58] sm:$0xff] %v3781
  %3876 = vst [vmem:[#allocation2 + $0x60] sm:$0xff] %v3786
  %3877 = vst [vmem:[#allocation2 + $0x68] sm:$0xff] %v3789
  %3878 = vst [vmem:[#allocation2 + $0x70] sm:$0xff] %v3794
  %3879 = vst [vmem:[#allocation2 + $0x78] sm:$0xff] %v3797
  %3880 = vst [vmem:[#allocation2 + $0x80] sm:$0xff] %v3802
  %3881 = vst [vmem:[#allocation2 + $0x88] sm:$0xff] %v3805
  %3882 = vst [vmem:[#allocation2 + $0x90] sm:$0xff] %v3810
  %3883 = vst [vmem:[#allocation2 + $0x98] sm:$0xff] %v3813
  %3884 = vst [vmem:[#allocation2 + $0xa0] sm:$0xff] %v3818
  %3885 = vst [vmem:[#allocation2 + $0xa8] sm:$0xff] %v3821
  %3886 = vst [vmem:[#allocation2 + $0xb0] sm:$0xff] %v3826
  %3887 = vst [vmem:[#allocation2 + $0xb8] sm:$0xff] %v3829
  %3888 = vst [vmem:[#allocation2 + $0xc0] sm:$0xff] %v3834
  %3889 = vst [vmem:[#allocation2 + $0xc8] sm:$0xff] %v3837
  %3890 = vst [vmem:[#allocation2 + $0xd0] sm:$0xff] %v3842
  %3891 = vst [vmem:[#allocation2 + $0xd8] sm:$0xff] %v3845
  %3892 = vst [vmem:[#allocation2 + $0xe0] sm:$0xff] %v3850
  %3893 = vst [vmem:[#allocation2 + $0xe8] sm:$0xff] %v3853
  %3894 = vst [vmem:[#allocation2 + $0xf0] sm:$0xff] %v3858
  %3895 = vst [vmem:[#allocation2 + $0xf8] sm:$0xff] %v3861
  %s3896 = scalar_lea.vmem %s0, 216
  %v3897 = vld [vmem:[%s3896] sm:$0xf]
  %v3898 = vld [vmem:[%s3896 + $0x4] sm:$0xf]
  %v3899 = vld [vmem:[%s3896 + $0xc] sm:$0xf]
  %v3900 = vld [vmem:[%s3896 + $0x10] sm:$0xf]
  %v3901 = vld [vmem:[%s3896 + $0x18] sm:$0xf]
  %v3902 = vld [vmem:[%s3896 + $0x1c] sm:$0xf]
  %v3903 = vld [vmem:[%s3896 + $0x24] sm:$0xf]
  %v3904 = vld [vmem:[%s3896 + $0x28] sm:$0xf]
  %v3905 = vld [vmem:[%s3896 + $0x30] sm:$0xf]
  %v3906 = vld [vmem:[%s3896 + $0x34] sm:$0xf]
  %v3907 = vld [vmem:[%s3896 + $0x3c] sm:$0xf]
  %v3908 = vld [vmem:[%s3896 + $0x40] sm:$0xf]
  %v3909 = vld [vmem:[%s3896 + $0x48] sm:$0xf]
  %v3910 = vld [vmem:[%s3896 + $0x4c] sm:$0xf]
  %v3911 = vld [vmem:[%s3896 + $0x54] sm:$0xf]
  %v3912 = vld [vmem:[%s3896 + $0x58] sm:$0xf]
  %v3913 = vld [vmem:[%s3896 + $0x60] sm:$0xf]
  %v3914 = vld [vmem:[%s3896 + $0x64] sm:$0xf]
  %v3915 = vld [vmem:[%s3896 + $0x6c] sm:$0xf]
  %v3916 = vld [vmem:[%s3896 + $0x70] sm:$0xf]
  %v3917 = vld [vmem:[%s3896 + $0x78] sm:$0xf]
  %v3918 = vld [vmem:[%s3896 + $0x7c] sm:$0xf]
  %v3919 = vld [vmem:[%s3896 + $0x84] sm:$0xf]
  %v3920 = vld [vmem:[%s3896 + $0x88] sm:$0xf]
  %v3921 = vld [vmem:[%s3896 + $0x90] sm:$0xf]
  %v3922 = vld [vmem:[%s3896 + $0x94] sm:$0xf]
  %v3923 = vld [vmem:[%s3896 + $0x9c] sm:$0xf]
  %v3924 = vld [vmem:[%s3896 + $0xa0] sm:$0xf]
  %v3925 = vld [vmem:[%s3896 + $0xa8] sm:$0xf]
  %v3926 = vld [vmem:[%s3896 + $0xac] sm:$0xf]
  %v3927 = vld [vmem:[%s3896 + $0xb4] sm:$0xf]
  %v3928 = vld [vmem:[%s3896 + $0xb8] sm:$0xf]
  %v3929 = vld [vmem:[%s3896 + $0x8] sm:$0x1]
  %v3930 = vld [vmem:[%s3896 + $0x14] sm:$0x1]
  %v3931 = vld [vmem:[%s3896 + $0x20] sm:$0x1]
  %v3932 = vld [vmem:[%s3896 + $0x2c] sm:$0x1]
  %v3933 = vld [vmem:[%s3896 + $0x38] sm:$0x1]
  %v3934 = vld [vmem:[%s3896 + $0x44] sm:$0x1]
  %v3935 = vld [vmem:[%s3896 + $0x50] sm:$0x1]
  %v3936 = vld [vmem:[%s3896 + $0x5c] sm:$0x1]
  %v3937 = vld [vmem:[%s3896 + $0x68] sm:$0x1]
  %v3938 = vld [vmem:[%s3896 + $0x74] sm:$0x1]
  %v3939 = vld [vmem:[%s3896 + $0x80] sm:$0x1]
  %v3940 = vld [vmem:[%s3896 + $0x8c] sm:$0x1]
  %v3941 = vld [vmem:[%s3896 + $0x98] sm:$0x1]
  %v3942 = vld [vmem:[%s3896 + $0xa4] sm:$0x1]
  %v3943 = vld [vmem:[%s3896 + $0xb0] sm:$0x1]
  %v3944 = vld [vmem:[%s3896 + $0xbc] sm:$0x1]
  %v3946 = vshrl.u32 %v3897, 16
  %v3948 = vrot.slane %v3946, 4
  %v3949 = vshll.u32 %v3897, 16
  %v3951 = vrot.slane %v3949, 5
  %v3952 = vor.u32 %v3948, %v3951
  %v3953 = vrot.slane %v3952, 4
  %v3955 = vshll.u32 %v3898, 16
  %v3957 = vrot.slane %v3955, 5
  %v3958 = vsel %vm221, %v3953, %v3957
  %v3959 = vshrl.u32 %v3898, 16
  %v3961 = vrot.slane %v3959, 4
  %v3962 = vor.u32 %v3961, %v3957
  %v3963 = vrot.slane %v3962, 4
  %v3965 = vshll.u32 %v3929, 16
  %v3967 = vrot.slane %v3965, 5
  %v3968 = vsel %vm221, %v3963, %v3967
  %v3970 = vshrl.u32 %v3899, 16
  %v3972 = vrot.slane %v3970, 4
  %v3973 = vshll.u32 %v3899, 16
  %v3975 = vrot.slane %v3973, 5
  %v3976 = vor.u32 %v3972, %v3975
  %v3977 = vrot.slane %v3976, 4
  %v3979 = vshll.u32 %v3900, 16
  %v3981 = vrot.slane %v3979, 5
  %v3982 = vsel %vm221, %v3977, %v3981
  %v3983 = vshrl.u32 %v3900, 16
  %v3985 = vrot.slane %v3983, 4
  %v3986 = vor.u32 %v3985, %v3981
  %v3987 = vrot.slane %v3986, 4
  %v3989 = vshll.u32 %v3930, 16
  %v3991 = vrot.slane %v3989, 5
  %v3992 = vsel %vm221, %v3987, %v3991
  %v3994 = vshrl.u32 %v3901, 16
  %v3996 = vrot.slane %v3994, 4
  %v3997 = vshll.u32 %v3901, 16
  %v3999 = vrot.slane %v3997, 5
  %v4000 = vor.u32 %v3996, %v3999
  %v4001 = vrot.slane %v4000, 4
  %v4003 = vshll.u32 %v3902, 16
  %v4005 = vrot.slane %v4003, 5
  %v4006 = vsel %vm221, %v4001, %v4005
  %v4007 = vshrl.u32 %v3902, 16
  %v4009 = vrot.slane %v4007, 4
  %v4010 = vor.u32 %v4009, %v4005
  %v4011 = vrot.slane %v4010, 4
  %v4013 = vshll.u32 %v3931, 16
  %v4015 = vrot.slane %v4013, 5
  %v4016 = vsel %vm221, %v4011, %v4015
  %v4018 = vshrl.u32 %v3903, 16
  %v4020 = vrot.slane %v4018, 4
  %v4021 = vshll.u32 %v3903, 16
  %v4023 = vrot.slane %v4021, 5
  %v4024 = vor.u32 %v4020, %v4023
  %v4025 = vrot.slane %v4024, 4
  %v4027 = vshll.u32 %v3904, 16
  %v4029 = vrot.slane %v4027, 5
  %v4030 = vsel %vm221, %v4025, %v4029
  %v4031 = vshrl.u32 %v3904, 16
  %v4033 = vrot.slane %v4031, 4
  %v4034 = vor.u32 %v4033, %v4029
  %v4035 = vrot.slane %v4034, 4
  %v4037 = vshll.u32 %v3932, 16
  %v4039 = vrot.slane %v4037, 5
  %v4040 = vsel %vm221, %v4035, %v4039
  %v4042 = vshrl.u32 %v3905, 16
  %v4044 = vrot.slane %v4042, 4
  %v4045 = vshll.u32 %v3905, 16
  %v4047 = vrot.slane %v4045, 5
  %v4048 = vor.u32 %v4044, %v4047
  %v4049 = vrot.slane %v4048, 4
  %v4051 = vshll.u32 %v3906, 16
  %v4053 = vrot.slane %v4051, 5
  %v4054 = vsel %vm221, %v4049, %v4053
  %v4055 = vshrl.u32 %v3906, 16
  %v4057 = vrot.slane %v4055, 4
  %v4058 = vor.u32 %v4057, %v4053
  %v4059 = vrot.slane %v4058, 4
  %v4061 = vshll.u32 %v3933, 16
  %v4063 = vrot.slane %v4061, 5
  %v4064 = vsel %vm221, %v4059, %v4063
  %v4066 = vshrl.u32 %v3907, 16
  %v4068 = vrot.slane %v4066, 4
  %v4069 = vshll.u32 %v3907, 16
  %v4071 = vrot.slane %v4069, 5
  %v4072 = vor.u32 %v4068, %v4071
  %v4073 = vrot.slane %v4072, 4
  %v4075 = vshll.u32 %v3908, 16
  %v4077 = vrot.slane %v4075, 5
  %v4078 = vsel %vm221, %v4073, %v4077
  %v4079 = vshrl.u32 %v3908, 16
  %v4081 = vrot.slane %v4079, 4
  %v4082 = vor.u32 %v4081, %v4077
  %v4083 = vrot.slane %v4082, 4
  %v4085 = vshll.u32 %v3934, 16
  %v4087 = vrot.slane %v4085, 5
  %v4088 = vsel %vm221, %v4083, %v4087
  %v4090 = vshrl.u32 %v3909, 16
  %v4092 = vrot.slane %v4090, 4
  %v4093 = vshll.u32 %v3909, 16
  %v4095 = vrot.slane %v4093, 5
  %v4096 = vor.u32 %v4092, %v4095
  %v4097 = vrot.slane %v4096, 4
  %v4099 = vshll.u32 %v3910, 16
  %v4101 = vrot.slane %v4099, 5
  %v4102 = vsel %vm221, %v4097, %v4101
  %v4103 = vshrl.u32 %v3910, 16
  %v4105 = vrot.slane %v4103, 4
  %v4106 = vor.u32 %v4105, %v4101
  %v4107 = vrot.slane %v4106, 4
  %v4109 = vshll.u32 %v3935, 16
  %v4111 = vrot.slane %v4109, 5
  %v4112 = vsel %vm221, %v4107, %v4111
  %v4114 = vshrl.u32 %v3911, 16
  %v4116 = vrot.slane %v4114, 4
  %v4117 = vshll.u32 %v3911, 16
  %v4119 = vrot.slane %v4117, 5
  %v4120 = vor.u32 %v4116, %v4119
  %v4121 = vrot.slane %v4120, 4
  %v4123 = vshll.u32 %v3912, 16
  %v4125 = vrot.slane %v4123, 5
  %v4126 = vsel %vm221, %v4121, %v4125
  %v4127 = vshrl.u32 %v3912, 16
  %v4129 = vrot.slane %v4127, 4
  %v4130 = vor.u32 %v4129, %v4125
  %v4131 = vrot.slane %v4130, 4
  %v4133 = vshll.u32 %v3936, 16
  %v4135 = vrot.slane %v4133, 5
  %v4136 = vsel %vm221, %v4131, %v4135
  %v4138 = vshrl.u32 %v3913, 16
  %v4140 = vrot.slane %v4138, 4
  %v4141 = vshll.u32 %v3913, 16
  %v4143 = vrot.slane %v4141, 5
  %v4144 = vor.u32 %v4140, %v4143
  %v4145 = vrot.slane %v4144, 4
  %v4147 = vshll.u32 %v3914, 16
  %v4149 = vrot.slane %v4147, 5
  %v4150 = vsel %vm221, %v4145, %v4149
  %v4151 = vshrl.u32 %v3914, 16
  %v4153 = vrot.slane %v4151, 4
  %v4154 = vor.u32 %v4153, %v4149
  %v4155 = vrot.slane %v4154, 4
  %v4157 = vshll.u32 %v3937, 16
  %v4159 = vrot.slane %v4157, 5
  %v4160 = vsel %vm221, %v4155, %v4159
  %v4162 = vshrl.u32 %v3915, 16
  %v4164 = vrot.slane %v4162, 4
  %v4165 = vshll.u32 %v3915, 16
  %v4167 = vrot.slane %v4165, 5
  %v4168 = vor.u32 %v4164, %v4167
  %v4169 = vrot.slane %v4168, 4
  %v4171 = vshll.u32 %v3916, 16
  %v4173 = vrot.slane %v4171, 5
  %v4174 = vsel %vm221, %v4169, %v4173
  %v4175 = vshrl.u32 %v3916, 16
  %v4177 = vrot.slane %v4175, 4
  %v4178 = vor.u32 %v4177, %v4173
  %v4179 = vrot.slane %v4178, 4
  %v4181 = vshll.u32 %v3938, 16
  %v4183 = vrot.slane %v4181, 5
  %v4184 = vsel %vm221, %v4179, %v4183
  %v4186 = vshrl.u32 %v3917, 16
  %v4188 = vrot.slane %v4186, 4
  %v4189 = vshll.u32 %v3917, 16
  %v4191 = vrot.slane %v4189, 5
  %v4192 = vor.u32 %v4188, %v4191
  %v4193 = vrot.slane %v4192, 4
  %v4195 = vshll.u32 %v3918, 16
  %v4197 = vrot.slane %v4195, 5
  %v4198 = vsel %vm221, %v4193, %v4197
  %v4199 = vshrl.u32 %v3918, 16
  %v4201 = vrot.slane %v4199, 4
  %v4202 = vor.u32 %v4201, %v4197
  %v4203 = vrot.slane %v4202, 4
  %v4205 = vshll.u32 %v3939, 16
  %v4207 = vrot.slane %v4205, 5
  %v4208 = vsel %vm221, %v4203, %v4207
  %v4210 = vshrl.u32 %v3919, 16
  %v4212 = vrot.slane %v4210, 4
  %v4213 = vshll.u32 %v3919, 16
  %v4215 = vrot.slane %v4213, 5
  %v4216 = vor.u32 %v4212, %v4215
  %v4217 = vrot.slane %v4216, 4
  %v4219 = vshll.u32 %v3920, 16
  %v4221 = vrot.slane %v4219, 5
  %v4222 = vsel %vm221, %v4217, %v4221
  %v4223 = vshrl.u32 %v3920, 16
  %v4225 = vrot.slane %v4223, 4
  %v4226 = vor.u32 %v4225, %v4221
  %v4227 = vrot.slane %v4226, 4
  %v4229 = vshll.u32 %v3940, 16
  %v4231 = vrot.slane %v4229, 5
  %v4232 = vsel %vm221, %v4227, %v4231
  %v4234 = vshrl.u32 %v3921, 16
  %v4236 = vrot.slane %v4234, 4
  %v4237 = vshll.u32 %v3921, 16
  %v4239 = vrot.slane %v4237, 5
  %v4240 = vor.u32 %v4236, %v4239
  %v4241 = vrot.slane %v4240, 4
  %v4243 = vshll.u32 %v3922, 16
  %v4245 = vrot.slane %v4243, 5
  %v4246 = vsel %vm221, %v4241, %v4245
  %v4247 = vshrl.u32 %v3922, 16
  %v4249 = vrot.slane %v4247, 4
  %v4250 = vor.u32 %v4249, %v4245
  %v4251 = vrot.slane %v4250, 4
  %v4253 = vshll.u32 %v3941, 16
  %v4255 = vrot.slane %v4253, 5
  %v4256 = vsel %vm221, %v4251, %v4255
  %v4258 = vshrl.u32 %v3923, 16
  %v4260 = vrot.slane %v4258, 4
  %v4261 = vshll.u32 %v3923, 16
  %v4263 = vrot.slane %v4261, 5
  %v4264 = vor.u32 %v4260, %v4263
  %v4265 = vrot.slane %v4264, 4
  %v4267 = vshll.u32 %v3924, 16
  %v4269 = vrot.slane %v4267, 5
  %v4270 = vsel %vm221, %v4265, %v4269
  %v4271 = vshrl.u32 %v3924, 16
  %v4273 = vrot.slane %v4271, 4
  %v4274 = vor.u32 %v4273, %v4269
  %v4275 = vrot.slane %v4274, 4
  %v4277 = vshll.u32 %v3942, 16
  %v4279 = vrot.slane %v4277, 5
  %v4280 = vsel %vm221, %v4275, %v4279
  %v4282 = vshrl.u32 %v3925, 16
  %v4284 = vrot.slane %v4282, 4
  %v4285 = vshll.u32 %v3925, 16
  %v4287 = vrot.slane %v4285, 5
  %v4288 = vor.u32 %v4284, %v4287
  %v4289 = vrot.slane %v4288, 4
  %v4291 = vshll.u32 %v3926, 16
  %v4293 = vrot.slane %v4291, 5
  %v4294 = vsel %vm221, %v4289, %v4293
  %v4295 = vshrl.u32 %v3926, 16
  %v4297 = vrot.slane %v4295, 4
  %v4298 = vor.u32 %v4297, %v4293
  %v4299 = vrot.slane %v4298, 4
  %v4301 = vshll.u32 %v3943, 16
  %v4303 = vrot.slane %v4301, 5
  %v4304 = vsel %vm221, %v4299, %v4303
  %v4306 = vshrl.u32 %v3927, 16
  %v4308 = vrot.slane %v4306, 4
  %v4309 = vshll.u32 %v3927, 16
  %v4311 = vrot.slane %v4309, 5
  %v4312 = vor.u32 %v4308, %v4311
  %v4313 = vrot.slane %v4312, 4
  %v4315 = vshll.u32 %v3928, 16
  %v4317 = vrot.slane %v4315, 5
  %v4318 = vsel %vm221, %v4313, %v4317
  %v4319 = vshrl.u32 %v3928, 16
  %v4321 = vrot.slane %v4319, 4
  %v4322 = vor.u32 %v4321, %v4317
  %v4323 = vrot.slane %v4322, 4
  %v4325 = vshll.u32 %v3944, 16
  %v4327 = vrot.slane %v4325, 5
  %v4328 = vsel %vm221, %v4323, %v4327
  %v4329 = vld [vmem:[%s3896] sm:$0xe]
  %v4330 = vld [vmem:[%s3896 + $0xc] sm:$0xe]
  %v4331 = vld [vmem:[%s3896 + $0x18] sm:$0xe]
  %v4332 = vld [vmem:[%s3896 + $0x24] sm:$0xe]
  %v4333 = vld [vmem:[%s3896 + $0x30] sm:$0xe]
  %v4334 = vld [vmem:[%s3896 + $0x3c] sm:$0xe]
  %v4335 = vld [vmem:[%s3896 + $0x48] sm:$0xe]
  %v4336 = vld [vmem:[%s3896 + $0x54] sm:$0xe]
  %v4337 = vld [vmem:[%s3896 + $0x60] sm:$0xe]
  %v4338 = vld [vmem:[%s3896 + $0x6c] sm:$0xe]
  %v4339 = vld [vmem:[%s3896 + $0x78] sm:$0xe]
  %v4340 = vld [vmem:[%s3896 + $0x84] sm:$0xe]
  %v4341 = vld [vmem:[%s3896 + $0x90] sm:$0xe]
  %v4342 = vld [vmem:[%s3896 + $0x9c] sm:$0xe]
  %v4343 = vld [vmem:[%s3896 + $0xa8] sm:$0xe]
  %v4344 = vld [vmem:[%s3896 + $0xb4] sm:$0xe]
  %v4393 = vrot.slane %v4329, 5
  %v4394 = vrot.slane %v4393, 4
  %v4395 = vrot.slane %v3898, 5
  %v4396 = vsel %vm672, %v4394, %v4395
  %v4397 = vrot.slane %v4395, 4
  %v4398 = vrot.slane %v3929, 5
  %v4399 = vsel %vm672, %v4397, %v4398
  %v4400 = vrot.slane %v4330, 5
  %v4401 = vrot.slane %v4400, 4
  %v4402 = vrot.slane %v3900, 5
  %v4403 = vsel %vm672, %v4401, %v4402
  %v4404 = vrot.slane %v4402, 4
  %v4405 = vrot.slane %v3930, 5
  %v4406 = vsel %vm672, %v4404, %v4405
  %v4407 = vrot.slane %v4331, 5
  %v4408 = vrot.slane %v4407, 4
  %v4409 = vrot.slane %v3902, 5
  %v4410 = vsel %vm672, %v4408, %v4409
  %v4411 = vrot.slane %v4409, 4
  %v4412 = vrot.slane %v3931, 5
  %v4413 = vsel %vm672, %v4411, %v4412
  %v4414 = vrot.slane %v4332, 5
  %v4415 = vrot.slane %v4414, 4
  %v4416 = vrot.slane %v3904, 5
  %v4417 = vsel %vm672, %v4415, %v4416
  %v4418 = vrot.slane %v4416, 4
  %v4419 = vrot.slane %v3932, 5
  %v4420 = vsel %vm672, %v4418, %v4419
  %v4421 = vrot.slane %v4333, 5
  %v4422 = vrot.slane %v4421, 4
  %v4423 = vrot.slane %v3906, 5
  %v4424 = vsel %vm672, %v4422, %v4423
  %v4425 = vrot.slane %v4423, 4
  %v4426 = vrot.slane %v3933, 5
  %v4427 = vsel %vm672, %v4425, %v4426
  %v4428 = vrot.slane %v4334, 5
  %v4429 = vrot.slane %v4428, 4
  %v4430 = vrot.slane %v3908, 5
  %v4431 = vsel %vm672, %v4429, %v4430
  %v4432 = vrot.slane %v4430, 4
  %v4433 = vrot.slane %v3934, 5
  %v4434 = vsel %vm672, %v4432, %v4433
  %v4435 = vrot.slane %v4335, 5
  %v4436 = vrot.slane %v4435, 4
  %v4437 = vrot.slane %v3910, 5
  %v4438 = vsel %vm672, %v4436, %v4437
  %v4439 = vrot.slane %v4437, 4
  %v4440 = vrot.slane %v3935, 5
  %v4441 = vsel %vm672, %v4439, %v4440
  %v4442 = vrot.slane %v4336, 5
  %v4443 = vrot.slane %v4442, 4
  %v4444 = vrot.slane %v3912, 5
  %v4445 = vsel %vm672, %v4443, %v4444
  %v4446 = vrot.slane %v4444, 4
  %v4447 = vrot.slane %v3936, 5
  %v4448 = vsel %vm672, %v4446, %v4447
  %v4449 = vrot.slane %v4337, 5
  %v4450 = vrot.slane %v4449, 4
  %v4451 = vrot.slane %v3914, 5
  %v4452 = vsel %vm672, %v4450, %v4451
  %v4453 = vrot.slane %v4451, 4
  %v4454 = vrot.slane %v3937, 5
  %v4455 = vsel %vm672, %v4453, %v4454
  %v4456 = vrot.slane %v4338, 5
  %v4457 = vrot.slane %v4456, 4
  %v4458 = vrot.slane %v3916, 5
  %v4459 = vsel %vm672, %v4457, %v4458
  %v4460 = vrot.slane %v4458, 4
  %v4461 = vrot.slane %v3938, 5
  %v4462 = vsel %vm672, %v4460, %v4461
  %v4463 = vrot.slane %v4339, 5
  %v4464 = vrot.slane %v4463, 4
  %v4465 = vrot.slane %v3918, 5
  %v4466 = vsel %vm672, %v4464, %v4465
  %v4467 = vrot.slane %v4465, 4
  %v4468 = vrot.slane %v3939, 5
  %v4469 = vsel %vm672, %v4467, %v4468
  %v4470 = vrot.slane %v4340, 5
  %v4471 = vrot.slane %v4470, 4
  %v4472 = vrot.slane %v3920, 5
  %v4473 = vsel %vm672, %v4471, %v4472
  %v4474 = vrot.slane %v4472, 4
  %v4475 = vrot.slane %v3940, 5
  %v4476 = vsel %vm672, %v4474, %v4475
  %v4477 = vrot.slane %v4341, 5
  %v4478 = vrot.slane %v4477, 4
  %v4479 = vrot.slane %v3922, 5
  %v4480 = vsel %vm672, %v4478, %v4479
  %v4481 = vrot.slane %v4479, 4
  %v4482 = vrot.slane %v3941, 5
  %v4483 = vsel %vm672, %v4481, %v4482
  %v4484 = vrot.slane %v4342, 5
  %v4485 = vrot.slane %v4484, 4
  %v4486 = vrot.slane %v3924, 5
  %v4487 = vsel %vm672, %v4485, %v4486
  %v4488 = vrot.slane %v4486, 4
  %v4489 = vrot.slane %v3942, 5
  %v4490 = vsel %vm672, %v4488, %v4489
  %v4491 = vrot.slane %v4343, 5
  %v4492 = vrot.slane %v4491, 4
  %v4493 = vrot.slane %v3926, 5
  %v4494 = vsel %vm672, %v4492, %v4493
  %v4495 = vrot.slane %v4493, 4
  %v4496 = vrot.slane %v3943, 5
  %v4497 = vsel %vm672, %v4495, %v4496
  %v4498 = vrot.slane %v4344, 5
  %v4499 = vrot.slane %v4498, 4
  %v4500 = vrot.slane %v3928, 5
  %v4501 = vsel %vm672, %v4499, %v4500
  %v4502 = vrot.slane %v4500, 4
  %v4503 = vrot.slane %v3944, 5
  %v4504 = vsel %vm672, %v4502, %v4503
  %s4505 = scalar_lea.vmem %s0, 228
  %v4506 = vld [vmem:[%s4505] sm:$0xf]
  %v4507 = vld [vmem:[%s4505 + $0x4] sm:$0xf]
  %v4508 = vld [vmem:[%s4505 + $0xc] sm:$0xf]
  %v4509 = vld [vmem:[%s4505 + $0x10] sm:$0xf]
  %v4510 = vld [vmem:[%s4505 + $0x18] sm:$0xf]
  %v4511 = vld [vmem:[%s4505 + $0x1c] sm:$0xf]
  %v4512 = vld [vmem:[%s4505 + $0x24] sm:$0xf]
  %v4513 = vld [vmem:[%s4505 + $0x28] sm:$0xf]
  %v4514 = vld [vmem:[%s4505 + $0x30] sm:$0xf]
  %v4515 = vld [vmem:[%s4505 + $0x34] sm:$0xf]
  %v4516 = vld [vmem:[%s4505 + $0x3c] sm:$0xf]
  %v4517 = vld [vmem:[%s4505 + $0x40] sm:$0xf]
  %v4518 = vld [vmem:[%s4505 + $0x48] sm:$0xf]
  %v4519 = vld [vmem:[%s4505 + $0x4c] sm:$0xf]
  %v4520 = vld [vmem:[%s4505 + $0x54] sm:$0xf]
  %v4521 = vld [vmem:[%s4505 + $0x58] sm:$0xf]
  %v4522 = vld [vmem:[%s4505 + $0x60] sm:$0xf]
  %v4523 = vld [vmem:[%s4505 + $0x64] sm:$0xf]
  %v4524 = vld [vmem:[%s4505 + $0x6c] sm:$0xf]
  %v4525 = vld [vmem:[%s4505 + $0x70] sm:$0xf]
  %v4526 = vld [vmem:[%s4505 + $0x78] sm:$0xf]
  %v4527 = vld [vmem:[%s4505 + $0x7c] sm:$0xf]
  %v4528 = vld [vmem:[%s4505 + $0x84] sm:$0xf]
  %v4529 = vld [vmem:[%s4505 + $0x88] sm:$0xf]
  %v4530 = vld [vmem:[%s4505 + $0x90] sm:$0xf]
  %v4531 = vld [vmem:[%s4505 + $0x94] sm:$0xf]
  %v4532 = vld [vmem:[%s4505 + $0x9c] sm:$0xf]
  %v4533 = vld [vmem:[%s4505 + $0xa0] sm:$0xf]
  %v4534 = vld [vmem:[%s4505 + $0xa8] sm:$0xf]
  %v4535 = vld [vmem:[%s4505 + $0xac] sm:$0xf]
  %v4536 = vld [vmem:[%s4505 + $0xb4] sm:$0xf]
  %v4537 = vld [vmem:[%s4505 + $0xb8] sm:$0xf]
  %v4538 = vld [vmem:[%s4505 + $0x8] sm:$0x1]
  %v4539 = vld [vmem:[%s4505 + $0x14] sm:$0x1]
  %v4540 = vld [vmem:[%s4505 + $0x20] sm:$0x1]
  %v4541 = vld [vmem:[%s4505 + $0x2c] sm:$0x1]
  %v4542 = vld [vmem:[%s4505 + $0x38] sm:$0x1]
  %v4543 = vld [vmem:[%s4505 + $0x44] sm:$0x1]
  %v4544 = vld [vmem:[%s4505 + $0x50] sm:$0x1]
  %v4545 = vld [vmem:[%s4505 + $0x5c] sm:$0x1]
  %v4546 = vld [vmem:[%s4505 + $0x68] sm:$0x1]
  %v4547 = vld [vmem:[%s4505 + $0x74] sm:$0x1]
  %v4548 = vld [vmem:[%s4505 + $0x80] sm:$0x1]
  %v4549 = vld [vmem:[%s4505 + $0x8c] sm:$0x1]
  %v4550 = vld [vmem:[%s4505 + $0x98] sm:$0x1]
  %v4551 = vld [vmem:[%s4505 + $0xa4] sm:$0x1]
  %v4552 = vld [vmem:[%s4505 + $0xb0] sm:$0x1]
  %v4553 = vld [vmem:[%s4505 + $0xbc] sm:$0x1]
  %v4555 = vshrl.u32 %v4506, 16
  %v4557 = vrot.slane %v4555, 4
  %v4558 = vshll.u32 %v4506, 16
  %v4560 = vrot.slane %v4558, 5
  %v4561 = vor.u32 %v4557, %v4560
  %v4562 = vrot.slane %v4561, 4
  %v4564 = vshll.u32 %v4507, 16
  %v4566 = vrot.slane %v4564, 5
  %v4567 = vsel %vm221, %v4562, %v4566
  %v4568 = vshrl.u32 %v4507, 16
  %v4570 = vrot.slane %v4568, 4
  %v4571 = vor.u32 %v4570, %v4566
  %v4572 = vrot.slane %v4571, 4
  %v4574 = vshll.u32 %v4538, 16
  %v4576 = vrot.slane %v4574, 5
  %v4577 = vsel %vm221, %v4572, %v4576
  %v4579 = vshrl.u32 %v4508, 16
  %v4581 = vrot.slane %v4579, 4
  %v4582 = vshll.u32 %v4508, 16
  %v4584 = vrot.slane %v4582, 5
  %v4585 = vor.u32 %v4581, %v4584
  %v4586 = vrot.slane %v4585, 4
  %v4588 = vshll.u32 %v4509, 16
  %v4590 = vrot.slane %v4588, 5
  %v4591 = vsel %vm221, %v4586, %v4590
  %v4592 = vshrl.u32 %v4509, 16
  %v4594 = vrot.slane %v4592, 4
  %v4595 = vor.u32 %v4594, %v4590
  %v4596 = vrot.slane %v4595, 4
  %v4598 = vshll.u32 %v4539, 16
  %v4600 = vrot.slane %v4598, 5
  %v4601 = vsel %vm221, %v4596, %v4600
  %v4603 = vshrl.u32 %v4510, 16
  %v4605 = vrot.slane %v4603, 4
  %v4606 = vshll.u32 %v4510, 16
  %v4608 = vrot.slane %v4606, 5
  %v4609 = vor.u32 %v4605, %v4608
  %v4610 = vrot.slane %v4609, 4
  %v4612 = vshll.u32 %v4511, 16
  %v4614 = vrot.slane %v4612, 5
  %v4615 = vsel %vm221, %v4610, %v4614
  %v4616 = vshrl.u32 %v4511, 16
  %v4618 = vrot.slane %v4616, 4
  %v4619 = vor.u32 %v4618, %v4614
  %v4620 = vrot.slane %v4619, 4
  %v4622 = vshll.u32 %v4540, 16
  %v4624 = vrot.slane %v4622, 5
  %v4625 = vsel %vm221, %v4620, %v4624
  %v4627 = vshrl.u32 %v4512, 16
  %v4629 = vrot.slane %v4627, 4
  %v4630 = vshll.u32 %v4512, 16
  %v4632 = vrot.slane %v4630, 5
  %v4633 = vor.u32 %v4629, %v4632
  %v4634 = vrot.slane %v4633, 4
  %v4636 = vshll.u32 %v4513, 16
  %v4638 = vrot.slane %v4636, 5
  %v4639 = vsel %vm221, %v4634, %v4638
  %v4640 = vshrl.u32 %v4513, 16
  %v4642 = vrot.slane %v4640, 4
  %v4643 = vor.u32 %v4642, %v4638
  %v4644 = vrot.slane %v4643, 4
  %v4646 = vshll.u32 %v4541, 16
  %v4648 = vrot.slane %v4646, 5
  %v4649 = vsel %vm221, %v4644, %v4648
  %v4651 = vshrl.u32 %v4514, 16
  %v4653 = vrot.slane %v4651, 4
  %v4654 = vshll.u32 %v4514, 16
  %v4656 = vrot.slane %v4654, 5
  %v4657 = vor.u32 %v4653, %v4656
  %v4658 = vrot.slane %v4657, 4
  %v4660 = vshll.u32 %v4515, 16
  %v4662 = vrot.slane %v4660, 5
  %v4663 = vsel %vm221, %v4658, %v4662
  %v4664 = vshrl.u32 %v4515, 16
  %v4666 = vrot.slane %v4664, 4
  %v4667 = vor.u32 %v4666, %v4662
  %v4668 = vrot.slane %v4667, 4
  %v4670 = vshll.u32 %v4542, 16
  %v4672 = vrot.slane %v4670, 5
  %v4673 = vsel %vm221, %v4668, %v4672
  %v4675 = vshrl.u32 %v4516, 16
  %v4677 = vrot.slane %v4675, 4
  %v4678 = vshll.u32 %v4516, 16
  %v4680 = vrot.slane %v4678, 5
  %v4681 = vor.u32 %v4677, %v4680
  %v4682 = vrot.slane %v4681, 4
  %v4684 = vshll.u32 %v4517, 16
  %v4686 = vrot.slane %v4684, 5
  %v4687 = vsel %vm221, %v4682, %v4686
  %v4688 = vshrl.u32 %v4517, 16
  %v4690 = vrot.slane %v4688, 4
  %v4691 = vor.u32 %v4690, %v4686
  %v4692 = vrot.slane %v4691, 4
  %v4694 = vshll.u32 %v4543, 16
  %v4696 = vrot.slane %v4694, 5
  %v4697 = vsel %vm221, %v4692, %v4696
  %v4699 = vshrl.u32 %v4518, 16
  %v4701 = vrot.slane %v4699, 4
  %v4702 = vshll.u32 %v4518, 16
  %v4704 = vrot.slane %v4702, 5
  %v4705 = vor.u32 %v4701, %v4704
  %v4706 = vrot.slane %v4705, 4
  %v4708 = vshll.u32 %v4519, 16
  %v4710 = vrot.slane %v4708, 5
  %v4711 = vsel %vm221, %v4706, %v4710
  %v4712 = vshrl.u32 %v4519, 16
  %v4714 = vrot.slane %v4712, 4
  %v4715 = vor.u32 %v4714, %v4710
  %v4716 = vrot.slane %v4715, 4
  %v4718 = vshll.u32 %v4544, 16
  %v4720 = vrot.slane %v4718, 5
  %v4721 = vsel %vm221, %v4716, %v4720
  %v4723 = vshrl.u32 %v4520, 16
  %v4725 = vrot.slane %v4723, 4
  %v4726 = vshll.u32 %v4520, 16
  %v4728 = vrot.slane %v4726, 5
  %v4729 = vor.u32 %v4725, %v4728
  %v4730 = vrot.slane %v4729, 4
  %v4732 = vshll.u32 %v4521, 16
  %v4734 = vrot.slane %v4732, 5
  %v4735 = vsel %vm221, %v4730, %v4734
  %v4736 = vshrl.u32 %v4521, 16
  %v4738 = vrot.slane %v4736, 4
  %v4739 = vor.u32 %v4738, %v4734
  %v4740 = vrot.slane %v4739, 4
  %v4742 = vshll.u32 %v4545, 16
  %v4744 = vrot.slane %v4742, 5
  %v4745 = vsel %vm221, %v4740, %v4744
  %v4747 = vshrl.u32 %v4522, 16
  %v4749 = vrot.slane %v4747, 4
  %v4750 = vshll.u32 %v4522, 16
  %v4752 = vrot.slane %v4750, 5
  %v4753 = vor.u32 %v4749, %v4752
  %v4754 = vrot.slane %v4753, 4
  %v4756 = vshll.u32 %v4523, 16
  %v4758 = vrot.slane %v4756, 5
  %v4759 = vsel %vm221, %v4754, %v4758
  %v4760 = vshrl.u32 %v4523, 16
  %v4762 = vrot.slane %v4760, 4
  %v4763 = vor.u32 %v4762, %v4758
  %v4764 = vrot.slane %v4763, 4
  %v4766 = vshll.u32 %v4546, 16
  %v4768 = vrot.slane %v4766, 5
  %v4769 = vsel %vm221, %v4764, %v4768
  %v4771 = vshrl.u32 %v4524, 16
  %v4773 = vrot.slane %v4771, 4
  %v4774 = vshll.u32 %v4524, 16
  %v4776 = vrot.slane %v4774, 5
  %v4777 = vor.u32 %v4773, %v4776
  %v4778 = vrot.slane %v4777, 4
  %v4780 = vshll.u32 %v4525, 16
  %v4782 = vrot.slane %v4780, 5
  %v4783 = vsel %vm221, %v4778, %v4782
  %v4784 = vshrl.u32 %v4525, 16
  %v4786 = vrot.slane %v4784, 4
  %v4787 = vor.u32 %v4786, %v4782
  %v4788 = vrot.slane %v4787, 4
  %v4790 = vshll.u32 %v4547, 16
  %v4792 = vrot.slane %v4790, 5
  %v4793 = vsel %vm221, %v4788, %v4792
  %v4795 = vshrl.u32 %v4526, 16
  %v4797 = vrot.slane %v4795, 4
  %v4798 = vshll.u32 %v4526, 16
  %v4800 = vrot.slane %v4798, 5
  %v4801 = vor.u32 %v4797, %v4800
  %v4802 = vrot.slane %v4801, 4
  %v4804 = vshll.u32 %v4527, 16
  %v4806 = vrot.slane %v4804, 5
  %v4807 = vsel %vm221, %v4802, %v4806
  %v4808 = vshrl.u32 %v4527, 16
  %v4810 = vrot.slane %v4808, 4
  %v4811 = vor.u32 %v4810, %v4806
  %v4812 = vrot.slane %v4811, 4
  %v4814 = vshll.u32 %v4548, 16
  %v4816 = vrot.slane %v4814, 5
  %v4817 = vsel %vm221, %v4812, %v4816
  %v4819 = vshrl.u32 %v4528, 16
  %v4821 = vrot.slane %v4819, 4
  %v4822 = vshll.u32 %v4528, 16
  %v4824 = vrot.slane %v4822, 5
  %v4825 = vor.u32 %v4821, %v4824
  %v4826 = vrot.slane %v4825, 4
  %v4828 = vshll.u32 %v4529, 16
  %v4830 = vrot.slane %v4828, 5
  %v4831 = vsel %vm221, %v4826, %v4830
  %v4832 = vshrl.u32 %v4529, 16
  %v4834 = vrot.slane %v4832, 4
  %v4835 = vor.u32 %v4834, %v4830
  %v4836 = vrot.slane %v4835, 4
  %v4838 = vshll.u32 %v4549, 16
  %v4840 = vrot.slane %v4838, 5
  %v4841 = vsel %vm221, %v4836, %v4840
  %v4843 = vshrl.u32 %v4530, 16
  %v4845 = vrot.slane %v4843, 4
  %v4846 = vshll.u32 %v4530, 16
  %v4848 = vrot.slane %v4846, 5
  %v4849 = vor.u32 %v4845, %v4848
  %v4850 = vrot.slane %v4849, 4
  %v4852 = vshll.u32 %v4531, 16
  %v4854 = vrot.slane %v4852, 5
  %v4855 = vsel %vm221, %v4850, %v4854
  %v4856 = vshrl.u32 %v4531, 16
  %v4858 = vrot.slane %v4856, 4
  %v4859 = vor.u32 %v4858, %v4854
  %v4860 = vrot.slane %v4859, 4
  %v4862 = vshll.u32 %v4550, 16
  %v4864 = vrot.slane %v4862, 5
  %v4865 = vsel %vm221, %v4860, %v4864
  %v4867 = vshrl.u32 %v4532, 16
  %v4869 = vrot.slane %v4867, 4
  %v4870 = vshll.u32 %v4532, 16
  %v4872 = vrot.slane %v4870, 5
  %v4873 = vor.u32 %v4869, %v4872
  %v4874 = vrot.slane %v4873, 4
  %v4876 = vshll.u32 %v4533, 16
  %v4878 = vrot.slane %v4876, 5
  %v4879 = vsel %vm221, %v4874, %v4878
  %v4880 = vshrl.u32 %v4533, 16
  %v4882 = vrot.slane %v4880, 4
  %v4883 = vor.u32 %v4882, %v4878
  %v4884 = vrot.slane %v4883, 4
  %v4886 = vshll.u32 %v4551, 16
  %v4888 = vrot.slane %v4886, 5
  %v4889 = vsel %vm221, %v4884, %v4888
  %v4891 = vshrl.u32 %v4534, 16
  %v4893 = vrot.slane %v4891, 4
  %v4894 = vshll.u32 %v4534, 16
  %v4896 = vrot.slane %v4894, 5
  %v4897 = vor.u32 %v4893, %v4896
  %v4898 = vrot.slane %v4897, 4
  %v4900 = vshll.u32 %v4535, 16
  %v4902 = vrot.slane %v4900, 5
  %v4903 = vsel %vm221, %v4898, %v4902
  %v4904 = vshrl.u32 %v4535, 16
  %v4906 = vrot.slane %v4904, 4
  %v4907 = vor.u32 %v4906, %v4902
  %v4908 = vrot.slane %v4907, 4
  %v4910 = vshll.u32 %v4552, 16
  %v4912 = vrot.slane %v4910, 5
  %v4913 = vsel %vm221, %v4908, %v4912
  %v4915 = vshrl.u32 %v4536, 16
  %v4917 = vrot.slane %v4915, 4
  %v4918 = vshll.u32 %v4536, 16
  %v4920 = vrot.slane %v4918, 5
  %v4921 = vor.u32 %v4917, %v4920
  %v4922 = vrot.slane %v4921, 4
  %v4924 = vshll.u32 %v4537, 16
  %v4926 = vrot.slane %v4924, 5
  %v4927 = vsel %vm221, %v4922, %v4926
  %v4928 = vshrl.u32 %v4537, 16
  %v4930 = vrot.slane %v4928, 4
  %v4931 = vor.u32 %v4930, %v4926
  %v4932 = vrot.slane %v4931, 4
  %v4934 = vshll.u32 %v4553, 16
  %v4936 = vrot.slane %v4934, 5
  %v4937 = vsel %vm221, %v4932, %v4936
  %v4938 = vld [vmem:[%s4505] sm:$0xe]
  %v4939 = vld [vmem:[%s4505 + $0xc] sm:$0xe]
  %v4940 = vld [vmem:[%s4505 + $0x18] sm:$0xe]
  %v4941 = vld [vmem:[%s4505 + $0x24] sm:$0xe]
  %v4942 = vld [vmem:[%s4505 + $0x30] sm:$0xe]
  %v4943 = vld [vmem:[%s4505 + $0x3c] sm:$0xe]
  %v4944 = vld [vmem:[%s4505 + $0x48] sm:$0xe]
  %v4945 = vld [vmem:[%s4505 + $0x54] sm:$0xe]
  %v4946 = vld [vmem:[%s4505 + $0x60] sm:$0xe]
  %v4947 = vld [vmem:[%s4505 + $0x6c] sm:$0xe]
  %v4948 = vld [vmem:[%s4505 + $0x78] sm:$0xe]
  %v4949 = vld [vmem:[%s4505 + $0x84] sm:$0xe]
  %v4950 = vld [vmem:[%s4505 + $0x90] sm:$0xe]
  %v4951 = vld [vmem:[%s4505 + $0x9c] sm:$0xe]
  %v4952 = vld [vmem:[%s4505 + $0xa8] sm:$0xe]
  %v4953 = vld [vmem:[%s4505 + $0xb4] sm:$0xe]
  %v5002 = vrot.slane %v4938, 5
  %v5003 = vrot.slane %v5002, 4
  %v5004 = vrot.slane %v4507, 5
  %v5005 = vsel %vm672, %v5003, %v5004
  %v5006 = vrot.slane %v5004, 4
  %v5007 = vrot.slane %v4538, 5
  %v5008 = vsel %vm672, %v5006, %v5007
  %v5009 = vrot.slane %v4939, 5
  %v5010 = vrot.slane %v5009, 4
  %v5011 = vrot.slane %v4509, 5
  %v5012 = vsel %vm672, %v5010, %v5011
  %v5013 = vrot.slane %v5011, 4
  %v5014 = vrot.slane %v4539, 5
  %v5015 = vsel %vm672, %v5013, %v5014
  %v5016 = vrot.slane %v4940, 5
  %v5017 = vrot.slane %v5016, 4
  %v5018 = vrot.slane %v4511, 5
  %v5019 = vsel %vm672, %v5017, %v5018
  %v5020 = vrot.slane %v5018, 4
  %v5021 = vrot.slane %v4540, 5
  %v5022 = vsel %vm672, %v5020, %v5021
  %v5023 = vrot.slane %v4941, 5
  %v5024 = vrot.slane %v5023, 4
  %v5025 = vrot.slane %v4513, 5
  %v5026 = vsel %vm672, %v5024, %v5025
  %v5027 = vrot.slane %v5025, 4
  %v5028 = vrot.slane %v4541, 5
  %v5029 = vsel %vm672, %v5027, %v5028
  %v5030 = vrot.slane %v4942, 5
  %v5031 = vrot.slane %v5030, 4
  %v5032 = vrot.slane %v4515, 5
  %v5033 = vsel %vm672, %v5031, %v5032
  %v5034 = vrot.slane %v5032, 4
  %v5035 = vrot.slane %v4542, 5
  %v5036 = vsel %vm672, %v5034, %v5035
  %v5037 = vrot.slane %v4943, 5
  %v5038 = vrot.slane %v5037, 4
  %v5039 = vrot.slane %v4517, 5
  %v5040 = vsel %vm672, %v5038, %v5039
  %v5041 = vrot.slane %v5039, 4
  %v5042 = vrot.slane %v4543, 5
  %v5043 = vsel %vm672, %v5041, %v5042
  %v5044 = vrot.slane %v4944, 5
  %v5045 = vrot.slane %v5044, 4
  %v5046 = vrot.slane %v4519, 5
  %v5047 = vsel %vm672, %v5045, %v5046
  %v5048 = vrot.slane %v5046, 4
  %v5049 = vrot.slane %v4544, 5
  %v5050 = vsel %vm672, %v5048, %v5049
  %v5051 = vrot.slane %v4945, 5
  %v5052 = vrot.slane %v5051, 4
  %v5053 = vrot.slane %v4521, 5
  %v5054 = vsel %vm672, %v5052, %v5053
  %v5055 = vrot.slane %v5053, 4
  %v5056 = vrot.slane %v4545, 5
  %v5057 = vsel %vm672, %v5055, %v5056
  %v5058 = vrot.slane %v4946, 5
  %v5059 = vrot.slane %v5058, 4
  %v5060 = vrot.slane %v4523, 5
  %v5061 = vsel %vm672, %v5059, %v5060
  %v5062 = vrot.slane %v5060, 4
  %v5063 = vrot.slane %v4546, 5
  %v5064 = vsel %vm672, %v5062, %v5063
  %v5065 = vrot.slane %v4947, 5
  %v5066 = vrot.slane %v5065, 4
  %v5067 = vrot.slane %v4525, 5
  %v5068 = vsel %vm672, %v5066, %v5067
  %v5069 = vrot.slane %v5067, 4
  %v5070 = vrot.slane %v4547, 5
  %v5071 = vsel %vm672, %v5069, %v5070
  %v5072 = vrot.slane %v4948, 5
  %v5073 = vrot.slane %v5072, 4
  %v5074 = vrot.slane %v4527, 5
  %v5075 = vsel %vm672, %v5073, %v5074
  %v5076 = vrot.slane %v5074, 4
  %v5077 = vrot.slane %v4548, 5
  %v5078 = vsel %vm672, %v5076, %v5077
  %v5079 = vrot.slane %v4949, 5
  %v5080 = vrot.slane %v5079, 4
  %v5081 = vrot.slane %v4529, 5
  %v5082 = vsel %vm672, %v5080, %v5081
  %v5083 = vrot.slane %v5081, 4
  %v5084 = vrot.slane %v4549, 5
  %v5085 = vsel %vm672, %v5083, %v5084
  %v5086 = vrot.slane %v4950, 5
  %v5087 = vrot.slane %v5086, 4
  %v5088 = vrot.slane %v4531, 5
  %v5089 = vsel %vm672, %v5087, %v5088
  %v5090 = vrot.slane %v5088, 4
  %v5091 = vrot.slane %v4550, 5
  %v5092 = vsel %vm672, %v5090, %v5091
  %v5093 = vrot.slane %v4951, 5
  %v5094 = vrot.slane %v5093, 4
  %v5095 = vrot.slane %v4533, 5
  %v5096 = vsel %vm672, %v5094, %v5095
  %v5097 = vrot.slane %v5095, 4
  %v5098 = vrot.slane %v4551, 5
  %v5099 = vsel %vm672, %v5097, %v5098
  %v5100 = vrot.slane %v4952, 5
  %v5101 = vrot.slane %v5100, 4
  %v5102 = vrot.slane %v4535, 5
  %v5103 = vsel %vm672, %v5101, %v5102
  %v5104 = vrot.slane %v5102, 4
  %v5105 = vrot.slane %v4552, 5
  %v5106 = vsel %vm672, %v5104, %v5105
  %v5107 = vrot.slane %v4953, 5
  %v5108 = vrot.slane %v5107, 4
  %v5109 = vrot.slane %v4537, 5
  %v5110 = vsel %vm672, %v5108, %v5109
  %v5111 = vrot.slane %v5109, 4
  %v5112 = vrot.slane %v4553, 5
  %v5113 = vsel %vm672, %v5111, %v5112
  %s5114 = scalar_lea.vmem %s0, 240
  %v5115 = vld [vmem:[%s5114] sm:$0xf]
  %v5116 = vld [vmem:[%s5114 + $0x4] sm:$0xf]
  %v5117 = vld [vmem:[%s5114 + $0xc] sm:$0xf]
  %v5118 = vld [vmem:[%s5114 + $0x10] sm:$0xf]
  %v5119 = vld [vmem:[%s5114 + $0x18] sm:$0xf]
  %v5120 = vld [vmem:[%s5114 + $0x1c] sm:$0xf]
  %v5121 = vld [vmem:[%s5114 + $0x24] sm:$0xf]
  %v5122 = vld [vmem:[%s5114 + $0x28] sm:$0xf]
  %v5123 = vld [vmem:[%s5114 + $0x30] sm:$0xf]
  %v5124 = vld [vmem:[%s5114 + $0x34] sm:$0xf]
  %v5125 = vld [vmem:[%s5114 + $0x3c] sm:$0xf]
  %v5126 = vld [vmem:[%s5114 + $0x40] sm:$0xf]
  %v5127 = vld [vmem:[%s5114 + $0x48] sm:$0xf]
  %v5128 = vld [vmem:[%s5114 + $0x4c] sm:$0xf]
  %v5129 = vld [vmem:[%s5114 + $0x54] sm:$0xf]
  %v5130 = vld [vmem:[%s5114 + $0x58] sm:$0xf]
  %v5131 = vld [vmem:[%s5114 + $0x60] sm:$0xf]
  %v5132 = vld [vmem:[%s5114 + $0x64] sm:$0xf]
  %v5133 = vld [vmem:[%s5114 + $0x6c] sm:$0xf]
  %v5134 = vld [vmem:[%s5114 + $0x70] sm:$0xf]
  %v5135 = vld [vmem:[%s5114 + $0x78] sm:$0xf]
  %v5136 = vld [vmem:[%s5114 + $0x7c] sm:$0xf]
  %v5137 = vld [vmem:[%s5114 + $0x84] sm:$0xf]
  %v5138 = vld [vmem:[%s5114 + $0x88] sm:$0xf]
  %v5139 = vld [vmem:[%s5114 + $0x90] sm:$0xf]
  %v5140 = vld [vmem:[%s5114 + $0x94] sm:$0xf]
  %v5141 = vld [vmem:[%s5114 + $0x9c] sm:$0xf]
  %v5142 = vld [vmem:[%s5114 + $0xa0] sm:$0xf]
  %v5143 = vld [vmem:[%s5114 + $0xa8] sm:$0xf]
  %v5144 = vld [vmem:[%s5114 + $0xac] sm:$0xf]
  %v5145 = vld [vmem:[%s5114 + $0xb4] sm:$0xf]
  %v5146 = vld [vmem:[%s5114 + $0xb8] sm:$0xf]
  %v5147 = vld [vmem:[%s5114 + $0x8] sm:$0x1]
  %v5148 = vld [vmem:[%s5114 + $0x14] sm:$0x1]
  %v5149 = vld [vmem:[%s5114 + $0x20] sm:$0x1]
  %v5150 = vld [vmem:[%s5114 + $0x2c] sm:$0x1]
  %v5151 = vld [vmem:[%s5114 + $0x38] sm:$0x1]
  %v5152 = vld [vmem:[%s5114 + $0x44] sm:$0x1]
  %v5153 = vld [vmem:[%s5114 + $0x50] sm:$0x1]
  %v5154 = vld [vmem:[%s5114 + $0x5c] sm:$0x1]
  %v5155 = vld [vmem:[%s5114 + $0x68] sm:$0x1]
  %v5156 = vld [vmem:[%s5114 + $0x74] sm:$0x1]
  %v5157 = vld [vmem:[%s5114 + $0x80] sm:$0x1]
  %v5158 = vld [vmem:[%s5114 + $0x8c] sm:$0x1]
  %v5159 = vld [vmem:[%s5114 + $0x98] sm:$0x1]
  %v5160 = vld [vmem:[%s5114 + $0xa4] sm:$0x1]
  %v5161 = vld [vmem:[%s5114 + $0xb0] sm:$0x1]
  %v5162 = vld [vmem:[%s5114 + $0xbc] sm:$0x1]
  %v5164 = vshrl.u32 %v5115, 16
  %v5166 = vrot.slane %v5164, 4
  %v5167 = vshll.u32 %v5115, 16
  %v5169 = vrot.slane %v5167, 5
  %v5170 = vor.u32 %v5166, %v5169
  %v5171 = vrot.slane %v5170, 4
  %v5173 = vshll.u32 %v5116, 16
  %v5175 = vrot.slane %v5173, 5
  %v5176 = vsel %vm221, %v5171, %v5175
  %v5177 = vshrl.u32 %v5116, 16
  %v5179 = vrot.slane %v5177, 4
  %v5180 = vor.u32 %v5179, %v5175
  %v5181 = vrot.slane %v5180, 4
  %v5183 = vshll.u32 %v5147, 16
  %v5185 = vrot.slane %v5183, 5
  %v5186 = vsel %vm221, %v5181, %v5185
  %v5188 = vshrl.u32 %v5117, 16
  %v5190 = vrot.slane %v5188, 4
  %v5191 = vshll.u32 %v5117, 16
  %v5193 = vrot.slane %v5191, 5
  %v5194 = vor.u32 %v5190, %v5193
  %v5195 = vrot.slane %v5194, 4
  %v5197 = vshll.u32 %v5118, 16
  %v5199 = vrot.slane %v5197, 5
  %v5200 = vsel %vm221, %v5195, %v5199
  %v5201 = vshrl.u32 %v5118, 16
  %v5203 = vrot.slane %v5201, 4
  %v5204 = vor.u32 %v5203, %v5199
  %v5205 = vrot.slane %v5204, 4
  %v5207 = vshll.u32 %v5148, 16
  %v5209 = vrot.slane %v5207, 5
  %v5210 = vsel %vm221, %v5205, %v5209
  %v5212 = vshrl.u32 %v5119, 16
  %v5214 = vrot.slane %v5212, 4
  %v5215 = vshll.u32 %v5119, 16
  %v5217 = vrot.slane %v5215, 5
  %v5218 = vor.u32 %v5214, %v5217
  %v5219 = vrot.slane %v5218, 4
  %v5221 = vshll.u32 %v5120, 16
  %v5223 = vrot.slane %v5221, 5
  %v5224 = vsel %vm221, %v5219, %v5223
  %v5225 = vshrl.u32 %v5120, 16
  %v5227 = vrot.slane %v5225, 4
  %v5228 = vor.u32 %v5227, %v5223
  %v5229 = vrot.slane %v5228, 4
  %v5231 = vshll.u32 %v5149, 16
  %v5233 = vrot.slane %v5231, 5
  %v5234 = vsel %vm221, %v5229, %v5233
  %v5236 = vshrl.u32 %v5121, 16
  %v5238 = vrot.slane %v5236, 4
  %v5239 = vshll.u32 %v5121, 16
  %v5241 = vrot.slane %v5239, 5
  %v5242 = vor.u32 %v5238, %v5241
  %v5243 = vrot.slane %v5242, 4
  %v5245 = vshll.u32 %v5122, 16
  %v5247 = vrot.slane %v5245, 5
  %v5248 = vsel %vm221, %v5243, %v5247
  %v5249 = vshrl.u32 %v5122, 16
  %v5251 = vrot.slane %v5249, 4
  %v5252 = vor.u32 %v5251, %v5247
  %v5253 = vrot.slane %v5252, 4
  %v5255 = vshll.u32 %v5150, 16
  %v5257 = vrot.slane %v5255, 5
  %v5258 = vsel %vm221, %v5253, %v5257
  %v5260 = vshrl.u32 %v5123, 16
  %v5262 = vrot.slane %v5260, 4
  %v5263 = vshll.u32 %v5123, 16
  %v5265 = vrot.slane %v5263, 5
  %v5266 = vor.u32 %v5262, %v5265
  %v5267 = vrot.slane %v5266, 4
  %v5269 = vshll.u32 %v5124, 16
  %v5271 = vrot.slane %v5269, 5
  %v5272 = vsel %vm221, %v5267, %v5271
  %v5273 = vshrl.u32 %v5124, 16
  %v5275 = vrot.slane %v5273, 4
  %v5276 = vor.u32 %v5275, %v5271
  %v5277 = vrot.slane %v5276, 4
  %v5279 = vshll.u32 %v5151, 16
  %v5281 = vrot.slane %v5279, 5
  %v5282 = vsel %vm221, %v5277, %v5281
  %v5284 = vshrl.u32 %v5125, 16
  %v5286 = vrot.slane %v5284, 4
  %v5287 = vshll.u32 %v5125, 16
  %v5289 = vrot.slane %v5287, 5
  %v5290 = vor.u32 %v5286, %v5289
  %v5291 = vrot.slane %v5290, 4
  %v5293 = vshll.u32 %v5126, 16
  %v5295 = vrot.slane %v5293, 5
  %v5296 = vsel %vm221, %v5291, %v5295
  %v5297 = vshrl.u32 %v5126, 16
  %v5299 = vrot.slane %v5297, 4
  %v5300 = vor.u32 %v5299, %v5295
  %v5301 = vrot.slane %v5300, 4
  %v5303 = vshll.u32 %v5152, 16
  %v5305 = vrot.slane %v5303, 5
  %v5306 = vsel %vm221, %v5301, %v5305
  %v5308 = vshrl.u32 %v5127, 16
  %v5310 = vrot.slane %v5308, 4
  %v5311 = vshll.u32 %v5127, 16
  %v5313 = vrot.slane %v5311, 5
  %v5314 = vor.u32 %v5310, %v5313
  %v5315 = vrot.slane %v5314, 4
  %v5317 = vshll.u32 %v5128, 16
  %v5319 = vrot.slane %v5317, 5
  %v5320 = vsel %vm221, %v5315, %v5319
  %v5321 = vshrl.u32 %v5128, 16
  %v5323 = vrot.slane %v5321, 4
  %v5324 = vor.u32 %v5323, %v5319
  %v5325 = vrot.slane %v5324, 4
  %v5327 = vshll.u32 %v5153, 16
  %v5329 = vrot.slane %v5327, 5
  %v5330 = vsel %vm221, %v5325, %v5329
  %v5332 = vshrl.u32 %v5129, 16
  %v5334 = vrot.slane %v5332, 4
  %v5335 = vshll.u32 %v5129, 16
  %v5337 = vrot.slane %v5335, 5
  %v5338 = vor.u32 %v5334, %v5337
  %v5339 = vrot.slane %v5338, 4
  %v5341 = vshll.u32 %v5130, 16
  %v5343 = vrot.slane %v5341, 5
  %v5344 = vsel %vm221, %v5339, %v5343
  %v5345 = vshrl.u32 %v5130, 16
  %v5347 = vrot.slane %v5345, 4
  %v5348 = vor.u32 %v5347, %v5343
  %v5349 = vrot.slane %v5348, 4
  %v5351 = vshll.u32 %v5154, 16
  %v5353 = vrot.slane %v5351, 5
  %v5354 = vsel %vm221, %v5349, %v5353
  %v5356 = vshrl.u32 %v5131, 16
  %v5358 = vrot.slane %v5356, 4
  %v5359 = vshll.u32 %v5131, 16
  %v5361 = vrot.slane %v5359, 5
  %v5362 = vor.u32 %v5358, %v5361
  %v5363 = vrot.slane %v5362, 4
  %v5365 = vshll.u32 %v5132, 16
  %v5367 = vrot.slane %v5365, 5
  %v5368 = vsel %vm221, %v5363, %v5367
  %v5369 = vshrl.u32 %v5132, 16
  %v5371 = vrot.slane %v5369, 4
  %v5372 = vor.u32 %v5371, %v5367
  %v5373 = vrot.slane %v5372, 4
  %v5375 = vshll.u32 %v5155, 16
  %v5377 = vrot.slane %v5375, 5
  %v5378 = vsel %vm221, %v5373, %v5377
  %v5380 = vshrl.u32 %v5133, 16
  %v5382 = vrot.slane %v5380, 4
  %v5383 = vshll.u32 %v5133, 16
  %v5385 = vrot.slane %v5383, 5
  %v5386 = vor.u32 %v5382, %v5385
  %v5387 = vrot.slane %v5386, 4
  %v5389 = vshll.u32 %v5134, 16
  %v5391 = vrot.slane %v5389, 5
  %v5392 = vsel %vm221, %v5387, %v5391
  %v5393 = vshrl.u32 %v5134, 16
  %v5395 = vrot.slane %v5393, 4
  %v5396 = vor.u32 %v5395, %v5391
  %v5397 = vrot.slane %v5396, 4
  %v5399 = vshll.u32 %v5156, 16
  %v5401 = vrot.slane %v5399, 5
  %v5402 = vsel %vm221, %v5397, %v5401
  %v5404 = vshrl.u32 %v5135, 16
  %v5406 = vrot.slane %v5404, 4
  %v5407 = vshll.u32 %v5135, 16
  %v5409 = vrot.slane %v5407, 5
  %v5410 = vor.u32 %v5406, %v5409
  %v5411 = vrot.slane %v5410, 4
  %v5413 = vshll.u32 %v5136, 16
  %v5415 = vrot.slane %v5413, 5
  %v5416 = vsel %vm221, %v5411, %v5415
  %v5417 = vshrl.u32 %v5136, 16
  %v5419 = vrot.slane %v5417, 4
  %v5420 = vor.u32 %v5419, %v5415
  %v5421 = vrot.slane %v5420, 4
  %v5423 = vshll.u32 %v5157, 16
  %v5425 = vrot.slane %v5423, 5
  %v5426 = vsel %vm221, %v5421, %v5425
  %v5428 = vshrl.u32 %v5137, 16
  %v5430 = vrot.slane %v5428, 4
  %v5431 = vshll.u32 %v5137, 16
  %v5433 = vrot.slane %v5431, 5
  %v5434 = vor.u32 %v5430, %v5433
  %v5435 = vrot.slane %v5434, 4
  %v5437 = vshll.u32 %v5138, 16
  %v5439 = vrot.slane %v5437, 5
  %v5440 = vsel %vm221, %v5435, %v5439
  %v5441 = vshrl.u32 %v5138, 16
  %v5443 = vrot.slane %v5441, 4
  %v5444 = vor.u32 %v5443, %v5439
  %v5445 = vrot.slane %v5444, 4
  %v5447 = vshll.u32 %v5158, 16
  %v5449 = vrot.slane %v5447, 5
  %v5450 = vsel %vm221, %v5445, %v5449
  %v5452 = vshrl.u32 %v5139, 16
  %v5454 = vrot.slane %v5452, 4
  %v5455 = vshll.u32 %v5139, 16
  %v5457 = vrot.slane %v5455, 5
  %v5458 = vor.u32 %v5454, %v5457
  %v5459 = vrot.slane %v5458, 4
  %v5461 = vshll.u32 %v5140, 16
  %v5463 = vrot.slane %v5461, 5
  %v5464 = vsel %vm221, %v5459, %v5463
  %v5465 = vshrl.u32 %v5140, 16
  %v5467 = vrot.slane %v5465, 4
  %v5468 = vor.u32 %v5467, %v5463
  %v5469 = vrot.slane %v5468, 4
  %v5471 = vshll.u32 %v5159, 16
  %v5473 = vrot.slane %v5471, 5
  %v5474 = vsel %vm221, %v5469, %v5473
  %v5476 = vshrl.u32 %v5141, 16
  %v5478 = vrot.slane %v5476, 4
  %v5479 = vshll.u32 %v5141, 16
  %v5481 = vrot.slane %v5479, 5
  %v5482 = vor.u32 %v5478, %v5481
  %v5483 = vrot.slane %v5482, 4
  %v5485 = vshll.u32 %v5142, 16
  %v5487 = vrot.slane %v5485, 5
  %v5488 = vsel %vm221, %v5483, %v5487
  %v5489 = vshrl.u32 %v5142, 16
  %v5491 = vrot.slane %v5489, 4
  %v5492 = vor.u32 %v5491, %v5487
  %v5493 = vrot.slane %v5492, 4
  %v5495 = vshll.u32 %v5160, 16
  %v5497 = vrot.slane %v5495, 5
  %v5498 = vsel %vm221, %v5493, %v5497
  %v5500 = vshrl.u32 %v5143, 16
  %v5502 = vrot.slane %v5500, 4
  %v5503 = vshll.u32 %v5143, 16
  %v5505 = vrot.slane %v5503, 5
  %v5506 = vor.u32 %v5502, %v5505
  %v5507 = vrot.slane %v5506, 4
  %v5509 = vshll.u32 %v5144, 16
  %v5511 = vrot.slane %v5509, 5
  %v5512 = vsel %vm221, %v5507, %v5511
  %v5513 = vshrl.u32 %v5144, 16
  %v5515 = vrot.slane %v5513, 4
  %v5516 = vor.u32 %v5515, %v5511
  %v5517 = vrot.slane %v5516, 4
  %v5519 = vshll.u32 %v5161, 16
  %v5521 = vrot.slane %v5519, 5
  %v5522 = vsel %vm221, %v5517, %v5521
  %v5524 = vshrl.u32 %v5145, 16
  %v5526 = vrot.slane %v5524, 4
  %v5527 = vshll.u32 %v5145, 16
  %v5529 = vrot.slane %v5527, 5
  %v5530 = vor.u32 %v5526, %v5529
  %v5531 = vrot.slane %v5530, 4
  %v5533 = vshll.u32 %v5146, 16
  %v5535 = vrot.slane %v5533, 5
  %v5536 = vsel %vm221, %v5531, %v5535
  %v5537 = vshrl.u32 %v5146, 16
  %v5539 = vrot.slane %v5537, 4
  %v5540 = vor.u32 %v5539, %v5535
  %v5541 = vrot.slane %v5540, 4
  %v5543 = vshll.u32 %v5162, 16
  %v5545 = vrot.slane %v5543, 5
  %v5546 = vsel %vm221, %v5541, %v5545
  %v5547 = vld [vmem:[%s5114] sm:$0xe]
  %v5548 = vld [vmem:[%s5114 + $0xc] sm:$0xe]
  %v5549 = vld [vmem:[%s5114 + $0x18] sm:$0xe]
  %v5550 = vld [vmem:[%s5114 + $0x24] sm:$0xe]
  %v5551 = vld [vmem:[%s5114 + $0x30] sm:$0xe]
  %v5552 = vld [vmem:[%s5114 + $0x3c] sm:$0xe]
  %v5553 = vld [vmem:[%s5114 + $0x48] sm:$0xe]
  %v5554 = vld [vmem:[%s5114 + $0x54] sm:$0xe]
  %v5555 = vld [vmem:[%s5114 + $0x60] sm:$0xe]
  %v5556 = vld [vmem:[%s5114 + $0x6c] sm:$0xe]
  %v5557 = vld [vmem:[%s5114 + $0x78] sm:$0xe]
  %v5558 = vld [vmem:[%s5114 + $0x84] sm:$0xe]
  %v5559 = vld [vmem:[%s5114 + $0x90] sm:$0xe]
  %v5560 = vld [vmem:[%s5114 + $0x9c] sm:$0xe]
  %v5561 = vld [vmem:[%s5114 + $0xa8] sm:$0xe]
  %v5562 = vld [vmem:[%s5114 + $0xb4] sm:$0xe]
  %v5611 = vrot.slane %v5547, 5
  %v5612 = vrot.slane %v5611, 4
  %v5613 = vrot.slane %v5116, 5
  %v5614 = vsel %vm672, %v5612, %v5613
  %v5615 = vrot.slane %v5613, 4
  %v5616 = vrot.slane %v5147, 5
  %v5617 = vsel %vm672, %v5615, %v5616
  %v5618 = vrot.slane %v5548, 5
  %v5619 = vrot.slane %v5618, 4
  %v5620 = vrot.slane %v5118, 5
  %v5621 = vsel %vm672, %v5619, %v5620
  %v5622 = vrot.slane %v5620, 4
  %v5623 = vrot.slane %v5148, 5
  %v5624 = vsel %vm672, %v5622, %v5623
  %v5625 = vrot.slane %v5549, 5
  %v5626 = vrot.slane %v5625, 4
  %v5627 = vrot.slane %v5120, 5
  %v5628 = vsel %vm672, %v5626, %v5627
  %v5629 = vrot.slane %v5627, 4
  %v5630 = vrot.slane %v5149, 5
  %v5631 = vsel %vm672, %v5629, %v5630
  %v5632 = vrot.slane %v5550, 5
  %v5633 = vrot.slane %v5632, 4
  %v5634 = vrot.slane %v5122, 5
  %v5635 = vsel %vm672, %v5633, %v5634
  %v5636 = vrot.slane %v5634, 4
  %v5637 = vrot.slane %v5150, 5
  %v5638 = vsel %vm672, %v5636, %v5637
  %v5639 = vrot.slane %v5551, 5
  %v5640 = vrot.slane %v5639, 4
  %v5641 = vrot.slane %v5124, 5
  %v5642 = vsel %vm672, %v5640, %v5641
  %v5643 = vrot.slane %v5641, 4
  %v5644 = vrot.slane %v5151, 5
  %v5645 = vsel %vm672, %v5643, %v5644
  %v5646 = vrot.slane %v5552, 5
  %v5647 = vrot.slane %v5646, 4
  %v5648 = vrot.slane %v5126, 5
  %v5649 = vsel %vm672, %v5647, %v5648
  %v5650 = vrot.slane %v5648, 4
  %v5651 = vrot.slane %v5152, 5
  %v5652 = vsel %vm672, %v5650, %v5651
  %v5653 = vrot.slane %v5553, 5
  %v5654 = vrot.slane %v5653, 4
  %v5655 = vrot.slane %v5128, 5
  %v5656 = vsel %vm672, %v5654, %v5655
  %v5657 = vrot.slane %v5655, 4
  %v5658 = vrot.slane %v5153, 5
  %v5659 = vsel %vm672, %v5657, %v5658
  %v5660 = vrot.slane %v5554, 5
  %v5661 = vrot.slane %v5660, 4
  %v5662 = vrot.slane %v5130, 5
  %v5663 = vsel %vm672, %v5661, %v5662
  %v5664 = vrot.slane %v5662, 4
  %v5665 = vrot.slane %v5154, 5
  %v5666 = vsel %vm672, %v5664, %v5665
  %v5667 = vrot.slane %v5555, 5
  %v5668 = vrot.slane %v5667, 4
  %v5669 = vrot.slane %v5132, 5
  %v5670 = vsel %vm672, %v5668, %v5669
  %v5671 = vrot.slane %v5669, 4
  %v5672 = vrot.slane %v5155, 5
  %v5673 = vsel %vm672, %v5671, %v5672
  %v5674 = vrot.slane %v5556, 5
  %v5675 = vrot.slane %v5674, 4
  %v5676 = vrot.slane %v5134, 5
  %v5677 = vsel %vm672, %v5675, %v5676
  %v5678 = vrot.slane %v5676, 4
  %v5679 = vrot.slane %v5156, 5
  %v5680 = vsel %vm672, %v5678, %v5679
  %v5681 = vrot.slane %v5557, 5
  %v5682 = vrot.slane %v5681, 4
  %v5683 = vrot.slane %v5136, 5
  %v5684 = vsel %vm672, %v5682, %v5683
  %v5685 = vrot.slane %v5683, 4
  %v5686 = vrot.slane %v5157, 5
  %v5687 = vsel %vm672, %v5685, %v5686
  %v5688 = vrot.slane %v5558, 5
  %v5689 = vrot.slane %v5688, 4
  %v5690 = vrot.slane %v5138, 5
  %v5691 = vsel %vm672, %v5689, %v5690
  %v5692 = vrot.slane %v5690, 4
  %v5693 = vrot.slane %v5158, 5
  %v5694 = vsel %vm672, %v5692, %v5693
  %v5695 = vrot.slane %v5559, 5
  %v5696 = vrot.slane %v5695, 4
  %v5697 = vrot.slane %v5140, 5
  %v5698 = vsel %vm672, %v5696, %v5697
  %v5699 = vrot.slane %v5697, 4
  %v5700 = vrot.slane %v5159, 5
  %v5701 = vsel %vm672, %v5699, %v5700
  %v5702 = vrot.slane %v5560, 5
  %v5703 = vrot.slane %v5702, 4
  %v5704 = vrot.slane %v5142, 5
  %v5705 = vsel %vm672, %v5703, %v5704
  %v5706 = vrot.slane %v5704, 4
  %v5707 = vrot.slane %v5160, 5
  %v5708 = vsel %vm672, %v5706, %v5707
  %v5709 = vrot.slane %v5561, 5
  %v5710 = vrot.slane %v5709, 4
  %v5711 = vrot.slane %v5144, 5
  %v5712 = vsel %vm672, %v5710, %v5711
  %v5713 = vrot.slane %v5711, 4
  %v5714 = vrot.slane %v5161, 5
  %v5715 = vsel %vm672, %v5713, %v5714
  %v5716 = vrot.slane %v5562, 5
  %v5717 = vrot.slane %v5716, 4
  %v5718 = vrot.slane %v5146, 5
  %v5719 = vsel %vm672, %v5717, %v5718
  %v5720 = vrot.slane %v5718, 4
  %v5721 = vrot.slane %v5162, 5
  %v5722 = vsel %vm672, %v5720, %v5721
  %v5739 = vunpack.c.l.b16 %v3897
  %v5740 = vunpack.c.l.b16 %v3898
  %v5741 = vunpack.c.l.b16 %v3899
  %v5742 = vunpack.c.l.b16 %v3900
  %v5743 = vunpack.c.l.b16 %v3901
  %v5744 = vunpack.c.l.b16 %v3902
  %v5745 = vunpack.c.l.b16 %v3903
  %v5746 = vunpack.c.l.b16 %v3904
  %v5747 = vunpack.c.l.b16 %v3905
  %v5748 = vunpack.c.l.b16 %v3906
  %v5749 = vunpack.c.l.b16 %v3907
  %v5750 = vunpack.c.l.b16 %v3908
  %v5751 = vunpack.c.l.b16 %v3909
  %v5752 = vunpack.c.l.b16 %v3910
  %v5753 = vunpack.c.l.b16 %v3911
  %v5754 = vunpack.c.l.b16 %v3912
  %v5755 = vunpack.c.l.b16 %v3913
  %v5756 = vunpack.c.l.b16 %v3914
  %v5757 = vunpack.c.l.b16 %v3915
  %v5758 = vunpack.c.l.b16 %v3916
  %v5759 = vunpack.c.l.b16 %v3917
  %v5760 = vunpack.c.l.b16 %v3918
  %v5761 = vunpack.c.l.b16 %v3919
  %v5762 = vunpack.c.l.b16 %v3920
  %v5763 = vunpack.c.l.b16 %v3921
  %v5764 = vunpack.c.l.b16 %v3922
  %v5765 = vunpack.c.l.b16 %v3923
  %v5766 = vunpack.c.l.b16 %v3924
  %v5767 = vunpack.c.l.b16 %v3925
  %v5768 = vunpack.c.l.b16 %v3926
  %v5769 = vunpack.c.l.b16 %v3927
  %v5770 = vunpack.c.l.b16 %v3928
  %v5771 = vpack.c.b16 %v5740, %v5739
  %v5772 = vpack.c.b16 %v5742, %v5741
  %v5773 = vpack.c.b16 %v5744, %v5743
  %v5774 = vpack.c.b16 %v5746, %v5745
  %v5775 = vpack.c.b16 %v5748, %v5747
  %v5776 = vpack.c.b16 %v5750, %v5749
  %v5777 = vpack.c.b16 %v5752, %v5751
  %v5778 = vpack.c.b16 %v5754, %v5753
  %v5779 = vpack.c.b16 %v5756, %v5755
  %v5780 = vpack.c.b16 %v5758, %v5757
  %v5781 = vpack.c.b16 %v5760, %v5759
  %v5782 = vpack.c.b16 %v5762, %v5761
  %v5783 = vpack.c.b16 %v5764, %v5763
  %v5784 = vpack.c.b16 %v5766, %v5765
  %v5785 = vpack.c.b16 %v5768, %v5767
  %v5786 = vpack.c.b16 %v5770, %v5769
  %v5803 = vunpack.c.l.b16 %v3958
  %v5804 = vunpack.c.l.b16 %v3968
  %v5805 = vunpack.c.l.b16 %v3982
  %v5806 = vunpack.c.l.b16 %v3992
  %v5807 = vunpack.c.l.b16 %v4006
  %v5808 = vunpack.c.l.b16 %v4016
  %v5809 = vunpack.c.l.b16 %v4030
  %v5810 = vunpack.c.l.b16 %v4040
  %v5811 = vunpack.c.l.b16 %v4054
  %v5812 = vunpack.c.l.b16 %v4064
  %v5813 = vunpack.c.l.b16 %v4078
  %v5814 = vunpack.c.l.b16 %v4088
  %v5815 = vunpack.c.l.b16 %v4102
  %v5816 = vunpack.c.l.b16 %v4112
  %v5817 = vunpack.c.l.b16 %v4126
  %v5818 = vunpack.c.l.b16 %v4136
  %v5819 = vunpack.c.l.b16 %v4150
  %v5820 = vunpack.c.l.b16 %v4160
  %v5821 = vunpack.c.l.b16 %v4174
  %v5822 = vunpack.c.l.b16 %v4184
  %v5823 = vunpack.c.l.b16 %v4198
  %v5824 = vunpack.c.l.b16 %v4208
  %v5825 = vunpack.c.l.b16 %v4222
  %v5826 = vunpack.c.l.b16 %v4232
  %v5827 = vunpack.c.l.b16 %v4246
  %v5828 = vunpack.c.l.b16 %v4256
  %v5829 = vunpack.c.l.b16 %v4270
  %v5830 = vunpack.c.l.b16 %v4280
  %v5831 = vunpack.c.l.b16 %v4294
  %v5832 = vunpack.c.l.b16 %v4304
  %v5833 = vunpack.c.l.b16 %v4318
  %v5834 = vunpack.c.l.b16 %v4328
  %v5835 = vpack.c.b16 %v5804, %v5803
  %v5836 = vpack.c.b16 %v5806, %v5805
  %v5837 = vpack.c.b16 %v5808, %v5807
  %v5838 = vpack.c.b16 %v5810, %v5809
  %v5839 = vpack.c.b16 %v5812, %v5811
  %v5840 = vpack.c.b16 %v5814, %v5813
  %v5841 = vpack.c.b16 %v5816, %v5815
  %v5842 = vpack.c.b16 %v5818, %v5817
  %v5843 = vpack.c.b16 %v5820, %v5819
  %v5844 = vpack.c.b16 %v5822, %v5821
  %v5845 = vpack.c.b16 %v5824, %v5823
  %v5846 = vpack.c.b16 %v5826, %v5825
  %v5847 = vpack.c.b16 %v5828, %v5827
  %v5848 = vpack.c.b16 %v5830, %v5829
  %v5849 = vpack.c.b16 %v5832, %v5831
  %v5850 = vpack.c.b16 %v5834, %v5833
  %v5867 = vunpack.c.l.b16 %v4396
  %v5868 = vunpack.c.l.b16 %v4399
  %v5869 = vunpack.c.l.b16 %v4403
  %v5870 = vunpack.c.l.b16 %v4406
  %v5871 = vunpack.c.l.b16 %v4410
  %v5872 = vunpack.c.l.b16 %v4413
  %v5873 = vunpack.c.l.b16 %v4417
  %v5874 = vunpack.c.l.b16 %v4420
  %v5875 = vunpack.c.l.b16 %v4424
  %v5876 = vunpack.c.l.b16 %v4427
  %v5877 = vunpack.c.l.b16 %v4431
  %v5878 = vunpack.c.l.b16 %v4434
  %v5879 = vunpack.c.l.b16 %v4438
  %v5880 = vunpack.c.l.b16 %v4441
  %v5881 = vunpack.c.l.b16 %v4445
  %v5882 = vunpack.c.l.b16 %v4448
  %v5883 = vunpack.c.l.b16 %v4452
  %v5884 = vunpack.c.l.b16 %v4455
  %v5885 = vunpack.c.l.b16 %v4459
  %v5886 = vunpack.c.l.b16 %v4462
  %v5887 = vunpack.c.l.b16 %v4466
  %v5888 = vunpack.c.l.b16 %v4469
  %v5889 = vunpack.c.l.b16 %v4473
  %v5890 = vunpack.c.l.b16 %v4476
  %v5891 = vunpack.c.l.b16 %v4480
  %v5892 = vunpack.c.l.b16 %v4483
  %v5893 = vunpack.c.l.b16 %v4487
  %v5894 = vunpack.c.l.b16 %v4490
  %v5895 = vunpack.c.l.b16 %v4494
  %v5896 = vunpack.c.l.b16 %v4497
  %v5897 = vunpack.c.l.b16 %v4501
  %v5898 = vunpack.c.l.b16 %v4504
  %v5899 = vpack.c.b16 %v5868, %v5867
  %v5900 = vpack.c.b16 %v5870, %v5869
  %v5901 = vpack.c.b16 %v5872, %v5871
  %v5902 = vpack.c.b16 %v5874, %v5873
  %v5903 = vpack.c.b16 %v5876, %v5875
  %v5904 = vpack.c.b16 %v5878, %v5877
  %v5905 = vpack.c.b16 %v5880, %v5879
  %v5906 = vpack.c.b16 %v5882, %v5881
  %v5907 = vpack.c.b16 %v5884, %v5883
  %v5908 = vpack.c.b16 %v5886, %v5885
  %v5909 = vpack.c.b16 %v5888, %v5887
  %v5910 = vpack.c.b16 %v5890, %v5889
  %v5911 = vpack.c.b16 %v5892, %v5891
  %v5912 = vpack.c.b16 %v5894, %v5893
  %v5913 = vpack.c.b16 %v5896, %v5895
  %v5914 = vpack.c.b16 %v5898, %v5897
  %v5947 = vunpack.c.l.b16 %v4506
  %v5948 = vunpack.c.l.b16 %v4507
  %v5949 = vunpack.c.l.b16 %v4508
  %v5950 = vunpack.c.l.b16 %v4509
  %v5951 = vunpack.c.l.b16 %v4510
  %v5952 = vunpack.c.l.b16 %v4511
  %v5953 = vunpack.c.l.b16 %v4512
  %v5954 = vunpack.c.l.b16 %v4513
  %v5955 = vunpack.c.l.b16 %v4514
  %v5956 = vunpack.c.l.b16 %v4515
  %v5957 = vunpack.c.l.b16 %v4516
  %v5958 = vunpack.c.l.b16 %v4517
  %v5959 = vunpack.c.l.b16 %v4518
  %v5960 = vunpack.c.l.b16 %v4519
  %v5961 = vunpack.c.l.b16 %v4520
  %v5962 = vunpack.c.l.b16 %v4521
  %v5963 = vunpack.c.l.b16 %v4522
  %v5964 = vunpack.c.l.b16 %v4523
  %v5965 = vunpack.c.l.b16 %v4524
  %v5966 = vunpack.c.l.b16 %v4525
  %v5967 = vunpack.c.l.b16 %v4526
  %v5968 = vunpack.c.l.b16 %v4527
  %v5969 = vunpack.c.l.b16 %v4528
  %v5970 = vunpack.c.l.b16 %v4529
  %v5971 = vunpack.c.l.b16 %v4530
  %v5972 = vunpack.c.l.b16 %v4531
  %v5973 = vunpack.c.l.b16 %v4532
  %v5974 = vunpack.c.l.b16 %v4533
  %v5975 = vunpack.c.l.b16 %v4534
  %v5976 = vunpack.c.l.b16 %v4535
  %v5977 = vunpack.c.l.b16 %v4536
  %v5978 = vunpack.c.l.b16 %v4537
  %v5979 = vpack.c.b16 %v5948, %v5947
  %v5980 = vpack.c.b16 %v5950, %v5949
  %v5981 = vpack.c.b16 %v5952, %v5951
  %v5982 = vpack.c.b16 %v5954, %v5953
  %v5983 = vpack.c.b16 %v5956, %v5955
  %v5984 = vpack.c.b16 %v5958, %v5957
  %v5985 = vpack.c.b16 %v5960, %v5959
  %v5986 = vpack.c.b16 %v5962, %v5961
  %v5987 = vpack.c.b16 %v5964, %v5963
  %v5988 = vpack.c.b16 %v5966, %v5965
  %v5989 = vpack.c.b16 %v5968, %v5967
  %v5990 = vpack.c.b16 %v5970, %v5969
  %v5991 = vpack.c.b16 %v5972, %v5971
  %v5992 = vpack.c.b16 %v5974, %v5973
  %v5993 = vpack.c.b16 %v5976, %v5975
  %v5994 = vpack.c.b16 %v5978, %v5977
  %v6011 = vunpack.c.l.b16 %v4567
  %v6012 = vunpack.c.l.b16 %v4577
  %v6013 = vunpack.c.l.b16 %v4591
  %v6014 = vunpack.c.l.b16 %v4601
  %v6015 = vunpack.c.l.b16 %v4615
  %v6016 = vunpack.c.l.b16 %v4625
  %v6017 = vunpack.c.l.b16 %v4639
  %v6018 = vunpack.c.l.b16 %v4649
  %v6019 = vunpack.c.l.b16 %v4663
  %v6020 = vunpack.c.l.b16 %v4673
  %v6021 = vunpack.c.l.b16 %v4687
  %v6022 = vunpack.c.l.b16 %v4697
  %v6023 = vunpack.c.l.b16 %v4711
  %v6024 = vunpack.c.l.b16 %v4721
  %v6025 = vunpack.c.l.b16 %v4735
  %v6026 = vunpack.c.l.b16 %v4745
  %v6027 = vunpack.c.l.b16 %v4759
  %v6028 = vunpack.c.l.b16 %v4769
  %v6029 = vunpack.c.l.b16 %v4783
  %v6030 = vunpack.c.l.b16 %v4793
  %v6031 = vunpack.c.l.b16 %v4807
  %v6032 = vunpack.c.l.b16 %v4817
  %v6033 = vunpack.c.l.b16 %v4831
  %v6034 = vunpack.c.l.b16 %v4841
  %v6035 = vunpack.c.l.b16 %v4855
  %v6036 = vunpack.c.l.b16 %v4865
  %v6037 = vunpack.c.l.b16 %v4879
  %v6038 = vunpack.c.l.b16 %v4889
  %v6039 = vunpack.c.l.b16 %v4903
  %v6040 = vunpack.c.l.b16 %v4913
  %v6041 = vunpack.c.l.b16 %v4927
  %v6042 = vunpack.c.l.b16 %v4937
  %v6043 = vpack.c.b16 %v6012, %v6011
  %v6044 = vpack.c.b16 %v6014, %v6013
  %v6045 = vpack.c.b16 %v6016, %v6015
  %v6046 = vpack.c.b16 %v6018, %v6017
  %v6047 = vpack.c.b16 %v6020, %v6019
  %v6048 = vpack.c.b16 %v6022, %v6021
  %v6049 = vpack.c.b16 %v6024, %v6023
  %v6050 = vpack.c.b16 %v6026, %v6025
  %v6051 = vpack.c.b16 %v6028, %v6027
  %v6052 = vpack.c.b16 %v6030, %v6029
  %v6053 = vpack.c.b16 %v6032, %v6031
  %v6054 = vpack.c.b16 %v6034, %v6033
  %v6055 = vpack.c.b16 %v6036, %v6035
  %v6056 = vpack.c.b16 %v6038, %v6037
  %v6057 = vpack.c.b16 %v6040, %v6039
  %v6058 = vpack.c.b16 %v6042, %v6041
  %v6075 = vunpack.c.l.b16 %v5005
  %v6076 = vunpack.c.l.b16 %v5008
  %v6077 = vunpack.c.l.b16 %v5012
  %v6078 = vunpack.c.l.b16 %v5015
  %v6079 = vunpack.c.l.b16 %v5019
  %v6080 = vunpack.c.l.b16 %v5022
  %v6081 = vunpack.c.l.b16 %v5026
  %v6082 = vunpack.c.l.b16 %v5029
  %v6083 = vunpack.c.l.b16 %v5033
  %v6084 = vunpack.c.l.b16 %v5036
  %v6085 = vunpack.c.l.b16 %v5040
  %v6086 = vunpack.c.l.b16 %v5043
  %v6087 = vunpack.c.l.b16 %v5047
  %v6088 = vunpack.c.l.b16 %v5050
  %v6089 = vunpack.c.l.b16 %v5054
  %v6090 = vunpack.c.l.b16 %v5057
  %v6091 = vunpack.c.l.b16 %v5061
  %v6092 = vunpack.c.l.b16 %v5064
  %v6093 = vunpack.c.l.b16 %v5068
  %v6094 = vunpack.c.l.b16 %v5071
  %v6095 = vunpack.c.l.b16 %v5075
  %v6096 = vunpack.c.l.b16 %v5078
  %v6097 = vunpack.c.l.b16 %v5082
  %v6098 = vunpack.c.l.b16 %v5085
  %v6099 = vunpack.c.l.b16 %v5089
  %v6100 = vunpack.c.l.b16 %v5092
  %v6101 = vunpack.c.l.b16 %v5096
  %v6102 = vunpack.c.l.b16 %v5099
  %v6103 = vunpack.c.l.b16 %v5103
  %v6104 = vunpack.c.l.b16 %v5106
  %v6105 = vunpack.c.l.b16 %v5110
  %v6106 = vunpack.c.l.b16 %v5113
  %v6107 = vpack.c.b16 %v6076, %v6075
  %v6108 = vpack.c.b16 %v6078, %v6077
  %v6109 = vpack.c.b16 %v6080, %v6079
  %v6110 = vpack.c.b16 %v6082, %v6081
  %v6111 = vpack.c.b16 %v6084, %v6083
  %v6112 = vpack.c.b16 %v6086, %v6085
  %v6113 = vpack.c.b16 %v6088, %v6087
  %v6114 = vpack.c.b16 %v6090, %v6089
  %v6115 = vpack.c.b16 %v6092, %v6091
  %v6116 = vpack.c.b16 %v6094, %v6093
  %v6117 = vpack.c.b16 %v6096, %v6095
  %v6118 = vpack.c.b16 %v6098, %v6097
  %v6119 = vpack.c.b16 %v6100, %v6099
  %v6120 = vpack.c.b16 %v6102, %v6101
  %v6121 = vpack.c.b16 %v6104, %v6103
  %v6122 = vpack.c.b16 %v6106, %v6105
  %v6155 = vunpack.c.l.b16 %v5115
  %v6156 = vunpack.c.l.b16 %v5116
  %v6157 = vunpack.c.l.b16 %v5117
  %v6158 = vunpack.c.l.b16 %v5118
  %v6159 = vunpack.c.l.b16 %v5119
  %v6160 = vunpack.c.l.b16 %v5120
  %v6161 = vunpack.c.l.b16 %v5121
  %v6162 = vunpack.c.l.b16 %v5122
  %v6163 = vunpack.c.l.b16 %v5123
  %v6164 = vunpack.c.l.b16 %v5124
  %v6165 = vunpack.c.l.b16 %v5125
  %v6166 = vunpack.c.l.b16 %v5126
  %v6167 = vunpack.c.l.b16 %v5127
  %v6168 = vunpack.c.l.b16 %v5128
  %v6169 = vunpack.c.l.b16 %v5129
  %v6170 = vunpack.c.l.b16 %v5130
  %v6171 = vunpack.c.l.b16 %v5131
  %v6172 = vunpack.c.l.b16 %v5132
  %v6173 = vunpack.c.l.b16 %v5133
  %v6174 = vunpack.c.l.b16 %v5134
  %v6175 = vunpack.c.l.b16 %v5135
  %v6176 = vunpack.c.l.b16 %v5136
  %v6177 = vunpack.c.l.b16 %v5137
  %v6178 = vunpack.c.l.b16 %v5138
  %v6179 = vunpack.c.l.b16 %v5139
  %v6180 = vunpack.c.l.b16 %v5140
  %v6181 = vunpack.c.l.b16 %v5141
  %v6182 = vunpack.c.l.b16 %v5142
  %v6183 = vunpack.c.l.b16 %v5143
  %v6184 = vunpack.c.l.b16 %v5144
  %v6185 = vunpack.c.l.b16 %v5145
  %v6186 = vunpack.c.l.b16 %v5146
  %v6187 = vpack.c.b16 %v6156, %v6155
  %v6188 = vpack.c.b16 %v6158, %v6157
  %v6189 = vpack.c.b16 %v6160, %v6159
  %v6190 = vpack.c.b16 %v6162, %v6161
  %v6191 = vpack.c.b16 %v6164, %v6163
  %v6192 = vpack.c.b16 %v6166, %v6165
  %v6193 = vpack.c.b16 %v6168, %v6167
  %v6194 = vpack.c.b16 %v6170, %v6169
  %v6195 = vpack.c.b16 %v6172, %v6171
  %v6196 = vpack.c.b16 %v6174, %v6173
  %v6197 = vpack.c.b16 %v6176, %v6175
  %v6198 = vpack.c.b16 %v6178, %v6177
  %v6199 = vpack.c.b16 %v6180, %v6179
  %v6200 = vpack.c.b16 %v6182, %v6181
  %v6201 = vpack.c.b16 %v6184, %v6183
  %v6202 = vpack.c.b16 %v6186, %v6185
  %v6219 = vunpack.c.l.b16 %v5176
  %v6220 = vunpack.c.l.b16 %v5186
  %v6221 = vunpack.c.l.b16 %v5200
  %v6222 = vunpack.c.l.b16 %v5210
  %v6223 = vunpack.c.l.b16 %v5224
  %v6224 = vunpack.c.l.b16 %v5234
  %v6225 = vunpack.c.l.b16 %v5248
  %v6226 = vunpack.c.l.b16 %v5258
  %v6227 = vunpack.c.l.b16 %v5272
  %v6228 = vunpack.c.l.b16 %v5282
  %v6229 = vunpack.c.l.b16 %v5296
  %v6230 = vunpack.c.l.b16 %v5306
  %v6231 = vunpack.c.l.b16 %v5320
  %v6232 = vunpack.c.l.b16 %v5330
  %v6233 = vunpack.c.l.b16 %v5344
  %v6234 = vunpack.c.l.b16 %v5354
  %v6235 = vunpack.c.l.b16 %v5368
  %v6236 = vunpack.c.l.b16 %v5378
  %v6237 = vunpack.c.l.b16 %v5392
  %v6238 = vunpack.c.l.b16 %v5402
  %v6239 = vunpack.c.l.b16 %v5416
  %v6240 = vunpack.c.l.b16 %v5426
  %v6241 = vunpack.c.l.b16 %v5440
  %v6242 = vunpack.c.l.b16 %v5450
  %v6243 = vunpack.c.l.b16 %v5464
  %v6244 = vunpack.c.l.b16 %v5474
  %v6245 = vunpack.c.l.b16 %v5488
  %v6246 = vunpack.c.l.b16 %v5498
  %v6247 = vunpack.c.l.b16 %v5512
  %v6248 = vunpack.c.l.b16 %v5522
  %v6249 = vunpack.c.l.b16 %v5536
  %v6250 = vunpack.c.l.b16 %v5546
  %v6251 = vpack.c.b16 %v6220, %v6219
  %v6252 = vpack.c.b16 %v6222, %v6221
  %v6253 = vpack.c.b16 %v6224, %v6223
  %v6254 = vpack.c.b16 %v6226, %v6225
  %v6255 = vpack.c.b16 %v6228, %v6227
  %v6256 = vpack.c.b16 %v6230, %v6229
  %v6257 = vpack.c.b16 %v6232, %v6231
  %v6258 = vpack.c.b16 %v6234, %v6233
  %v6259 = vpack.c.b16 %v6236, %v6235
  %v6260 = vpack.c.b16 %v6238, %v6237
  %v6261 = vpack.c.b16 %v6240, %v6239
  %v6262 = vpack.c.b16 %v6242, %v6241
  %v6263 = vpack.c.b16 %v6244, %v6243
  %v6264 = vpack.c.b16 %v6246, %v6245
  %v6265 = vpack.c.b16 %v6248, %v6247
  %v6266 = vpack.c.b16 %v6250, %v6249
  %v6283 = vunpack.c.l.b16 %v5614
  %v6284 = vunpack.c.l.b16 %v5617
  %v6285 = vunpack.c.l.b16 %v5621
  %v6286 = vunpack.c.l.b16 %v5624
  %v6287 = vunpack.c.l.b16 %v5628
  %v6288 = vunpack.c.l.b16 %v5631
  %v6289 = vunpack.c.l.b16 %v5635
  %v6290 = vunpack.c.l.b16 %v5638
  %v6291 = vunpack.c.l.b16 %v5642
  %v6292 = vunpack.c.l.b16 %v5645
  %v6293 = vunpack.c.l.b16 %v5649
  %v6294 = vunpack.c.l.b16 %v5652
  %v6295 = vunpack.c.l.b16 %v5656
  %v6296 = vunpack.c.l.b16 %v5659
  %v6297 = vunpack.c.l.b16 %v5663
  %v6298 = vunpack.c.l.b16 %v5666
  %v6299 = vunpack.c.l.b16 %v5670
  %v6300 = vunpack.c.l.b16 %v5673
  %v6301 = vunpack.c.l.b16 %v5677
  %v6302 = vunpack.c.l.b16 %v5680
  %v6303 = vunpack.c.l.b16 %v5684
  %v6304 = vunpack.c.l.b16 %v5687
  %v6305 = vunpack.c.l.b16 %v5691
  %v6306 = vunpack.c.l.b16 %v5694
  %v6307 = vunpack.c.l.b16 %v5698
  %v6308 = vunpack.c.l.b16 %v5701
  %v6309 = vunpack.c.l.b16 %v5705
  %v6310 = vunpack.c.l.b16 %v5708
  %v6311 = vunpack.c.l.b16 %v5712
  %v6312 = vunpack.c.l.b16 %v5715
  %v6313 = vunpack.c.l.b16 %v5719
  %v6314 = vunpack.c.l.b16 %v5722
  %v6315 = vpack.c.b16 %v6284, %v6283
  %v6316 = vpack.c.b16 %v6286, %v6285
  %v6317 = vpack.c.b16 %v6288, %v6287
  %v6318 = vpack.c.b16 %v6290, %v6289
  %v6319 = vpack.c.b16 %v6292, %v6291
  %v6320 = vpack.c.b16 %v6294, %v6293
  %v6321 = vpack.c.b16 %v6296, %v6295
  %v6322 = vpack.c.b16 %v6298, %v6297
  %v6323 = vpack.c.b16 %v6300, %v6299
  %v6324 = vpack.c.b16 %v6302, %v6301
  %v6325 = vpack.c.b16 %v6304, %v6303
  %v6326 = vpack.c.b16 %v6306, %v6305
  %v6327 = vpack.c.b16 %v6308, %v6307
  %v6328 = vpack.c.b16 %v6310, %v6309
  %v6329 = vpack.c.b16 %v6312, %v6311
  %v6330 = vpack.c.b16 %v6314, %v6313
  %6347 = vmatprep.subr.bf16.mxu0 0
  %6348 = vmatpush1.bf16.msra.mxu0 %v2922
  %6349 = vmatprep.subr.bf16.mxu0 0
  %6350 = vmatpush1.bf16.msra.mxu0 %v2921
  %6351 = vmatprep.subr.bf16.mxu0 0
  %6352 = vmatpush1.bf16.msra.mxu0 %v2920
  %6353 = vmatprep.subr.bf16.mxu0 0
  %6354 = vmatpush1.bf16.msra.mxu0 %v2919
  %6355 = vmatprep.subr.bf16.mxu0 0
  %6356 = vmatpush1.bf16.msra.mxu0 %v2918
  %6357 = vmatprep.subr.bf16.mxu0 0
  %6358 = vmatpush1.bf16.msra.mxu0 %v2917
  %6359 = vmatprep.subr.bf16.mxu0 0
  %6360 = vmatpush1.bf16.msra.mxu0 %v2916
  %6361 = vmatprep.subr.bf16.mxu0 0
  %6362 = vmatpush1.bf16.msra.mxu0 %v2915
  %6363 = vmatprep.subr.bf16.mxu0 0
  %6364 = vmatpush2.bf16.msra.mxu0 %v2930
  %6365 = vmatprep.subr.bf16.mxu0 0
  %6366 = vmatpush2.bf16.msra.mxu0 %v2929
  %6367 = vmatprep.subr.bf16.mxu0 0
  %6368 = vmatpush2.bf16.msra.mxu0 %v2928
  %6369 = vmatprep.subr.bf16.mxu0 0
  %6370 = vmatpush2.bf16.msra.mxu0 %v2927
  %6371 = vmatprep.subr.bf16.mxu0 0
  %6372 = vmatpush2.bf16.msra.mxu0 %v2926
  %6373 = vmatprep.subr.bf16.mxu0 0
  %6374 = vmatpush2.bf16.msra.mxu0 %v2925
  %6375 = vmatprep.subr.bf16.mxu0 0
  %6376 = vmatpush2.bf16.msra.mxu0 %v2924
  %6377 = vmatprep.subr.bf16.mxu0 0
  %6378 = vmatpush2.bf16.msra.mxu0 %v2923
  %6379 = vmatprep.mubr.bf16.mxu0 %v5835
  %6380 = vmatmul.mubr.bf16.gmra.mxu0 %v5771
  %v6381 = vpop.f32.mrf.mxu0
  %v6382 = vadd.f32 0.0, %v6381
  %v6383 = vpop.f32.mrf.mxu0
  %v6384 = vpop.f32.mrf.mxu0
  %v6385 = vadd.f32 0.0, %v6384
  %v6386 = vpop.f32.mrf.mxu0
  %6387 = vmatprep.mubr.bf16.mxu0 %v5836
  %6388 = vmatmul.mubr.bf16.gmra.mxu0 %v5772
  %v6389 = vpop.f32.mrf.mxu0
  %v6390 = vadd.f32 0.0, %v6389
  %v6391 = vpop.f32.mrf.mxu0
  %v6392 = vpop.f32.mrf.mxu0
  %v6393 = vadd.f32 0.0, %v6392
  %v6394 = vpop.f32.mrf.mxu0
  %6395 = vmatprep.mubr.bf16.mxu0 %v5837
  %6396 = vmatmul.mubr.bf16.gmra.mxu0 %v5773
  %v6397 = vpop.f32.mrf.mxu0
  %v6398 = vadd.f32 0.0, %v6397
  %v6399 = vpop.f32.mrf.mxu0
  %v6400 = vpop.f32.mrf.mxu0
  %v6401 = vadd.f32 0.0, %v6400
  %v6402 = vpop.f32.mrf.mxu0
  %6403 = vmatprep.mubr.bf16.mxu0 %v5838
  %6404 = vmatmul.mubr.bf16.gmra.mxu0 %v5774
  %v6405 = vpop.f32.mrf.mxu0
  %v6406 = vadd.f32 0.0, %v6405
  %v6407 = vpop.f32.mrf.mxu0
  %v6408 = vpop.f32.mrf.mxu0
  %v6409 = vadd.f32 0.0, %v6408
  %v6410 = vpop.f32.mrf.mxu0
  %6411 = vmatprep.mubr.bf16.mxu0 %v5839
  %6412 = vmatmul.mubr.bf16.gmra.mxu0 %v5775
  %v6413 = vpop.f32.mrf.mxu0
  %v6414 = vadd.f32 0.0, %v6413
  %v6415 = vpop.f32.mrf.mxu0
  %v6416 = vpop.f32.mrf.mxu0
  %v6417 = vadd.f32 0.0, %v6416
  %v6418 = vpop.f32.mrf.mxu0
  %6419 = vmatprep.mubr.bf16.mxu0 %v5840
  %6420 = vmatmul.mubr.bf16.gmra.mxu0 %v5776
  %v6421 = vpop.f32.mrf.mxu0
  %v6422 = vadd.f32 0.0, %v6421
  %v6423 = vpop.f32.mrf.mxu0
  %v6424 = vpop.f32.mrf.mxu0
  %v6425 = vadd.f32 0.0, %v6424
  %v6426 = vpop.f32.mrf.mxu0
  %6427 = vmatprep.mubr.bf16.mxu0 %v5841
  %6428 = vmatmul.mubr.bf16.gmra.mxu0 %v5777
  %v6429 = vpop.f32.mrf.mxu0
  %v6430 = vadd.f32 0.0, %v6429
  %v6431 = vpop.f32.mrf.mxu0
  %v6432 = vpop.f32.mrf.mxu0
  %v6433 = vadd.f32 0.0, %v6432
  %v6434 = vpop.f32.mrf.mxu0
  %6435 = vmatprep.mubr.bf16.mxu0 %v5842
  %6436 = vmatmul.mubr.bf16.gmra.mxu0 %v5778
  %v6437 = vpop.f32.mrf.mxu0
  %v6438 = vadd.f32 0.0, %v6437
  %v6439 = vpop.f32.mrf.mxu0
  %v6440 = vpop.f32.mrf.mxu0
  %v6441 = vadd.f32 0.0, %v6440
  %v6442 = vpop.f32.mrf.mxu0
  %6443 = vmatprep.mubr.bf16.mxu0 %v5843
  %6444 = vmatmul.mubr.bf16.gmra.mxu0 %v5779
  %v6445 = vpop.f32.mrf.mxu0
  %v6446 = vadd.f32 0.0, %v6445
  %v6447 = vpop.f32.mrf.mxu0
  %v6448 = vpop.f32.mrf.mxu0
  %v6449 = vadd.f32 0.0, %v6448
  %v6450 = vpop.f32.mrf.mxu0
  %6451 = vmatprep.mubr.bf16.mxu0 %v5844
  %6452 = vmatmul.mubr.bf16.gmra.mxu0 %v5780
  %v6453 = vpop.f32.mrf.mxu0
  %v6454 = vadd.f32 0.0, %v6453
  %v6455 = vpop.f32.mrf.mxu0
  %v6456 = vpop.f32.mrf.mxu0
  %v6457 = vadd.f32 0.0, %v6456
  %v6458 = vpop.f32.mrf.mxu0
  %6459 = vmatprep.mubr.bf16.mxu0 %v5845
  %6460 = vmatmul.mubr.bf16.gmra.mxu0 %v5781
  %v6461 = vpop.f32.mrf.mxu0
  %v6462 = vadd.f32 0.0, %v6461
  %v6463 = vpop.f32.mrf.mxu0
  %v6464 = vpop.f32.mrf.mxu0
  %v6465 = vadd.f32 0.0, %v6464
  %v6466 = vpop.f32.mrf.mxu0
  %6467 = vmatprep.mubr.bf16.mxu0 %v5846
  %6468 = vmatmul.mubr.bf16.gmra.mxu0 %v5782
  %v6469 = vpop.f32.mrf.mxu0
  %v6470 = vadd.f32 0.0, %v6469
  %v6471 = vpop.f32.mrf.mxu0
  %v6472 = vpop.f32.mrf.mxu0
  %v6473 = vadd.f32 0.0, %v6472
  %v6474 = vpop.f32.mrf.mxu0
  %6475 = vmatprep.mubr.bf16.mxu0 %v5847
  %6476 = vmatmul.mubr.bf16.gmra.mxu0 %v5783
  %v6477 = vpop.f32.mrf.mxu0
  %v6478 = vadd.f32 0.0, %v6477
  %v6479 = vpop.f32.mrf.mxu0
  %v6480 = vpop.f32.mrf.mxu0
  %v6481 = vadd.f32 0.0, %v6480
  %v6482 = vpop.f32.mrf.mxu0
  %6483 = vmatprep.mubr.bf16.mxu0 %v5848
  %6484 = vmatmul.mubr.bf16.gmra.mxu0 %v5784
  %v6485 = vpop.f32.mrf.mxu0
  %v6486 = vadd.f32 0.0, %v6485
  %v6487 = vpop.f32.mrf.mxu0
  %v6488 = vpop.f32.mrf.mxu0
  %v6489 = vadd.f32 0.0, %v6488
  %v6490 = vpop.f32.mrf.mxu0
  %6491 = vmatprep.mubr.bf16.mxu0 %v5849
  %6492 = vmatmul.mubr.bf16.gmra.mxu0 %v5785
  %v6493 = vpop.f32.mrf.mxu0
  %v6494 = vadd.f32 0.0, %v6493
  %v6495 = vpop.f32.mrf.mxu0
  %v6496 = vpop.f32.mrf.mxu0
  %v6497 = vadd.f32 0.0, %v6496
  %v6498 = vpop.f32.mrf.mxu0
  %6499 = vmatprep.mubr.bf16.mxu0 %v5850
  %6500 = vmatmul.mubr.bf16.gmra.mxu0 %v5786
  %v6501 = vpop.f32.mrf.mxu0
  %v6502 = vadd.f32 0.0, %v6501
  %v6503 = vpop.f32.mrf.mxu0
  %v6504 = vpop.f32.mrf.mxu0
  %v6505 = vadd.f32 0.0, %v6504
  %v6506 = vpop.f32.mrf.mxu0
  %6507 = vdwg.mxu0
  %6508 = vmatprep.subr.bf16.mxu0 0
  %6509 = vmatpush1.bf16.msra.mxu0 %v2938
  %6510 = vmatprep.subr.bf16.mxu0 0
  %6511 = vmatpush1.bf16.msra.mxu0 %v2937
  %6512 = vmatprep.subr.bf16.mxu0 0
  %6513 = vmatpush1.bf16.msra.mxu0 %v2936
  %6514 = vmatprep.subr.bf16.mxu0 0
  %6515 = vmatpush1.bf16.msra.mxu0 %v2935
  %6516 = vmatprep.subr.bf16.mxu0 0
  %6517 = vmatpush1.bf16.msra.mxu0 %v2934
  %6518 = vmatprep.subr.bf16.mxu0 0
  %6519 = vmatpush1.bf16.msra.mxu0 %v2933
  %6520 = vmatprep.subr.bf16.mxu0 0
  %6521 = vmatpush1.bf16.msra.mxu0 %v2932
  %6522 = vmatprep.subr.bf16.mxu0 0
  %6523 = vmatpush1.bf16.msra.mxu0 %v2931
  %6524 = vmatprep.subr.bf16.mxu0 0
  %6525 = vmatpush2.bf16.msra.mxu0 %v2946
  %6526 = vmatprep.subr.bf16.mxu0 0
  %6527 = vmatpush2.bf16.msra.mxu0 %v2945
  %6528 = vmatprep.subr.bf16.mxu0 0
  %6529 = vmatpush2.bf16.msra.mxu0 %v2944
  %6530 = vmatprep.subr.bf16.mxu0 0
  %6531 = vmatpush2.bf16.msra.mxu0 %v2943
  %6532 = vmatprep.subr.bf16.mxu0 0
  %6533 = vmatpush2.bf16.msra.mxu0 %v2942
  %6534 = vmatprep.subr.bf16.mxu0 0
  %6535 = vmatpush2.bf16.msra.mxu0 %v2941
  %6536 = vmatprep.subr.bf16.mxu0 0
  %6537 = vmatpush2.bf16.msra.mxu0 %v2940
  %6538 = vmatprep.subr.bf16.mxu0 0
  %6539 = vmatpush2.bf16.msra.mxu0 %v2939
  %6540 = vmatprep.mubr.bf16.mxu0 %v5979
  %6541 = vmatmul.mubr.bf16.gmra.mxu0 %v5899
  %v6542 = vpop.f32.mrf.mxu0
  %v6543 = vadd.f32 %v6382, %v6542
  %v6544 = vpop.f32.mrf.mxu0
  %v6545 = vpop.f32.mrf.mxu0
  %v6546 = vadd.f32 %v6385, %v6545
  %v6547 = vpop.f32.mrf.mxu0
  %6548 = vmatprep.mubr.bf16.mxu0 %v5980
  %6549 = vmatmul.mubr.bf16.gmra.mxu0 %v5900
  %v6550 = vpop.f32.mrf.mxu0
  %v6551 = vadd.f32 %v6390, %v6550
  %v6552 = vpop.f32.mrf.mxu0
  %v6553 = vpop.f32.mrf.mxu0
  %v6554 = vadd.f32 %v6393, %v6553
  %v6555 = vpop.f32.mrf.mxu0
  %6556 = vmatprep.mubr.bf16.mxu0 %v5981
  %6557 = vmatmul.mubr.bf16.gmra.mxu0 %v5901
  %v6558 = vpop.f32.mrf.mxu0
  %v6559 = vadd.f32 %v6398, %v6558
  %v6560 = vpop.f32.mrf.mxu0
  %v6561 = vpop.f32.mrf.mxu0
  %v6562 = vadd.f32 %v6401, %v6561
  %v6563 = vpop.f32.mrf.mxu0
  %6564 = vmatprep.mubr.bf16.mxu0 %v5982
  %6565 = vmatmul.mubr.bf16.gmra.mxu0 %v5902
  %v6566 = vpop.f32.mrf.mxu0
  %v6567 = vadd.f32 %v6406, %v6566
  %v6568 = vpop.f32.mrf.mxu0
  %v6569 = vpop.f32.mrf.mxu0
  %v6570 = vadd.f32 %v6409, %v6569
  %v6571 = vpop.f32.mrf.mxu0
  %6572 = vmatprep.mubr.bf16.mxu0 %v5983
  %6573 = vmatmul.mubr.bf16.gmra.mxu0 %v5903
  %v6574 = vpop.f32.mrf.mxu0
  %v6575 = vadd.f32 %v6414, %v6574
  %v6576 = vpop.f32.mrf.mxu0
  %v6577 = vpop.f32.mrf.mxu0
  %v6578 = vadd.f32 %v6417, %v6577
  %v6579 = vpop.f32.mrf.mxu0
  %6580 = vmatprep.mubr.bf16.mxu0 %v5984
  %6581 = vmatmul.mubr.bf16.gmra.mxu0 %v5904
  %v6582 = vpop.f32.mrf.mxu0
  %v6583 = vadd.f32 %v6422, %v6582
  %v6584 = vpop.f32.mrf.mxu0
  %v6585 = vpop.f32.mrf.mxu0
  %v6586 = vadd.f32 %v6425, %v6585
  %v6587 = vpop.f32.mrf.mxu0
  %6588 = vmatprep.mubr.bf16.mxu0 %v5985
  %6589 = vmatmul.mubr.bf16.gmra.mxu0 %v5905
  %v6590 = vpop.f32.mrf.mxu0
  %v6591 = vadd.f32 %v6430, %v6590
  %v6592 = vpop.f32.mrf.mxu0
  %v6593 = vpop.f32.mrf.mxu0
  %v6594 = vadd.f32 %v6433, %v6593
  %v6595 = vpop.f32.mrf.mxu0
  %6596 = vmatprep.mubr.bf16.mxu0 %v5986
  %6597 = vmatmul.mubr.bf16.gmra.mxu0 %v5906
  %v6598 = vpop.f32.mrf.mxu0
  %v6599 = vadd.f32 %v6438, %v6598
  %v6600 = vpop.f32.mrf.mxu0
  %v6601 = vpop.f32.mrf.mxu0
  %v6602 = vadd.f32 %v6441, %v6601
  %v6603 = vpop.f32.mrf.mxu0
  %6604 = vmatprep.mubr.bf16.mxu0 %v5987
  %6605 = vmatmul.mubr.bf16.gmra.mxu0 %v5907
  %v6606 = vpop.f32.mrf.mxu0
  %v6607 = vadd.f32 %v6446, %v6606
  %v6608 = vpop.f32.mrf.mxu0
  %v6609 = vpop.f32.mrf.mxu0
  %v6610 = vadd.f32 %v6449, %v6609
  %v6611 = vpop.f32.mrf.mxu0
  %6612 = vmatprep.mubr.bf16.mxu0 %v5988
  %6613 = vmatmul.mubr.bf16.gmra.mxu0 %v5908
  %v6614 = vpop.f32.mrf.mxu0
  %v6615 = vadd.f32 %v6454, %v6614
  %v6616 = vpop.f32.mrf.mxu0
  %v6617 = vpop.f32.mrf.mxu0
  %v6618 = vadd.f32 %v6457, %v6617
  %v6619 = vpop.f32.mrf.mxu0
  %6620 = vmatprep.mubr.bf16.mxu0 %v5989
  %6621 = vmatmul.mubr.bf16.gmra.mxu0 %v5909
  %v6622 = vpop.f32.mrf.mxu0
  %v6623 = vadd.f32 %v6462, %v6622
  %v6624 = vpop.f32.mrf.mxu0
  %v6625 = vpop.f32.mrf.mxu0
  %v6626 = vadd.f32 %v6465, %v6625
  %v6627 = vpop.f32.mrf.mxu0
  %6628 = vmatprep.mubr.bf16.mxu0 %v5990
  %6629 = vmatmul.mubr.bf16.gmra.mxu0 %v5910
  %v6630 = vpop.f32.mrf.mxu0
  %v6631 = vadd.f32 %v6470, %v6630
  %v6632 = vpop.f32.mrf.mxu0
  %v6633 = vpop.f32.mrf.mxu0
  %v6634 = vadd.f32 %v6473, %v6633
  %v6635 = vpop.f32.mrf.mxu0
  %6636 = vmatprep.mubr.bf16.mxu0 %v5991
  %6637 = vmatmul.mubr.bf16.gmra.mxu0 %v5911
  %v6638 = vpop.f32.mrf.mxu0
  %v6639 = vadd.f32 %v6478, %v6638
  %v6640 = vpop.f32.mrf.mxu0
  %v6641 = vpop.f32.mrf.mxu0
  %v6642 = vadd.f32 %v6481, %v6641
  %v6643 = vpop.f32.mrf.mxu0
  %6644 = vmatprep.mubr.bf16.mxu0 %v5992
  %6645 = vmatmul.mubr.bf16.gmra.mxu0 %v5912
  %v6646 = vpop.f32.mrf.mxu0
  %v6647 = vadd.f32 %v6486, %v6646
  %v6648 = vpop.f32.mrf.mxu0
  %v6649 = vpop.f32.mrf.mxu0
  %v6650 = vadd.f32 %v6489, %v6649
  %v6651 = vpop.f32.mrf.mxu0
  %6652 = vmatprep.mubr.bf16.mxu0 %v5993
  %6653 = vmatmul.mubr.bf16.gmra.mxu0 %v5913
  %v6654 = vpop.f32.mrf.mxu0
  %v6655 = vadd.f32 %v6494, %v6654
  %v6656 = vpop.f32.mrf.mxu0
  %v6657 = vpop.f32.mrf.mxu0
  %v6658 = vadd.f32 %v6497, %v6657
  %v6659 = vpop.f32.mrf.mxu0
  %6660 = vmatprep.mubr.bf16.mxu0 %v5994
  %6661 = vmatmul.mubr.bf16.gmra.mxu0 %v5914
  %v6662 = vpop.f32.mrf.mxu0
  %v6663 = vadd.f32 %v6502, %v6662
  %v6664 = vpop.f32.mrf.mxu0
  %v6665 = vpop.f32.mrf.mxu0
  %v6666 = vadd.f32 %v6505, %v6665
  %v6667 = vpop.f32.mrf.mxu0
  %6668 = vdwg.mxu0
  %6669 = vmatprep.subr.bf16.mxu0 0
  %6670 = vmatpush1.bf16.msra.mxu0 %v2954
  %6671 = vmatprep.subr.bf16.mxu0 0
  %6672 = vmatpush1.bf16.msra.mxu0 %v2953
  %6673 = vmatprep.subr.bf16.mxu0 0
  %6674 = vmatpush1.bf16.msra.mxu0 %v2952
  %6675 = vmatprep.subr.bf16.mxu0 0
  %6676 = vmatpush1.bf16.msra.mxu0 %v2951
  %6677 = vmatprep.subr.bf16.mxu0 0
  %6678 = vmatpush1.bf16.msra.mxu0 %v2950
  %6679 = vmatprep.subr.bf16.mxu0 0
  %6680 = vmatpush1.bf16.msra.mxu0 %v2949
  %6681 = vmatprep.subr.bf16.mxu0 0
  %6682 = vmatpush1.bf16.msra.mxu0 %v2948
  %6683 = vmatprep.subr.bf16.mxu0 0
  %6684 = vmatpush1.bf16.msra.mxu0 %v2947
  %6685 = vmatprep.subr.bf16.mxu0 0
  %6686 = vmatpush2.bf16.msra.mxu0 %v2962
  %6687 = vmatprep.subr.bf16.mxu0 0
  %6688 = vmatpush2.bf16.msra.mxu0 %v2961
  %6689 = vmatprep.subr.bf16.mxu0 0
  %6690 = vmatpush2.bf16.msra.mxu0 %v2960
  %6691 = vmatprep.subr.bf16.mxu0 0
  %6692 = vmatpush2.bf16.msra.mxu0 %v2959
  %6693 = vmatprep.subr.bf16.mxu0 0
  %6694 = vmatpush2.bf16.msra.mxu0 %v2958
  %6695 = vmatprep.subr.bf16.mxu0 0
  %6696 = vmatpush2.bf16.msra.mxu0 %v2957
  %6697 = vmatprep.subr.bf16.mxu0 0
  %6698 = vmatpush2.bf16.msra.mxu0 %v2956
  %6699 = vmatprep.subr.bf16.mxu0 0
  %6700 = vmatpush2.bf16.msra.mxu0 %v2955
  %6701 = vmatprep.mubr.bf16.mxu0 %v6107
  %6702 = vmatmul.mubr.bf16.gmra.mxu0 %v6043
  %v6703 = vpop.f32.mrf.mxu0
  %v6704 = vadd.f32 %v6543, %v6703
  %v6705 = vpop.f32.mrf.mxu0
  %v6706 = vpop.f32.mrf.mxu0
  %v6707 = vadd.f32 %v6546, %v6706
  %v6708 = vpop.f32.mrf.mxu0
  %6709 = vmatprep.mubr.bf16.mxu0 %v6108
  %6710 = vmatmul.mubr.bf16.gmra.mxu0 %v6044
  %v6711 = vpop.f32.mrf.mxu0
  %v6712 = vadd.f32 %v6551, %v6711
  %v6713 = vpop.f32.mrf.mxu0
  %v6714 = vpop.f32.mrf.mxu0
  %v6715 = vadd.f32 %v6554, %v6714
  %v6716 = vpop.f32.mrf.mxu0
  %6717 = vmatprep.mubr.bf16.mxu0 %v6109
  %6718 = vmatmul.mubr.bf16.gmra.mxu0 %v6045
  %v6719 = vpop.f32.mrf.mxu0
  %v6720 = vadd.f32 %v6559, %v6719
  %v6721 = vpop.f32.mrf.mxu0
  %v6722 = vpop.f32.mrf.mxu0
  %v6723 = vadd.f32 %v6562, %v6722
  %v6724 = vpop.f32.mrf.mxu0
  %6725 = vmatprep.mubr.bf16.mxu0 %v6110
  %6726 = vmatmul.mubr.bf16.gmra.mxu0 %v6046
  %v6727 = vpop.f32.mrf.mxu0
  %v6728 = vadd.f32 %v6567, %v6727
  %v6729 = vpop.f32.mrf.mxu0
  %v6730 = vpop.f32.mrf.mxu0
  %v6731 = vadd.f32 %v6570, %v6730
  %v6732 = vpop.f32.mrf.mxu0
  %6733 = vmatprep.mubr.bf16.mxu0 %v6111
  %6734 = vmatmul.mubr.bf16.gmra.mxu0 %v6047
  %v6735 = vpop.f32.mrf.mxu0
  %v6736 = vadd.f32 %v6575, %v6735
  %v6737 = vpop.f32.mrf.mxu0
  %v6738 = vpop.f32.mrf.mxu0
  %v6739 = vadd.f32 %v6578, %v6738
  %v6740 = vpop.f32.mrf.mxu0
  %6741 = vmatprep.mubr.bf16.mxu0 %v6112
  %6742 = vmatmul.mubr.bf16.gmra.mxu0 %v6048
  %v6743 = vpop.f32.mrf.mxu0
  %v6744 = vadd.f32 %v6583, %v6743
  %v6745 = vpop.f32.mrf.mxu0
  %v6746 = vpop.f32.mrf.mxu0
  %v6747 = vadd.f32 %v6586, %v6746
  %v6748 = vpop.f32.mrf.mxu0
  %6749 = vmatprep.mubr.bf16.mxu0 %v6113
  %6750 = vmatmul.mubr.bf16.gmra.mxu0 %v6049
  %v6751 = vpop.f32.mrf.mxu0
  %v6752 = vadd.f32 %v6591, %v6751
  %v6753 = vpop.f32.mrf.mxu0
  %v6754 = vpop.f32.mrf.mxu0
  %v6755 = vadd.f32 %v6594, %v6754
  %v6756 = vpop.f32.mrf.mxu0
  %6757 = vmatprep.mubr.bf16.mxu0 %v6114
  %6758 = vmatmul.mubr.bf16.gmra.mxu0 %v6050
  %v6759 = vpop.f32.mrf.mxu0
  %v6760 = vadd.f32 %v6599, %v6759
  %v6761 = vpop.f32.mrf.mxu0
  %v6762 = vpop.f32.mrf.mxu0
  %v6763 = vadd.f32 %v6602, %v6762
  %v6764 = vpop.f32.mrf.mxu0
  %6765 = vmatprep.mubr.bf16.mxu0 %v6115
  %6766 = vmatmul.mubr.bf16.gmra.mxu0 %v6051
  %v6767 = vpop.f32.mrf.mxu0
  %v6768 = vadd.f32 %v6607, %v6767
  %v6769 = vpop.f32.mrf.mxu0
  %v6770 = vpop.f32.mrf.mxu0
  %v6771 = vadd.f32 %v6610, %v6770
  %v6772 = vpop.f32.mrf.mxu0
  %6773 = vmatprep.mubr.bf16.mxu0 %v6116
  %6774 = vmatmul.mubr.bf16.gmra.mxu0 %v6052
  %v6775 = vpop.f32.mrf.mxu0
  %v6776 = vadd.f32 %v6615, %v6775
  %v6777 = vpop.f32.mrf.mxu0
  %v6778 = vpop.f32.mrf.mxu0
  %v6779 = vadd.f32 %v6618, %v6778
  %v6780 = vpop.f32.mrf.mxu0
  %6781 = vmatprep.mubr.bf16.mxu0 %v6117
  %6782 = vmatmul.mubr.bf16.gmra.mxu0 %v6053
  %v6783 = vpop.f32.mrf.mxu0
  %v6784 = vadd.f32 %v6623, %v6783
  %v6785 = vpop.f32.mrf.mxu0
  %v6786 = vpop.f32.mrf.mxu0
  %v6787 = vadd.f32 %v6626, %v6786
  %v6788 = vpop.f32.mrf.mxu0
  %6789 = vmatprep.mubr.bf16.mxu0 %v6118
  %6790 = vmatmul.mubr.bf16.gmra.mxu0 %v6054
  %v6791 = vpop.f32.mrf.mxu0
  %v6792 = vadd.f32 %v6631, %v6791
  %v6793 = vpop.f32.mrf.mxu0
  %v6794 = vpop.f32.mrf.mxu0
  %v6795 = vadd.f32 %v6634, %v6794
  %v6796 = vpop.f32.mrf.mxu0
  %6797 = vmatprep.mubr.bf16.mxu0 %v6119
  %6798 = vmatmul.mubr.bf16.gmra.mxu0 %v6055
  %v6799 = vpop.f32.mrf.mxu0
  %v6800 = vadd.f32 %v6639, %v6799
  %v6801 = vpop.f32.mrf.mxu0
  %v6802 = vpop.f32.mrf.mxu0
  %v6803 = vadd.f32 %v6642, %v6802
  %v6804 = vpop.f32.mrf.mxu0
  %6805 = vmatprep.mubr.bf16.mxu0 %v6120
  %6806 = vmatmul.mubr.bf16.gmra.mxu0 %v6056
  %v6807 = vpop.f32.mrf.mxu0
  %v6808 = vadd.f32 %v6647, %v6807
  %v6809 = vpop.f32.mrf.mxu0
  %v6810 = vpop.f32.mrf.mxu0
  %v6811 = vadd.f32 %v6650, %v6810
  %v6812 = vpop.f32.mrf.mxu0
  %6813 = vmatprep.mubr.bf16.mxu0 %v6121
  %6814 = vmatmul.mubr.bf16.gmra.mxu0 %v6057
  %v6815 = vpop.f32.mrf.mxu0
  %v6816 = vadd.f32 %v6655, %v6815
  %v6817 = vpop.f32.mrf.mxu0
  %v6818 = vpop.f32.mrf.mxu0
  %v6819 = vadd.f32 %v6658, %v6818
  %v6820 = vpop.f32.mrf.mxu0
  %6821 = vmatprep.mubr.bf16.mxu0 %v6122
  %6822 = vmatmul.mubr.bf16.gmra.mxu0 %v6058
  %v6823 = vpop.f32.mrf.mxu0
  %v6824 = vadd.f32 %v6663, %v6823
  %v6825 = vpop.f32.mrf.mxu0
  %v6826 = vpop.f32.mrf.mxu0
  %v6827 = vadd.f32 %v6666, %v6826
  %v6828 = vpop.f32.mrf.mxu0
  %6829 = vdwg.mxu0
  %6830 = vmatprep.subr.bf16.mxu0 0
  %6831 = vmatpush1.bf16.msra.mxu0 %v2970
  %6832 = vmatprep.subr.bf16.mxu0 0
  %6833 = vmatpush1.bf16.msra.mxu0 %v2969
  %6834 = vmatprep.subr.bf16.mxu0 0
  %6835 = vmatpush1.bf16.msra.mxu0 %v2968
  %6836 = vmatprep.subr.bf16.mxu0 0
  %6837 = vmatpush1.bf16.msra.mxu0 %v2967
  %6838 = vmatprep.subr.bf16.mxu0 0
  %6839 = vmatpush1.bf16.msra.mxu0 %v2966
  %6840 = vmatprep.subr.bf16.mxu0 0
  %6841 = vmatpush1.bf16.msra.mxu0 %v2965
  %6842 = vmatprep.subr.bf16.mxu0 0
  %6843 = vmatpush1.bf16.msra.mxu0 %v2964
  %6844 = vmatprep.subr.bf16.mxu0 0
  %6845 = vmatpush1.bf16.msra.mxu0 %v2963
  %6846 = vmatprep.subr.bf16.mxu0 0
  %6847 = vmatpush2.bf16.msra.mxu0 %v2978
  %6848 = vmatprep.subr.bf16.mxu0 0
  %6849 = vmatpush2.bf16.msra.mxu0 %v2977
  %6850 = vmatprep.subr.bf16.mxu0 0
  %6851 = vmatpush2.bf16.msra.mxu0 %v2976
  %6852 = vmatprep.subr.bf16.mxu0 0
  %6853 = vmatpush2.bf16.msra.mxu0 %v2975
  %6854 = vmatprep.subr.bf16.mxu0 0
  %6855 = vmatpush2.bf16.msra.mxu0 %v2974
  %6856 = vmatprep.subr.bf16.mxu0 0
  %6857 = vmatpush2.bf16.msra.mxu0 %v2973
  %6858 = vmatprep.subr.bf16.mxu0 0
  %6859 = vmatpush2.bf16.msra.mxu0 %v2972
  %6860 = vmatprep.subr.bf16.mxu0 0
  %6861 = vmatpush2.bf16.msra.mxu0 %v2971
  %6862 = vmatprep.mubr.bf16.mxu0 %v6251
  %6863 = vmatmul.mubr.bf16.gmra.mxu0 %v6187
  %v6864 = vpop.f32.mrf.mxu0
  %v6865 = vadd.f32 %v6704, %v6864
  %v6866 = vpop.f32.mrf.mxu0
  %v6867 = vpop.f32.mrf.mxu0
  %v6868 = vadd.f32 %v6707, %v6867
  %v6869 = vpop.f32.mrf.mxu0
  %6870 = vmatprep.mubr.bf16.mxu0 %v6252
  %6871 = vmatmul.mubr.bf16.gmra.mxu0 %v6188
  %v6872 = vpop.f32.mrf.mxu0
  %v6873 = vadd.f32 %v6712, %v6872
  %v6874 = vpop.f32.mrf.mxu0
  %v6875 = vpop.f32.mrf.mxu0
  %v6876 = vadd.f32 %v6715, %v6875
  %v6877 = vpop.f32.mrf.mxu0
  %6878 = vmatprep.mubr.bf16.mxu0 %v6253
  %6879 = vmatmul.mubr.bf16.gmra.mxu0 %v6189
  %v6880 = vpop.f32.mrf.mxu0
  %v6881 = vadd.f32 %v6720, %v6880
  %v6882 = vpop.f32.mrf.mxu0
  %v6883 = vpop.f32.mrf.mxu0
  %v6884 = vadd.f32 %v6723, %v6883
  %v6885 = vpop.f32.mrf.mxu0
  %6886 = vmatprep.mubr.bf16.mxu0 %v6254
  %6887 = vmatmul.mubr.bf16.gmra.mxu0 %v6190
  %v6888 = vpop.f32.mrf.mxu0
  %v6889 = vadd.f32 %v6728, %v6888
  %v6890 = vpop.f32.mrf.mxu0
  %v6891 = vpop.f32.mrf.mxu0
  %v6892 = vadd.f32 %v6731, %v6891
  %v6893 = vpop.f32.mrf.mxu0
  %6894 = vmatprep.mubr.bf16.mxu0 %v6255
  %6895 = vmatmul.mubr.bf16.gmra.mxu0 %v6191
  %v6896 = vpop.f32.mrf.mxu0
  %v6897 = vadd.f32 %v6736, %v6896
  %v6898 = vpop.f32.mrf.mxu0
  %v6899 = vpop.f32.mrf.mxu0
  %v6900 = vadd.f32 %v6739, %v6899
  %v6901 = vpop.f32.mrf.mxu0
  %6902 = vmatprep.mubr.bf16.mxu0 %v6256
  %6903 = vmatmul.mubr.bf16.gmra.mxu0 %v6192
  %v6904 = vpop.f32.mrf.mxu0
  %v6905 = vadd.f32 %v6744, %v6904
  %v6906 = vpop.f32.mrf.mxu0
  %v6907 = vpop.f32.mrf.mxu0
  %v6908 = vadd.f32 %v6747, %v6907
  %v6909 = vpop.f32.mrf.mxu0
  %6910 = vmatprep.mubr.bf16.mxu0 %v6257
  %6911 = vmatmul.mubr.bf16.gmra.mxu0 %v6193
  %v6912 = vpop.f32.mrf.mxu0
  %v6913 = vadd.f32 %v6752, %v6912
  %v6914 = vpop.f32.mrf.mxu0
  %v6915 = vpop.f32.mrf.mxu0
  %v6916 = vadd.f32 %v6755, %v6915
  %v6917 = vpop.f32.mrf.mxu0
  %6918 = vmatprep.mubr.bf16.mxu0 %v6258
  %6919 = vmatmul.mubr.bf16.gmra.mxu0 %v6194
  %v6920 = vpop.f32.mrf.mxu0
  %v6921 = vadd.f32 %v6760, %v6920
  %v6922 = vpop.f32.mrf.mxu0
  %v6923 = vpop.f32.mrf.mxu0
  %v6924 = vadd.f32 %v6763, %v6923
  %v6925 = vpop.f32.mrf.mxu0
  %6926 = vmatprep.mubr.bf16.mxu0 %v6259
  %6927 = vmatmul.mubr.bf16.gmra.mxu0 %v6195
  %v6928 = vpop.f32.mrf.mxu0
  %v6929 = vadd.f32 %v6768, %v6928
  %v6930 = vpop.f32.mrf.mxu0
  %v6931 = vpop.f32.mrf.mxu0
  %v6932 = vadd.f32 %v6771, %v6931
  %v6933 = vpop.f32.mrf.mxu0
  %6934 = vmatprep.mubr.bf16.mxu0 %v6260
  %6935 = vmatmul.mubr.bf16.gmra.mxu0 %v6196
  %v6936 = vpop.f32.mrf.mxu0
  %v6937 = vadd.f32 %v6776, %v6936
  %v6938 = vpop.f32.mrf.mxu0
  %v6939 = vpop.f32.mrf.mxu0
  %v6940 = vadd.f32 %v6779, %v6939
  %v6941 = vpop.f32.mrf.mxu0
  %6942 = vmatprep.mubr.bf16.mxu0 %v6261
  %6943 = vmatmul.mubr.bf16.gmra.mxu0 %v6197
  %v6944 = vpop.f32.mrf.mxu0
  %v6945 = vadd.f32 %v6784, %v6944
  %v6946 = vpop.f32.mrf.mxu0
  %v6947 = vpop.f32.mrf.mxu0
  %v6948 = vadd.f32 %v6787, %v6947
  %v6949 = vpop.f32.mrf.mxu0
  %6950 = vmatprep.mubr.bf16.mxu0 %v6262
  %6951 = vmatmul.mubr.bf16.gmra.mxu0 %v6198
  %v6952 = vpop.f32.mrf.mxu0
  %v6953 = vadd.f32 %v6792, %v6952
  %v6954 = vpop.f32.mrf.mxu0
  %v6955 = vpop.f32.mrf.mxu0
  %v6956 = vadd.f32 %v6795, %v6955
  %v6957 = vpop.f32.mrf.mxu0
  %6958 = vmatprep.mubr.bf16.mxu0 %v6263
  %6959 = vmatmul.mubr.bf16.gmra.mxu0 %v6199
  %v6960 = vpop.f32.mrf.mxu0
  %v6961 = vadd.f32 %v6800, %v6960
  %v6962 = vpop.f32.mrf.mxu0
  %v6963 = vpop.f32.mrf.mxu0
  %v6964 = vadd.f32 %v6803, %v6963
  %v6965 = vpop.f32.mrf.mxu0
  %6966 = vmatprep.mubr.bf16.mxu0 %v6264
  %6967 = vmatmul.mubr.bf16.gmra.mxu0 %v6200
  %v6968 = vpop.f32.mrf.mxu0
  %v6969 = vadd.f32 %v6808, %v6968
  %v6970 = vpop.f32.mrf.mxu0
  %v6971 = vpop.f32.mrf.mxu0
  %v6972 = vadd.f32 %v6811, %v6971
  %v6973 = vpop.f32.mrf.mxu0
  %6974 = vmatprep.mubr.bf16.mxu0 %v6265
  %6975 = vmatmul.mubr.bf16.gmra.mxu0 %v6201
  %v6976 = vpop.f32.mrf.mxu0
  %v6977 = vadd.f32 %v6816, %v6976
  %v6978 = vpop.f32.mrf.mxu0
  %v6979 = vpop.f32.mrf.mxu0
  %v6980 = vadd.f32 %v6819, %v6979
  %v6981 = vpop.f32.mrf.mxu0
  %6982 = vmatprep.mubr.bf16.mxu0 %v6266
  %6983 = vmatmul.mubr.bf16.gmra.mxu0 %v6202
  %v6984 = vpop.f32.mrf.mxu0
  %v6985 = vadd.f32 %v6824, %v6984
  %v6986 = vpop.f32.mrf.mxu0
  %v6987 = vpop.f32.mrf.mxu0
  %v6988 = vadd.f32 %v6827, %v6987
  %v6989 = vpop.f32.mrf.mxu0
  %6990 = vdwg.mxu0
  %6991 = vmatprep.subr.bf16.mxu0 0
  %6992 = vmatpush1.bf16.msra.mxu0 %v2986
  %6993 = vmatprep.subr.bf16.mxu0 0
  %6994 = vmatpush1.bf16.msra.mxu0 %v2985
  %6995 = vmatprep.subr.bf16.mxu0 0
  %6996 = vmatpush1.bf16.msra.mxu0 %v2984
  %6997 = vmatprep.subr.bf16.mxu0 0
  %6998 = vmatpush1.bf16.msra.mxu0 %v2983
  %6999 = vmatprep.subr.bf16.mxu0 0
  %7000 = vmatpush1.bf16.msra.mxu0 %v2982
  %7001 = vmatprep.subr.bf16.mxu0 0
  %7002 = vmatpush1.bf16.msra.mxu0 %v2981
  %7003 = vmatprep.subr.bf16.mxu0 0
  %7004 = vmatpush1.bf16.msra.mxu0 %v2980
  %7005 = vmatprep.subr.bf16.mxu0 0
  %7006 = vmatpush1.bf16.msra.mxu0 %v2979
  %7007 = vmatprep.subr.bf16.mxu0 0
  %7008 = vmatpush2.bf16.msra.mxu0 0
  %7009 = vmatprep.subr.bf16.mxu0 0
  %7010 = vmatpush2.bf16.msra.mxu0 0
  %7011 = vmatprep.subr.bf16.mxu0 0
  %7012 = vmatpush2.bf16.msra.mxu0 0
  %7013 = vmatprep.subr.bf16.mxu0 0
  %7014 = vmatpush2.bf16.msra.mxu0 0
  %7015 = vmatprep.subr.bf16.mxu0 0
  %7016 = vmatpush2.bf16.msra.mxu0 0
  %7017 = vmatprep.subr.bf16.mxu0 0
  %7018 = vmatpush2.bf16.msra.mxu0 0
  %7019 = vmatprep.subr.bf16.mxu0 0
  %7020 = vmatpush2.bf16.msra.mxu0 0
  %7021 = vmatprep.subr.bf16.mxu0 0
  %7022 = vmatpush2.bf16.msra.mxu0 0
  %7023 = vmatprep.mubr.bf16.mxu0 0
  %7024 = vmatmul.mubr.bf16.gmra.mxu0 %v6315
  %v7025 = vpop.f32.mrf.mxu0
  %v7026 = vadd.f32 %v6865, %v7025
  %v7027 = vpop.f32.mrf.mxu0
  %v7028 = vpop.f32.mrf.mxu0
  %v7029 = vadd.f32 %v6868, %v7028
  %v7030 = vpop.f32.mrf.mxu0
  %7031 = vmatprep.mubr.bf16.mxu0 0
  %7032 = vmatmul.mubr.bf16.gmra.mxu0 %v6316
  %v7033 = vpop.f32.mrf.mxu0
  %v7034 = vadd.f32 %v6873, %v7033
  %v7035 = vpop.f32.mrf.mxu0
  %v7036 = vpop.f32.mrf.mxu0
  %v7037 = vadd.f32 %v6876, %v7036
  %v7038 = vpop.f32.mrf.mxu0
  %7039 = vmatprep.mubr.bf16.mxu0 0
  %7040 = vmatmul.mubr.bf16.gmra.mxu0 %v6317
  %v7041 = vpop.f32.mrf.mxu0
  %v7042 = vadd.f32 %v6881, %v7041
  %v7043 = vpop.f32.mrf.mxu0
  %v7044 = vpop.f32.mrf.mxu0
  %v7045 = vadd.f32 %v6884, %v7044
  %v7046 = vpop.f32.mrf.mxu0
  %7047 = vmatprep.mubr.bf16.mxu0 0
  %7048 = vmatmul.mubr.bf16.gmra.mxu0 %v6318
  %v7049 = vpop.f32.mrf.mxu0
  %v7050 = vadd.f32 %v6889, %v7049
  %v7051 = vpop.f32.mrf.mxu0
  %v7052 = vpop.f32.mrf.mxu0
  %v7053 = vadd.f32 %v6892, %v7052
  %v7054 = vpop.f32.mrf.mxu0
  %7055 = vmatprep.mubr.bf16.mxu0 0
  %7056 = vmatmul.mubr.bf16.gmra.mxu0 %v6319
  %v7057 = vpop.f32.mrf.mxu0
  %v7058 = vadd.f32 %v6897, %v7057
  %v7059 = vpop.f32.mrf.mxu0
  %v7060 = vpop.f32.mrf.mxu0
  %v7061 = vadd.f32 %v6900, %v7060
  %v7062 = vpop.f32.mrf.mxu0
  %7063 = vmatprep.mubr.bf16.mxu0 0
  %7064 = vmatmul.mubr.bf16.gmra.mxu0 %v6320
  %v7065 = vpop.f32.mrf.mxu0
  %v7066 = vadd.f32 %v6905, %v7065
  %v7067 = vpop.f32.mrf.mxu0
  %v7068 = vpop.f32.mrf.mxu0
  %v7069 = vadd.f32 %v6908, %v7068
  %v7070 = vpop.f32.mrf.mxu0
  %7071 = vmatprep.mubr.bf16.mxu0 0
  %7072 = vmatmul.mubr.bf16.gmra.mxu0 %v6321
  %v7073 = vpop.f32.mrf.mxu0
  %v7074 = vadd.f32 %v6913, %v7073
  %v7075 = vpop.f32.mrf.mxu0
  %v7076 = vpop.f32.mrf.mxu0
  %v7077 = vadd.f32 %v6916, %v7076
  %v7078 = vpop.f32.mrf.mxu0
  %7079 = vmatprep.mubr.bf16.mxu0 0
  %7080 = vmatmul.mubr.bf16.gmra.mxu0 %v6322
  %v7081 = vpop.f32.mrf.mxu0
  %v7082 = vadd.f32 %v6921, %v7081
  %v7083 = vpop.f32.mrf.mxu0
  %v7084 = vpop.f32.mrf.mxu0
  %v7085 = vadd.f32 %v6924, %v7084
  %v7086 = vpop.f32.mrf.mxu0
  %7087 = vmatprep.mubr.bf16.mxu0 0
  %7088 = vmatmul.mubr.bf16.gmra.mxu0 %v6323
  %v7089 = vpop.f32.mrf.mxu0
  %v7090 = vadd.f32 %v6929, %v7089
  %v7091 = vpop.f32.mrf.mxu0
  %v7092 = vpop.f32.mrf.mxu0
  %v7093 = vadd.f32 %v6932, %v7092
  %v7094 = vpop.f32.mrf.mxu0
  %7095 = vmatprep.mubr.bf16.mxu0 0
  %7096 = vmatmul.mubr.bf16.gmra.mxu0 %v6324
  %v7097 = vpop.f32.mrf.mxu0
  %v7098 = vadd.f32 %v6937, %v7097
  %v7099 = vpop.f32.mrf.mxu0
  %v7100 = vpop.f32.mrf.mxu0
  %v7101 = vadd.f32 %v6940, %v7100
  %v7102 = vpop.f32.mrf.mxu0
  %7103 = vmatprep.mubr.bf16.mxu0 0
  %7104 = vmatmul.mubr.bf16.gmra.mxu0 %v6325
  %v7105 = vpop.f32.mrf.mxu0
  %v7106 = vadd.f32 %v6945, %v7105
  %v7107 = vpop.f32.mrf.mxu0
  %v7108 = vpop.f32.mrf.mxu0
  %v7109 = vadd.f32 %v6948, %v7108
  %v7110 = vpop.f32.mrf.mxu0
  %7111 = vmatprep.mubr.bf16.mxu0 0
  %7112 = vmatmul.mubr.bf16.gmra.mxu0 %v6326
  %v7113 = vpop.f32.mrf.mxu0
  %v7114 = vadd.f32 %v6953, %v7113
  %v7115 = vpop.f32.mrf.mxu0
  %v7116 = vpop.f32.mrf.mxu0
  %v7117 = vadd.f32 %v6956, %v7116
  %v7118 = vpop.f32.mrf.mxu0
  %7119 = vmatprep.mubr.bf16.mxu0 0
  %7120 = vmatmul.mubr.bf16.gmra.mxu0 %v6327
  %v7121 = vpop.f32.mrf.mxu0
  %v7122 = vadd.f32 %v6961, %v7121
  %v7123 = vpop.f32.mrf.mxu0
  %v7124 = vpop.f32.mrf.mxu0
  %v7125 = vadd.f32 %v6964, %v7124
  %v7126 = vpop.f32.mrf.mxu0
  %7127 = vmatprep.mubr.bf16.mxu0 0
  %7128 = vmatmul.mubr.bf16.gmra.mxu0 %v6328
  %v7129 = vpop.f32.mrf.mxu0
  %v7130 = vadd.f32 %v6969, %v7129
  %v7131 = vpop.f32.mrf.mxu0
  %v7132 = vpop.f32.mrf.mxu0
  %v7133 = vadd.f32 %v6972, %v7132
  %v7134 = vpop.f32.mrf.mxu0
  %7135 = vmatprep.mubr.bf16.mxu0 0
  %7136 = vmatmul.mubr.bf16.gmra.mxu0 %v6329
  %v7137 = vpop.f32.mrf.mxu0
  %v7138 = vadd.f32 %v6977, %v7137
  %v7139 = vpop.f32.mrf.mxu0
  %v7140 = vpop.f32.mrf.mxu0
  %v7141 = vadd.f32 %v6980, %v7140
  %v7142 = vpop.f32.mrf.mxu0
  %7143 = vmatprep.mubr.bf16.mxu0 0
  %7144 = vmatmul.mubr.bf16.gmra.mxu0 %v6330
  %v7145 = vpop.f32.mrf.mxu0
  %v7146 = vadd.f32 %v6985, %v7145
  %v7147 = vpop.f32.mrf.mxu0
  %v7148 = vpop.f32.mrf.mxu0
  %v7149 = vadd.f32 %v6988, %v7148
  %v7150 = vpop.f32.mrf.mxu0
  %7151 = vdwg.mxu0
  %7152 = vst [vmem:[#allocation2 + $0x100] sm:$0xff] %v7026
  %7153 = vst [vmem:[#allocation2 + $0x108] sm:$0xff] %v7029
  %7154 = vst [vmem:[#allocation2 + $0x110] sm:$0xff] %v7034
  %7155 = vst [vmem:[#allocation2 + $0x118] sm:$0xff] %v7037
  %7156 = vst [vmem:[#allocation2 + $0x120] sm:$0xff] %v7042
  %7157 = vst [vmem:[#allocation2 + $0x128] sm:$0xff] %v7045
  %7158 = vst [vmem:[#allocation2 + $0x130] sm:$0xff] %v7050
  %7159 = vst [vmem:[#allocation2 + $0x138] sm:$0xff] %v7053
  %7160 = vst [vmem:[#allocation2 + $0x140] sm:$0xff] %v7058
  %7161 = vst [vmem:[#allocation2 + $0x148] sm:$0xff] %v7061
  %7162 = vst [vmem:[#allocation2 + $0x150] sm:$0xff] %v7066
  %7163 = vst [vmem:[#allocation2 + $0x158] sm:$0xff] %v7069
  %7164 = vst [vmem:[#allocation2 + $0x160] sm:$0xff] %v7074
  %7165 = vst [vmem:[#allocation2 + $0x168] sm:$0xff] %v7077
  %7166 = vst [vmem:[#allocation2 + $0x170] sm:$0xff] %v7082
  %7167 = vst [vmem:[#allocation2 + $0x178] sm:$0xff] %v7085
  %7168 = vst [vmem:[#allocation2 + $0x180] sm:$0xff] %v7090
  %7169 = vst [vmem:[#allocation2 + $0x188] sm:$0xff] %v7093
  %7170 = vst [vmem:[#allocation2 + $0x190] sm:$0xff] %v7098
  %7171 = vst [vmem:[#allocation2 + $0x198] sm:$0xff] %v7101
  %7172 = vst [vmem:[#allocation2 + $0x1a0] sm:$0xff] %v7106
  %7173 = vst [vmem:[#allocation2 + $0x1a8] sm:$0xff] %v7109
  %7174 = vst [vmem:[#allocation2 + $0x1b0] sm:$0xff] %v7114
  %7175 = vst [vmem:[#allocation2 + $0x1b8] sm:$0xff] %v7117
  %7176 = vst [vmem:[#allocation2 + $0x1c0] sm:$0xff] %v7122
  %7177 = vst [vmem:[#allocation2 + $0x1c8] sm:$0xff] %v7125
  %7178 = vst [vmem:[#allocation2 + $0x1d0] sm:$0xff] %v7130
  %7179 = vst [vmem:[#allocation2 + $0x1d8] sm:$0xff] %v7133
  %7180 = vst [vmem:[#allocation2 + $0x1e0] sm:$0xff] %v7138
  %7181 = vst [vmem:[#allocation2 + $0x1e8] sm:$0xff] %v7141
  %7182 = vst [vmem:[#allocation2 + $0x1f0] sm:$0xff] %v7146
  %7183 = vst [vmem:[#allocation2 + $0x1f8] sm:$0xff] %v7149
  %v7184 = vld [vmem:[#allocation2] sm:$0xff]
  %v7185 = vld [vmem:[#allocation2 + $0x8] sm:$0xff]
  %v7186 = vld [vmem:[#allocation2 + $0x10] sm:$0xff]
  %v7187 = vld [vmem:[#allocation2 + $0x18] sm:$0xff]
  %v7188 = vld [vmem:[#allocation2 + $0x20] sm:$0xff]
  %v7189 = vld [vmem:[#allocation2 + $0x28] sm:$0xff]
  %v7190 = vld [vmem:[#allocation2 + $0x30] sm:$0xff]
  %v7191 = vld [vmem:[#allocation2 + $0x38] sm:$0xff]
  %v7192 = vld [vmem:[#allocation2 + $0x40] sm:$0xff]
  %v7193 = vld [vmem:[#allocation2 + $0x48] sm:$0xff]
  %v7194 = vld [vmem:[#allocation2 + $0x50] sm:$0xff]
  %v7195 = vld [vmem:[#allocation2 + $0x58] sm:$0xff]
  %v7196 = vld [vmem:[#allocation2 + $0x60] sm:$0xff]
  %v7197 = vld [vmem:[#allocation2 + $0x68] sm:$0xff]
  %v7198 = vld [vmem:[#allocation2 + $0x70] sm:$0xff]
  %v7199 = vld [vmem:[#allocation2 + $0x78] sm:$0xff]
  %v7200 = vld [vmem:[#allocation2 + $0x80] sm:$0xff]
  %v7201 = vld [vmem:[#allocation2 + $0x88] sm:$0xff]
  %v7202 = vld [vmem:[#allocation2 + $0x90] sm:$0xff]
  %v7203 = vld [vmem:[#allocation2 + $0x98] sm:$0xff]
  %v7204 = vld [vmem:[#allocation2 + $0xa0] sm:$0xff]
  %v7205 = vld [vmem:[#allocation2 + $0xa8] sm:$0xff]
  %v7206 = vld [vmem:[#allocation2 + $0xb0] sm:$0xff]
  %v7207 = vld [vmem:[#allocation2 + $0xb8] sm:$0xff]
  %v7208 = vld [vmem:[#allocation2 + $0xc0] sm:$0xff]
  %v7209 = vld [vmem:[#allocation2 + $0xc8] sm:$0xff]
  %v7210 = vld [vmem:[#allocation2 + $0xd0] sm:$0xff]
  %v7211 = vld [vmem:[#allocation2 + $0xd8] sm:$0xff]
  %v7212 = vld [vmem:[#allocation2 + $0xe0] sm:$0xff]
  %v7213 = vld [vmem:[#allocation2 + $0xe8] sm:$0xff]
  %v7214 = vld [vmem:[#allocation2 + $0xf0] sm:$0xff]
  %v7215 = vld [vmem:[#allocation2 + $0xf8] sm:$0xff]
  %v7216 = vld [vmem:[#allocation2 + $0x100] sm:$0xff]
  %v7217 = vld [vmem:[#allocation2 + $0x108] sm:$0xff]
  %v7218 = vld [vmem:[#allocation2 + $0x110] sm:$0xff]
  %v7219 = vld [vmem:[#allocation2 + $0x118] sm:$0xff]
  %v7220 = vld [vmem:[#allocation2 + $0x120] sm:$0xff]
  %v7221 = vld [vmem:[#allocation2 + $0x128] sm:$0xff]
  %v7222 = vld [vmem:[#allocation2 + $0x130] sm:$0xff]
  %v7223 = vld [vmem:[#allocation2 + $0x138] sm:$0xff]
  %v7224 = vld [vmem:[#allocation2 + $0x140] sm:$0xff]
  %v7225 = vld [vmem:[#allocation2 + $0x148] sm:$0xff]
  %v7226 = vld [vmem:[#allocation2 + $0x150] sm:$0xff]
  %v7227 = vld [vmem:[#allocation2 + $0x158] sm:$0xff]
  %v7228 = vld [vmem:[#allocation2 + $0x160] sm:$0xff]
  %v7229 = vld [vmem:[#allocation2 + $0x168] sm:$0xff]
  %v7230 = vld [vmem:[#allocation2 + $0x170] sm:$0xff]
  %v7231 = vld [vmem:[#allocation2 + $0x178] sm:$0xff]
  %v7232 = vld [vmem:[#allocation2 + $0x180] sm:$0xff]
  %v7233 = vld [vmem:[#allocation2 + $0x188] sm:$0xff]
  %v7234 = vld [vmem:[#allocation2 + $0x190] sm:$0xff]
  %v7235 = vld [vmem:[#allocation2 + $0x198] sm:$0xff]
  %v7236 = vld [vmem:[#allocation2 + $0x1a0] sm:$0xff]
  %v7237 = vld [vmem:[#allocation2 + $0x1a8] sm:$0xff]
  %v7238 = vld [vmem:[#allocation2 + $0x1b0] sm:$0xff]
  %v7239 = vld [vmem:[#allocation2 + $0x1b8] sm:$0xff]
  %v7240 = vld [vmem:[#allocation2 + $0x1c0] sm:$0xff]
  %v7241 = vld [vmem:[#allocation2 + $0x1c8] sm:$0xff]
  %v7242 = vld [vmem:[#allocation2 + $0x1d0] sm:$0xff]
  %v7243 = vld [vmem:[#allocation2 + $0x1d8] sm:$0xff]
  %v7244 = vld [vmem:[#allocation2 + $0x1e0] sm:$0xff]
  %v7245 = vld [vmem:[#allocation2 + $0x1e8] sm:$0xff]
  %v7246 = vld [vmem:[#allocation2 + $0x1f0] sm:$0xff]
  %v7247 = vld [vmem:[#allocation2 + $0x1f8] sm:$0xff]
  %v7248 = vld [vmem:[%s2] sm:$0x1]
  %v7249 = vld [vmem:[%s3] sm:$0x1]
  %v7250 = vadd.f32 %v7184, %v7185
  %v7251 = vadd.f32 %v7250, %v7186
  %v7252 = vadd.f32 %v7251, %v7187
  %v7253 = vadd.f32 %v7252, %v7188
  %v7254 = vadd.f32 %v7253, %v7189
  %v7255 = vadd.f32 %v7254, %v7190
  %v7256 = vadd.f32 %v7255, %v7191
  %v7257 = vadd.f32 %v7256, %v7192
  %v7258 = vadd.f32 %v7257, %v7193
  %v7259 = vadd.f32 %v7258, %v7194
  %v7260 = vadd.f32 %v7259, %v7195
  %v7261 = vadd.f32 %v7260, %v7196
  %v7262 = vadd.f32 %v7261, %v7197
  %v7263 = vadd.f32 %v7262, %v7198
  %v7264 = vadd.f32 %v7263, %v7199
  %v7265 = vadd.f32 %v7264, %v7200
  %v7266 = vadd.f32 %v7265, %v7201
  %v7267 = vadd.f32 %v7266, %v7202
  %v7268 = vadd.f32 %v7267, %v7203
  %v7269 = vadd.f32 %v7268, %v7204
  %v7270 = vadd.f32 %v7269, %v7205
  %v7271 = vadd.f32 %v7270, %v7206
  %v7272 = vadd.f32 %v7271, %v7207
  %v7273 = vadd.f32 %v7272, %v7208
  %v7274 = vadd.f32 %v7273, %v7209
  %v7275 = vadd.f32 %v7274, %v7210
  %v7276 = vadd.f32 %v7275, %v7211
  %v7277 = vadd.f32 %v7276, %v7212
  %v7278 = vadd.f32 %v7277, %v7213
  %v7279 = vadd.f32 %v7278, %v7214
  %v7280 = vadd.f32 %v7279, %v7215
  %v7281 = vadd.f32 %v7280, %v7216
  %v7282 = vadd.f32 %v7281, %v7217
  %v7283 = vadd.f32 %v7282, %v7218
  %v7284 = vadd.f32 %v7283, %v7219
  %v7285 = vadd.f32 %v7284, %v7220
  %v7286 = vadd.f32 %v7285, %v7221
  %v7287 = vadd.f32 %v7286, %v7222
  %v7288 = vadd.f32 %v7287, %v7223
  %v7289 = vadd.f32 %v7288, %v7224
  %v7290 = vadd.f32 %v7289, %v7225
  %v7291 = vadd.f32 %v7290, %v7226
  %v7292 = vadd.f32 %v7291, %v7227
  %v7293 = vadd.f32 %v7292, %v7228
  %v7294 = vadd.f32 %v7293, %v7229
  %v7295 = vadd.f32 %v7294, %v7230
  %v7296 = vadd.f32 %v7295, %v7231
  %v7297 = vadd.f32 %v7296, %v7232
  %v7298 = vadd.f32 %v7297, %v7233
  %v7299 = vadd.f32 %v7298, %v7234
  %v7300 = vadd.f32 %v7299, %v7235
  %v7301 = vadd.f32 %v7300, %v7236
  %v7302 = vadd.f32 %v7301, %v7237
  %v7303 = vadd.f32 %v7302, %v7238
  %v7304 = vadd.f32 %v7303, %v7239
  %v7305 = vadd.f32 %v7304, %v7240
  %v7306 = vadd.f32 %v7305, %v7241
  %v7307 = vadd.f32 %v7306, %v7242
  %v7308 = vadd.f32 %v7307, %v7243
  %v7309 = vadd.f32 %v7308, %v7244
  %v7310 = vadd.f32 %v7309, %v7245
  %v7311 = vadd.f32 %v7310, %v7246
  %v7312 = vadd.f32 %v7311, %v7247
  %v7313 = vrot.slane %v7312, 4
  %v7314 = vadd.f32 %v7312, %v7313
  %v7315 = vrot.slane %v7314, 2
  %v7316 = vadd.f32 %v7314, %v7315
  %v7317 = vrot.slane %v7316, 1
  %v7318 = vadd.f32 %v7316, %v7317
  %v7319 = vmul.f32 %v7184, %v7184
  %v7320 = vmul.f32 %v7185, %v7185
  %v7321 = vmul.f32 %v7186, %v7186
  %v7322 = vmul.f32 %v7187, %v7187
  %v7323 = vmul.f32 %v7188, %v7188
  %v7324 = vmul.f32 %v7189, %v7189
  %v7325 = vmul.f32 %v7190, %v7190
  %v7326 = vmul.f32 %v7191, %v7191
  %v7327 = vmul.f32 %v7192, %v7192
  %v7328 = vmul.f32 %v7193, %v7193
  %v7329 = vmul.f32 %v7194, %v7194
  %v7330 = vmul.f32 %v7195, %v7195
  %v7331 = vmul.f32 %v7196, %v7196
  %v7332 = vmul.f32 %v7197, %v7197
  %v7333 = vmul.f32 %v7198, %v7198
  %v7334 = vmul.f32 %v7199, %v7199
  %v7335 = vmul.f32 %v7200, %v7200
  %v7336 = vmul.f32 %v7201, %v7201
  %v7337 = vmul.f32 %v7202, %v7202
  %v7338 = vmul.f32 %v7203, %v7203
  %v7339 = vmul.f32 %v7204, %v7204
  %v7340 = vmul.f32 %v7205, %v7205
  %v7341 = vmul.f32 %v7206, %v7206
  %v7342 = vmul.f32 %v7207, %v7207
  %v7343 = vmul.f32 %v7208, %v7208
  %v7344 = vmul.f32 %v7209, %v7209
  %v7345 = vmul.f32 %v7210, %v7210
  %v7346 = vmul.f32 %v7211, %v7211
  %v7347 = vmul.f32 %v7212, %v7212
  %v7348 = vmul.f32 %v7213, %v7213
  %v7349 = vmul.f32 %v7214, %v7214
  %v7350 = vmul.f32 %v7215, %v7215
  %v7351 = vmul.f32 %v7216, %v7216
  %v7352 = vmul.f32 %v7217, %v7217
  %v7353 = vmul.f32 %v7218, %v7218
  %v7354 = vmul.f32 %v7219, %v7219
  %v7355 = vmul.f32 %v7220, %v7220
  %v7356 = vmul.f32 %v7221, %v7221
  %v7357 = vmul.f32 %v7222, %v7222
  %v7358 = vmul.f32 %v7223, %v7223
  %v7359 = vmul.f32 %v7224, %v7224
  %v7360 = vmul.f32 %v7225, %v7225
  %v7361 = vmul.f32 %v7226, %v7226
  %v7362 = vmul.f32 %v7227, %v7227
  %v7363 = vmul.f32 %v7228, %v7228
  %v7364 = vmul.f32 %v7229, %v7229
  %v7365 = vmul.f32 %v7230, %v7230
  %v7366 = vmul.f32 %v7231, %v7231
  %v7367 = vmul.f32 %v7232, %v7232
  %v7368 = vmul.f32 %v7233, %v7233
  %v7369 = vmul.f32 %v7234, %v7234
  %v7370 = vmul.f32 %v7235, %v7235
  %v7371 = vmul.f32 %v7236, %v7236
  %v7372 = vmul.f32 %v7237, %v7237
  %v7373 = vmul.f32 %v7238, %v7238
  %v7374 = vmul.f32 %v7239, %v7239
  %v7375 = vmul.f32 %v7240, %v7240
  %v7376 = vmul.f32 %v7241, %v7241
  %v7377 = vmul.f32 %v7242, %v7242
  %v7378 = vmul.f32 %v7243, %v7243
  %v7379 = vmul.f32 %v7244, %v7244
  %v7380 = vmul.f32 %v7245, %v7245
  %v7381 = vmul.f32 %v7246, %v7246
  %v7382 = vmul.f32 %v7247, %v7247
  %v7383 = vadd.f32 %v7319, %v7320
  %v7384 = vadd.f32 %v7383, %v7321
  %v7385 = vadd.f32 %v7384, %v7322
  %v7386 = vadd.f32 %v7385, %v7323
  %v7387 = vadd.f32 %v7386, %v7324
  %v7388 = vadd.f32 %v7387, %v7325
  %v7389 = vadd.f32 %v7388, %v7326
  %v7390 = vadd.f32 %v7389, %v7327
  %v7391 = vadd.f32 %v7390, %v7328
  %v7392 = vadd.f32 %v7391, %v7329
  %v7393 = vadd.f32 %v7392, %v7330
  %v7394 = vadd.f32 %v7393, %v7331
  %v7395 = vadd.f32 %v7394, %v7332
  %v7396 = vadd.f32 %v7395, %v7333
  %v7397 = vadd.f32 %v7396, %v7334
  %v7398 = vadd.f32 %v7397, %v7335
  %v7399 = vadd.f32 %v7398, %v7336
  %v7400 = vadd.f32 %v7399, %v7337
  %v7401 = vadd.f32 %v7400, %v7338
  %v7402 = vadd.f32 %v7401, %v7339
  %v7403 = vadd.f32 %v7402, %v7340
  %v7404 = vadd.f32 %v7403, %v7341
  %v7405 = vadd.f32 %v7404, %v7342
  %v7406 = vadd.f32 %v7405, %v7343
  %v7407 = vadd.f32 %v7406, %v7344
  %v7408 = vadd.f32 %v7407, %v7345
  %v7409 = vadd.f32 %v7408, %v7346
  %v7410 = vadd.f32 %v7409, %v7347
  %v7411 = vadd.f32 %v7410, %v7348
  %v7412 = vadd.f32 %v7411, %v7349
  %v7413 = vadd.f32 %v7412, %v7350
  %v7414 = vadd.f32 %v7413, %v7351
  %v7415 = vadd.f32 %v7414, %v7352
  %v7416 = vadd.f32 %v7415, %v7353
  %v7417 = vadd.f32 %v7416, %v7354
  %v7418 = vadd.f32 %v7417, %v7355
  %v7419 = vadd.f32 %v7418, %v7356
  %v7420 = vadd.f32 %v7419, %v7357
  %v7421 = vadd.f32 %v7420, %v7358
  %v7422 = vadd.f32 %v7421, %v7359
  %v7423 = vadd.f32 %v7422, %v7360
  %v7424 = vadd.f32 %v7423, %v7361
  %v7425 = vadd.f32 %v7424, %v7362
  %v7426 = vadd.f32 %v7425, %v7363
  %v7427 = vadd.f32 %v7426, %v7364
  %v7428 = vadd.f32 %v7427, %v7365
  %v7429 = vadd.f32 %v7428, %v7366
  %v7430 = vadd.f32 %v7429, %v7367
  %v7431 = vadd.f32 %v7430, %v7368
  %v7432 = vadd.f32 %v7431, %v7369
  %v7433 = vadd.f32 %v7432, %v7370
  %v7434 = vadd.f32 %v7433, %v7371
  %v7435 = vadd.f32 %v7434, %v7372
  %v7436 = vadd.f32 %v7435, %v7373
  %v7437 = vadd.f32 %v7436, %v7374
  %v7438 = vadd.f32 %v7437, %v7375
  %v7439 = vadd.f32 %v7438, %v7376
  %v7440 = vadd.f32 %v7439, %v7377
  %v7441 = vadd.f32 %v7440, %v7378
  %v7442 = vadd.f32 %v7441, %v7379
  %v7443 = vadd.f32 %v7442, %v7380
  %v7444 = vadd.f32 %v7443, %v7381
  %v7445 = vadd.f32 %v7444, %v7382
  %v7446 = vrot.slane %v7445, 4
  %v7447 = vadd.f32 %v7445, %v7446
  %v7448 = vrot.slane %v7447, 2
  %v7449 = vadd.f32 %v7447, %v7448
  %v7450 = vrot.slane %v7449, 1
  %v7451 = vadd.f32 %v7449, %v7450
  %v7452 = vmul.f32 %v7318, 0.001953125
  %v7453 = vmul.f32 %v7451, 0.001953125
  %v7454 = vmul.f32 %v7452, %v7452
  %v7455 = vsub.f32 %v7453, %v7454
  %v7456 = vmax.f32 %v7455, 0.0
  %v7457 = vadd.f32 %v7456, 1e-05
  %v7458 = vrsqrt.pop %v7457
  %v7459 = vmul.f32 %v7248, %v7458
  %v7460 = vmul.f32 %v7452, %v7459
  %v7461 = vsub.f32 %v7249, %v7460
  %v7463 = vlaneseq
  %v7464 = vshrl.u32 %v7463, 7
  %v7465 = vsub.s32 0, %v7464
  %v7466 = vrot.slane %v7459, %v7465
  %v7468 = vmul.f32 %v7184, %v7466
  %v7469 = vmul.f32 %v7185, %v7466
  %v7470 = vmul.f32 %v7186, %v7466
  %v7471 = vmul.f32 %v7187, %v7466
  %v7472 = vmul.f32 %v7188, %v7466
  %v7473 = vmul.f32 %v7189, %v7466
  %v7474 = vmul.f32 %v7190, %v7466
  %v7475 = vmul.f32 %v7191, %v7466
  %v7476 = vmul.f32 %v7192, %v7466
  %v7477 = vmul.f32 %v7193, %v7466
  %v7478 = vmul.f32 %v7194, %v7466
  %v7479 = vmul.f32 %v7195, %v7466
  %v7480 = vmul.f32 %v7196, %v7466
  %v7481 = vmul.f32 %v7197, %v7466
  %v7482 = vmul.f32 %v7198, %v7466
  %v7483 = vmul.f32 %v7199, %v7466
  %v7484 = vmul.f32 %v7200, %v7466
  %v7485 = vmul.f32 %v7201, %v7466
  %v7486 = vmul.f32 %v7202, %v7466
  %v7487 = vmul.f32 %v7203, %v7466
  %v7488 = vmul.f32 %v7204, %v7466
  %v7489 = vmul.f32 %v7205, %v7466
  %v7490 = vmul.f32 %v7206, %v7466
  %v7491 = vmul.f32 %v7207, %v7466
  %v7492 = vmul.f32 %v7208, %v7466
  %v7493 = vmul.f32 %v7209, %v7466
  %v7494 = vmul.f32 %v7210, %v7466
  %v7495 = vmul.f32 %v7211, %v7466
  %v7496 = vmul.f32 %v7212, %v7466
  %v7497 = vmul.f32 %v7213, %v7466
  %v7498 = vmul.f32 %v7214, %v7466
  %v7499 = vmul.f32 %v7215, %v7466
  %v7500 = vmul.f32 %v7216, %v7466
  %v7501 = vmul.f32 %v7217, %v7466
  %v7502 = vmul.f32 %v7218, %v7466
  %v7503 = vmul.f32 %v7219, %v7466
  %v7504 = vmul.f32 %v7220, %v7466
  %v7505 = vmul.f32 %v7221, %v7466
  %v7506 = vmul.f32 %v7222, %v7466
  %v7507 = vmul.f32 %v7223, %v7466
  %v7508 = vmul.f32 %v7224, %v7466
  %v7509 = vmul.f32 %v7225, %v7466
  %v7510 = vmul.f32 %v7226, %v7466
  %v7511 = vmul.f32 %v7227, %v7466
  %v7512 = vmul.f32 %v7228, %v7466
  %v7513 = vmul.f32 %v7229, %v7466
  %v7514 = vmul.f32 %v7230, %v7466
  %v7515 = vmul.f32 %v7231, %v7466
  %v7516 = vmul.f32 %v7232, %v7466
  %v7517 = vmul.f32 %v7233, %v7466
  %v7518 = vmul.f32 %v7234, %v7466
  %v7519 = vmul.f32 %v7235, %v7466
  %v7520 = vmul.f32 %v7236, %v7466
  %v7521 = vmul.f32 %v7237, %v7466
  %v7522 = vmul.f32 %v7238, %v7466
  %v7523 = vmul.f32 %v7239, %v7466
  %v7524 = vmul.f32 %v7240, %v7466
  %v7525 = vmul.f32 %v7241, %v7466
  %v7526 = vmul.f32 %v7242, %v7466
  %v7527 = vmul.f32 %v7243, %v7466
  %v7528 = vmul.f32 %v7244, %v7466
  %v7529 = vmul.f32 %v7245, %v7466
  %v7530 = vmul.f32 %v7246, %v7466
  %v7531 = vmul.f32 %v7247, %v7466
  %v7533 = vlaneseq
  %v7534 = vshrl.u32 %v7533, 7
  %v7535 = vsub.s32 0, %v7534
  %v7536 = vrot.slane %v7461, %v7535
  %v7538 = vadd.f32 %v7468, %v7536
  %v7539 = vadd.f32 %v7469, %v7536
  %v7540 = vadd.f32 %v7470, %v7536
  %v7541 = vadd.f32 %v7471, %v7536
  %v7542 = vadd.f32 %v7472, %v7536
  %v7543 = vadd.f32 %v7473, %v7536
  %v7544 = vadd.f32 %v7474, %v7536
  %v7545 = vadd.f32 %v7475, %v7536
  %v7546 = vadd.f32 %v7476, %v7536
  %v7547 = vadd.f32 %v7477, %v7536
  %v7548 = vadd.f32 %v7478, %v7536
  %v7549 = vadd.f32 %v7479, %v7536
  %v7550 = vadd.f32 %v7480, %v7536
  %v7551 = vadd.f32 %v7481, %v7536
  %v7552 = vadd.f32 %v7482, %v7536
  %v7553 = vadd.f32 %v7483, %v7536
  %v7554 = vadd.f32 %v7484, %v7536
  %v7555 = vadd.f32 %v7485, %v7536
  %v7556 = vadd.f32 %v7486, %v7536
  %v7557 = vadd.f32 %v7487, %v7536
  %v7558 = vadd.f32 %v7488, %v7536
  %v7559 = vadd.f32 %v7489, %v7536
  %v7560 = vadd.f32 %v7490, %v7536
  %v7561 = vadd.f32 %v7491, %v7536
  %v7562 = vadd.f32 %v7492, %v7536
  %v7563 = vadd.f32 %v7493, %v7536
  %v7564 = vadd.f32 %v7494, %v7536
  %v7565 = vadd.f32 %v7495, %v7536
  %v7566 = vadd.f32 %v7496, %v7536
  %v7567 = vadd.f32 %v7497, %v7536
  %v7568 = vadd.f32 %v7498, %v7536
  %v7569 = vadd.f32 %v7499, %v7536
  %v7570 = vadd.f32 %v7500, %v7536
  %v7571 = vadd.f32 %v7501, %v7536
  %v7572 = vadd.f32 %v7502, %v7536
  %v7573 = vadd.f32 %v7503, %v7536
  %v7574 = vadd.f32 %v7504, %v7536
  %v7575 = vadd.f32 %v7505, %v7536
  %v7576 = vadd.f32 %v7506, %v7536
  %v7577 = vadd.f32 %v7507, %v7536
  %v7578 = vadd.f32 %v7508, %v7536
  %v7579 = vadd.f32 %v7509, %v7536
  %v7580 = vadd.f32 %v7510, %v7536
  %v7581 = vadd.f32 %v7511, %v7536
  %v7582 = vadd.f32 %v7512, %v7536
  %v7583 = vadd.f32 %v7513, %v7536
  %v7584 = vadd.f32 %v7514, %v7536
  %v7585 = vadd.f32 %v7515, %v7536
  %v7586 = vadd.f32 %v7516, %v7536
  %v7587 = vadd.f32 %v7517, %v7536
  %v7588 = vadd.f32 %v7518, %v7536
  %v7589 = vadd.f32 %v7519, %v7536
  %v7590 = vadd.f32 %v7520, %v7536
  %v7591 = vadd.f32 %v7521, %v7536
  %v7592 = vadd.f32 %v7522, %v7536
  %v7593 = vadd.f32 %v7523, %v7536
  %v7594 = vadd.f32 %v7524, %v7536
  %v7595 = vadd.f32 %v7525, %v7536
  %v7596 = vadd.f32 %v7526, %v7536
  %v7597 = vadd.f32 %v7527, %v7536
  %v7598 = vadd.f32 %v7528, %v7536
  %v7599 = vadd.f32 %v7529, %v7536
  %v7600 = vadd.f32 %v7530, %v7536
  %v7601 = vadd.f32 %v7531, %v7536
  %v7602 = vmax.f32 %v7538, 0.0
  %v7603 = vmax.f32 %v7539, 0.0
  %v7604 = vmax.f32 %v7540, 0.0
  %v7605 = vmax.f32 %v7541, 0.0
  %v7606 = vmax.f32 %v7542, 0.0
  %v7607 = vmax.f32 %v7543, 0.0
  %v7608 = vmax.f32 %v7544, 0.0
  %v7609 = vmax.f32 %v7545, 0.0
  %v7610 = vmax.f32 %v7546, 0.0
  %v7611 = vmax.f32 %v7547, 0.0
  %v7612 = vmax.f32 %v7548, 0.0
  %v7613 = vmax.f32 %v7549, 0.0
  %v7614 = vmax.f32 %v7550, 0.0
  %v7615 = vmax.f32 %v7551, 0.0
  %v7616 = vmax.f32 %v7552, 0.0
  %v7617 = vmax.f32 %v7553, 0.0
  %v7618 = vmax.f32 %v7554, 0.0
  %v7619 = vmax.f32 %v7555, 0.0
  %v7620 = vmax.f32 %v7556, 0.0
  %v7621 = vmax.f32 %v7557, 0.0
  %v7622 = vmax.f32 %v7558, 0.0
  %v7623 = vmax.f32 %v7559, 0.0
  %v7624 = vmax.f32 %v7560, 0.0
  %v7625 = vmax.f32 %v7561, 0.0
  %v7626 = vmax.f32 %v7562, 0.0
  %v7627 = vmax.f32 %v7563, 0.0
  %v7628 = vmax.f32 %v7564, 0.0
  %v7629 = vmax.f32 %v7565, 0.0
  %v7630 = vmax.f32 %v7566, 0.0
  %v7631 = vmax.f32 %v7567, 0.0
  %v7632 = vmax.f32 %v7568, 0.0
  %v7633 = vmax.f32 %v7569, 0.0
  %v7634 = vmax.f32 %v7570, 0.0
  %v7635 = vmax.f32 %v7571, 0.0
  %v7636 = vmax.f32 %v7572, 0.0
  %v7637 = vmax.f32 %v7573, 0.0
  %v7638 = vmax.f32 %v7574, 0.0
  %v7639 = vmax.f32 %v7575, 0.0
  %v7640 = vmax.f32 %v7576, 0.0
  %v7641 = vmax.f32 %v7577, 0.0
  %v7642 = vmax.f32 %v7578, 0.0
  %v7643 = vmax.f32 %v7579, 0.0
  %v7644 = vmax.f32 %v7580, 0.0
  %v7645 = vmax.f32 %v7581, 0.0
  %v7646 = vmax.f32 %v7582, 0.0
  %v7647 = vmax.f32 %v7583, 0.0
  %v7648 = vmax.f32 %v7584, 0.0
  %v7649 = vmax.f32 %v7585, 0.0
  %v7650 = vmax.f32 %v7586, 0.0
  %v7651 = vmax.f32 %v7587, 0.0
  %v7652 = vmax.f32 %v7588, 0.0
  %v7653 = vmax.f32 %v7589, 0.0
  %v7654 = vmax.f32 %v7590, 0.0
  %v7655 = vmax.f32 %v7591, 0.0
  %v7656 = vmax.f32 %v7592, 0.0
  %v7657 = vmax.f32 %v7593, 0.0
  %v7658 = vmax.f32 %v7594, 0.0
  %v7659 = vmax.f32 %v7595, 0.0
  %v7660 = vmax.f32 %v7596, 0.0
  %v7661 = vmax.f32 %v7597, 0.0
  %v7662 = vmax.f32 %v7598, 0.0
  %v7663 = vmax.f32 %v7599, 0.0
  %v7664 = vmax.f32 %v7600, 0.0
  %v7665 = vmax.f32 %v7601, 0.0
  %7666 = vst [vmem:[#allocation3] sm:$0xff] 0.0
  %7667 = vst [vmem:[#allocation3 + $0x8] sm:$0xff] 0.0
  %7668 = vst [vmem:[#allocation3 + $0x10] sm:$0x3] 0.0
  %7669 = vst [vmem:[#allocation3 + $0x18] sm:$0xff] 0.0
  %7670 = vst [vmem:[#allocation3 + $0x20] sm:$0xff] 0.0
  %7671 = vst [vmem:[#allocation3 + $0x28] sm:$0x3] 0.0
  %7672 = vst [vmem:[#allocation3 + $0x30] sm:$0xff] 0.0
  %7673 = vst [vmem:[#allocation3 + $0x38] sm:$0xff] 0.0
  %7674 = vst [vmem:[#allocation3 + $0x40] sm:$0x3] 0.0
  %7675 = vst [vmem:[#allocation3 + $0x48] sm:$0xff] 0.0
  %7676 = vst [vmem:[#allocation3 + $0x50] sm:$0xff] 0.0
  %7677 = vst [vmem:[#allocation3 + $0x58] sm:$0x3] 0.0
  %7678 = vst [vmem:[#allocation3 + $0x60] sm:$0xff] 0.0
  %7679 = vst [vmem:[#allocation3 + $0x68] sm:$0xff] 0.0
  %7680 = vst [vmem:[#allocation3 + $0x70] sm:$0x3] 0.0
  %7681 = vst [vmem:[#allocation3 + $0x78] sm:$0xff] 0.0
  %7682 = vst [vmem:[#allocation3 + $0x80] sm:$0xff] 0.0
  %7683 = vst [vmem:[#allocation3 + $0x88] sm:$0x3] 0.0
  %7684 = vst [vmem:[#allocation3 + $0x90] sm:$0xff] 0.0
  %7685 = vst [vmem:[#allocation3 + $0x98] sm:$0xff] 0.0
  %7686 = vst [vmem:[#allocation3 + $0xa0] sm:$0x3] 0.0
  %7687 = vst [vmem:[#allocation3 + $0xa8] sm:$0xff] 0.0
  %7688 = vst [vmem:[#allocation3 + $0xb0] sm:$0xff] 0.0
  %7689 = vst [vmem:[#allocation3 + $0xb8] sm:$0x3] 0.0
  %7690 = vst [vmem:[#allocation3 + $0xc0] sm:$0xff] 0.0
  %7691 = vst [vmem:[#allocation3 + $0xc8] sm:$0xff] 0.0
  %7692 = vst [vmem:[#allocation3 + $0xd0] sm:$0x3] 0.0
  %7693 = vst [vmem:[#allocation3 + $0xd8] sm:$0xff] 0.0
  %7694 = vst [vmem:[#allocation3 + $0xe0] sm:$0xff] 0.0
  %7695 = vst [vmem:[#allocation3 + $0xe8] sm:$0x3] 0.0
  %7696 = vst [vmem:[#allocation3 + $0xf0] sm:$0xff] 0.0
  %7697 = vst [vmem:[#allocation3 + $0xf8] sm:$0xff] 0.0
  %7698 = vst [vmem:[#allocation3 + $0x100] sm:$0x3] 0.0
  %7699 = vst [vmem:[#allocation3 + $0x108] sm:$0xff] 0.0
  %7700 = vst [vmem:[#allocation3 + $0x110] sm:$0xff] 0.0
  %7701 = vst [vmem:[#allocation3 + $0x118] sm:$0x3] 0.0
  %7702 = vst [vmem:[#allocation3 + $0x120] sm:$0xff] 0.0
  %7703 = vst [vmem:[#allocation3 + $0x128] sm:$0xff] 0.0
  %7704 = vst [vmem:[#allocation3 + $0x130] sm:$0x3] 0.0
  %7705 = vst [vmem:[#allocation3 + $0x138] sm:$0xff] 0.0
  %7706 = vst [vmem:[#allocation3 + $0x140] sm:$0xff] 0.0
  %7707 = vst [vmem:[#allocation3 + $0x148] sm:$0x3] 0.0
  %7708 = vst [vmem:[#allocation3 + $0x150] sm:$0xff] 0.0
  %7709 = vst [vmem:[#allocation3 + $0x158] sm:$0xff] 0.0
  %7710 = vst [vmem:[#allocation3 + $0x160] sm:$0x3] 0.0
  %7711 = vst [vmem:[#allocation3 + $0x168] sm:$0xff] 0.0
  %7712 = vst [vmem:[#allocation3 + $0x170] sm:$0xff] 0.0
  %7713 = vst [vmem:[#allocation3 + $0x178] sm:$0x3] 0.0
  %7714 = vst [vmem:[#allocation3 + $0x180] sm:$0xff] 0.0
  %7715 = vst [vmem:[#allocation3 + $0x188] sm:$0xff] 0.0
  %7716 = vst [vmem:[#allocation3 + $0x190] sm:$0x3] 0.0
  %7717 = vst [vmem:[#allocation3 + $0x198] sm:$0xff] 0.0
  %7718 = vst [vmem:[#allocation3 + $0x1a0] sm:$0xff] 0.0
  %7719 = vst [vmem:[#allocation3 + $0x1a8] sm:$0x3] 0.0
  %7720 = vst [vmem:[#allocation3 + $0x1b0] sm:$0xff] 0.0
  %7721 = vst [vmem:[#allocation3 + $0x1b8] sm:$0xff] 0.0
  %7722 = vst [vmem:[#allocation3 + $0x1c0] sm:$0x3] 0.0
  %7723 = vst [vmem:[#allocation3 + $0x1c8] sm:$0xff] 0.0
  %7724 = vst [vmem:[#allocation3 + $0x1d0] sm:$0xff] 0.0
  %7725 = vst [vmem:[#allocation3 + $0x1d8] sm:$0x3] 0.0
  %7726 = vst [vmem:[#allocation3 + $0x1e0] sm:$0xff] 0.0
  %7727 = vst [vmem:[#allocation3 + $0x1e8] sm:$0xff] 0.0
  %7728 = vst [vmem:[#allocation3 + $0x1f0] sm:$0x3] 0.0
  %7729 = vst [vmem:[#allocation3 + $0x1f8] sm:$0xff] 0.0
  %7730 = vst [vmem:[#allocation3 + $0x200] sm:$0xff] 0.0
  %7731 = vst [vmem:[#allocation3 + $0x208] sm:$0x3] 0.0
  %7732 = vst [vmem:[#allocation3 + $0x210] sm:$0xff] 0.0
  %7733 = vst [vmem:[#allocation3 + $0x218] sm:$0xff] 0.0
  %7734 = vst [vmem:[#allocation3 + $0x220] sm:$0x3] 0.0
  %7735 = vst [vmem:[#allocation3 + $0x228] sm:$0xff] 0.0
  %7736 = vst [vmem:[#allocation3 + $0x230] sm:$0xff] 0.0
  %7737 = vst [vmem:[#allocation3 + $0x238] sm:$0x3] 0.0
  %7738 = vst [vmem:[#allocation3 + $0x240] sm:$0xff] 0.0
  %7739 = vst [vmem:[#allocation3 + $0x248] sm:$0xff] 0.0
  %7740 = vst [vmem:[#allocation3 + $0x250] sm:$0x3] 0.0
  %7741 = vst [vmem:[#allocation3 + $0x258] sm:$0xff] 0.0
  %7742 = vst [vmem:[#allocation3 + $0x260] sm:$0xff] 0.0
  %7743 = vst [vmem:[#allocation3 + $0x268] sm:$0x3] 0.0
  %7744 = vst [vmem:[#allocation3 + $0x270] sm:$0xff] 0.0
  %7745 = vst [vmem:[#allocation3 + $0x278] sm:$0xff] 0.0
  %7746 = vst [vmem:[#allocation3 + $0x280] sm:$0x3] 0.0
  %7747 = vst [vmem:[#allocation3 + $0x288] sm:$0xff] 0.0
  %7748 = vst [vmem:[#allocation3 + $0x290] sm:$0xff] 0.0
  %7749 = vst [vmem:[#allocation3 + $0x298] sm:$0x3] 0.0
  %7750 = vst [vmem:[#allocation3 + $0x2a0] sm:$0xff] 0.0
  %7751 = vst [vmem:[#allocation3 + $0x2a8] sm:$0xff] 0.0
  %7752 = vst [vmem:[#allocation3 + $0x2b0] sm:$0x3] 0.0
  %7753 = vst [vmem:[#allocation3 + $0x2b8] sm:$0xff] 0.0
  %7754 = vst [vmem:[#allocation3 + $0x2c0] sm:$0xff] 0.0
  %7755 = vst [vmem:[#allocation3 + $0x2c8] sm:$0x3] 0.0
  %7756 = vst [vmem:[#allocation3 + $0x2d0] sm:$0xff] 0.0
  %7757 = vst [vmem:[#allocation3 + $0x2d8] sm:$0xff] 0.0
  %7758 = vst [vmem:[#allocation3 + $0x2e0] sm:$0x3] 0.0
  %7759 = vst [vmem:[#allocation3 + $0x2e8] sm:$0xff] 0.0
  %7760 = vst [vmem:[#allocation3 + $0x2f0] sm:$0xff] 0.0
  %7761 = vst [vmem:[#allocation3 + $0x2f8] sm:$0x3] 0.0
  %7762 = vst [vmem:[#allocation3 + $0x300] sm:$0xff] 0.0
  %7763 = vst [vmem:[#allocation3 + $0x308] sm:$0xff] 0.0
  %7764 = vst [vmem:[#allocation3 + $0x310] sm:$0x3] 0.0
  %7765 = vst [vmem:[#allocation3 + $0x318] sm:$0xff] 0.0
  %7766 = vst [vmem:[#allocation3 + $0x320] sm:$0xff] 0.0
  %7767 = vst [vmem:[#allocation3 + $0x328] sm:$0x3] 0.0
  %7768 = vst [vmem:[#allocation3 + $0x330] sm:$0xff] 0.0
  %7769 = vst [vmem:[#allocation3 + $0x338] sm:$0xff] 0.0
  %7770 = vst [vmem:[#allocation3 + $0x340] sm:$0x3] 0.0
  %7771 = vst [vmem:[#allocation3 + $0x348] sm:$0xff] 0.0
  %7772 = vst [vmem:[#allocation3 + $0x350] sm:$0xff] 0.0
  %7773 = vst [vmem:[#allocation3 + $0x358] sm:$0x3] 0.0
  %s7774 = scalar_lea.vmem [#allocation3], 24
  %7775 = vst [vmem:[%s7774 + $0x1] sm:$0xff] %v7602
  %7776 = vst [vmem:[%s7774 + $0x9] sm:$0xff] %v7603
  %7777 = vst [vmem:[%s7774 + $0x19] sm:$0xff] %v7604
  %7778 = vst [vmem:[%s7774 + $0x21] sm:$0xff] %v7605
  %7779 = vst [vmem:[%s7774 + $0x31] sm:$0xff] %v7606
  %7780 = vst [vmem:[%s7774 + $0x39] sm:$0xff] %v7607
  %7781 = vst [vmem:[%s7774 + $0x49] sm:$0xff] %v7608
  %7782 = vst [vmem:[%s7774 + $0x51] sm:$0xff] %v7609
  %7783 = vst [vmem:[%s7774 + $0x61] sm:$0xff] %v7610
  %7784 = vst [vmem:[%s7774 + $0x69] sm:$0xff] %v7611
  %7785 = vst [vmem:[%s7774 + $0x79] sm:$0xff] %v7612
  %7786 = vst [vmem:[%s7774 + $0x81] sm:$0xff] %v7613
  %7787 = vst [vmem:[%s7774 + $0x91] sm:$0xff] %v7614
  %7788 = vst [vmem:[%s7774 + $0x99] sm:$0xff] %v7615
  %7789 = vst [vmem:[%s7774 + $0xa9] sm:$0xff] %v7616
  %7790 = vst [vmem:[%s7774 + $0xb1] sm:$0xff] %v7617
  %7791 = vst [vmem:[%s7774 + $0xc1] sm:$0xff] %v7618
  %7792 = vst [vmem:[%s7774 + $0xc9] sm:$0xff] %v7619
  %7793 = vst [vmem:[%s7774 + $0xd9] sm:$0xff] %v7620
  %7794 = vst [vmem:[%s7774 + $0xe1] sm:$0xff] %v7621
  %7795 = vst [vmem:[%s7774 + $0xf1] sm:$0xff] %v7622
  %7796 = vst [vmem:[%s7774 + $0xf9] sm:$0xff] %v7623
  %7797 = vst [vmem:[%s7774 + $0x109] sm:$0xff] %v7624
  %7798 = vst [vmem:[%s7774 + $0x111] sm:$0xff] %v7625
  %7799 = vst [vmem:[%s7774 + $0x121] sm:$0xff] %v7626
  %7800 = vst [vmem:[%s7774 + $0x129] sm:$0xff] %v7627
  %7801 = vst [vmem:[%s7774 + $0x139] sm:$0xff] %v7628
  %7802 = vst [vmem:[%s7774 + $0x141] sm:$0xff] %v7629
  %7803 = vst [vmem:[%s7774 + $0x151] sm:$0xff] %v7630
  %7804 = vst [vmem:[%s7774 + $0x159] sm:$0xff] %v7631
  %7805 = vst [vmem:[%s7774 + $0x169] sm:$0xff] %v7632
  %7806 = vst [vmem:[%s7774 + $0x171] sm:$0xff] %v7633
  %7807 = vst [vmem:[%s7774 + $0x1b1] sm:$0xff] %v7634
  %7808 = vst [vmem:[%s7774 + $0x1b9] sm:$0xff] %v7635
  %7809 = vst [vmem:[%s7774 + $0x1c9] sm:$0xff] %v7636
  %7810 = vst [vmem:[%s7774 + $0x1d1] sm:$0xff] %v7637
  %7811 = vst [vmem:[%s7774 + $0x1e1] sm:$0xff] %v7638
  %7812 = vst [vmem:[%s7774 + $0x1e9] sm:$0xff] %v7639
  %7813 = vst [vmem:[%s7774 + $0x1f9] sm:$0xff] %v7640
  %7814 = vst [vmem:[%s7774 + $0x201] sm:$0xff] %v7641
  %7815 = vst [vmem:[%s7774 + $0x211] sm:$0xff] %v7642
  %7816 = vst [vmem:[%s7774 + $0x219] sm:$0xff] %v7643
  %7817 = vst [vmem:[%s7774 + $0x229] sm:$0xff] %v7644
  %7818 = vst [vmem:[%s7774 + $0x231] sm:$0xff] %v7645
  %7819 = vst [vmem:[%s7774 + $0x241] sm:$0xff] %v7646
  %7820 = vst [vmem:[%s7774 + $0x249] sm:$0xff] %v7647
  %7821 = vst [vmem:[%s7774 + $0x259] sm:$0xff] %v7648
  %7822 = vst [vmem:[%s7774 + $0x261] sm:$0xff] %v7649
  %7823 = vst [vmem:[%s7774 + $0x271] sm:$0xff] %v7650
  %7824 = vst [vmem:[%s7774 + $0x279] sm:$0xff] %v7651
  %7825 = vst [vmem:[%s7774 + $0x289] sm:$0xff] %v7652
  %7826 = vst [vmem:[%s7774 + $0x291] sm:$0xff] %v7653
  %7827 = vst [vmem:[%s7774 + $0x2a1] sm:$0xff] %v7654
  %7828 = vst [vmem:[%s7774 + $0x2a9] sm:$0xff] %v7655
  %7829 = vst [vmem:[%s7774 + $0x2b9] sm:$0xff] %v7656
  %7830 = vst [vmem:[%s7774 + $0x2c1] sm:$0xff] %v7657
  %7831 = vst [vmem:[%s7774 + $0x2d1] sm:$0xff] %v7658
  %7832 = vst [vmem:[%s7774 + $0x2d9] sm:$0xff] %v7659
  %7833 = vst [vmem:[%s7774 + $0x2e9] sm:$0xff] %v7660
  %7834 = vst [vmem:[%s7774 + $0x2f1] sm:$0xff] %v7661
  %7835 = vst [vmem:[%s7774 + $0x301] sm:$0xff] %v7662
  %7836 = vst [vmem:[%s7774 + $0x309] sm:$0xff] %v7663
  %7837 = vst [vmem:[%s7774 + $0x319] sm:$0xff] %v7664
  %7838 = vst [vmem:[%s7774 + $0x321] sm:$0xff] %v7665
  %v7839 = vld [vmem:[%s4] sm:$0xf]
  %v7840 = vld [vmem:[%s4 + $0x4] sm:$0xf]
  %v7841 = vld [vmem:[%s4 + $0x8] sm:$0xf]
  %v7842 = vld [vmem:[%s4 + $0xc] sm:$0xf]
  %v7843 = vld [vmem:[%s4 + $0x10] sm:$0xf]
  %v7844 = vld [vmem:[%s4 + $0x14] sm:$0xf]
  %v7845 = vld [vmem:[%s4 + $0x18] sm:$0xf]
  %v7846 = vld [vmem:[%s4 + $0x1c] sm:$0xf]
  %v7847 = vld [vmem:[%s4 + $0x20] sm:$0xf]
  %v7848 = vld [vmem:[%s4 + $0x24] sm:$0xf]
  %v7849 = vld [vmem:[%s4 + $0x28] sm:$0xf]
  %v7850 = vld [vmem:[%s4 + $0x2c] sm:$0xf]
  %v7851 = vld [vmem:[%s4 + $0x30] sm:$0xf]
  %v7852 = vld [vmem:[%s4 + $0x34] sm:$0xf]
  %v7853 = vld [vmem:[%s4 + $0x38] sm:$0xf]
  %v7854 = vld [vmem:[%s4 + $0x3c] sm:$0xf]
  %v7855 = vld [vmem:[%s4 + $0x40] sm:$0xf]
  %v7856 = vld [vmem:[%s4 + $0x44] sm:$0xf]
  %v7857 = vld [vmem:[%s4 + $0x48] sm:$0xf]
  %v7858 = vld [vmem:[%s4 + $0x4c] sm:$0xf]
  %v7859 = vld [vmem:[%s4 + $0x50] sm:$0xf]
  %v7860 = vld [vmem:[%s4 + $0x54] sm:$0xf]
  %v7861 = vld [vmem:[%s4 + $0x58] sm:$0xf]
  %v7862 = vld [vmem:[%s4 + $0x5c] sm:$0xf]
  %v7863 = vld [vmem:[%s4 + $0x60] sm:$0xf]
  %v7864 = vld [vmem:[%s4 + $0x64] sm:$0xf]
  %v7865 = vld [vmem:[%s4 + $0x68] sm:$0xf]
  %v7866 = vld [vmem:[%s4 + $0x6c] sm:$0xf]
  %v7867 = vld [vmem:[%s4 + $0x70] sm:$0xf]
  %v7868 = vld [vmem:[%s4 + $0x74] sm:$0xf]
  %v7869 = vld [vmem:[%s4 + $0x78] sm:$0xf]
  %v7870 = vld [vmem:[%s4 + $0x7c] sm:$0xf]
  %v7871 = vld [vmem:[%s4 + $0x80] sm:$0xf]
  %v7872 = vld [vmem:[%s4 + $0x84] sm:$0xf]
  %v7873 = vld [vmem:[%s4 + $0x88] sm:$0xf]
  %v7874 = vld [vmem:[%s4 + $0x8c] sm:$0xf]
  %v7875 = vld [vmem:[%s4 + $0x90] sm:$0xf]
  %v7876 = vld [vmem:[%s4 + $0x94] sm:$0xf]
  %v7877 = vld [vmem:[%s4 + $0x98] sm:$0xf]
  %v7878 = vld [vmem:[%s4 + $0x9c] sm:$0xf]
  %v7879 = vld [vmem:[%s4 + $0xa0] sm:$0xf]
  %v7880 = vld [vmem:[%s4 + $0xa4] sm:$0xf]
  %v7881 = vld [vmem:[%s4 + $0xa8] sm:$0xf]
  %v7882 = vld [vmem:[%s4 + $0xac] sm:$0xf]
  %v7883 = vld [vmem:[%s4 + $0xb0] sm:$0xf]
  %v7884 = vld [vmem:[%s4 + $0xb4] sm:$0xf]
  %v7885 = vld [vmem:[%s4 + $0xb8] sm:$0xf]
  %v7886 = vld [vmem:[%s4 + $0xbc] sm:$0xf]
  %v7887 = vld [vmem:[%s4 + $0xc0] sm:$0xf]
  %v7888 = vld [vmem:[%s4 + $0xc4] sm:$0xf]
  %v7889 = vld [vmem:[%s4 + $0xc8] sm:$0xf]
  %v7890 = vld [vmem:[%s4 + $0xcc] sm:$0xf]
  %v7891 = vld [vmem:[%s4 + $0xd0] sm:$0xf]
  %v7892 = vld [vmem:[%s4 + $0xd4] sm:$0xf]
  %v7893 = vld [vmem:[%s4 + $0xd8] sm:$0xf]
  %v7894 = vld [vmem:[%s4 + $0xdc] sm:$0xf]
  %v7895 = vld [vmem:[%s4 + $0xe0] sm:$0xf]
  %v7896 = vld [vmem:[%s4 + $0xe4] sm:$0xf]
  %v7897 = vld [vmem:[%s4 + $0xe8] sm:$0xf]
  %v7898 = vld [vmem:[%s4 + $0xec] sm:$0xf]
  %v7899 = vld [vmem:[%s4 + $0xf0] sm:$0xf]
  %v7900 = vld [vmem:[%s4 + $0xf4] sm:$0xf]
  %v7901 = vld [vmem:[%s4 + $0xf8] sm:$0xf]
  %v7902 = vld [vmem:[%s4 + $0xfc] sm:$0xf]
  %v7903 = vld [vmem:[%s4 + $0x100] sm:$0xf]
  %v7904 = vld [vmem:[%s4 + $0x104] sm:$0xf]
  %v7905 = vld [vmem:[%s4 + $0x108] sm:$0xf]
  %v7906 = vld [vmem:[%s4 + $0x10c] sm:$0xf]
  %v7907 = vld [vmem:[%s4 + $0x110] sm:$0xf]
  %v7908 = vld [vmem:[%s4 + $0x114] sm:$0xf]
  %v7909 = vld [vmem:[%s4 + $0x118] sm:$0xf]
  %v7910 = vld [vmem:[%s4 + $0x11c] sm:$0xf]
  %v7911 = vld [vmem:[%s4 + $0x120] sm:$0xf]
  %v7912 = vld [vmem:[%s4 + $0x124] sm:$0xf]
  %v7913 = vld [vmem:[%s4 + $0x128] sm:$0xf]
  %v7914 = vld [vmem:[%s4 + $0x12c] sm:$0xf]
  %v7915 = vld [vmem:[%s4 + $0x130] sm:$0xf]
  %v7916 = vld [vmem:[%s4 + $0x134] sm:$0xf]
  %v7917 = vld [vmem:[%s4 + $0x138] sm:$0xf]
  %v7918 = vld [vmem:[%s4 + $0x13c] sm:$0xf]
  %v7919 = vld [vmem:[%s4 + $0x140] sm:$0xf]
  %v7920 = vld [vmem:[%s4 + $0x144] sm:$0xf]
  %v7921 = vld [vmem:[%s4 + $0x148] sm:$0xf]
  %v7922 = vld [vmem:[%s4 + $0x14c] sm:$0xf]
  %v7923 = vld [vmem:[%s4 + $0x150] sm:$0xf]
  %v7924 = vld [vmem:[%s4 + $0x154] sm:$0xf]
  %v7925 = vld [vmem:[%s4 + $0x158] sm:$0xf]
  %v7926 = vld [vmem:[%s4 + $0x15c] sm:$0xf]
  %v7927 = vld [vmem:[%s4 + $0x160] sm:$0xf]
  %v7928 = vld [vmem:[%s4 + $0x164] sm:$0xf]
  %v7929 = vld [vmem:[%s4 + $0x168] sm:$0xf]
  %v7930 = vld [vmem:[%s4 + $0x16c] sm:$0xf]
  %v7931 = vld [vmem:[%s4 + $0x170] sm:$0xf]
  %v7932 = vld [vmem:[%s4 + $0x174] sm:$0xf]
  %v7933 = vld [vmem:[%s4 + $0x178] sm:$0xf]
  %v7934 = vld [vmem:[%s4 + $0x17c] sm:$0xf]
  %v7935 = vld [vmem:[%s4 + $0x180] sm:$0xf]
  %v7936 = vld [vmem:[%s4 + $0x184] sm:$0xf]
  %v7937 = vld [vmem:[%s4 + $0x188] sm:$0xf]
  %v7938 = vld [vmem:[%s4 + $0x18c] sm:$0xf]
  %v7939 = vld [vmem:[%s4 + $0x190] sm:$0xf]
  %v7940 = vld [vmem:[%s4 + $0x194] sm:$0xf]
  %v7941 = vld [vmem:[%s4 + $0x198] sm:$0xf]
  %v7942 = vld [vmem:[%s4 + $0x19c] sm:$0xf]
  %v7943 = vld [vmem:[%s4 + $0x1a0] sm:$0xf]
  %v7944 = vld [vmem:[%s4 + $0x1a4] sm:$0xf]
  %v7945 = vld [vmem:[%s4 + $0x1a8] sm:$0xf]
  %v7946 = vld [vmem:[%s4 + $0x1ac] sm:$0xf]
  %v7947 = vld [vmem:[%s4 + $0x1b0] sm:$0xf]
  %v7948 = vld [vmem:[%s4 + $0x1b4] sm:$0xf]
  %v7949 = vld [vmem:[%s4 + $0x1b8] sm:$0xf]
  %v7950 = vld [vmem:[%s4 + $0x1bc] sm:$0xf]
  %v7951 = vld [vmem:[%s4 + $0x1c0] sm:$0xf]
  %v7952 = vld [vmem:[%s4 + $0x1c4] sm:$0xf]
  %v7953 = vld [vmem:[%s4 + $0x1c8] sm:$0xf]
  %v7954 = vld [vmem:[%s4 + $0x1cc] sm:$0xf]
  %v7955 = vld [vmem:[%s4 + $0x1d0] sm:$0xf]
  %v7956 = vld [vmem:[%s4 + $0x1d4] sm:$0xf]
  %v7957 = vld [vmem:[%s4 + $0x1d8] sm:$0xf]
  %v7958 = vld [vmem:[%s4 + $0x1dc] sm:$0xf]
  %v7959 = vld [vmem:[%s4 + $0x1e0] sm:$0xf]
  %v7960 = vld [vmem:[%s4 + $0x1e4] sm:$0xf]
  %v7961 = vld [vmem:[%s4 + $0x1e8] sm:$0xf]
  %v7962 = vld [vmem:[%s4 + $0x1ec] sm:$0xf]
  %v7963 = vld [vmem:[%s4 + $0x1f0] sm:$0xf]
  %v7964 = vld [vmem:[%s4 + $0x1f4] sm:$0xf]
  %v7965 = vld [vmem:[%s4 + $0x1f8] sm:$0xf]
  %v7966 = vld [vmem:[%s4 + $0x1fc] sm:$0xf]
  %v7967 = vld [vmem:[%s4 + $0x200] sm:$0xf]
  %v7968 = vld [vmem:[%s4 + $0x204] sm:$0xf]
  %v7969 = vld [vmem:[%s4 + $0x208] sm:$0xf]
  %v7970 = vld [vmem:[%s4 + $0x20c] sm:$0xf]
  %v7971 = vld [vmem:[%s4 + $0x210] sm:$0xf]
  %v7972 = vld [vmem:[%s4 + $0x214] sm:$0xf]
  %v7973 = vld [vmem:[%s4 + $0x218] sm:$0xf]
  %v7974 = vld [vmem:[%s4 + $0x21c] sm:$0xf]
  %v7975 = vld [vmem:[%s4 + $0x220] sm:$0xf]
  %v7976 = vld [vmem:[%s4 + $0x224] sm:$0xf]
  %v7977 = vld [vmem:[%s4 + $0x228] sm:$0xf]
  %v7978 = vld [vmem:[%s4 + $0x22c] sm:$0xf]
  %v7979 = vld [vmem:[%s4 + $0x230] sm:$0xf]
  %v7980 = vld [vmem:[%s4 + $0x234] sm:$0xf]
  %v7981 = vld [vmem:[%s4 + $0x238] sm:$0xf]
  %v7982 = vld [vmem:[%s4 + $0x23c] sm:$0xf]
  %v7983 = vld [vmem:[#allocation3] sm:$0xff]
  %v7984 = vld [vmem:[#allocation3 + $0x8] sm:$0xff]
  %v7985 = vld [vmem:[#allocation3 + $0x18] sm:$0xff]
  %v7986 = vld [vmem:[#allocation3 + $0x20] sm:$0xff]
  %v7987 = vld [vmem:[#allocation3 + $0x30] sm:$0xff]
  %v7988 = vld [vmem:[#allocation3 + $0x38] sm:$0xff]
  %v7989 = vld [vmem:[#allocation3 + $0x48] sm:$0xff]
  %v7990 = vld [vmem:[#allocation3 + $0x50] sm:$0xff]
  %v7991 = vld [vmem:[#allocation3 + $0x60] sm:$0xff]
  %v7992 = vld [vmem:[#allocation3 + $0x68] sm:$0xff]
  %v7993 = vld [vmem:[#allocation3 + $0x78] sm:$0xff]
  %v7994 = vld [vmem:[#allocation3 + $0x80] sm:$0xff]
  %v7995 = vld [vmem:[#allocation3 + $0x90] sm:$0xff]
  %v7996 = vld [vmem:[#allocation3 + $0x98] sm:$0xff]
  %v7997 = vld [vmem:[#allocation3 + $0xa8] sm:$0xff]
  %v7998 = vld [vmem:[#allocation3 + $0xb0] sm:$0xff]
  %v7999 = vld [vmem:[#allocation3 + $0xc0] sm:$0xff]
  %v8000 = vld [vmem:[#allocation3 + $0xc8] sm:$0xff]
  %v8001 = vld [vmem:[#allocation3 + $0xd8] sm:$0xff]
  %v8002 = vld [vmem:[#allocation3 + $0xe0] sm:$0xff]
  %v8003 = vld [vmem:[#allocation3 + $0xf0] sm:$0xff]
  %v8004 = vld [vmem:[#allocation3 + $0xf8] sm:$0xff]
  %v8005 = vld [vmem:[#allocation3 + $0x108] sm:$0xff]
  %v8006 = vld [vmem:[#allocation3 + $0x110] sm:$0xff]
  %v8007 = vld [vmem:[#allocation3 + $0x120] sm:$0xff]
  %v8008 = vld [vmem:[#allocation3 + $0x128] sm:$0xff]
  %v8009 = vld [vmem:[#allocation3 + $0x138] sm:$0xff]
  %v8010 = vld [vmem:[#allocation3 + $0x140] sm:$0xff]
  %v8011 = vld [vmem:[#allocation3 + $0x150] sm:$0xff]
  %v8012 = vld [vmem:[#allocation3 + $0x158] sm:$0xff]
  %v8013 = vld [vmem:[#allocation3 + $0x168] sm:$0xff]
  %v8014 = vld [vmem:[#allocation3 + $0x170] sm:$0xff]
  %v8015 = vpack.c.bf16 %v7984, %v7983
  %v8016 = vpack.c.bf16 %v7986, %v7985
  %v8017 = vpack.c.bf16 %v7988, %v7987
  %v8018 = vpack.c.bf16 %v7990, %v7989
  %v8019 = vpack.c.bf16 %v7992, %v7991
  %v8020 = vpack.c.bf16 %v7994, %v7993
  %v8021 = vpack.c.bf16 %v7996, %v7995
  %v8022 = vpack.c.bf16 %v7998, %v7997
  %v8023 = vpack.c.bf16 %v8000, %v7999
  %v8024 = vpack.c.bf16 %v8002, %v8001
  %v8025 = vpack.c.bf16 %v8004, %v8003
  %v8026 = vpack.c.bf16 %v8006, %v8005
  %v8027 = vpack.c.bf16 %v8008, %v8007
  %v8028 = vpack.c.bf16 %v8010, %v8009
  %v8029 = vpack.c.bf16 %v8012, %v8011
  %v8030 = vpack.c.bf16 %v8014, %v8013
  %v8031 = vld [vmem:[#allocation3 + $0x1] sm:$0xff]
  %v8032 = vld [vmem:[#allocation3 + $0x9] sm:$0xff]
  %v8033 = vld [vmem:[#allocation3 + $0x19] sm:$0xff]
  %v8034 = vld [vmem:[#allocation3 + $0x21] sm:$0xff]
  %v8035 = vld [vmem:[#allocation3 + $0x31] sm:$0xff]
  %v8036 = vld [vmem:[#allocation3 + $0x39] sm:$0xff]
  %v8037 = vld [vmem:[#allocation3 + $0x49] sm:$0xff]
  %v8038 = vld [vmem:[#allocation3 + $0x51] sm:$0xff]
  %v8039 = vld [vmem:[#allocation3 + $0x61] sm:$0xff]
  %v8040 = vld [vmem:[#allocation3 + $0x69] sm:$0xff]
  %v8041 = vld [vmem:[#allocation3 + $0x79] sm:$0xff]
  %v8042 = vld [vmem:[#allocation3 + $0x81] sm:$0xff]
  %v8043 = vld [vmem:[#allocation3 + $0x91] sm:$0xff]
  %v8044 = vld [vmem:[#allocation3 + $0x99] sm:$0xff]
  %v8045 = vld [vmem:[#allocation3 + $0xa9] sm:$0xff]
  %v8046 = vld [vmem:[#allocation3 + $0xb1] sm:$0xff]
  %v8047 = vld [vmem:[#allocation3 + $0xc1] sm:$0xff]
  %v8048 = vld [vmem:[#allocation3 + $0xc9] sm:$0xff]
  %v8049 = vld [vmem:[#allocation3 + $0xd9] sm:$0xff]
  %v8050 = vld [vmem:[#allocation3 + $0xe1] sm:$0xff]
  %v8051 = vld [vmem:[#allocation3 + $0xf1] sm:$0xff]
  %v8052 = vld [vmem:[#allocation3 + $0xf9] sm:$0xff]
  %v8053 = vld [vmem:[#allocation3 + $0x109] sm:$0xff]
  %v8054 = vld [vmem:[#allocation3 + $0x111] sm:$0xff]
  %v8055 = vld [vmem:[#allocation3 + $0x121] sm:$0xff]
  %v8056 = vld [vmem:[#allocation3 + $0x129] sm:$0xff]
  %v8057 = vld [vmem:[#allocation3 + $0x139] sm:$0xff]
  %v8058 = vld [vmem:[#allocation3 + $0x141] sm:$0xff]
  %v8059 = vld [vmem:[#allocation3 + $0x151] sm:$0xff]
  %v8060 = vld [vmem:[#allocation3 + $0x159] sm:$0xff]
  %v8061 = vld [vmem:[#allocation3 + $0x169] sm:$0xff]
  %v8062 = vld [vmem:[#allocation3 + $0x171] sm:$0xff]
  %v8063 = vpack.c.bf16 %v8032, %v8031
  %v8064 = vpack.c.bf16 %v8034, %v8033
  %v8065 = vpack.c.bf16 %v8036, %v8035
  %v8066 = vpack.c.bf16 %v8038, %v8037
  %v8067 = vpack.c.bf16 %v8040, %v8039
  %v8068 = vpack.c.bf16 %v8042, %v8041
  %v8069 = vpack.c.bf16 %v8044, %v8043
  %v8070 = vpack.c.bf16 %v8046, %v8045
  %v8071 = vpack.c.bf16 %v8048, %v8047
  %v8072 = vpack.c.bf16 %v8050, %v8049
  %v8073 = vpack.c.bf16 %v8052, %v8051
  %v8074 = vpack.c.bf16 %v8054, %v8053
  %v8075 = vpack.c.bf16 %v8056, %v8055
  %v8076 = vpack.c.bf16 %v8058, %v8057
  %v8077 = vpack.c.bf16 %v8060, %v8059
  %v8078 = vpack.c.bf16 %v8062, %v8061
  %v8079 = vld [vmem:[#allocation3 + $0x2] sm:$0xff]
  %v8080 = vld [vmem:[#allocation3 + $0xa] sm:$0xff]
  %v8081 = vld [vmem:[#allocation3 + $0x1a] sm:$0xff]
  %v8082 = vld [vmem:[#allocation3 + $0x22] sm:$0xff]
  %v8083 = vld [vmem:[#allocation3 + $0x32] sm:$0xff]
  %v8084 = vld [vmem:[#allocation3 + $0x3a] sm:$0xff]
  %v8085 = vld [vmem:[#allocation3 + $0x4a] sm:$0xff]
  %v8086 = vld [vmem:[#allocation3 + $0x52] sm:$0xff]
  %v8087 = vld [vmem:[#allocation3 + $0x62] sm:$0xff]
  %v8088 = vld [vmem:[#allocation3 + $0x6a] sm:$0xff]
  %v8089 = vld [vmem:[#allocation3 + $0x7a] sm:$0xff]
  %v8090 = vld [vmem:[#allocation3 + $0x82] sm:$0xff]
  %v8091 = vld [vmem:[#allocation3 + $0x92] sm:$0xff]
  %v8092 = vld [vmem:[#allocation3 + $0x9a] sm:$0xff]
  %v8093 = vld [vmem:[#allocation3 + $0xaa] sm:$0xff]
  %v8094 = vld [vmem:[#allocation3 + $0xb2] sm:$0xff]
  %v8095 = vld [vmem:[#allocation3 + $0xc2] sm:$0xff]
  %v8096 = vld [vmem:[#allocation3 + $0xca] sm:$0xff]
  %v8097 = vld [vmem:[#allocation3 + $0xda] sm:$0xff]
  %v8098 = vld [vmem:[#allocation3 + $0xe2] sm:$0xff]
  %v8099 = vld [vmem:[#allocation3 + $0xf2] sm:$0xff]
  %v8100 = vld [vmem:[#allocation3 + $0xfa] sm:$0xff]
  %v8101 = vld [vmem:[#allocation3 + $0x10a] sm:$0xff]
  %v8102 = vld [vmem:[#allocation3 + $0x112] sm:$0xff]
  %v8103 = vld [vmem:[#allocation3 + $0x122] sm:$0xff]
  %v8104 = vld [vmem:[#allocation3 + $0x12a] sm:$0xff]
  %v8105 = vld [vmem:[#allocation3 + $0x13a] sm:$0xff]
  %v8106 = vld [vmem:[#allocation3 + $0x142] sm:$0xff]
  %v8107 = vld [vmem:[#allocation3 + $0x152] sm:$0xff]
  %v8108 = vld [vmem:[#allocation3 + $0x15a] sm:$0xff]
  %v8109 = vld [vmem:[#allocation3 + $0x16a] sm:$0xff]
  %v8110 = vld [vmem:[#allocation3 + $0x172] sm:$0xff]
  %v8111 = vpack.c.bf16 %v8080, %v8079
  %v8112 = vpack.c.bf16 %v8082, %v8081
  %v8113 = vpack.c.bf16 %v8084, %v8083
  %v8114 = vpack.c.bf16 %v8086, %v8085
  %v8115 = vpack.c.bf16 %v8088, %v8087
  %v8116 = vpack.c.bf16 %v8090, %v8089
  %v8117 = vpack.c.bf16 %v8092, %v8091
  %v8118 = vpack.c.bf16 %v8094, %v8093
  %v8119 = vpack.c.bf16 %v8096, %v8095
  %v8120 = vpack.c.bf16 %v8098, %v8097
  %v8121 = vpack.c.bf16 %v8100, %v8099
  %v8122 = vpack.c.bf16 %v8102, %v8101
  %v8123 = vpack.c.bf16 %v8104, %v8103
  %v8124 = vpack.c.bf16 %v8106, %v8105
  %v8125 = vpack.c.bf16 %v8108, %v8107
  %v8126 = vpack.c.bf16 %v8110, %v8109
  %v8127 = vld [vmem:[%s7774] sm:$0xff]
  %v8128 = vld [vmem:[%s7774 + $0x8] sm:$0xff]
  %v8129 = vld [vmem:[%s7774 + $0x18] sm:$0xff]
  %v8130 = vld [vmem:[%s7774 + $0x20] sm:$0xff]
  %v8131 = vld [vmem:[%s7774 + $0x30] sm:$0xff]
  %v8132 = vld [vmem:[%s7774 + $0x38] sm:$0xff]
  %v8133 = vld [vmem:[%s7774 + $0x48] sm:$0xff]
  %v8134 = vld [vmem:[%s7774 + $0x50] sm:$0xff]
  %v8135 = vld [vmem:[%s7774 + $0x60] sm:$0xff]
  %v8136 = vld [vmem:[%s7774 + $0x68] sm:$0xff]
  %v8137 = vld [vmem:[%s7774 + $0x78] sm:$0xff]
  %v8138 = vld [vmem:[%s7774 + $0x80] sm:$0xff]
  %v8139 = vld [vmem:[%s7774 + $0x90] sm:$0xff]
  %v8140 = vld [vmem:[%s7774 + $0x98] sm:$0xff]
  %v8141 = vld [vmem:[%s7774 + $0xa8] sm:$0xff]
  %v8142 = vld [vmem:[%s7774 + $0xb0] sm:$0xff]
  %v8143 = vld [vmem:[%s7774 + $0xc0] sm:$0xff]
  %v8144 = vld [vmem:[%s7774 + $0xc8] sm:$0xff]
  %v8145 = vld [vmem:[%s7774 + $0xd8] sm:$0xff]
  %v8146 = vld [vmem:[%s7774 + $0xe0] sm:$0xff]
  %v8147 = vld [vmem:[%s7774 + $0xf0] sm:$0xff]
  %v8148 = vld [vmem:[%s7774 + $0xf8] sm:$0xff]
  %v8149 = vld [vmem:[%s7774 + $0x108] sm:$0xff]
  %v8150 = vld [vmem:[%s7774 + $0x110] sm:$0xff]
  %v8151 = vld [vmem:[%s7774 + $0x120] sm:$0xff]
  %v8152 = vld [vmem:[%s7774 + $0x128] sm:$0xff]
  %v8153 = vld [vmem:[%s7774 + $0x138] sm:$0xff]
  %v8154 = vld [vmem:[%s7774 + $0x140] sm:$0xff]
  %v8155 = vld [vmem:[%s7774 + $0x150] sm:$0xff]
  %v8156 = vld [vmem:[%s7774 + $0x158] sm:$0xff]
  %v8157 = vld [vmem:[%s7774 + $0x168] sm:$0xff]
  %v8158 = vld [vmem:[%s7774 + $0x170] sm:$0xff]
  %v8159 = vpack.c.bf16 %v8128, %v8127
  %v8160 = vpack.c.bf16 %v8130, %v8129
  %v8161 = vpack.c.bf16 %v8132, %v8131
  %v8162 = vpack.c.bf16 %v8134, %v8133
  %v8163 = vpack.c.bf16 %v8136, %v8135
  %v8164 = vpack.c.bf16 %v8138, %v8137
  %v8165 = vpack.c.bf16 %v8140, %v8139
  %v8166 = vpack.c.bf16 %v8142, %v8141
  %v8167 = vpack.c.bf16 %v8144, %v8143
  %v8168 = vpack.c.bf16 %v8146, %v8145
  %v8169 = vpack.c.bf16 %v8148, %v8147
  %v8170 = vpack.c.bf16 %v8150, %v8149
  %v8171 = vpack.c.bf16 %v8152, %v8151
  %v8172 = vpack.c.bf16 %v8154, %v8153
  %v8173 = vpack.c.bf16 %v8156, %v8155
  %v8174 = vpack.c.bf16 %v8158, %v8157
  %v8175 = vld [vmem:[%s7774 + $0x1] sm:$0xff]
  %v8176 = vld [vmem:[%s7774 + $0x9] sm:$0xff]
  %v8177 = vld [vmem:[%s7774 + $0x19] sm:$0xff]
  %v8178 = vld [vmem:[%s7774 + $0x21] sm:$0xff]
  %v8179 = vld [vmem:[%s7774 + $0x31] sm:$0xff]
  %v8180 = vld [vmem:[%s7774 + $0x39] sm:$0xff]
  %v8181 = vld [vmem:[%s7774 + $0x49] sm:$0xff]
  %v8182 = vld [vmem:[%s7774 + $0x51] sm:$0xff]
  %v8183 = vld [vmem:[%s7774 + $0x61] sm:$0xff]
  %v8184 = vld [vmem:[%s7774 + $0x69] sm:$0xff]
  %v8185 = vld [vmem:[%s7774 + $0x79] sm:$0xff]
  %v8186 = vld [vmem:[%s7774 + $0x81] sm:$0xff]
  %v8187 = vld [vmem:[%s7774 + $0x91] sm:$0xff]
  %v8188 = vld [vmem:[%s7774 + $0x99] sm:$0xff]
  %v8189 = vld [vmem:[%s7774 + $0xa9] sm:$0xff]
  %v8190 = vld [vmem:[%s7774 + $0xb1] sm:$0xff]
  %v8191 = vld [vmem:[%s7774 + $0xc1] sm:$0xff]
  %v8192 = vld [vmem:[%s7774 + $0xc9] sm:$0xff]
  %v8193 = vld [vmem:[%s7774 + $0xd9] sm:$0xff]
  %v8194 = vld [vmem:[%s7774 + $0xe1] sm:$0xff]
  %v8195 = vld [vmem:[%s7774 + $0xf1] sm:$0xff]
  %v8196 = vld [vmem:[%s7774 + $0xf9] sm:$0xff]
  %v8197 = vld [vmem:[%s7774 + $0x109] sm:$0xff]
  %v8198 = vld [vmem:[%s7774 + $0x111] sm:$0xff]
  %v8199 = vld [vmem:[%s7774 + $0x121] sm:$0xff]
  %v8200 = vld [vmem:[%s7774 + $0x129] sm:$0xff]
  %v8201 = vld [vmem:[%s7774 + $0x139] sm:$0xff]
  %v8202 = vld [vmem:[%s7774 + $0x141] sm:$0xff]
  %v8203 = vld [vmem:[%s7774 + $0x151] sm:$0xff]
  %v8204 = vld [vmem:[%s7774 + $0x159] sm:$0xff]
  %v8205 = vld [vmem:[%s7774 + $0x169] sm:$0xff]
  %v8206 = vld [vmem:[%s7774 + $0x171] sm:$0xff]
  %v8207 = vpack.c.bf16 %v8176, %v8175
  %v8208 = vpack.c.bf16 %v8178, %v8177
  %v8209 = vpack.c.bf16 %v8180, %v8179
  %v8210 = vpack.c.bf16 %v8182, %v8181
  %v8211 = vpack.c.bf16 %v8184, %v8183
  %v8212 = vpack.c.bf16 %v8186, %v8185
  %v8213 = vpack.c.bf16 %v8188, %v8187
  %v8214 = vpack.c.bf16 %v8190, %v8189
  %v8215 = vpack.c.bf16 %v8192, %v8191
  %v8216 = vpack.c.bf16 %v8194, %v8193
  %v8217 = vpack.c.bf16 %v8196, %v8195
  %v8218 = vpack.c.bf16 %v8198, %v8197
  %v8219 = vpack.c.bf16 %v8200, %v8199
  %v8220 = vpack.c.bf16 %v8202, %v8201
  %v8221 = vpack.c.bf16 %v8204, %v8203
  %v8222 = vpack.c.bf16 %v8206, %v8205
  %v8223 = vld [vmem:[%s7774 + $0x2] sm:$0xff]
  %v8224 = vld [vmem:[%s7774 + $0xa] sm:$0xff]
  %v8225 = vld [vmem:[%s7774 + $0x1a] sm:$0xff]
  %v8226 = vld [vmem:[%s7774 + $0x22] sm:$0xff]
  %v8227 = vld [vmem:[%s7774 + $0x32] sm:$0xff]
  %v8228 = vld [vmem:[%s7774 + $0x3a] sm:$0xff]
  %v8229 = vld [vmem:[%s7774 + $0x4a] sm:$0xff]
  %v8230 = vld [vmem:[%s7774 + $0x52] sm:$0xff]
  %v8231 = vld [vmem:[%s7774 + $0x62] sm:$0xff]
  %v8232 = vld [vmem:[%s7774 + $0x6a] sm:$0xff]
  %v8233 = vld [vmem:[%s7774 + $0x7a] sm:$0xff]
  %v8234 = vld [vmem:[%s7774 + $0x82] sm:$0xff]
  %v8235 = vld [vmem:[%s7774 + $0x92] sm:$0xff]
  %v8236 = vld [vmem:[%s7774 + $0x9a] sm:$0xff]
  %v8237 = vld [vmem:[%s7774 + $0xaa] sm:$0xff]
  %v8238 = vld [vmem:[%s7774 + $0xb2] sm:$0xff]
  %v8239 = vld [vmem:[%s7774 + $0xc2] sm:$0xff]
  %v8240 = vld [vmem:[%s7774 + $0xca] sm:$0xff]
  %v8241 = vld [vmem:[%s7774 + $0xda] sm:$0xff]
  %v8242 = vld [vmem:[%s7774 + $0xe2] sm:$0xff]
  %v8243 = vld [vmem:[%s7774 + $0xf2] sm:$0xff]
  %v8244 = vld [vmem:[%s7774 + $0xfa] sm:$0xff]
  %v8245 = vld [vmem:[%s7774 + $0x10a] sm:$0xff]
  %v8246 = vld [vmem:[%s7774 + $0x112] sm:$0xff]
  %v8247 = vld [vmem:[%s7774 + $0x122] sm:$0xff]
  %v8248 = vld [vmem:[%s7774 + $0x12a] sm:$0xff]
  %v8249 = vld [vmem:[%s7774 + $0x13a] sm:$0xff]
  %v8250 = vld [vmem:[%s7774 + $0x142] sm:$0xff]
  %v8251 = vld [vmem:[%s7774 + $0x152] sm:$0xff]
  %v8252 = vld [vmem:[%s7774 + $0x15a] sm:$0xff]
  %v8253 = vld [vmem:[%s7774 + $0x16a] sm:$0xff]
  %v8254 = vld [vmem:[%s7774 + $0x172] sm:$0xff]
  %v8255 = vpack.c.bf16 %v8224, %v8223
  %v8256 = vpack.c.bf16 %v8226, %v8225
  %v8257 = vpack.c.bf16 %v8228, %v8227
  %v8258 = vpack.c.bf16 %v8230, %v8229
  %v8259 = vpack.c.bf16 %v8232, %v8231
  %v8260 = vpack.c.bf16 %v8234, %v8233
  %v8261 = vpack.c.bf16 %v8236, %v8235
  %v8262 = vpack.c.bf16 %v8238, %v8237
  %v8263 = vpack.c.bf16 %v8240, %v8239
  %v8264 = vpack.c.bf16 %v8242, %v8241
  %v8265 = vpack.c.bf16 %v8244, %v8243
  %v8266 = vpack.c.bf16 %v8246, %v8245
  %v8267 = vpack.c.bf16 %v8248, %v8247
  %v8268 = vpack.c.bf16 %v8250, %v8249
  %v8269 = vpack.c.bf16 %v8252, %v8251
  %v8270 = vpack.c.bf16 %v8254, %v8253
  %s8271 = scalar_lea.vmem [#allocation3], 48
  %v8272 = vld [vmem:[%s8271] sm:$0xff]
  %v8273 = vld [vmem:[%s8271 + $0x8] sm:$0xff]
  %v8274 = vld [vmem:[%s8271 + $0x18] sm:$0xff]
  %v8275 = vld [vmem:[%s8271 + $0x20] sm:$0xff]
  %v8276 = vld [vmem:[%s8271 + $0x30] sm:$0xff]
  %v8277 = vld [vmem:[%s8271 + $0x38] sm:$0xff]
  %v8278 = vld [vmem:[%s8271 + $0x48] sm:$0xff]
  %v8279 = vld [vmem:[%s8271 + $0x50] sm:$0xff]
  %v8280 = vld [vmem:[%s8271 + $0x60] sm:$0xff]
  %v8281 = vld [vmem:[%s8271 + $0x68] sm:$0xff]
  %v8282 = vld [vmem:[%s8271 + $0x78] sm:$0xff]
  %v8283 = vld [vmem:[%s8271 + $0x80] sm:$0xff]
  %v8284 = vld [vmem:[%s8271 + $0x90] sm:$0xff]
  %v8285 = vld [vmem:[%s8271 + $0x98] sm:$0xff]
  %v8286 = vld [vmem:[%s8271 + $0xa8] sm:$0xff]
  %v8287 = vld [vmem:[%s8271 + $0xb0] sm:$0xff]
  %v8288 = vld [vmem:[%s8271 + $0xc0] sm:$0xff]
  %v8289 = vld [vmem:[%s8271 + $0xc8] sm:$0xff]
  %v8290 = vld [vmem:[%s8271 + $0xd8] sm:$0xff]
  %v8291 = vld [vmem:[%s8271 + $0xe0] sm:$0xff]
  %v8292 = vld [vmem:[%s8271 + $0xf0] sm:$0xff]
  %v8293 = vld [vmem:[%s8271 + $0xf8] sm:$0xff]
  %v8294 = vld [vmem:[%s8271 + $0x108] sm:$0xff]
  %v8295 = vld [vmem:[%s8271 + $0x110] sm:$0xff]
  %v8296 = vld [vmem:[%s8271 + $0x120] sm:$0xff]
  %v8297 = vld [vmem:[%s8271 + $0x128] sm:$0xff]
  %v8298 = vld [vmem:[%s8271 + $0x138] sm:$0xff]
  %v8299 = vld [vmem:[%s8271 + $0x140] sm:$0xff]
  %v8300 = vld [vmem:[%s8271 + $0x150] sm:$0xff]
  %v8301 = vld [vmem:[%s8271 + $0x158] sm:$0xff]
  %v8302 = vld [vmem:[%s8271 + $0x168] sm:$0xff]
  %v8303 = vld [vmem:[%s8271 + $0x170] sm:$0xff]
  %v8304 = vpack.c.bf16 %v8273, %v8272
  %v8305 = vpack.c.bf16 %v8275, %v8274
  %v8306 = vpack.c.bf16 %v8277, %v8276
  %v8307 = vpack.c.bf16 %v8279, %v8278
  %v8308 = vpack.c.bf16 %v8281, %v8280
  %v8309 = vpack.c.bf16 %v8283, %v8282
  %v8310 = vpack.c.bf16 %v8285, %v8284
  %v8311 = vpack.c.bf16 %v8287, %v8286
  %v8312 = vpack.c.bf16 %v8289, %v8288
  %v8313 = vpack.c.bf16 %v8291, %v8290
  %v8314 = vpack.c.bf16 %v8293, %v8292
  %v8315 = vpack.c.bf16 %v8295, %v8294
  %v8316 = vpack.c.bf16 %v8297, %v8296
  %v8317 = vpack.c.bf16 %v8299, %v8298
  %v8318 = vpack.c.bf16 %v8301, %v8300
  %v8319 = vpack.c.bf16 %v8303, %v8302
  %v8320 = vld [vmem:[%s8271 + $0x1] sm:$0xff]
  %v8321 = vld [vmem:[%s8271 + $0x9] sm:$0xff]
  %v8322 = vld [vmem:[%s8271 + $0x19] sm:$0xff]
  %v8323 = vld [vmem:[%s8271 + $0x21] sm:$0xff]
  %v8324 = vld [vmem:[%s8271 + $0x31] sm:$0xff]
  %v8325 = vld [vmem:[%s8271 + $0x39] sm:$0xff]
  %v8326 = vld [vmem:[%s8271 + $0x49] sm:$0xff]
  %v8327 = vld [vmem:[%s8271 + $0x51] sm:$0xff]
  %v8328 = vld [vmem:[%s8271 + $0x61] sm:$0xff]
  %v8329 = vld [vmem:[%s8271 + $0x69] sm:$0xff]
  %v8330 = vld [vmem:[%s8271 + $0x79] sm:$0xff]
  %v8331 = vld [vmem:[%s8271 + $0x81] sm:$0xff]
  %v8332 = vld [vmem:[%s8271 + $0x91] sm:$0xff]
  %v8333 = vld [vmem:[%s8271 + $0x99] sm:$0xff]
  %v8334 = vld [vmem:[%s8271 + $0xa9] sm:$0xff]
  %v8335 = vld [vmem:[%s8271 + $0xb1] sm:$0xff]
  %v8336 = vld [vmem:[%s8271 + $0xc1] sm:$0xff]
  %v8337 = vld [vmem:[%s8271 + $0xc9] sm:$0xff]
  %v8338 = vld [vmem:[%s8271 + $0xd9] sm:$0xff]
  %v8339 = vld [vmem:[%s8271 + $0xe1] sm:$0xff]
  %v8340 = vld [vmem:[%s8271 + $0xf1] sm:$0xff]
  %v8341 = vld [vmem:[%s8271 + $0xf9] sm:$0xff]
  %v8342 = vld [vmem:[%s8271 + $0x109] sm:$0xff]
  %v8343 = vld [vmem:[%s8271 + $0x111] sm:$0xff]
  %v8344 = vld [vmem:[%s8271 + $0x121] sm:$0xff]
  %v8345 = vld [vmem:[%s8271 + $0x129] sm:$0xff]
  %v8346 = vld [vmem:[%s8271 + $0x139] sm:$0xff]
  %v8347 = vld [vmem:[%s8271 + $0x141] sm:$0xff]
  %v8348 = vld [vmem:[%s8271 + $0x151] sm:$0xff]
  %v8349 = vld [vmem:[%s8271 + $0x159] sm:$0xff]
  %v8350 = vld [vmem:[%s8271 + $0x169] sm:$0xff]
  %v8351 = vld [vmem:[%s8271 + $0x171] sm:$0xff]
  %v8352 = vpack.c.bf16 %v8321, %v8320
  %v8353 = vpack.c.bf16 %v8323, %v8322
  %v8354 = vpack.c.bf16 %v8325, %v8324
  %v8355 = vpack.c.bf16 %v8327, %v8326
  %v8356 = vpack.c.bf16 %v8329, %v8328
  %v8357 = vpack.c.bf16 %v8331, %v8330
  %v8358 = vpack.c.bf16 %v8333, %v8332
  %v8359 = vpack.c.bf16 %v8335, %v8334
  %v8360 = vpack.c.bf16 %v8337, %v8336
  %v8361 = vpack.c.bf16 %v8339, %v8338
  %v8362 = vpack.c.bf16 %v8341, %v8340
  %v8363 = vpack.c.bf16 %v8343, %v8342
  %v8364 = vpack.c.bf16 %v8345, %v8344
  %v8365 = vpack.c.bf16 %v8347, %v8346
  %v8366 = vpack.c.bf16 %v8349, %v8348
  %v8367 = vpack.c.bf16 %v8351, %v8350
  %v8368 = vld [vmem:[%s8271 + $0x2] sm:$0xff]
  %v8369 = vld [vmem:[%s8271 + $0xa] sm:$0xff]
  %v8370 = vld [vmem:[%s8271 + $0x1a] sm:$0xff]
  %v8371 = vld [vmem:[%s8271 + $0x22] sm:$0xff]
  %v8372 = vld [vmem:[%s8271 + $0x32] sm:$0xff]
  %v8373 = vld [vmem:[%s8271 + $0x3a] sm:$0xff]
  %v8374 = vld [vmem:[%s8271 + $0x4a] sm:$0xff]
  %v8375 = vld [vmem:[%s8271 + $0x52] sm:$0xff]
  %v8376 = vld [vmem:[%s8271 + $0x62] sm:$0xff]
  %v8377 = vld [vmem:[%s8271 + $0x6a] sm:$0xff]
  %v8378 = vld [vmem:[%s8271 + $0x7a] sm:$0xff]
  %v8379 = vld [vmem:[%s8271 + $0x82] sm:$0xff]
  %v8380 = vld [vmem:[%s8271 + $0x92] sm:$0xff]
  %v8381 = vld [vmem:[%s8271 + $0x9a] sm:$0xff]
  %v8382 = vld [vmem:[%s8271 + $0xaa] sm:$0xff]
  %v8383 = vld [vmem:[%s8271 + $0xb2] sm:$0xff]
  %v8384 = vld [vmem:[%s8271 + $0xc2] sm:$0xff]
  %v8385 = vld [vmem:[%s8271 + $0xca] sm:$0xff]
  %v8386 = vld [vmem:[%s8271 + $0xda] sm:$0xff]
  %v8387 = vld [vmem:[%s8271 + $0xe2] sm:$0xff]
  %v8388 = vld [vmem:[%s8271 + $0xf2] sm:$0xff]
  %v8389 = vld [vmem:[%s8271 + $0xfa] sm:$0xff]
  %v8390 = vld [vmem:[%s8271 + $0x10a] sm:$0xff]
  %v8391 = vld [vmem:[%s8271 + $0x112] sm:$0xff]
  %v8392 = vld [vmem:[%s8271 + $0x122] sm:$0xff]
  %v8393 = vld [vmem:[%s8271 + $0x12a] sm:$0xff]
  %v8394 = vld [vmem:[%s8271 + $0x13a] sm:$0xff]
  %v8395 = vld [vmem:[%s8271 + $0x142] sm:$0xff]
  %v8396 = vld [vmem:[%s8271 + $0x152] sm:$0xff]
  %v8397 = vld [vmem:[%s8271 + $0x15a] sm:$0xff]
  %v8398 = vld [vmem:[%s8271 + $0x16a] sm:$0xff]
  %v8399 = vld [vmem:[%s8271 + $0x172] sm:$0xff]
  %v8400 = vpack.c.bf16 %v8369, %v8368
  %v8401 = vpack.c.bf16 %v8371, %v8370
  %v8402 = vpack.c.bf16 %v8373, %v8372
  %v8403 = vpack.c.bf16 %v8375, %v8374
  %v8404 = vpack.c.bf16 %v8377, %v8376
  %v8405 = vpack.c.bf16 %v8379, %v8378
  %v8406 = vpack.c.bf16 %v8381, %v8380
  %v8407 = vpack.c.bf16 %v8383, %v8382
  %v8408 = vpack.c.bf16 %v8385, %v8384
  %v8409 = vpack.c.bf16 %v8387, %v8386
  %v8410 = vpack.c.bf16 %v8389, %v8388
  %v8411 = vpack.c.bf16 %v8391, %v8390
  %v8412 = vpack.c.bf16 %v8393, %v8392
  %v8413 = vpack.c.bf16 %v8395, %v8394
  %v8414 = vpack.c.bf16 %v8397, %v8396
  %v8415 = vpack.c.bf16 %v8399, %v8398
  %v8560 = vunpack.c.l.b16 %v7839
  %v8561 = vunpack.c.l.b16 %v7840
  %v8562 = vunpack.c.l.b16 %v7841
  %v8563 = vunpack.c.l.b16 %v7842
  %v8564 = vunpack.c.l.b16 %v7843
  %v8565 = vunpack.c.l.b16 %v7844
  %v8566 = vunpack.c.l.b16 %v7845
  %v8567 = vunpack.c.l.b16 %v7846
  %v8568 = vunpack.c.l.b16 %v7847
  %v8569 = vunpack.c.l.b16 %v7848
  %v8570 = vunpack.c.l.b16 %v7849
  %v8571 = vunpack.c.l.b16 %v7850
  %v8572 = vunpack.c.l.b16 %v7851
  %v8573 = vunpack.c.l.b16 %v7852
  %v8574 = vunpack.c.l.b16 %v7853
  %v8575 = vunpack.c.l.b16 %v7854
  %v8576 = vunpack.c.l.b16 %v7855
  %v8577 = vunpack.c.l.b16 %v7856
  %v8578 = vunpack.c.l.b16 %v7857
  %v8579 = vunpack.c.l.b16 %v7858
  %v8580 = vunpack.c.l.b16 %v7859
  %v8581 = vunpack.c.l.b16 %v7860
  %v8582 = vunpack.c.l.b16 %v7861
  %v8583 = vunpack.c.l.b16 %v7862
  %v8584 = vunpack.c.l.b16 %v7863
  %v8585 = vunpack.c.l.b16 %v7864
  %v8586 = vunpack.c.l.b16 %v7865
  %v8587 = vunpack.c.l.b16 %v7866
  %v8588 = vunpack.c.l.b16 %v7867
  %v8589 = vunpack.c.l.b16 %v7868
  %v8590 = vunpack.c.l.b16 %v7869
  %v8591 = vunpack.c.l.b16 %v7870
  %v8592 = vunpack.c.l.b16 %v7871
  %v8593 = vunpack.c.l.b16 %v7872
  %v8594 = vunpack.c.l.b16 %v7873
  %v8595 = vunpack.c.l.b16 %v7874
  %v8596 = vunpack.c.l.b16 %v7875
  %v8597 = vunpack.c.l.b16 %v7876
  %v8598 = vunpack.c.l.b16 %v7877
  %v8599 = vunpack.c.l.b16 %v7878
  %v8600 = vunpack.c.l.b16 %v7879
  %v8601 = vunpack.c.l.b16 %v7880
  %v8602 = vunpack.c.l.b16 %v7881
  %v8603 = vunpack.c.l.b16 %v7882
  %v8604 = vunpack.c.l.b16 %v7883
  %v8605 = vunpack.c.l.b16 %v7884
  %v8606 = vunpack.c.l.b16 %v7885
  %v8607 = vunpack.c.l.b16 %v7886
  %v8608 = vunpack.c.l.b16 %v7887
  %v8609 = vunpack.c.l.b16 %v7888
  %v8610 = vunpack.c.l.b16 %v7889
  %v8611 = vunpack.c.l.b16 %v7890
  %v8612 = vunpack.c.l.b16 %v7891
  %v8613 = vunpack.c.l.b16 %v7892
  %v8614 = vunpack.c.l.b16 %v7893
  %v8615 = vunpack.c.l.b16 %v7894
  %v8616 = vunpack.c.l.b16 %v7895
  %v8617 = vunpack.c.l.b16 %v7896
  %v8618 = vunpack.c.l.b16 %v7897
  %v8619 = vunpack.c.l.b16 %v7898
  %v8620 = vunpack.c.l.b16 %v7899
  %v8621 = vunpack.c.l.b16 %v7900
  %v8622 = vunpack.c.l.b16 %v7901
  %v8623 = vunpack.c.l.b16 %v7902
  %v8624 = vunpack.c.l.b16 %v7903
  %v8625 = vunpack.c.l.b16 %v7904
  %v8626 = vunpack.c.l.b16 %v7905
  %v8627 = vunpack.c.l.b16 %v7906
  %v8628 = vunpack.c.l.b16 %v7907
  %v8629 = vunpack.c.l.b16 %v7908
  %v8630 = vunpack.c.l.b16 %v7909
  %v8631 = vunpack.c.l.b16 %v7910
  %v8632 = vunpack.c.l.b16 %v7911
  %v8633 = vunpack.c.l.b16 %v7912
  %v8634 = vunpack.c.l.b16 %v7913
  %v8635 = vunpack.c.l.b16 %v7914
  %v8636 = vunpack.c.l.b16 %v7915
  %v8637 = vunpack.c.l.b16 %v7916
  %v8638 = vunpack.c.l.b16 %v7917
  %v8639 = vunpack.c.l.b16 %v7918
  %v8640 = vunpack.c.l.b16 %v7919
  %v8641 = vunpack.c.l.b16 %v7920
  %v8642 = vunpack.c.l.b16 %v7921
  %v8643 = vunpack.c.l.b16 %v7922
  %v8644 = vunpack.c.l.b16 %v7923
  %v8645 = vunpack.c.l.b16 %v7924
  %v8646 = vunpack.c.l.b16 %v7925
  %v8647 = vunpack.c.l.b16 %v7926
  %v8648 = vunpack.c.l.b16 %v7927
  %v8649 = vunpack.c.l.b16 %v7928
  %v8650 = vunpack.c.l.b16 %v7929
  %v8651 = vunpack.c.l.b16 %v7930
  %v8652 = vunpack.c.l.b16 %v7931
  %v8653 = vunpack.c.l.b16 %v7932
  %v8654 = vunpack.c.l.b16 %v7933
  %v8655 = vunpack.c.l.b16 %v7934
  %v8656 = vunpack.c.l.b16 %v7935
  %v8657 = vunpack.c.l.b16 %v7936
  %v8658 = vunpack.c.l.b16 %v7937
  %v8659 = vunpack.c.l.b16 %v7938
  %v8660 = vunpack.c.l.b16 %v7939
  %v8661 = vunpack.c.l.b16 %v7940
  %v8662 = vunpack.c.l.b16 %v7941
  %v8663 = vunpack.c.l.b16 %v7942
  %v8664 = vunpack.c.l.b16 %v7943
  %v8665 = vunpack.c.l.b16 %v7944
  %v8666 = vunpack.c.l.b16 %v7945
  %v8667 = vunpack.c.l.b16 %v7946
  %v8668 = vunpack.c.l.b16 %v7947
  %v8669 = vunpack.c.l.b16 %v7948
  %v8670 = vunpack.c.l.b16 %v7949
  %v8671 = vunpack.c.l.b16 %v7950
  %v8672 = vunpack.c.l.b16 %v7951
  %v8673 = vunpack.c.l.b16 %v7952
  %v8674 = vunpack.c.l.b16 %v7953
  %v8675 = vunpack.c.l.b16 %v7954
  %v8676 = vunpack.c.l.b16 %v7955
  %v8677 = vunpack.c.l.b16 %v7956
  %v8678 = vunpack.c.l.b16 %v7957
  %v8679 = vunpack.c.l.b16 %v7958
  %v8680 = vunpack.c.l.b16 %v7959
  %v8681 = vunpack.c.l.b16 %v7960
  %v8682 = vunpack.c.l.b16 %v7961
  %v8683 = vunpack.c.l.b16 %v7962
  %v8684 = vunpack.c.l.b16 %v7963
  %v8685 = vunpack.c.l.b16 %v7964
  %v8686 = vunpack.c.l.b16 %v7965
  %v8687 = vunpack.c.l.b16 %v7966
  %v8688 = vunpack.c.l.b16 %v7967
  %v8689 = vunpack.c.l.b16 %v7968
  %v8690 = vunpack.c.l.b16 %v7969
  %v8691 = vunpack.c.l.b16 %v7970
  %v8692 = vunpack.c.l.b16 %v7971
  %v8693 = vunpack.c.l.b16 %v7972
  %v8694 = vunpack.c.l.b16 %v7973
  %v8695 = vunpack.c.l.b16 %v7974
  %v8696 = vunpack.c.l.b16 %v7975
  %v8697 = vunpack.c.l.b16 %v7976
  %v8698 = vunpack.c.l.b16 %v7977
  %v8699 = vunpack.c.l.b16 %v7978
  %v8700 = vunpack.c.l.b16 %v7979
  %v8701 = vunpack.c.l.b16 %v7980
  %v8702 = vunpack.c.l.b16 %v7981
  %v8703 = vunpack.c.l.b16 %v7982
  %v8704 = vpack.c.b16 %v8561, %v8560
  %v8705 = vpack.c.b16 %v8563, %v8562
  %v8706 = vpack.c.b16 %v8565, %v8564
  %v8707 = vpack.c.b16 %v8567, %v8566
  %v8708 = vpack.c.b16 %v8569, %v8568
  %v8709 = vpack.c.b16 %v8571, %v8570
  %v8710 = vpack.c.b16 %v8573, %v8572
  %v8711 = vpack.c.b16 %v8575, %v8574
  %v8712 = vpack.c.b16 %v8577, %v8576
  %v8713 = vpack.c.b16 %v8579, %v8578
  %v8714 = vpack.c.b16 %v8581, %v8580
  %v8715 = vpack.c.b16 %v8583, %v8582
  %v8716 = vpack.c.b16 %v8585, %v8584
  %v8717 = vpack.c.b16 %v8587, %v8586
  %v8718 = vpack.c.b16 %v8589, %v8588
  %v8719 = vpack.c.b16 %v8591, %v8590
  %v8720 = vpack.c.b16 %v8593, %v8592
  %v8721 = vpack.c.b16 %v8595, %v8594
  %v8722 = vpack.c.b16 %v8597, %v8596
  %v8723 = vpack.c.b16 %v8599, %v8598
  %v8724 = vpack.c.b16 %v8601, %v8600
  %v8725 = vpack.c.b16 %v8603, %v8602
  %v8726 = vpack.c.b16 %v8605, %v8604
  %v8727 = vpack.c.b16 %v8607, %v8606
  %v8728 = vpack.c.b16 %v8609, %v8608
  %v8729 = vpack.c.b16 %v8611, %v8610
  %v8730 = vpack.c.b16 %v8613, %v8612
  %v8731 = vpack.c.b16 %v8615, %v8614
  %v8732 = vpack.c.b16 %v8617, %v8616
  %v8733 = vpack.c.b16 %v8619, %v8618
  %v8734 = vpack.c.b16 %v8621, %v8620
  %v8735 = vpack.c.b16 %v8623, %v8622
  %v8736 = vpack.c.b16 %v8625, %v8624
  %v8737 = vpack.c.b16 %v8627, %v8626
  %v8738 = vpack.c.b16 %v8629, %v8628
  %v8739 = vpack.c.b16 %v8631, %v8630
  %v8740 = vpack.c.b16 %v8633, %v8632
  %v8741 = vpack.c.b16 %v8635, %v8634
  %v8742 = vpack.c.b16 %v8637, %v8636
  %v8743 = vpack.c.b16 %v8639, %v8638
  %v8744 = vpack.c.b16 %v8641, %v8640
  %v8745 = vpack.c.b16 %v8643, %v8642
  %v8746 = vpack.c.b16 %v8645, %v8644
  %v8747 = vpack.c.b16 %v8647, %v8646
  %v8748 = vpack.c.b16 %v8649, %v8648
  %v8749 = vpack.c.b16 %v8651, %v8650
  %v8750 = vpack.c.b16 %v8653, %v8652
  %v8751 = vpack.c.b16 %v8655, %v8654
  %v8752 = vpack.c.b16 %v8657, %v8656
  %v8753 = vpack.c.b16 %v8659, %v8658
  %v8754 = vpack.c.b16 %v8661, %v8660
  %v8755 = vpack.c.b16 %v8663, %v8662
  %v8756 = vpack.c.b16 %v8665, %v8664
  %v8757 = vpack.c.b16 %v8667, %v8666
  %v8758 = vpack.c.b16 %v8669, %v8668
  %v8759 = vpack.c.b16 %v8671, %v8670
  %v8760 = vpack.c.b16 %v8673, %v8672
  %v8761 = vpack.c.b16 %v8675, %v8674
  %v8762 = vpack.c.b16 %v8677, %v8676
  %v8763 = vpack.c.b16 %v8679, %v8678
  %v8764 = vpack.c.b16 %v8681, %v8680
  %v8765 = vpack.c.b16 %v8683, %v8682
  %v8766 = vpack.c.b16 %v8685, %v8684
  %v8767 = vpack.c.b16 %v8687, %v8686
  %v8768 = vpack.c.b16 %v8689, %v8688
  %v8769 = vpack.c.b16 %v8691, %v8690
  %v8770 = vpack.c.b16 %v8693, %v8692
  %v8771 = vpack.c.b16 %v8695, %v8694
  %v8772 = vpack.c.b16 %v8697, %v8696
  %v8773 = vpack.c.b16 %v8699, %v8698
  %v8774 = vpack.c.b16 %v8701, %v8700
  %v8775 = vpack.c.b16 %v8703, %v8702
  %8848 = vmatprep.subr.bf16.mxu0 0
  %8849 = vmatpush1.bf16.msra.mxu0 %v8711
  %8850 = vmatprep.subr.bf16.mxu0 0
  %8851 = vmatpush1.bf16.msra.mxu0 %v8710
  %8852 = vmatprep.subr.bf16.mxu0 0
  %8853 = vmatpush1.bf16.msra.mxu0 %v8709
  %8854 = vmatprep.subr.bf16.mxu0 0
  %8855 = vmatpush1.bf16.msra.mxu0 %v8708
  %8856 = vmatprep.subr.bf16.mxu0 0
  %8857 = vmatpush1.bf16.msra.mxu0 %v8707
  %8858 = vmatprep.subr.bf16.mxu0 0
  %8859 = vmatpush1.bf16.msra.mxu0 %v8706
  %8860 = vmatprep.subr.bf16.mxu0 0
  %8861 = vmatpush1.bf16.msra.mxu0 %v8705
  %8862 = vmatprep.subr.bf16.mxu0 0
  %8863 = vmatpush1.bf16.msra.mxu0 %v8704
  %8864 = vmatprep.subr.bf16.mxu0 0
  %8865 = vmatpush2.bf16.msra.mxu0 %v8719
  %8866 = vmatprep.subr.bf16.mxu0 0
  %8867 = vmatpush2.bf16.msra.mxu0 %v8718
  %8868 = vmatprep.subr.bf16.mxu0 0
  %8869 = vmatpush2.bf16.msra.mxu0 %v8717
  %8870 = vmatprep.subr.bf16.mxu0 0
  %8871 = vmatpush2.bf16.msra.mxu0 %v8716
  %8872 = vmatprep.subr.bf16.mxu0 0
  %8873 = vmatpush2.bf16.msra.mxu0 %v8715
  %8874 = vmatprep.subr.bf16.mxu0 0
  %8875 = vmatpush2.bf16.msra.mxu0 %v8714
  %8876 = vmatprep.subr.bf16.mxu0 0
  %8877 = vmatpush2.bf16.msra.mxu0 %v8713
  %8878 = vmatprep.subr.bf16.mxu0 0
  %8879 = vmatpush2.bf16.msra.mxu0 %v8712
  %8880 = vmatprep.mubr.bf16.mxu0 %v8063
  %8881 = vmatmul.mubr.bf16.gmra.mxu0 %v8015
  %v8882 = vpop.f32.mrf.mxu0
  %v8883 = vadd.f32 0.0, %v8882
  %v8884 = vpop.f32.mrf.mxu0
  %v8885 = vpop.f32.mrf.mxu0
  %v8886 = vadd.f32 0.0, %v8885
  %v8887 = vpop.f32.mrf.mxu0
  %8888 = vmatprep.mubr.bf16.mxu0 %v8064
  %8889 = vmatmul.mubr.bf16.gmra.mxu0 %v8016
  %v8890 = vpop.f32.mrf.mxu0
  %v8891 = vadd.f32 0.0, %v8890
  %v8892 = vpop.f32.mrf.mxu0
  %v8893 = vpop.f32.mrf.mxu0
  %v8894 = vadd.f32 0.0, %v8893
  %v8895 = vpop.f32.mrf.mxu0
  %8896 = vmatprep.mubr.bf16.mxu0 %v8065
  %8897 = vmatmul.mubr.bf16.gmra.mxu0 %v8017
  %v8898 = vpop.f32.mrf.mxu0
  %v8899 = vadd.f32 0.0, %v8898
  %v8900 = vpop.f32.mrf.mxu0
  %v8901 = vpop.f32.mrf.mxu0
  %v8902 = vadd.f32 0.0, %v8901
  %v8903 = vpop.f32.mrf.mxu0
  %8904 = vmatprep.mubr.bf16.mxu0 %v8066
  %8905 = vmatmul.mubr.bf16.gmra.mxu0 %v8018
  %v8906 = vpop.f32.mrf.mxu0
  %v8907 = vadd.f32 0.0, %v8906
  %v8908 = vpop.f32.mrf.mxu0
  %v8909 = vpop.f32.mrf.mxu0
  %v8910 = vadd.f32 0.0, %v8909
  %v8911 = vpop.f32.mrf.mxu0
  %8912 = vmatprep.mubr.bf16.mxu0 %v8067
  %8913 = vmatmul.mubr.bf16.gmra.mxu0 %v8019
  %v8914 = vpop.f32.mrf.mxu0
  %v8915 = vadd.f32 0.0, %v8914
  %v8916 = vpop.f32.mrf.mxu0
  %v8917 = vpop.f32.mrf.mxu0
  %v8918 = vadd.f32 0.0, %v8917
  %v8919 = vpop.f32.mrf.mxu0
  %8920 = vmatprep.mubr.bf16.mxu0 %v8068
  %8921 = vmatmul.mubr.bf16.gmra.mxu0 %v8020
  %v8922 = vpop.f32.mrf.mxu0
  %v8923 = vadd.f32 0.0, %v8922
  %v8924 = vpop.f32.mrf.mxu0
  %v8925 = vpop.f32.mrf.mxu0
  %v8926 = vadd.f32 0.0, %v8925
  %v8927 = vpop.f32.mrf.mxu0
  %8928 = vmatprep.mubr.bf16.mxu0 %v8069
  %8929 = vmatmul.mubr.bf16.gmra.mxu0 %v8021
  %v8930 = vpop.f32.mrf.mxu0
  %v8931 = vadd.f32 0.0, %v8930
  %v8932 = vpop.f32.mrf.mxu0
  %v8933 = vpop.f32.mrf.mxu0
  %v8934 = vadd.f32 0.0, %v8933
  %v8935 = vpop.f32.mrf.mxu0
  %8936 = vmatprep.mubr.bf16.mxu0 %v8070
  %8937 = vmatmul.mubr.bf16.gmra.mxu0 %v8022
  %v8938 = vpop.f32.mrf.mxu0
  %v8939 = vadd.f32 0.0, %v8938
  %v8940 = vpop.f32.mrf.mxu0
  %v8941 = vpop.f32.mrf.mxu0
  %v8942 = vadd.f32 0.0, %v8941
  %v8943 = vpop.f32.mrf.mxu0
  %8944 = vmatprep.mubr.bf16.mxu0 %v8071
  %8945 = vmatmul.mubr.bf16.gmra.mxu0 %v8023
  %v8946 = vpop.f32.mrf.mxu0
  %v8947 = vadd.f32 0.0, %v8946
  %v8948 = vpop.f32.mrf.mxu0
  %v8949 = vpop.f32.mrf.mxu0
  %v8950 = vadd.f32 0.0, %v8949
  %v8951 = vpop.f32.mrf.mxu0
  %8952 = vmatprep.mubr.bf16.mxu0 %v8072
  %8953 = vmatmul.mubr.bf16.gmra.mxu0 %v8024
  %v8954 = vpop.f32.mrf.mxu0
  %v8955 = vadd.f32 0.0, %v8954
  %v8956 = vpop.f32.mrf.mxu0
  %v8957 = vpop.f32.mrf.mxu0
  %v8958 = vadd.f32 0.0, %v8957
  %v8959 = vpop.f32.mrf.mxu0
  %8960 = vmatprep.mubr.bf16.mxu0 %v8073
  %8961 = vmatmul.mubr.bf16.gmra.mxu0 %v8025
  %v8962 = vpop.f32.mrf.mxu0
  %v8963 = vadd.f32 0.0, %v8962
  %v8964 = vpop.f32.mrf.mxu0
  %v8965 = vpop.f32.mrf.mxu0
  %v8966 = vadd.f32 0.0, %v8965
  %v8967 = vpop.f32.mrf.mxu0
  %8968 = vmatprep.mubr.bf16.mxu0 %v8074
  %8969 = vmatmul.mubr.bf16.gmra.mxu0 %v8026
  %v8970 = vpop.f32.mrf.mxu0
  %v8971 = vadd.f32 0.0, %v8970
  %v8972 = vpop.f32.mrf.mxu0
  %v8973 = vpop.f32.mrf.mxu0
  %v8974 = vadd.f32 0.0, %v8973
  %v8975 = vpop.f32.mrf.mxu0
  %8976 = vmatprep.mubr.bf16.mxu0 %v8075
  %8977 = vmatmul.mubr.bf16.gmra.mxu0 %v8027
  %v8978 = vpop.f32.mrf.mxu0
  %v8979 = vadd.f32 0.0, %v8978
  %v8980 = vpop.f32.mrf.mxu0
  %v8981 = vpop.f32.mrf.mxu0
  %v8982 = vadd.f32 0.0, %v8981
  %v8983 = vpop.f32.mrf.mxu0
  %8984 = vmatprep.mubr.bf16.mxu0 %v8076
  %8985 = vmatmul.mubr.bf16.gmra.mxu0 %v8028
  %v8986 = vpop.f32.mrf.mxu0
  %v8987 = vadd.f32 0.0, %v8986
  %v8988 = vpop.f32.mrf.mxu0
  %v8989 = vpop.f32.mrf.mxu0
  %v8990 = vadd.f32 0.0, %v8989
  %v8991 = vpop.f32.mrf.mxu0
  %8992 = vmatprep.mubr.bf16.mxu0 %v8077
  %8993 = vmatmul.mubr.bf16.gmra.mxu0 %v8029
  %v8994 = vpop.f32.mrf.mxu0
  %v8995 = vadd.f32 0.0, %v8994
  %v8996 = vpop.f32.mrf.mxu0
  %v8997 = vpop.f32.mrf.mxu0
  %v8998 = vadd.f32 0.0, %v8997
  %v8999 = vpop.f32.mrf.mxu0
  %9000 = vmatprep.mubr.bf16.mxu0 %v8078
  %9001 = vmatmul.mubr.bf16.gmra.mxu0 %v8030
  %v9002 = vpop.f32.mrf.mxu0
  %v9003 = vadd.f32 0.0, %v9002
  %v9004 = vpop.f32.mrf.mxu0
  %v9005 = vpop.f32.mrf.mxu0
  %v9006 = vadd.f32 0.0, %v9005
  %v9007 = vpop.f32.mrf.mxu0
  %9008 = vdwg.mxu0
  %9009 = vmatprep.subr.bf16.mxu0 0
  %9010 = vmatpush1.bf16.msra.mxu0 %v8727
  %9011 = vmatprep.subr.bf16.mxu0 0
  %9012 = vmatpush1.bf16.msra.mxu0 %v8726
  %9013 = vmatprep.subr.bf16.mxu0 0
  %9014 = vmatpush1.bf16.msra.mxu0 %v8725
  %9015 = vmatprep.subr.bf16.mxu0 0
  %9016 = vmatpush1.bf16.msra.mxu0 %v8724
  %9017 = vmatprep.subr.bf16.mxu0 0
  %9018 = vmatpush1.bf16.msra.mxu0 %v8723
  %9019 = vmatprep.subr.bf16.mxu0 0
  %9020 = vmatpush1.bf16.msra.mxu0 %v8722
  %9021 = vmatprep.subr.bf16.mxu0 0
  %9022 = vmatpush1.bf16.msra.mxu0 %v8721
  %9023 = vmatprep.subr.bf16.mxu0 0
  %9024 = vmatpush1.bf16.msra.mxu0 %v8720
  %9025 = vmatprep.subr.bf16.mxu0 0
  %9026 = vmatpush2.bf16.msra.mxu0 %v8735
  %9027 = vmatprep.subr.bf16.mxu0 0
  %9028 = vmatpush2.bf16.msra.mxu0 %v8734
  %9029 = vmatprep.subr.bf16.mxu0 0
  %9030 = vmatpush2.bf16.msra.mxu0 %v8733
  %9031 = vmatprep.subr.bf16.mxu0 0
  %9032 = vmatpush2.bf16.msra.mxu0 %v8732
  %9033 = vmatprep.subr.bf16.mxu0 0
  %9034 = vmatpush2.bf16.msra.mxu0 %v8731
  %9035 = vmatprep.subr.bf16.mxu0 0
  %9036 = vmatpush2.bf16.msra.mxu0 %v8730
  %9037 = vmatprep.subr.bf16.mxu0 0
  %9038 = vmatpush2.bf16.msra.mxu0 %v8729
  %9039 = vmatprep.subr.bf16.mxu0 0
  %9040 = vmatpush2.bf16.msra.mxu0 %v8728
  %9041 = vmatprep.mubr.bf16.mxu0 %v8159
  %9042 = vmatmul.mubr.bf16.gmra.mxu0 %v8111
  %v9043 = vpop.f32.mrf.mxu0
  %v9044 = vadd.f32 %v8883, %v9043
  %v9045 = vpop.f32.mrf.mxu0
  %v9046 = vpop.f32.mrf.mxu0
  %v9047 = vadd.f32 %v8886, %v9046
  %v9048 = vpop.f32.mrf.mxu0
  %9049 = vmatprep.mubr.bf16.mxu0 %v8160
  %9050 = vmatmul.mubr.bf16.gmra.mxu0 %v8112
  %v9051 = vpop.f32.mrf.mxu0
  %v9052 = vadd.f32 %v8891, %v9051
  %v9053 = vpop.f32.mrf.mxu0
  %v9054 = vpop.f32.mrf.mxu0
  %v9055 = vadd.f32 %v8894, %v9054
  %v9056 = vpop.f32.mrf.mxu0
  %9057 = vmatprep.mubr.bf16.mxu0 %v8161
  %9058 = vmatmul.mubr.bf16.gmra.mxu0 %v8113
  %v9059 = vpop.f32.mrf.mxu0
  %v9060 = vadd.f32 %v8899, %v9059
  %v9061 = vpop.f32.mrf.mxu0
  %v9062 = vpop.f32.mrf.mxu0
  %v9063 = vadd.f32 %v8902, %v9062
  %v9064 = vpop.f32.mrf.mxu0
  %9065 = vmatprep.mubr.bf16.mxu0 %v8162
  %9066 = vmatmul.mubr.bf16.gmra.mxu0 %v8114
  %v9067 = vpop.f32.mrf.mxu0
  %v9068 = vadd.f32 %v8907, %v9067
  %v9069 = vpop.f32.mrf.mxu0
  %v9070 = vpop.f32.mrf.mxu0
  %v9071 = vadd.f32 %v8910, %v9070
  %v9072 = vpop.f32.mrf.mxu0
  %9073 = vmatprep.mubr.bf16.mxu0 %v8163
  %9074 = vmatmul.mubr.bf16.gmra.mxu0 %v8115
  %v9075 = vpop.f32.mrf.mxu0
  %v9076 = vadd.f32 %v8915, %v9075
  %v9077 = vpop.f32.mrf.mxu0
  %v9078 = vpop.f32.mrf.mxu0
  %v9079 = vadd.f32 %v8918, %v9078
  %v9080 = vpop.f32.mrf.mxu0
  %9081 = vmatprep.mubr.bf16.mxu0 %v8164
  %9082 = vmatmul.mubr.bf16.gmra.mxu0 %v8116
  %v9083 = vpop.f32.mrf.mxu0
  %v9084 = vadd.f32 %v8923, %v9083
  %v9085 = vpop.f32.mrf.mxu0
  %v9086 = vpop.f32.mrf.mxu0
  %v9087 = vadd.f32 %v8926, %v9086
  %v9088 = vpop.f32.mrf.mxu0
  %9089 = vmatprep.mubr.bf16.mxu0 %v8165
  %9090 = vmatmul.mubr.bf16.gmra.mxu0 %v8117
  %v9091 = vpop.f32.mrf.mxu0
  %v9092 = vadd.f32 %v8931, %v9091
  %v9093 = vpop.f32.mrf.mxu0
  %v9094 = vpop.f32.mrf.mxu0
  %v9095 = vadd.f32 %v8934, %v9094
  %v9096 = vpop.f32.mrf.mxu0
  %9097 = vmatprep.mubr.bf16.mxu0 %v8166
  %9098 = vmatmul.mubr.bf16.gmra.mxu0 %v8118
  %v9099 = vpop.f32.mrf.mxu0
  %v9100 = vadd.f32 %v8939, %v9099
  %v9101 = vpop.f32.mrf.mxu0
  %v9102 = vpop.f32.mrf.mxu0
  %v9103 = vadd.f32 %v8942, %v9102
  %v9104 = vpop.f32.mrf.mxu0
  %9105 = vmatprep.mubr.bf16.mxu0 %v8167
  %9106 = vmatmul.mubr.bf16.gmra.mxu0 %v8119
  %v9107 = vpop.f32.mrf.mxu0
  %v9108 = vadd.f32 %v8947, %v9107
  %v9109 = vpop.f32.mrf.mxu0
  %v9110 = vpop.f32.mrf.mxu0
  %v9111 = vadd.f32 %v8950, %v9110
  %v9112 = vpop.f32.mrf.mxu0
  %9113 = vmatprep.mubr.bf16.mxu0 %v8168
  %9114 = vmatmul.mubr.bf16.gmra.mxu0 %v8120
  %v9115 = vpop.f32.mrf.mxu0
  %v9116 = vadd.f32 %v8955, %v9115
  %v9117 = vpop.f32.mrf.mxu0
  %v9118 = vpop.f32.mrf.mxu0
  %v9119 = vadd.f32 %v8958, %v9118
  %v9120 = vpop.f32.mrf.mxu0
  %9121 = vmatprep.mubr.bf16.mxu0 %v8169
  %9122 = vmatmul.mubr.bf16.gmra.mxu0 %v8121
  %v9123 = vpop.f32.mrf.mxu0
  %v9124 = vadd.f32 %v8963, %v9123
  %v9125 = vpop.f32.mrf.mxu0
  %v9126 = vpop.f32.mrf.mxu0
  %v9127 = vadd.f32 %v8966, %v9126
  %v9128 = vpop.f32.mrf.mxu0
  %9129 = vmatprep.mubr.bf16.mxu0 %v8170
  %9130 = vmatmul.mubr.bf16.gmra.mxu0 %v8122
  %v9131 = vpop.f32.mrf.mxu0
  %v9132 = vadd.f32 %v8971, %v9131
  %v9133 = vpop.f32.mrf.mxu0
  %v9134 = vpop.f32.mrf.mxu0
  %v9135 = vadd.f32 %v8974, %v9134
  %v9136 = vpop.f32.mrf.mxu0
  %9137 = vmatprep.mubr.bf16.mxu0 %v8171
  %9138 = vmatmul.mubr.bf16.gmra.mxu0 %v8123
  %v9139 = vpop.f32.mrf.mxu0
  %v9140 = vadd.f32 %v8979, %v9139
  %v9141 = vpop.f32.mrf.mxu0
  %v9142 = vpop.f32.mrf.mxu0
  %v9143 = vadd.f32 %v8982, %v9142
  %v9144 = vpop.f32.mrf.mxu0
  %9145 = vmatprep.mubr.bf16.mxu0 %v8172
  %9146 = vmatmul.mubr.bf16.gmra.mxu0 %v8124
  %v9147 = vpop.f32.mrf.mxu0
  %v9148 = vadd.f32 %v8987, %v9147
  %v9149 = vpop.f32.mrf.mxu0
  %v9150 = vpop.f32.mrf.mxu0
  %v9151 = vadd.f32 %v8990, %v9150
  %v9152 = vpop.f32.mrf.mxu0
  %9153 = vmatprep.mubr.bf16.mxu0 %v8173
  %9154 = vmatmul.mubr.bf16.gmra.mxu0 %v8125
  %v9155 = vpop.f32.mrf.mxu0
  %v9156 = vadd.f32 %v8995, %v9155
  %v9157 = vpop.f32.mrf.mxu0
  %v9158 = vpop.f32.mrf.mxu0
  %v9159 = vadd.f32 %v8998, %v9158
  %v9160 = vpop.f32.mrf.mxu0
  %9161 = vmatprep.mubr.bf16.mxu0 %v8174
  %9162 = vmatmul.mubr.bf16.gmra.mxu0 %v8126
  %v9163 = vpop.f32.mrf.mxu0
  %v9164 = vadd.f32 %v9003, %v9163
  %v9165 = vpop.f32.mrf.mxu0
  %v9166 = vpop.f32.mrf.mxu0
  %v9167 = vadd.f32 %v9006, %v9166
  %v9168 = vpop.f32.mrf.mxu0
  %9169 = vdwg.mxu0
  %9170 = vmatprep.subr.bf16.mxu0 0
  %9171 = vmatpush1.bf16.msra.mxu0 %v8743
  %9172 = vmatprep.subr.bf16.mxu0 0
  %9173 = vmatpush1.bf16.msra.mxu0 %v8742
  %9174 = vmatprep.subr.bf16.mxu0 0
  %9175 = vmatpush1.bf16.msra.mxu0 %v8741
  %9176 = vmatprep.subr.bf16.mxu0 0
  %9177 = vmatpush1.bf16.msra.mxu0 %v8740
  %9178 = vmatprep.subr.bf16.mxu0 0
  %9179 = vmatpush1.bf16.msra.mxu0 %v8739
  %9180 = vmatprep.subr.bf16.mxu0 0
  %9181 = vmatpush1.bf16.msra.mxu0 %v8738
  %9182 = vmatprep.subr.bf16.mxu0 0
  %9183 = vmatpush1.bf16.msra.mxu0 %v8737
  %9184 = vmatprep.subr.bf16.mxu0 0
  %9185 = vmatpush1.bf16.msra.mxu0 %v8736
  %9186 = vmatprep.subr.bf16.mxu0 0
  %9187 = vmatpush2.bf16.msra.mxu0 %v8751
  %9188 = vmatprep.subr.bf16.mxu0 0
  %9189 = vmatpush2.bf16.msra.mxu0 %v8750
  %9190 = vmatprep.subr.bf16.mxu0 0
  %9191 = vmatpush2.bf16.msra.mxu0 %v8749
  %9192 = vmatprep.subr.bf16.mxu0 0
  %9193 = vmatpush2.bf16.msra.mxu0 %v8748
  %9194 = vmatprep.subr.bf16.mxu0 0
  %9195 = vmatpush2.bf16.msra.mxu0 %v8747
  %9196 = vmatprep.subr.bf16.mxu0 0
  %9197 = vmatpush2.bf16.msra.mxu0 %v8746
  %9198 = vmatprep.subr.bf16.mxu0 0
  %9199 = vmatpush2.bf16.msra.mxu0 %v8745
  %9200 = vmatprep.subr.bf16.mxu0 0
  %9201 = vmatpush2.bf16.msra.mxu0 %v8744
  %9202 = vmatprep.mubr.bf16.mxu0 %v8255
  %9203 = vmatmul.mubr.bf16.gmra.mxu0 %v8207
  %v9204 = vpop.f32.mrf.mxu0
  %v9205 = vadd.f32 %v9044, %v9204
  %v9206 = vpop.f32.mrf.mxu0
  %v9207 = vpop.f32.mrf.mxu0
  %v9208 = vadd.f32 %v9047, %v9207
  %v9209 = vpop.f32.mrf.mxu0
  %9210 = vmatprep.mubr.bf16.mxu0 %v8256
  %9211 = vmatmul.mubr.bf16.gmra.mxu0 %v8208
  %v9212 = vpop.f32.mrf.mxu0
  %v9213 = vadd.f32 %v9052, %v9212
  %v9214 = vpop.f32.mrf.mxu0
  %v9215 = vpop.f32.mrf.mxu0
  %v9216 = vadd.f32 %v9055, %v9215
  %v9217 = vpop.f32.mrf.mxu0
  %9218 = vmatprep.mubr.bf16.mxu0 %v8257
  %9219 = vmatmul.mubr.bf16.gmra.mxu0 %v8209
  %v9220 = vpop.f32.mrf.mxu0
  %v9221 = vadd.f32 %v9060, %v9220
  %v9222 = vpop.f32.mrf.mxu0
  %v9223 = vpop.f32.mrf.mxu0
  %v9224 = vadd.f32 %v9063, %v9223
  %v9225 = vpop.f32.mrf.mxu0
  %9226 = vmatprep.mubr.bf16.mxu0 %v8258
  %9227 = vmatmul.mubr.bf16.gmra.mxu0 %v8210
  %v9228 = vpop.f32.mrf.mxu0
  %v9229 = vadd.f32 %v9068, %v9228
  %v9230 = vpop.f32.mrf.mxu0
  %v9231 = vpop.f32.mrf.mxu0
  %v9232 = vadd.f32 %v9071, %v9231
  %v9233 = vpop.f32.mrf.mxu0
  %9234 = vmatprep.mubr.bf16.mxu0 %v8259
  %9235 = vmatmul.mubr.bf16.gmra.mxu0 %v8211
  %v9236 = vpop.f32.mrf.mxu0
  %v9237 = vadd.f32 %v9076, %v9236
  %v9238 = vpop.f32.mrf.mxu0
  %v9239 = vpop.f32.mrf.mxu0
  %v9240 = vadd.f32 %v9079, %v9239
  %v9241 = vpop.f32.mrf.mxu0
  %9242 = vmatprep.mubr.bf16.mxu0 %v8260
  %9243 = vmatmul.mubr.bf16.gmra.mxu0 %v8212
  %v9244 = vpop.f32.mrf.mxu0
  %v9245 = vadd.f32 %v9084, %v9244
  %v9246 = vpop.f32.mrf.mxu0
  %v9247 = vpop.f32.mrf.mxu0
  %v9248 = vadd.f32 %v9087, %v9247
  %v9249 = vpop.f32.mrf.mxu0
  %9250 = vmatprep.mubr.bf16.mxu0 %v8261
  %9251 = vmatmul.mubr.bf16.gmra.mxu0 %v8213
  %v9252 = vpop.f32.mrf.mxu0
  %v9253 = vadd.f32 %v9092, %v9252
  %v9254 = vpop.f32.mrf.mxu0
  %v9255 = vpop.f32.mrf.mxu0
  %v9256 = vadd.f32 %v9095, %v9255
  %v9257 = vpop.f32.mrf.mxu0
  %9258 = vmatprep.mubr.bf16.mxu0 %v8262
  %9259 = vmatmul.mubr.bf16.gmra.mxu0 %v8214
  %v9260 = vpop.f32.mrf.mxu0
  %v9261 = vadd.f32 %v9100, %v9260
  %v9262 = vpop.f32.mrf.mxu0
  %v9263 = vpop.f32.mrf.mxu0
  %v9264 = vadd.f32 %v9103, %v9263
  %v9265 = vpop.f32.mrf.mxu0
  %9266 = vmatprep.mubr.bf16.mxu0 %v8263
  %9267 = vmatmul.mubr.bf16.gmra.mxu0 %v8215
  %v9268 = vpop.f32.mrf.mxu0
  %v9269 = vadd.f32 %v9108, %v9268
  %v9270 = vpop.f32.mrf.mxu0
  %v9271 = vpop.f32.mrf.mxu0
  %v9272 = vadd.f32 %v9111, %v9271
  %v9273 = vpop.f32.mrf.mxu0
  %9274 = vmatprep.mubr.bf16.mxu0 %v8264
  %9275 = vmatmul.mubr.bf16.gmra.mxu0 %v8216
  %v9276 = vpop.f32.mrf.mxu0
  %v9277 = vadd.f32 %v9116, %v9276
  %v9278 = vpop.f32.mrf.mxu0
  %v9279 = vpop.f32.mrf.mxu0
  %v9280 = vadd.f32 %v9119, %v9279
  %v9281 = vpop.f32.mrf.mxu0
  %9282 = vmatprep.mubr.bf16.mxu0 %v8265
  %9283 = vmatmul.mubr.bf16.gmra.mxu0 %v8217
  %v9284 = vpop.f32.mrf.mxu0
  %v9285 = vadd.f32 %v9124, %v9284
  %v9286 = vpop.f32.mrf.mxu0
  %v9287 = vpop.f32.mrf.mxu0
  %v9288 = vadd.f32 %v9127, %v9287
  %v9289 = vpop.f32.mrf.mxu0
  %9290 = vmatprep.mubr.bf16.mxu0 %v8266
  %9291 = vmatmul.mubr.bf16.gmra.mxu0 %v8218
  %v9292 = vpop.f32.mrf.mxu0
  %v9293 = vadd.f32 %v9132, %v9292
  %v9294 = vpop.f32.mrf.mxu0
  %v9295 = vpop.f32.mrf.mxu0
  %v9296 = vadd.f32 %v9135, %v9295
  %v9297 = vpop.f32.mrf.mxu0
  %9298 = vmatprep.mubr.bf16.mxu0 %v8267
  %9299 = vmatmul.mubr.bf16.gmra.mxu0 %v8219
  %v9300 = vpop.f32.mrf.mxu0
  %v9301 = vadd.f32 %v9140, %v9300
  %v9302 = vpop.f32.mrf.mxu0
  %v9303 = vpop.f32.mrf.mxu0
  %v9304 = vadd.f32 %v9143, %v9303
  %v9305 = vpop.f32.mrf.mxu0
  %9306 = vmatprep.mubr.bf16.mxu0 %v8268
  %9307 = vmatmul.mubr.bf16.gmra.mxu0 %v8220
  %v9308 = vpop.f32.mrf.mxu0
  %v9309 = vadd.f32 %v9148, %v9308
  %v9310 = vpop.f32.mrf.mxu0
  %v9311 = vpop.f32.mrf.mxu0
  %v9312 = vadd.f32 %v9151, %v9311
  %v9313 = vpop.f32.mrf.mxu0
  %9314 = vmatprep.mubr.bf16.mxu0 %v8269
  %9315 = vmatmul.mubr.bf16.gmra.mxu0 %v8221
  %v9316 = vpop.f32.mrf.mxu0
  %v9317 = vadd.f32 %v9156, %v9316
  %v9318 = vpop.f32.mrf.mxu0
  %v9319 = vpop.f32.mrf.mxu0
  %v9320 = vadd.f32 %v9159, %v9319
  %v9321 = vpop.f32.mrf.mxu0
  %9322 = vmatprep.mubr.bf16.mxu0 %v8270
  %9323 = vmatmul.mubr.bf16.gmra.mxu0 %v8222
  %v9324 = vpop.f32.mrf.mxu0
  %v9325 = vadd.f32 %v9164, %v9324
  %v9326 = vpop.f32.mrf.mxu0
  %v9327 = vpop.f32.mrf.mxu0
  %v9328 = vadd.f32 %v9167, %v9327
  %v9329 = vpop.f32.mrf.mxu0
  %9330 = vdwg.mxu0
  %9331 = vmatprep.subr.bf16.mxu0 0
  %9332 = vmatpush1.bf16.msra.mxu0 %v8759
  %9333 = vmatprep.subr.bf16.mxu0 0
  %9334 = vmatpush1.bf16.msra.mxu0 %v8758
  %9335 = vmatprep.subr.bf16.mxu0 0
  %9336 = vmatpush1.bf16.msra.mxu0 %v8757
  %9337 = vmatprep.subr.bf16.mxu0 0
  %9338 = vmatpush1.bf16.msra.mxu0 %v8756
  %9339 = vmatprep.subr.bf16.mxu0 0
  %9340 = vmatpush1.bf16.msra.mxu0 %v8755
  %9341 = vmatprep.subr.bf16.mxu0 0
  %9342 = vmatpush1.bf16.msra.mxu0 %v8754
  %9343 = vmatprep.subr.bf16.mxu0 0
  %9344 = vmatpush1.bf16.msra.mxu0 %v8753
  %9345 = vmatprep.subr.bf16.mxu0 0
  %9346 = vmatpush1.bf16.msra.mxu0 %v8752
  %9347 = vmatprep.subr.bf16.mxu0 0
  %9348 = vmatpush2.bf16.msra.mxu0 %v8767
  %9349 = vmatprep.subr.bf16.mxu0 0
  %9350 = vmatpush2.bf16.msra.mxu0 %v8766
  %9351 = vmatprep.subr.bf16.mxu0 0
  %9352 = vmatpush2.bf16.msra.mxu0 %v8765
  %9353 = vmatprep.subr.bf16.mxu0 0
  %9354 = vmatpush2.bf16.msra.mxu0 %v8764
  %9355 = vmatprep.subr.bf16.mxu0 0
  %9356 = vmatpush2.bf16.msra.mxu0 %v8763
  %9357 = vmatprep.subr.bf16.mxu0 0
  %9358 = vmatpush2.bf16.msra.mxu0 %v8762
  %9359 = vmatprep.subr.bf16.mxu0 0
  %9360 = vmatpush2.bf16.msra.mxu0 %v8761
  %9361 = vmatprep.subr.bf16.mxu0 0
  %9362 = vmatpush2.bf16.msra.mxu0 %v8760
  %9363 = vmatprep.mubr.bf16.mxu0 %v8352
  %9364 = vmatmul.mubr.bf16.gmra.mxu0 %v8304
  %v9365 = vpop.f32.mrf.mxu0
  %v9366 = vadd.f32 %v9205, %v9365
  %v9367 = vpop.f32.mrf.mxu0
  %v9368 = vpop.f32.mrf.mxu0
  %v9369 = vadd.f32 %v9208, %v9368
  %v9370 = vpop.f32.mrf.mxu0
  %9371 = vmatprep.mubr.bf16.mxu0 %v8353
  %9372 = vmatmul.mubr.bf16.gmra.mxu0 %v8305
  %v9373 = vpop.f32.mrf.mxu0
  %v9374 = vadd.f32 %v9213, %v9373
  %v9375 = vpop.f32.mrf.mxu0
  %v9376 = vpop.f32.mrf.mxu0
  %v9377 = vadd.f32 %v9216, %v9376
  %v9378 = vpop.f32.mrf.mxu0
  %9379 = vmatprep.mubr.bf16.mxu0 %v8354
  %9380 = vmatmul.mubr.bf16.gmra.mxu0 %v8306
  %v9381 = vpop.f32.mrf.mxu0
  %v9382 = vadd.f32 %v9221, %v9381
  %v9383 = vpop.f32.mrf.mxu0
  %v9384 = vpop.f32.mrf.mxu0
  %v9385 = vadd.f32 %v9224, %v9384
  %v9386 = vpop.f32.mrf.mxu0
  %9387 = vmatprep.mubr.bf16.mxu0 %v8355
  %9388 = vmatmul.mubr.bf16.gmra.mxu0 %v8307
  %v9389 = vpop.f32.mrf.mxu0
  %v9390 = vadd.f32 %v9229, %v9389
  %v9391 = vpop.f32.mrf.mxu0
  %v9392 = vpop.f32.mrf.mxu0
  %v9393 = vadd.f32 %v9232, %v9392
  %v9394 = vpop.f32.mrf.mxu0
  %9395 = vmatprep.mubr.bf16.mxu0 %v8356
  %9396 = vmatmul.mubr.bf16.gmra.mxu0 %v8308
  %v9397 = vpop.f32.mrf.mxu0
  %v9398 = vadd.f32 %v9237, %v9397
  %v9399 = vpop.f32.mrf.mxu0
  %v9400 = vpop.f32.mrf.mxu0
  %v9401 = vadd.f32 %v9240, %v9400
  %v9402 = vpop.f32.mrf.mxu0
  %9403 = vmatprep.mubr.bf16.mxu0 %v8357
  %9404 = vmatmul.mubr.bf16.gmra.mxu0 %v8309
  %v9405 = vpop.f32.mrf.mxu0
  %v9406 = vadd.f32 %v9245, %v9405
  %v9407 = vpop.f32.mrf.mxu0
  %v9408 = vpop.f32.mrf.mxu0
  %v9409 = vadd.f32 %v9248, %v9408
  %v9410 = vpop.f32.mrf.mxu0
  %9411 = vmatprep.mubr.bf16.mxu0 %v8358
  %9412 = vmatmul.mubr.bf16.gmra.mxu0 %v8310
  %v9413 = vpop.f32.mrf.mxu0
  %v9414 = vadd.f32 %v9253, %v9413
  %v9415 = vpop.f32.mrf.mxu0
  %v9416 = vpop.f32.mrf.mxu0
  %v9417 = vadd.f32 %v9256, %v9416
  %v9418 = vpop.f32.mrf.mxu0
  %9419 = vmatprep.mubr.bf16.mxu0 %v8359
  %9420 = vmatmul.mubr.bf16.gmra.mxu0 %v8311
  %v9421 = vpop.f32.mrf.mxu0
  %v9422 = vadd.f32 %v9261, %v9421
  %v9423 = vpop.f32.mrf.mxu0
  %v9424 = vpop.f32.mrf.mxu0
  %v9425 = vadd.f32 %v9264, %v9424
  %v9426 = vpop.f32.mrf.mxu0
  %9427 = vmatprep.mubr.bf16.mxu0 %v8360
  %9428 = vmatmul.mubr.bf16.gmra.mxu0 %v8312
  %v9429 = vpop.f32.mrf.mxu0
  %v9430 = vadd.f32 %v9269, %v9429
  %v9431 = vpop.f32.mrf.mxu0
  %v9432 = vpop.f32.mrf.mxu0
  %v9433 = vadd.f32 %v9272, %v9432
  %v9434 = vpop.f32.mrf.mxu0
  %9435 = vmatprep.mubr.bf16.mxu0 %v8361
  %9436 = vmatmul.mubr.bf16.gmra.mxu0 %v8313
  %v9437 = vpop.f32.mrf.mxu0
  %v9438 = vadd.f32 %v9277, %v9437
  %v9439 = vpop.f32.mrf.mxu0
  %v9440 = vpop.f32.mrf.mxu0
  %v9441 = vadd.f32 %v9280, %v9440
  %v9442 = vpop.f32.mrf.mxu0
  %9443 = vmatprep.mubr.bf16.mxu0 %v8362
  %9444 = vmatmul.mubr.bf16.gmra.mxu0 %v8314
  %v9445 = vpop.f32.mrf.mxu0
  %v9446 = vadd.f32 %v9285, %v9445
  %v9447 = vpop.f32.mrf.mxu0
  %v9448 = vpop.f32.mrf.mxu0
  %v9449 = vadd.f32 %v9288, %v9448
  %v9450 = vpop.f32.mrf.mxu0
  %9451 = vmatprep.mubr.bf16.mxu0 %v8363
  %9452 = vmatmul.mubr.bf16.gmra.mxu0 %v8315
  %v9453 = vpop.f32.mrf.mxu0
  %v9454 = vadd.f32 %v9293, %v9453
  %v9455 = vpop.f32.mrf.mxu0
  %v9456 = vpop.f32.mrf.mxu0
  %v9457 = vadd.f32 %v9296, %v9456
  %v9458 = vpop.f32.mrf.mxu0
  %9459 = vmatprep.mubr.bf16.mxu0 %v8364
  %9460 = vmatmul.mubr.bf16.gmra.mxu0 %v8316
  %v9461 = vpop.f32.mrf.mxu0
  %v9462 = vadd.f32 %v9301, %v9461
  %v9463 = vpop.f32.mrf.mxu0
  %v9464 = vpop.f32.mrf.mxu0
  %v9465 = vadd.f32 %v9304, %v9464
  %v9466 = vpop.f32.mrf.mxu0
  %9467 = vmatprep.mubr.bf16.mxu0 %v8365
  %9468 = vmatmul.mubr.bf16.gmra.mxu0 %v8317
  %v9469 = vpop.f32.mrf.mxu0
  %v9470 = vadd.f32 %v9309, %v9469
  %v9471 = vpop.f32.mrf.mxu0
  %v9472 = vpop.f32.mrf.mxu0
  %v9473 = vadd.f32 %v9312, %v9472
  %v9474 = vpop.f32.mrf.mxu0
  %9475 = vmatprep.mubr.bf16.mxu0 %v8366
  %9476 = vmatmul.mubr.bf16.gmra.mxu0 %v8318
  %v9477 = vpop.f32.mrf.mxu0
  %v9478 = vadd.f32 %v9317, %v9477
  %v9479 = vpop.f32.mrf.mxu0
  %v9480 = vpop.f32.mrf.mxu0
  %v9481 = vadd.f32 %v9320, %v9480
  %v9482 = vpop.f32.mrf.mxu0
  %9483 = vmatprep.mubr.bf16.mxu0 %v8367
  %9484 = vmatmul.mubr.bf16.gmra.mxu0 %v8319
  %v9485 = vpop.f32.mrf.mxu0
  %v9486 = vadd.f32 %v9325, %v9485
  %v9487 = vpop.f32.mrf.mxu0
  %v9488 = vpop.f32.mrf.mxu0
  %v9489 = vadd.f32 %v9328, %v9488
  %v9490 = vpop.f32.mrf.mxu0
  %9491 = vdwg.mxu0
  %9492 = vmatprep.subr.bf16.mxu0 0
  %9493 = vmatpush1.bf16.msra.mxu0 %v8775
  %9494 = vmatprep.subr.bf16.mxu0 0
  %9495 = vmatpush1.bf16.msra.mxu0 %v8774
  %9496 = vmatprep.subr.bf16.mxu0 0
  %9497 = vmatpush1.bf16.msra.mxu0 %v8773
  %9498 = vmatprep.subr.bf16.mxu0 0
  %9499 = vmatpush1.bf16.msra.mxu0 %v8772
  %9500 = vmatprep.subr.bf16.mxu0 0
  %9501 = vmatpush1.bf16.msra.mxu0 %v8771
  %9502 = vmatprep.subr.bf16.mxu0 0
  %9503 = vmatpush1.bf16.msra.mxu0 %v8770
  %9504 = vmatprep.subr.bf16.mxu0 0
  %9505 = vmatpush1.bf16.msra.mxu0 %v8769
  %9506 = vmatprep.subr.bf16.mxu0 0
  %9507 = vmatpush1.bf16.msra.mxu0 %v8768
  %9508 = vmatprep.subr.bf16.mxu0 0
  %9509 = vmatpush2.bf16.msra.mxu0 0
  %9510 = vmatprep.subr.bf16.mxu0 0
  %9511 = vmatpush2.bf16.msra.mxu0 0
  %9512 = vmatprep.subr.bf16.mxu0 0
  %9513 = vmatpush2.bf16.msra.mxu0 0
  %9514 = vmatprep.subr.bf16.mxu0 0
  %9515 = vmatpush2.bf16.msra.mxu0 0
  %9516 = vmatprep.subr.bf16.mxu0 0
  %9517 = vmatpush2.bf16.msra.mxu0 0
  %9518 = vmatprep.subr.bf16.mxu0 0
  %9519 = vmatpush2.bf16.msra.mxu0 0
  %9520 = vmatprep.subr.bf16.mxu0 0
  %9521 = vmatpush2.bf16.msra.mxu0 0
  %9522 = vmatprep.subr.bf16.mxu0 0
  %9523 = vmatpush2.bf16.msra.mxu0 0
  %9524 = vmatprep.mubr.bf16.mxu0 0
  %9525 = vmatmul.mubr.bf16.gmra.mxu0 %v8400
  %v9526 = vpop.f32.mrf.mxu0
  %v9527 = vadd.f32 %v9366, %v9526
  %v9528 = vpop.f32.mrf.mxu0
  %v9529 = vpop.f32.mrf.mxu0
  %v9530 = vadd.f32 %v9369, %v9529
  %v9531 = vpop.f32.mrf.mxu0
  %9532 = vmatprep.mubr.bf16.mxu0 0
  %9533 = vmatmul.mubr.bf16.gmra.mxu0 %v8401
  %v9534 = vpop.f32.mrf.mxu0
  %v9535 = vadd.f32 %v9374, %v9534
  %v9536 = vpop.f32.mrf.mxu0
  %v9537 = vpop.f32.mrf.mxu0
  %v9538 = vadd.f32 %v9377, %v9537
  %v9539 = vpop.f32.mrf.mxu0
  %9540 = vmatprep.mubr.bf16.mxu0 0
  %9541 = vmatmul.mubr.bf16.gmra.mxu0 %v8402
  %v9542 = vpop.f32.mrf.mxu0
  %v9543 = vadd.f32 %v9382, %v9542
  %v9544 = vpop.f32.mrf.mxu0
  %v9545 = vpop.f32.mrf.mxu0
  %v9546 = vadd.f32 %v9385, %v9545
  %v9547 = vpop.f32.mrf.mxu0
  %9548 = vmatprep.mubr.bf16.mxu0 0
  %9549 = vmatmul.mubr.bf16.gmra.mxu0 %v8403
  %v9550 = vpop.f32.mrf.mxu0
  %v9551 = vadd.f32 %v9390, %v9550
  %v9552 = vpop.f32.mrf.mxu0
  %v9553 = vpop.f32.mrf.mxu0
  %v9554 = vadd.f32 %v9393, %v9553
  %v9555 = vpop.f32.mrf.mxu0
  %9556 = vmatprep.mubr.bf16.mxu0 0
  %9557 = vmatmul.mubr.bf16.gmra.mxu0 %v8404
  %v9558 = vpop.f32.mrf.mxu0
  %v9559 = vadd.f32 %v9398, %v9558
  %v9560 = vpop.f32.mrf.mxu0
  %v9561 = vpop.f32.mrf.mxu0
  %v9562 = vadd.f32 %v9401, %v9561
  %v9563 = vpop.f32.mrf.mxu0
  %9564 = vmatprep.mubr.bf16.mxu0 0
  %9565 = vmatmul.mubr.bf16.gmra.mxu0 %v8405
  %v9566 = vpop.f32.mrf.mxu0
  %v9567 = vadd.f32 %v9406, %v9566
  %v9568 = vpop.f32.mrf.mxu0
  %v9569 = vpop.f32.mrf.mxu0
  %v9570 = vadd.f32 %v9409, %v9569
  %v9571 = vpop.f32.mrf.mxu0
  %9572 = vmatprep.mubr.bf16.mxu0 0
  %9573 = vmatmul.mubr.bf16.gmra.mxu0 %v8406
  %v9574 = vpop.f32.mrf.mxu0
  %v9575 = vadd.f32 %v9414, %v9574
  %v9576 = vpop.f32.mrf.mxu0
  %v9577 = vpop.f32.mrf.mxu0
  %v9578 = vadd.f32 %v9417, %v9577
  %v9579 = vpop.f32.mrf.mxu0
  %9580 = vmatprep.mubr.bf16.mxu0 0
  %9581 = vmatmul.mubr.bf16.gmra.mxu0 %v8407
  %v9582 = vpop.f32.mrf.mxu0
  %v9583 = vadd.f32 %v9422, %v9582
  %v9584 = vpop.f32.mrf.mxu0
  %v9585 = vpop.f32.mrf.mxu0
  %v9586 = vadd.f32 %v9425, %v9585
  %v9587 = vpop.f32.mrf.mxu0
  %9588 = vmatprep.mubr.bf16.mxu0 0
  %9589 = vmatmul.mubr.bf16.gmra.mxu0 %v8408
  %v9590 = vpop.f32.mrf.mxu0
  %v9591 = vadd.f32 %v9430, %v9590
  %v9592 = vpop.f32.mrf.mxu0
  %v9593 = vpop.f32.mrf.mxu0
  %v9594 = vadd.f32 %v9433, %v9593
  %v9595 = vpop.f32.mrf.mxu0
  %9596 = vmatprep.mubr.bf16.mxu0 0
  %9597 = vmatmul.mubr.bf16.gmra.mxu0 %v8409
  %v9598 = vpop.f32.mrf.mxu0
  %v9599 = vadd.f32 %v9438, %v9598
  %v9600 = vpop.f32.mrf.mxu0
  %v9601 = vpop.f32.mrf.mxu0
  %v9602 = vadd.f32 %v9441, %v9601
  %v9603 = vpop.f32.mrf.mxu0
  %9604 = vmatprep.mubr.bf16.mxu0 0
  %9605 = vmatmul.mubr.bf16.gmra.mxu0 %v8410
  %v9606 = vpop.f32.mrf.mxu0
  %v9607 = vadd.f32 %v9446, %v9606
  %v9608 = vpop.f32.mrf.mxu0
  %v9609 = vpop.f32.mrf.mxu0
  %v9610 = vadd.f32 %v9449, %v9609
  %v9611 = vpop.f32.mrf.mxu0
  %9612 = vmatprep.mubr.bf16.mxu0 0
  %9613 = vmatmul.mubr.bf16.gmra.mxu0 %v8411
  %v9614 = vpop.f32.mrf.mxu0
  %v9615 = vadd.f32 %v9454, %v9614
  %v9616 = vpop.f32.mrf.mxu0
  %v9617 = vpop.f32.mrf.mxu0
  %v9618 = vadd.f32 %v9457, %v9617
  %v9619 = vpop.f32.mrf.mxu0
  %9620 = vmatprep.mubr.bf16.mxu0 0
  %9621 = vmatmul.mubr.bf16.gmra.mxu0 %v8412
  %v9622 = vpop.f32.mrf.mxu0
  %v9623 = vadd.f32 %v9462, %v9622
  %v9624 = vpop.f32.mrf.mxu0
  %v9625 = vpop.f32.mrf.mxu0
  %v9626 = vadd.f32 %v9465, %v9625
  %v9627 = vpop.f32.mrf.mxu0
  %9628 = vmatprep.mubr.bf16.mxu0 0
  %9629 = vmatmul.mubr.bf16.gmra.mxu0 %v8413
  %v9630 = vpop.f32.mrf.mxu0
  %v9631 = vadd.f32 %v9470, %v9630
  %v9632 = vpop.f32.mrf.mxu0
  %v9633 = vpop.f32.mrf.mxu0
  %v9634 = vadd.f32 %v9473, %v9633
  %v9635 = vpop.f32.mrf.mxu0
  %9636 = vmatprep.mubr.bf16.mxu0 0
  %9637 = vmatmul.mubr.bf16.gmra.mxu0 %v8414
  %v9638 = vpop.f32.mrf.mxu0
  %v9639 = vadd.f32 %v9478, %v9638
  %v9640 = vpop.f32.mrf.mxu0
  %v9641 = vpop.f32.mrf.mxu0
  %v9642 = vadd.f32 %v9481, %v9641
  %v9643 = vpop.f32.mrf.mxu0
  %9644 = vmatprep.mubr.bf16.mxu0 0
  %9645 = vmatmul.mubr.bf16.gmra.mxu0 %v8415
  %v9646 = vpop.f32.mrf.mxu0
  %v9647 = vadd.f32 %v9486, %v9646
  %v9648 = vpop.f32.mrf.mxu0
  %v9649 = vpop.f32.mrf.mxu0
  %v9650 = vadd.f32 %v9489, %v9649
  %v9651 = vpop.f32.mrf.mxu0
  %9652 = vdwg.mxu0
  %9653 = vst [vmem:[#allocation2] sm:$0xff] %v9527
  %9654 = vst [vmem:[#allocation2 + $0x8] sm:$0xff] %v9530
  %9655 = vst [vmem:[#allocation2 + $0x10] sm:$0xff] %v9535
  %9656 = vst [vmem:[#allocation2 + $0x18] sm:$0xff] %v9538
  %9657 = vst [vmem:[#allocation2 + $0x20] sm:$0xff] %v9543
  %9658 = vst [vmem:[#allocation2 + $0x28] sm:$0xff] %v9546
  %9659 = vst [vmem:[#allocation2 + $0x30] sm:$0xff] %v9551
  %9660 = vst [vmem:[#allocation2 + $0x38] sm:$0xff] %v9554
  %9661 = vst [vmem:[#allocation2 + $0x40] sm:$0xff] %v9559
  %9662 = vst [vmem:[#allocation2 + $0x48] sm:$0xff] %v9562
  %9663 = vst [vmem:[#allocation2 + $0x50] sm:$0xff] %v9567
  %9664 = vst [vmem:[#allocation2 + $0x58] sm:$0xff] %v9570
  %9665 = vst [vmem:[#allocation2 + $0x60] sm:$0xff] %v9575
  %9666 = vst [vmem:[#allocation2 + $0x68] sm:$0xff] %v9578
  %9667 = vst [vmem:[#allocation2 + $0x70] sm:$0xff] %v9583
  %9668 = vst [vmem:[#allocation2 + $0x78] sm:$0xff] %v9586
  %9669 = vst [vmem:[#allocation2 + $0x80] sm:$0xff] %v9591
  %9670 = vst [vmem:[#allocation2 + $0x88] sm:$0xff] %v9594
  %9671 = vst [vmem:[#allocation2 + $0x90] sm:$0xff] %v9599
  %9672 = vst [vmem:[#allocation2 + $0x98] sm:$0xff] %v9602
  %9673 = vst [vmem:[#allocation2 + $0xa0] sm:$0xff] %v9607
  %9674 = vst [vmem:[#allocation2 + $0xa8] sm:$0xff] %v9610
  %9675 = vst [vmem:[#allocation2 + $0xb0] sm:$0xff] %v9615
  %9676 = vst [vmem:[#allocation2 + $0xb8] sm:$0xff] %v9618
  %9677 = vst [vmem:[#allocation2 + $0xc0] sm:$0xff] %v9623
  %9678 = vst [vmem:[#allocation2 + $0xc8] sm:$0xff] %v9626
  %9679 = vst [vmem:[#allocation2 + $0xd0] sm:$0xff] %v9631
  %9680 = vst [vmem:[#allocation2 + $0xd8] sm:$0xff] %v9634
  %9681 = vst [vmem:[#allocation2 + $0xe0] sm:$0xff] %v9639
  %9682 = vst [vmem:[#allocation2 + $0xe8] sm:$0xff] %v9642
  %9683 = vst [vmem:[#allocation2 + $0xf0] sm:$0xff] %v9647
  %9684 = vst [vmem:[#allocation2 + $0xf8] sm:$0xff] %v9650
  %s9685 = scalar_lea.vmem [#allocation3], 432
  %v9686 = vld [vmem:[%s9685] sm:$0xff]
  %v9687 = vld [vmem:[%s9685 + $0x8] sm:$0xff]
  %v9688 = vld [vmem:[%s9685 + $0x18] sm:$0xff]
  %v9689 = vld [vmem:[%s9685 + $0x20] sm:$0xff]
  %v9690 = vld [vmem:[%s9685 + $0x30] sm:$0xff]
  %v9691 = vld [vmem:[%s9685 + $0x38] sm:$0xff]
  %v9692 = vld [vmem:[%s9685 + $0x48] sm:$0xff]
  %v9693 = vld [vmem:[%s9685 + $0x50] sm:$0xff]
  %v9694 = vld [vmem:[%s9685 + $0x60] sm:$0xff]
  %v9695 = vld [vmem:[%s9685 + $0x68] sm:$0xff]
  %v9696 = vld [vmem:[%s9685 + $0x78] sm:$0xff]
  %v9697 = vld [vmem:[%s9685 + $0x80] sm:$0xff]
  %v9698 = vld [vmem:[%s9685 + $0x90] sm:$0xff]
  %v9699 = vld [vmem:[%s9685 + $0x98] sm:$0xff]
  %v9700 = vld [vmem:[%s9685 + $0xa8] sm:$0xff]
  %v9701 = vld [vmem:[%s9685 + $0xb0] sm:$0xff]
  %v9702 = vld [vmem:[%s9685 + $0xc0] sm:$0xff]
  %v9703 = vld [vmem:[%s9685 + $0xc8] sm:$0xff]
  %v9704 = vld [vmem:[%s9685 + $0xd8] sm:$0xff]
  %v9705 = vld [vmem:[%s9685 + $0xe0] sm:$0xff]
  %v9706 = vld [vmem:[%s9685 + $0xf0] sm:$0xff]
  %v9707 = vld [vmem:[%s9685 + $0xf8] sm:$0xff]
  %v9708 = vld [vmem:[%s9685 + $0x108] sm:$0xff]
  %v9709 = vld [vmem:[%s9685 + $0x110] sm:$0xff]
  %v9710 = vld [vmem:[%s9685 + $0x120] sm:$0xff]
  %v9711 = vld [vmem:[%s9685 + $0x128] sm:$0xff]
  %v9712 = vld [vmem:[%s9685 + $0x138] sm:$0xff]
  %v9713 = vld [vmem:[%s9685 + $0x140] sm:$0xff]
  %v9714 = vld [vmem:[%s9685 + $0x150] sm:$0xff]
  %v9715 = vld [vmem:[%s9685 + $0x158] sm:$0xff]
  %v9716 = vld [vmem:[%s9685 + $0x168] sm:$0xff]
  %v9717 = vld [vmem:[%s9685 + $0x170] sm:$0xff]
  %v9718 = vpack.c.bf16 %v9687, %v9686
  %v9719 = vpack.c.bf16 %v9689, %v9688
  %v9720 = vpack.c.bf16 %v9691, %v9690
  %v9721 = vpack.c.bf16 %v9693, %v9692
  %v9722 = vpack.c.bf16 %v9695, %v9694
  %v9723 = vpack.c.bf16 %v9697, %v9696
  %v9724 = vpack.c.bf16 %v9699, %v9698
  %v9725 = vpack.c.bf16 %v9701, %v9700
  %v9726 = vpack.c.bf16 %v9703, %v9702
  %v9727 = vpack.c.bf16 %v9705, %v9704
  %v9728 = vpack.c.bf16 %v9707, %v9706
  %v9729 = vpack.c.bf16 %v9709, %v9708
  %v9730 = vpack.c.bf16 %v9711, %v9710
  %v9731 = vpack.c.bf16 %v9713, %v9712
  %v9732 = vpack.c.bf16 %v9715, %v9714
  %v9733 = vpack.c.bf16 %v9717, %v9716
  %v9734 = vld [vmem:[%s9685 + $0x1] sm:$0xff]
  %v9735 = vld [vmem:[%s9685 + $0x9] sm:$0xff]
  %v9736 = vld [vmem:[%s9685 + $0x19] sm:$0xff]
  %v9737 = vld [vmem:[%s9685 + $0x21] sm:$0xff]
  %v9738 = vld [vmem:[%s9685 + $0x31] sm:$0xff]
  %v9739 = vld [vmem:[%s9685 + $0x39] sm:$0xff]
  %v9740 = vld [vmem:[%s9685 + $0x49] sm:$0xff]
  %v9741 = vld [vmem:[%s9685 + $0x51] sm:$0xff]
  %v9742 = vld [vmem:[%s9685 + $0x61] sm:$0xff]
  %v9743 = vld [vmem:[%s9685 + $0x69] sm:$0xff]
  %v9744 = vld [vmem:[%s9685 + $0x79] sm:$0xff]
  %v9745 = vld [vmem:[%s9685 + $0x81] sm:$0xff]
  %v9746 = vld [vmem:[%s9685 + $0x91] sm:$0xff]
  %v9747 = vld [vmem:[%s9685 + $0x99] sm:$0xff]
  %v9748 = vld [vmem:[%s9685 + $0xa9] sm:$0xff]
  %v9749 = vld [vmem:[%s9685 + $0xb1] sm:$0xff]
  %v9750 = vld [vmem:[%s9685 + $0xc1] sm:$0xff]
  %v9751 = vld [vmem:[%s9685 + $0xc9] sm:$0xff]
  %v9752 = vld [vmem:[%s9685 + $0xd9] sm:$0xff]
  %v9753 = vld [vmem:[%s9685 + $0xe1] sm:$0xff]
  %v9754 = vld [vmem:[%s9685 + $0xf1] sm:$0xff]
  %v9755 = vld [vmem:[%s9685 + $0xf9] sm:$0xff]
  %v9756 = vld [vmem:[%s9685 + $0x109] sm:$0xff]
  %v9757 = vld [vmem:[%s9685 + $0x111] sm:$0xff]
  %v9758 = vld [vmem:[%s9685 + $0x121] sm:$0xff]
  %v9759 = vld [vmem:[%s9685 + $0x129] sm:$0xff]
  %v9760 = vld [vmem:[%s9685 + $0x139] sm:$0xff]
  %v9761 = vld [vmem:[%s9685 + $0x141] sm:$0xff]
  %v9762 = vld [vmem:[%s9685 + $0x151] sm:$0xff]
  %v9763 = vld [vmem:[%s9685 + $0x159] sm:$0xff]
  %v9764 = vld [vmem:[%s9685 + $0x169] sm:$0xff]
  %v9765 = vld [vmem:[%s9685 + $0x171] sm:$0xff]
  %v9766 = vpack.c.bf16 %v9735, %v9734
  %v9767 = vpack.c.bf16 %v9737, %v9736
  %v9768 = vpack.c.bf16 %v9739, %v9738
  %v9769 = vpack.c.bf16 %v9741, %v9740
  %v9770 = vpack.c.bf16 %v9743, %v9742
  %v9771 = vpack.c.bf16 %v9745, %v9744
  %v9772 = vpack.c.bf16 %v9747, %v9746
  %v9773 = vpack.c.bf16 %v9749, %v9748
  %v9774 = vpack.c.bf16 %v9751, %v9750
  %v9775 = vpack.c.bf16 %v9753, %v9752
  %v9776 = vpack.c.bf16 %v9755, %v9754
  %v9777 = vpack.c.bf16 %v9757, %v9756
  %v9778 = vpack.c.bf16 %v9759, %v9758
  %v9779 = vpack.c.bf16 %v9761, %v9760
  %v9780 = vpack.c.bf16 %v9763, %v9762
  %v9781 = vpack.c.bf16 %v9765, %v9764
  %v9782 = vld [vmem:[%s9685 + $0x2] sm:$0xff]
  %v9783 = vld [vmem:[%s9685 + $0xa] sm:$0xff]
  %v9784 = vld [vmem:[%s9685 + $0x1a] sm:$0xff]
  %v9785 = vld [vmem:[%s9685 + $0x22] sm:$0xff]
  %v9786 = vld [vmem:[%s9685 + $0x32] sm:$0xff]
  %v9787 = vld [vmem:[%s9685 + $0x3a] sm:$0xff]
  %v9788 = vld [vmem:[%s9685 + $0x4a] sm:$0xff]
  %v9789 = vld [vmem:[%s9685 + $0x52] sm:$0xff]
  %v9790 = vld [vmem:[%s9685 + $0x62] sm:$0xff]
  %v9791 = vld [vmem:[%s9685 + $0x6a] sm:$0xff]
  %v9792 = vld [vmem:[%s9685 + $0x7a] sm:$0xff]
  %v9793 = vld [vmem:[%s9685 + $0x82] sm:$0xff]
  %v9794 = vld [vmem:[%s9685 + $0x92] sm:$0xff]
  %v9795 = vld [vmem:[%s9685 + $0x9a] sm:$0xff]
  %v9796 = vld [vmem:[%s9685 + $0xaa] sm:$0xff]
  %v9797 = vld [vmem:[%s9685 + $0xb2] sm:$0xff]
  %v9798 = vld [vmem:[%s9685 + $0xc2] sm:$0xff]
  %v9799 = vld [vmem:[%s9685 + $0xca] sm:$0xff]
  %v9800 = vld [vmem:[%s9685 + $0xda] sm:$0xff]
  %v9801 = vld [vmem:[%s9685 + $0xe2] sm:$0xff]
  %v9802 = vld [vmem:[%s9685 + $0xf2] sm:$0xff]
  %v9803 = vld [vmem:[%s9685 + $0xfa] sm:$0xff]
  %v9804 = vld [vmem:[%s9685 + $0x10a] sm:$0xff]
  %v9805 = vld [vmem:[%s9685 + $0x112] sm:$0xff]
  %v9806 = vld [vmem:[%s9685 + $0x122] sm:$0xff]
  %v9807 = vld [vmem:[%s9685 + $0x12a] sm:$0xff]
  %v9808 = vld [vmem:[%s9685 + $0x13a] sm:$0xff]
  %v9809 = vld [vmem:[%s9685 + $0x142] sm:$0xff]
  %v9810 = vld [vmem:[%s9685 + $0x152] sm:$0xff]
  %v9811 = vld [vmem:[%s9685 + $0x15a] sm:$0xff]
  %v9812 = vld [vmem:[%s9685 + $0x16a] sm:$0xff]
  %v9813 = vld [vmem:[%s9685 + $0x172] sm:$0xff]
  %v9814 = vpack.c.bf16 %v9783, %v9782
  %v9815 = vpack.c.bf16 %v9785, %v9784
  %v9816 = vpack.c.bf16 %v9787, %v9786
  %v9817 = vpack.c.bf16 %v9789, %v9788
  %v9818 = vpack.c.bf16 %v9791, %v9790
  %v9819 = vpack.c.bf16 %v9793, %v9792
  %v9820 = vpack.c.bf16 %v9795, %v9794
  %v9821 = vpack.c.bf16 %v9797, %v9796
  %v9822 = vpack.c.bf16 %v9799, %v9798
  %v9823 = vpack.c.bf16 %v9801, %v9800
  %v9824 = vpack.c.bf16 %v9803, %v9802
  %v9825 = vpack.c.bf16 %v9805, %v9804
  %v9826 = vpack.c.bf16 %v9807, %v9806
  %v9827 = vpack.c.bf16 %v9809, %v9808
  %v9828 = vpack.c.bf16 %v9811, %v9810
  %v9829 = vpack.c.bf16 %v9813, %v9812
  %s9830 = scalar_lea.vmem [#allocation3], 456
  %v9831 = vld [vmem:[%s9830] sm:$0xff]
  %v9832 = vld [vmem:[%s9830 + $0x8] sm:$0xff]
  %v9833 = vld [vmem:[%s9830 + $0x18] sm:$0xff]
  %v9834 = vld [vmem:[%s9830 + $0x20] sm:$0xff]
  %v9835 = vld [vmem:[%s9830 + $0x30] sm:$0xff]
  %v9836 = vld [vmem:[%s9830 + $0x38] sm:$0xff]
  %v9837 = vld [vmem:[%s9830 + $0x48] sm:$0xff]
  %v9838 = vld [vmem:[%s9830 + $0x50] sm:$0xff]
  %v9839 = vld [vmem:[%s9830 + $0x60] sm:$0xff]
  %v9840 = vld [vmem:[%s9830 + $0x68] sm:$0xff]
  %v9841 = vld [vmem:[%s9830 + $0x78] sm:$0xff]
  %v9842 = vld [vmem:[%s9830 + $0x80] sm:$0xff]
  %v9843 = vld [vmem:[%s9830 + $0x90] sm:$0xff]
  %v9844 = vld [vmem:[%s9830 + $0x98] sm:$0xff]
  %v9845 = vld [vmem:[%s9830 + $0xa8] sm:$0xff]
  %v9846 = vld [vmem:[%s9830 + $0xb0] sm:$0xff]
  %v9847 = vld [vmem:[%s9830 + $0xc0] sm:$0xff]
  %v9848 = vld [vmem:[%s9830 + $0xc8] sm:$0xff]
  %v9849 = vld [vmem:[%s9830 + $0xd8] sm:$0xff]
  %v9850 = vld [vmem:[%s9830 + $0xe0] sm:$0xff]
  %v9851 = vld [vmem:[%s9830 + $0xf0] sm:$0xff]
  %v9852 = vld [vmem:[%s9830 + $0xf8] sm:$0xff]
  %v9853 = vld [vmem:[%s9830 + $0x108] sm:$0xff]
  %v9854 = vld [vmem:[%s9830 + $0x110] sm:$0xff]
  %v9855 = vld [vmem:[%s9830 + $0x120] sm:$0xff]
  %v9856 = vld [vmem:[%s9830 + $0x128] sm:$0xff]
  %v9857 = vld [vmem:[%s9830 + $0x138] sm:$0xff]
  %v9858 = vld [vmem:[%s9830 + $0x140] sm:$0xff]
  %v9859 = vld [vmem:[%s9830 + $0x150] sm:$0xff]
  %v9860 = vld [vmem:[%s9830 + $0x158] sm:$0xff]
  %v9861 = vld [vmem:[%s9830 + $0x168] sm:$0xff]
  %v9862 = vld [vmem:[%s9830 + $0x170] sm:$0xff]
  %v9863 = vpack.c.bf16 %v9832, %v9831
  %v9864 = vpack.c.bf16 %v9834, %v9833
  %v9865 = vpack.c.bf16 %v9836, %v9835
  %v9866 = vpack.c.bf16 %v9838, %v9837
  %v9867 = vpack.c.bf16 %v9840, %v9839
  %v9868 = vpack.c.bf16 %v9842, %v9841
  %v9869 = vpack.c.bf16 %v9844, %v9843
  %v9870 = vpack.c.bf16 %v9846, %v9845
  %v9871 = vpack.c.bf16 %v9848, %v9847
  %v9872 = vpack.c.bf16 %v9850, %v9849
  %v9873 = vpack.c.bf16 %v9852, %v9851
  %v9874 = vpack.c.bf16 %v9854, %v9853
  %v9875 = vpack.c.bf16 %v9856, %v9855
  %v9876 = vpack.c.bf16 %v9858, %v9857
  %v9877 = vpack.c.bf16 %v9860, %v9859
  %v9878 = vpack.c.bf16 %v9862, %v9861
  %v9879 = vld [vmem:[%s9830 + $0x1] sm:$0xff]
  %v9880 = vld [vmem:[%s9830 + $0x9] sm:$0xff]
  %v9881 = vld [vmem:[%s9830 + $0x19] sm:$0xff]
  %v9882 = vld [vmem:[%s9830 + $0x21] sm:$0xff]
  %v9883 = vld [vmem:[%s9830 + $0x31] sm:$0xff]
  %v9884 = vld [vmem:[%s9830 + $0x39] sm:$0xff]
  %v9885 = vld [vmem:[%s9830 + $0x49] sm:$0xff]
  %v9886 = vld [vmem:[%s9830 + $0x51] sm:$0xff]
  %v9887 = vld [vmem:[%s9830 + $0x61] sm:$0xff]
  %v9888 = vld [vmem:[%s9830 + $0x69] sm:$0xff]
  %v9889 = vld [vmem:[%s9830 + $0x79] sm:$0xff]
  %v9890 = vld [vmem:[%s9830 + $0x81] sm:$0xff]
  %v9891 = vld [vmem:[%s9830 + $0x91] sm:$0xff]
  %v9892 = vld [vmem:[%s9830 + $0x99] sm:$0xff]
  %v9893 = vld [vmem:[%s9830 + $0xa9] sm:$0xff]
  %v9894 = vld [vmem:[%s9830 + $0xb1] sm:$0xff]
  %v9895 = vld [vmem:[%s9830 + $0xc1] sm:$0xff]
  %v9896 = vld [vmem:[%s9830 + $0xc9] sm:$0xff]
  %v9897 = vld [vmem:[%s9830 + $0xd9] sm:$0xff]
  %v9898 = vld [vmem:[%s9830 + $0xe1] sm:$0xff]
  %v9899 = vld [vmem:[%s9830 + $0xf1] sm:$0xff]
  %v9900 = vld [vmem:[%s9830 + $0xf9] sm:$0xff]
  %v9901 = vld [vmem:[%s9830 + $0x109] sm:$0xff]
  %v9902 = vld [vmem:[%s9830 + $0x111] sm:$0xff]
  %v9903 = vld [vmem:[%s9830 + $0x121] sm:$0xff]
  %v9904 = vld [vmem:[%s9830 + $0x129] sm:$0xff]
  %v9905 = vld [vmem:[%s9830 + $0x139] sm:$0xff]
  %v9906 = vld [vmem:[%s9830 + $0x141] sm:$0xff]
  %v9907 = vld [vmem:[%s9830 + $0x151] sm:$0xff]
  %v9908 = vld [vmem:[%s9830 + $0x159] sm:$0xff]
  %v9909 = vld [vmem:[%s9830 + $0x169] sm:$0xff]
  %v9910 = vld [vmem:[%s9830 + $0x171] sm:$0xff]
  %v9911 = vpack.c.bf16 %v9880, %v9879
  %v9912 = vpack.c.bf16 %v9882, %v9881
  %v9913 = vpack.c.bf16 %v9884, %v9883
  %v9914 = vpack.c.bf16 %v9886, %v9885
  %v9915 = vpack.c.bf16 %v9888, %v9887
  %v9916 = vpack.c.bf16 %v9890, %v9889
  %v9917 = vpack.c.bf16 %v9892, %v9891
  %v9918 = vpack.c.bf16 %v9894, %v9893
  %v9919 = vpack.c.bf16 %v9896, %v9895
  %v9920 = vpack.c.bf16 %v9898, %v9897
  %v9921 = vpack.c.bf16 %v9900, %v9899
  %v9922 = vpack.c.bf16 %v9902, %v9901
  %v9923 = vpack.c.bf16 %v9904, %v9903
  %v9924 = vpack.c.bf16 %v9906, %v9905
  %v9925 = vpack.c.bf16 %v9908, %v9907
  %v9926 = vpack.c.bf16 %v9910, %v9909
  %v9927 = vld [vmem:[%s9830 + $0x2] sm:$0xff]
  %v9928 = vld [vmem:[%s9830 + $0xa] sm:$0xff]
  %v9929 = vld [vmem:[%s9830 + $0x1a] sm:$0xff]
  %v9930 = vld [vmem:[%s9830 + $0x22] sm:$0xff]
  %v9931 = vld [vmem:[%s9830 + $0x32] sm:$0xff]
  %v9932 = vld [vmem:[%s9830 + $0x3a] sm:$0xff]
  %v9933 = vld [vmem:[%s9830 + $0x4a] sm:$0xff]
  %v9934 = vld [vmem:[%s9830 + $0x52] sm:$0xff]
  %v9935 = vld [vmem:[%s9830 + $0x62] sm:$0xff]
  %v9936 = vld [vmem:[%s9830 + $0x6a] sm:$0xff]
  %v9937 = vld [vmem:[%s9830 + $0x7a] sm:$0xff]
  %v9938 = vld [vmem:[%s9830 + $0x82] sm:$0xff]
  %v9939 = vld [vmem:[%s9830 + $0x92] sm:$0xff]
  %v9940 = vld [vmem:[%s9830 + $0x9a] sm:$0xff]
  %v9941 = vld [vmem:[%s9830 + $0xaa] sm:$0xff]
  %v9942 = vld [vmem:[%s9830 + $0xb2] sm:$0xff]
  %v9943 = vld [vmem:[%s9830 + $0xc2] sm:$0xff]
  %v9944 = vld [vmem:[%s9830 + $0xca] sm:$0xff]
  %v9945 = vld [vmem:[%s9830 + $0xda] sm:$0xff]
  %v9946 = vld [vmem:[%s9830 + $0xe2] sm:$0xff]
  %v9947 = vld [vmem:[%s9830 + $0xf2] sm:$0xff]
  %v9948 = vld [vmem:[%s9830 + $0xfa] sm:$0xff]
  %v9949 = vld [vmem:[%s9830 + $0x10a] sm:$0xff]
  %v9950 = vld [vmem:[%s9830 + $0x112] sm:$0xff]
  %v9951 = vld [vmem:[%s9830 + $0x122] sm:$0xff]
  %v9952 = vld [vmem:[%s9830 + $0x12a] sm:$0xff]
  %v9953 = vld [vmem:[%s9830 + $0x13a] sm:$0xff]
  %v9954 = vld [vmem:[%s9830 + $0x142] sm:$0xff]
  %v9955 = vld [vmem:[%s9830 + $0x152] sm:$0xff]
  %v9956 = vld [vmem:[%s9830 + $0x15a] sm:$0xff]
  %v9957 = vld [vmem:[%s9830 + $0x16a] sm:$0xff]
  %v9958 = vld [vmem:[%s9830 + $0x172] sm:$0xff]
  %v9959 = vpack.c.bf16 %v9928, %v9927
  %v9960 = vpack.c.bf16 %v9930, %v9929
  %v9961 = vpack.c.bf16 %v9932, %v9931
  %v9962 = vpack.c.bf16 %v9934, %v9933
  %v9963 = vpack.c.bf16 %v9936, %v9935
  %v9964 = vpack.c.bf16 %v9938, %v9937
  %v9965 = vpack.c.bf16 %v9940, %v9939
  %v9966 = vpack.c.bf16 %v9942, %v9941
  %v9967 = vpack.c.bf16 %v9944, %v9943
  %v9968 = vpack.c.bf16 %v9946, %v9945
  %v9969 = vpack.c.bf16 %v9948, %v9947
  %v9970 = vpack.c.bf16 %v9950, %v9949
  %v9971 = vpack.c.bf16 %v9952, %v9951
  %v9972 = vpack.c.bf16 %v9954, %v9953
  %v9973 = vpack.c.bf16 %v9956, %v9955
  %v9974 = vpack.c.bf16 %v9958, %v9957
  %s9975 = scalar_lea.vmem [#allocation3], 480
  %v9976 = vld [vmem:[%s9975] sm:$0xff]
  %v9977 = vld [vmem:[%s9975 + $0x8] sm:$0xff]
  %v9978 = vld [vmem:[%s9975 + $0x18] sm:$0xff]
  %v9979 = vld [vmem:[%s9975 + $0x20] sm:$0xff]
  %v9980 = vld [vmem:[%s9975 + $0x30] sm:$0xff]
  %v9981 = vld [vmem:[%s9975 + $0x38] sm:$0xff]
  %v9982 = vld [vmem:[%s9975 + $0x48] sm:$0xff]
  %v9983 = vld [vmem:[%s9975 + $0x50] sm:$0xff]
  %v9984 = vld [vmem:[%s9975 + $0x60] sm:$0xff]
  %v9985 = vld [vmem:[%s9975 + $0x68] sm:$0xff]
  %v9986 = vld [vmem:[%s9975 + $0x78] sm:$0xff]
  %v9987 = vld [vmem:[%s9975 + $0x80] sm:$0xff]
  %v9988 = vld [vmem:[%s9975 + $0x90] sm:$0xff]
  %v9989 = vld [vmem:[%s9975 + $0x98] sm:$0xff]
  %v9990 = vld [vmem:[%s9975 + $0xa8] sm:$0xff]
  %v9991 = vld [vmem:[%s9975 + $0xb0] sm:$0xff]
  %v9992 = vld [vmem:[%s9975 + $0xc0] sm:$0xff]
  %v9993 = vld [vmem:[%s9975 + $0xc8] sm:$0xff]
  %v9994 = vld [vmem:[%s9975 + $0xd8] sm:$0xff]
  %v9995 = vld [vmem:[%s9975 + $0xe0] sm:$0xff]
  %v9996 = vld [vmem:[%s9975 + $0xf0] sm:$0xff]
  %v9997 = vld [vmem:[%s9975 + $0xf8] sm:$0xff]
  %v9998 = vld [vmem:[%s9975 + $0x108] sm:$0xff]
  %v9999 = vld [vmem:[%s9975 + $0x110] sm:$0xff]
  %v10000 = vld [vmem:[%s9975 + $0x120] sm:$0xff]
  %v10001 = vld [vmem:[%s9975 + $0x128] sm:$0xff]
  %v10002 = vld [vmem:[%s9975 + $0x138] sm:$0xff]
  %v10003 = vld [vmem:[%s9975 + $0x140] sm:$0xff]
  %v10004 = vld [vmem:[%s9975 + $0x150] sm:$0xff]
  %v10005 = vld [vmem:[%s9975 + $0x158] sm:$0xff]
  %v10006 = vld [vmem:[%s9975 + $0x168] sm:$0xff]
  %v10007 = vld [vmem:[%s9975 + $0x170] sm:$0xff]
  %v10008 = vpack.c.bf16 %v9977, %v9976
  %v10009 = vpack.c.bf16 %v9979, %v9978
  %v10010 = vpack.c.bf16 %v9981, %v9980
  %v10011 = vpack.c.bf16 %v9983, %v9982
  %v10012 = vpack.c.bf16 %v9985, %v9984
  %v10013 = vpack.c.bf16 %v9987, %v9986
  %v10014 = vpack.c.bf16 %v9989, %v9988
  %v10015 = vpack.c.bf16 %v9991, %v9990
  %v10016 = vpack.c.bf16 %v9993, %v9992
  %v10017 = vpack.c.bf16 %v9995, %v9994
  %v10018 = vpack.c.bf16 %v9997, %v9996
  %v10019 = vpack.c.bf16 %v9999, %v9998
  %v10020 = vpack.c.bf16 %v10001, %v10000
  %v10021 = vpack.c.bf16 %v10003, %v10002
  %v10022 = vpack.c.bf16 %v10005, %v10004
  %v10023 = vpack.c.bf16 %v10007, %v10006
  %v10024 = vld [vmem:[%s9975 + $0x1] sm:$0xff]
  %v10025 = vld [vmem:[%s9975 + $0x9] sm:$0xff]
  %v10026 = vld [vmem:[%s9975 + $0x19] sm:$0xff]
  %v10027 = vld [vmem:[%s9975 + $0x21] sm:$0xff]
  %v10028 = vld [vmem:[%s9975 + $0x31] sm:$0xff]
  %v10029 = vld [vmem:[%s9975 + $0x39] sm:$0xff]
  %v10030 = vld [vmem:[%s9975 + $0x49] sm:$0xff]
  %v10031 = vld [vmem:[%s9975 + $0x51] sm:$0xff]
  %v10032 = vld [vmem:[%s9975 + $0x61] sm:$0xff]
  %v10033 = vld [vmem:[%s9975 + $0x69] sm:$0xff]
  %v10034 = vld [vmem:[%s9975 + $0x79] sm:$0xff]
  %v10035 = vld [vmem:[%s9975 + $0x81] sm:$0xff]
  %v10036 = vld [vmem:[%s9975 + $0x91] sm:$0xff]
  %v10037 = vld [vmem:[%s9975 + $0x99] sm:$0xff]
  %v10038 = vld [vmem:[%s9975 + $0xa9] sm:$0xff]
  %v10039 = vld [vmem:[%s9975 + $0xb1] sm:$0xff]
  %v10040 = vld [vmem:[%s9975 + $0xc1] sm:$0xff]
  %v10041 = vld [vmem:[%s9975 + $0xc9] sm:$0xff]
  %v10042 = vld [vmem:[%s9975 + $0xd9] sm:$0xff]
  %v10043 = vld [vmem:[%s9975 + $0xe1] sm:$0xff]
  %v10044 = vld [vmem:[%s9975 + $0xf1] sm:$0xff]
  %v10045 = vld [vmem:[%s9975 + $0xf9] sm:$0xff]
  %v10046 = vld [vmem:[%s9975 + $0x109] sm:$0xff]
  %v10047 = vld [vmem:[%s9975 + $0x111] sm:$0xff]
  %v10048 = vld [vmem:[%s9975 + $0x121] sm:$0xff]
  %v10049 = vld [vmem:[%s9975 + $0x129] sm:$0xff]
  %v10050 = vld [vmem:[%s9975 + $0x139] sm:$0xff]
  %v10051 = vld [vmem:[%s9975 + $0x141] sm:$0xff]
  %v10052 = vld [vmem:[%s9975 + $0x151] sm:$0xff]
  %v10053 = vld [vmem:[%s9975 + $0x159] sm:$0xff]
  %v10054 = vld [vmem:[%s9975 + $0x169] sm:$0xff]
  %v10055 = vld [vmem:[%s9975 + $0x171] sm:$0xff]
  %v10056 = vpack.c.bf16 %v10025, %v10024
  %v10057 = vpack.c.bf16 %v10027, %v10026
  %v10058 = vpack.c.bf16 %v10029, %v10028
  %v10059 = vpack.c.bf16 %v10031, %v10030
  %v10060 = vpack.c.bf16 %v10033, %v10032
  %v10061 = vpack.c.bf16 %v10035, %v10034
  %v10062 = vpack.c.bf16 %v10037, %v10036
  %v10063 = vpack.c.bf16 %v10039, %v10038
  %v10064 = vpack.c.bf16 %v10041, %v10040
  %v10065 = vpack.c.bf16 %v10043, %v10042
  %v10066 = vpack.c.bf16 %v10045, %v10044
  %v10067 = vpack.c.bf16 %v10047, %v10046
  %v10068 = vpack.c.bf16 %v10049, %v10048
  %v10069 = vpack.c.bf16 %v10051, %v10050
  %v10070 = vpack.c.bf16 %v10053, %v10052
  %v10071 = vpack.c.bf16 %v10055, %v10054
  %v10072 = vld [vmem:[%s9975 + $0x2] sm:$0xff]
  %v10073 = vld [vmem:[%s9975 + $0xa] sm:$0xff]
  %v10074 = vld [vmem:[%s9975 + $0x1a] sm:$0xff]
  %v10075 = vld [vmem:[%s9975 + $0x22] sm:$0xff]
  %v10076 = vld [vmem:[%s9975 + $0x32] sm:$0xff]
  %v10077 = vld [vmem:[%s9975 + $0x3a] sm:$0xff]
  %v10078 = vld [vmem:[%s9975 + $0x4a] sm:$0xff]
  %v10079 = vld [vmem:[%s9975 + $0x52] sm:$0xff]
  %v10080 = vld [vmem:[%s9975 + $0x62] sm:$0xff]
  %v10081 = vld [vmem:[%s9975 + $0x6a] sm:$0xff]
  %v10082 = vld [vmem:[%s9975 + $0x7a] sm:$0xff]
  %v10083 = vld [vmem:[%s9975 + $0x82] sm:$0xff]
  %v10084 = vld [vmem:[%s9975 + $0x92] sm:$0xff]
  %v10085 = vld [vmem:[%s9975 + $0x9a] sm:$0xff]
  %v10086 = vld [vmem:[%s9975 + $0xaa] sm:$0xff]
  %v10087 = vld [vmem:[%s9975 + $0xb2] sm:$0xff]
  %v10088 = vld [vmem:[%s9975 + $0xc2] sm:$0xff]
  %v10089 = vld [vmem:[%s9975 + $0xca] sm:$0xff]
  %v10090 = vld [vmem:[%s9975 + $0xda] sm:$0xff]
  %v10091 = vld [vmem:[%s9975 + $0xe2] sm:$0xff]
  %v10092 = vld [vmem:[%s9975 + $0xf2] sm:$0xff]
  %v10093 = vld [vmem:[%s9975 + $0xfa] sm:$0xff]
  %v10094 = vld [vmem:[%s9975 + $0x10a] sm:$0xff]
  %v10095 = vld [vmem:[%s9975 + $0x112] sm:$0xff]
  %v10096 = vld [vmem:[%s9975 + $0x122] sm:$0xff]
  %v10097 = vld [vmem:[%s9975 + $0x12a] sm:$0xff]
  %v10098 = vld [vmem:[%s9975 + $0x13a] sm:$0xff]
  %v10099 = vld [vmem:[%s9975 + $0x142] sm:$0xff]
  %v10100 = vld [vmem:[%s9975 + $0x152] sm:$0xff]
  %v10101 = vld [vmem:[%s9975 + $0x15a] sm:$0xff]
  %v10102 = vld [vmem:[%s9975 + $0x16a] sm:$0xff]
  %v10103 = vld [vmem:[%s9975 + $0x172] sm:$0xff]
  %v10104 = vpack.c.bf16 %v10073, %v10072
  %v10105 = vpack.c.bf16 %v10075, %v10074
  %v10106 = vpack.c.bf16 %v10077, %v10076
  %v10107 = vpack.c.bf16 %v10079, %v10078
  %v10108 = vpack.c.bf16 %v10081, %v10080
  %v10109 = vpack.c.bf16 %v10083, %v10082
  %v10110 = vpack.c.bf16 %v10085, %v10084
  %v10111 = vpack.c.bf16 %v10087, %v10086
  %v10112 = vpack.c.bf16 %v10089, %v10088
  %v10113 = vpack.c.bf16 %v10091, %v10090
  %v10114 = vpack.c.bf16 %v10093, %v10092
  %v10115 = vpack.c.bf16 %v10095, %v10094
  %v10116 = vpack.c.bf16 %v10097, %v10096
  %v10117 = vpack.c.bf16 %v10099, %v10098
  %v10118 = vpack.c.bf16 %v10101, %v10100
  %v10119 = vpack.c.bf16 %v10103, %v10102
  %10120 = vmatprep.subr.bf16.mxu0 0
  %10121 = vmatpush1.bf16.msra.mxu0 %v8711
  %10122 = vmatprep.subr.bf16.mxu0 0
  %10123 = vmatpush1.bf16.msra.mxu0 %v8710
  %10124 = vmatprep.subr.bf16.mxu0 0
  %10125 = vmatpush1.bf16.msra.mxu0 %v8709
  %10126 = vmatprep.subr.bf16.mxu0 0
  %10127 = vmatpush1.bf16.msra.mxu0 %v8708
  %10128 = vmatprep.subr.bf16.mxu0 0
  %10129 = vmatpush1.bf16.msra.mxu0 %v8707
  %10130 = vmatprep.subr.bf16.mxu0 0
  %10131 = vmatpush1.bf16.msra.mxu0 %v8706
  %10132 = vmatprep.subr.bf16.mxu0 0
  %10133 = vmatpush1.bf16.msra.mxu0 %v8705
  %10134 = vmatprep.subr.bf16.mxu0 0
  %10135 = vmatpush1.bf16.msra.mxu0 %v8704
  %10136 = vmatprep.subr.bf16.mxu0 0
  %10137 = vmatpush2.bf16.msra.mxu0 %v8719
  %10138 = vmatprep.subr.bf16.mxu0 0
  %10139 = vmatpush2.bf16.msra.mxu0 %v8718
  %10140 = vmatprep.subr.bf16.mxu0 0
  %10141 = vmatpush2.bf16.msra.mxu0 %v8717
  %10142 = vmatprep.subr.bf16.mxu0 0
  %10143 = vmatpush2.bf16.msra.mxu0 %v8716
  %10144 = vmatprep.subr.bf16.mxu0 0
  %10145 = vmatpush2.bf16.msra.mxu0 %v8715
  %10146 = vmatprep.subr.bf16.mxu0 0
  %10147 = vmatpush2.bf16.msra.mxu0 %v8714
  %10148 = vmatprep.subr.bf16.mxu0 0
  %10149 = vmatpush2.bf16.msra.mxu0 %v8713
  %10150 = vmatprep.subr.bf16.mxu0 0
  %10151 = vmatpush2.bf16.msra.mxu0 %v8712
  %10152 = vmatprep.mubr.bf16.mxu0 %v9766
  %10153 = vmatmul.mubr.bf16.gmra.mxu0 %v9718
  %v10154 = vpop.f32.mrf.mxu0
  %v10155 = vadd.f32 0.0, %v10154
  %v10156 = vpop.f32.mrf.mxu0
  %v10157 = vpop.f32.mrf.mxu0
  %v10158 = vadd.f32 0.0, %v10157
  %v10159 = vpop.f32.mrf.mxu0
  %10160 = vmatprep.mubr.bf16.mxu0 %v9767
  %10161 = vmatmul.mubr.bf16.gmra.mxu0 %v9719
  %v10162 = vpop.f32.mrf.mxu0
  %v10163 = vadd.f32 0.0, %v10162
  %v10164 = vpop.f32.mrf.mxu0
  %v10165 = vpop.f32.mrf.mxu0
  %v10166 = vadd.f32 0.0, %v10165
  %v10167 = vpop.f32.mrf.mxu0
  %10168 = vmatprep.mubr.bf16.mxu0 %v9768
  %10169 = vmatmul.mubr.bf16.gmra.mxu0 %v9720
  %v10170 = vpop.f32.mrf.mxu0
  %v10171 = vadd.f32 0.0, %v10170
  %v10172 = vpop.f32.mrf.mxu0
  %v10173 = vpop.f32.mrf.mxu0
  %v10174 = vadd.f32 0.0, %v10173
  %v10175 = vpop.f32.mrf.mxu0
  %10176 = vmatprep.mubr.bf16.mxu0 %v9769
  %10177 = vmatmul.mubr.bf16.gmra.mxu0 %v9721
  %v10178 = vpop.f32.mrf.mxu0
  %v10179 = vadd.f32 0.0, %v10178
  %v10180 = vpop.f32.mrf.mxu0
  %v10181 = vpop.f32.mrf.mxu0
  %v10182 = vadd.f32 0.0, %v10181
  %v10183 = vpop.f32.mrf.mxu0
  %10184 = vmatprep.mubr.bf16.mxu0 %v9770
  %10185 = vmatmul.mubr.bf16.gmra.mxu0 %v9722
  %v10186 = vpop.f32.mrf.mxu0
  %v10187 = vadd.f32 0.0, %v10186
  %v10188 = vpop.f32.mrf.mxu0
  %v10189 = vpop.f32.mrf.mxu0
  %v10190 = vadd.f32 0.0, %v10189
  %v10191 = vpop.f32.mrf.mxu0
  %10192 = vmatprep.mubr.bf16.mxu0 %v9771
  %10193 = vmatmul.mubr.bf16.gmra.mxu0 %v9723
  %v10194 = vpop.f32.mrf.mxu0
  %v10195 = vadd.f32 0.0, %v10194
  %v10196 = vpop.f32.mrf.mxu0
  %v10197 = vpop.f32.mrf.mxu0
  %v10198 = vadd.f32 0.0, %v10197
  %v10199 = vpop.f32.mrf.mxu0
  %10200 = vmatprep.mubr.bf16.mxu0 %v9772
  %10201 = vmatmul.mubr.bf16.gmra.mxu0 %v9724
  %v10202 = vpop.f32.mrf.mxu0
  %v10203 = vadd.f32 0.0, %v10202
  %v10204 = vpop.f32.mrf.mxu0
  %v10205 = vpop.f32.mrf.mxu0
  %v10206 = vadd.f32 0.0, %v10205
  %v10207 = vpop.f32.mrf.mxu0
  %10208 = vmatprep.mubr.bf16.mxu0 %v9773
  %10209 = vmatmul.mubr.bf16.gmra.mxu0 %v9725
  %v10210 = vpop.f32.mrf.mxu0
  %v10211 = vadd.f32 0.0, %v10210
  %v10212 = vpop.f32.mrf.mxu0
  %v10213 = vpop.f32.mrf.mxu0
  %v10214 = vadd.f32 0.0, %v10213
  %v10215 = vpop.f32.mrf.mxu0
  %10216 = vmatprep.mubr.bf16.mxu0 %v9774
  %10217 = vmatmul.mubr.bf16.gmra.mxu0 %v9726
  %v10218 = vpop.f32.mrf.mxu0
  %v10219 = vadd.f32 0.0, %v10218
  %v10220 = vpop.f32.mrf.mxu0
  %v10221 = vpop.f32.mrf.mxu0
  %v10222 = vadd.f32 0.0, %v10221
  %v10223 = vpop.f32.mrf.mxu0
  %10224 = vmatprep.mubr.bf16.mxu0 %v9775
  %10225 = vmatmul.mubr.bf16.gmra.mxu0 %v9727
  %v10226 = vpop.f32.mrf.mxu0
  %v10227 = vadd.f32 0.0, %v10226
  %v10228 = vpop.f32.mrf.mxu0
  %v10229 = vpop.f32.mrf.mxu0
  %v10230 = vadd.f32 0.0, %v10229
  %v10231 = vpop.f32.mrf.mxu0
  %10232 = vmatprep.mubr.bf16.mxu0 %v9776
  %10233 = vmatmul.mubr.bf16.gmra.mxu0 %v9728
  %v10234 = vpop.f32.mrf.mxu0
  %v10235 = vadd.f32 0.0, %v10234
  %v10236 = vpop.f32.mrf.mxu0
  %v10237 = vpop.f32.mrf.mxu0
  %v10238 = vadd.f32 0.0, %v10237
  %v10239 = vpop.f32.mrf.mxu0
  %10240 = vmatprep.mubr.bf16.mxu0 %v9777
  %10241 = vmatmul.mubr.bf16.gmra.mxu0 %v9729
  %v10242 = vpop.f32.mrf.mxu0
  %v10243 = vadd.f32 0.0, %v10242
  %v10244 = vpop.f32.mrf.mxu0
  %v10245 = vpop.f32.mrf.mxu0
  %v10246 = vadd.f32 0.0, %v10245
  %v10247 = vpop.f32.mrf.mxu0
  %10248 = vmatprep.mubr.bf16.mxu0 %v9778
  %10249 = vmatmul.mubr.bf16.gmra.mxu0 %v9730
  %v10250 = vpop.f32.mrf.mxu0
  %v10251 = vadd.f32 0.0, %v10250
  %v10252 = vpop.f32.mrf.mxu0
  %v10253 = vpop.f32.mrf.mxu0
  %v10254 = vadd.f32 0.0, %v10253
  %v10255 = vpop.f32.mrf.mxu0
  %10256 = vmatprep.mubr.bf16.mxu0 %v9779
  %10257 = vmatmul.mubr.bf16.gmra.mxu0 %v9731
  %v10258 = vpop.f32.mrf.mxu0
  %v10259 = vadd.f32 0.0, %v10258
  %v10260 = vpop.f32.mrf.mxu0
  %v10261 = vpop.f32.mrf.mxu0
  %v10262 = vadd.f32 0.0, %v10261
  %v10263 = vpop.f32.mrf.mxu0
  %10264 = vmatprep.mubr.bf16.mxu0 %v9780
  %10265 = vmatmul.mubr.bf16.gmra.mxu0 %v9732
  %v10266 = vpop.f32.mrf.mxu0
  %v10267 = vadd.f32 0.0, %v10266
  %v10268 = vpop.f32.mrf.mxu0
  %v10269 = vpop.f32.mrf.mxu0
  %v10270 = vadd.f32 0.0, %v10269
  %v10271 = vpop.f32.mrf.mxu0
  %10272 = vmatprep.mubr.bf16.mxu0 %v9781
  %10273 = vmatmul.mubr.bf16.gmra.mxu0 %v9733
  %v10274 = vpop.f32.mrf.mxu0
  %v10275 = vadd.f32 0.0, %v10274
  %v10276 = vpop.f32.mrf.mxu0
  %v10277 = vpop.f32.mrf.mxu0
  %v10278 = vadd.f32 0.0, %v10277
  %v10279 = vpop.f32.mrf.mxu0
  %10280 = vdwg.mxu0
  %10281 = vmatprep.subr.bf16.mxu0 0
  %10282 = vmatpush1.bf16.msra.mxu0 %v8727
  %10283 = vmatprep.subr.bf16.mxu0 0
  %10284 = vmatpush1.bf16.msra.mxu0 %v8726
  %10285 = vmatprep.subr.bf16.mxu0 0
  %10286 = vmatpush1.bf16.msra.mxu0 %v8725
  %10287 = vmatprep.subr.bf16.mxu0 0
  %10288 = vmatpush1.bf16.msra.mxu0 %v8724
  %10289 = vmatprep.subr.bf16.mxu0 0
  %10290 = vmatpush1.bf16.msra.mxu0 %v8723
  %10291 = vmatprep.subr.bf16.mxu0 0
  %10292 = vmatpush1.bf16.msra.mxu0 %v8722
  %10293 = vmatprep.subr.bf16.mxu0 0
  %10294 = vmatpush1.bf16.msra.mxu0 %v8721
  %10295 = vmatprep.subr.bf16.mxu0 0
  %10296 = vmatpush1.bf16.msra.mxu0 %v8720
  %10297 = vmatprep.subr.bf16.mxu0 0
  %10298 = vmatpush2.bf16.msra.mxu0 %v8735
  %10299 = vmatprep.subr.bf16.mxu0 0
  %10300 = vmatpush2.bf16.msra.mxu0 %v8734
  %10301 = vmatprep.subr.bf16.mxu0 0
  %10302 = vmatpush2.bf16.msra.mxu0 %v8733
  %10303 = vmatprep.subr.bf16.mxu0 0
  %10304 = vmatpush2.bf16.msra.mxu0 %v8732
  %10305 = vmatprep.subr.bf16.mxu0 0
  %10306 = vmatpush2.bf16.msra.mxu0 %v8731
  %10307 = vmatprep.subr.bf16.mxu0 0
  %10308 = vmatpush2.bf16.msra.mxu0 %v8730
  %10309 = vmatprep.subr.bf16.mxu0 0
  %10310 = vmatpush2.bf16.msra.mxu0 %v8729
  %10311 = vmatprep.subr.bf16.mxu0 0
  %10312 = vmatpush2.bf16.msra.mxu0 %v8728
  %10313 = vmatprep.mubr.bf16.mxu0 %v9863
  %10314 = vmatmul.mubr.bf16.gmra.mxu0 %v9814
  %v10315 = vpop.f32.mrf.mxu0
  %v10316 = vadd.f32 %v10155, %v10315
  %v10317 = vpop.f32.mrf.mxu0
  %v10318 = vpop.f32.mrf.mxu0
  %v10319 = vadd.f32 %v10158, %v10318
  %v10320 = vpop.f32.mrf.mxu0
  %10321 = vmatprep.mubr.bf16.mxu0 %v9864
  %10322 = vmatmul.mubr.bf16.gmra.mxu0 %v9815
  %v10323 = vpop.f32.mrf.mxu0
  %v10324 = vadd.f32 %v10163, %v10323
  %v10325 = vpop.f32.mrf.mxu0
  %v10326 = vpop.f32.mrf.mxu0
  %v10327 = vadd.f32 %v10166, %v10326
  %v10328 = vpop.f32.mrf.mxu0
  %10329 = vmatprep.mubr.bf16.mxu0 %v9865
  %10330 = vmatmul.mubr.bf16.gmra.mxu0 %v9816
  %v10331 = vpop.f32.mrf.mxu0
  %v10332 = vadd.f32 %v10171, %v10331
  %v10333 = vpop.f32.mrf.mxu0
  %v10334 = vpop.f32.mrf.mxu0
  %v10335 = vadd.f32 %v10174, %v10334
  %v10336 = vpop.f32.mrf.mxu0
  %10337 = vmatprep.mubr.bf16.mxu0 %v9866
  %10338 = vmatmul.mubr.bf16.gmra.mxu0 %v9817
  %v10339 = vpop.f32.mrf.mxu0
  %v10340 = vadd.f32 %v10179, %v10339
  %v10341 = vpop.f32.mrf.mxu0
  %v10342 = vpop.f32.mrf.mxu0
  %v10343 = vadd.f32 %v10182, %v10342
  %v10344 = vpop.f32.mrf.mxu0
  %10345 = vmatprep.mubr.bf16.mxu0 %v9867
  %10346 = vmatmul.mubr.bf16.gmra.mxu0 %v9818
  %v10347 = vpop.f32.mrf.mxu0
  %v10348 = vadd.f32 %v10187, %v10347
  %v10349 = vpop.f32.mrf.mxu0
  %v10350 = vpop.f32.mrf.mxu0
  %v10351 = vadd.f32 %v10190, %v10350
  %v10352 = vpop.f32.mrf.mxu0
  %10353 = vmatprep.mubr.bf16.mxu0 %v9868
  %10354 = vmatmul.mubr.bf16.gmra.mxu0 %v9819
  %v10355 = vpop.f32.mrf.mxu0
  %v10356 = vadd.f32 %v10195, %v10355
  %v10357 = vpop.f32.mrf.mxu0
  %v10358 = vpop.f32.mrf.mxu0
  %v10359 = vadd.f32 %v10198, %v10358
  %v10360 = vpop.f32.mrf.mxu0
  %10361 = vmatprep.mubr.bf16.mxu0 %v9869
  %10362 = vmatmul.mubr.bf16.gmra.mxu0 %v9820
  %v10363 = vpop.f32.mrf.mxu0
  %v10364 = vadd.f32 %v10203, %v10363
  %v10365 = vpop.f32.mrf.mxu0
  %v10366 = vpop.f32.mrf.mxu0
  %v10367 = vadd.f32 %v10206, %v10366
  %v10368 = vpop.f32.mrf.mxu0
  %10369 = vmatprep.mubr.bf16.mxu0 %v9870
  %10370 = vmatmul.mubr.bf16.gmra.mxu0 %v9821
  %v10371 = vpop.f32.mrf.mxu0
  %v10372 = vadd.f32 %v10211, %v10371
  %v10373 = vpop.f32.mrf.mxu0
  %v10374 = vpop.f32.mrf.mxu0
  %v10375 = vadd.f32 %v10214, %v10374
  %v10376 = vpop.f32.mrf.mxu0
  %10377 = vmatprep.mubr.bf16.mxu0 %v9871
  %10378 = vmatmul.mubr.bf16.gmra.mxu0 %v9822
  %v10379 = vpop.f32.mrf.mxu0
  %v10380 = vadd.f32 %v10219, %v10379
  %v10381 = vpop.f32.mrf.mxu0
  %v10382 = vpop.f32.mrf.mxu0
  %v10383 = vadd.f32 %v10222, %v10382
  %v10384 = vpop.f32.mrf.mxu0
  %10385 = vmatprep.mubr.bf16.mxu0 %v9872
  %10386 = vmatmul.mubr.bf16.gmra.mxu0 %v9823
  %v10387 = vpop.f32.mrf.mxu0
  %v10388 = vadd.f32 %v10227, %v10387
  %v10389 = vpop.f32.mrf.mxu0
  %v10390 = vpop.f32.mrf.mxu0
  %v10391 = vadd.f32 %v10230, %v10390
  %v10392 = vpop.f32.mrf.mxu0
  %10393 = vmatprep.mubr.bf16.mxu0 %v9873
  %10394 = vmatmul.mubr.bf16.gmra.mxu0 %v9824
  %v10395 = vpop.f32.mrf.mxu0
  %v10396 = vadd.f32 %v10235, %v10395
  %v10397 = vpop.f32.mrf.mxu0
  %v10398 = vpop.f32.mrf.mxu0
  %v10399 = vadd.f32 %v10238, %v10398
  %v10400 = vpop.f32.mrf.mxu0
  %10401 = vmatprep.mubr.bf16.mxu0 %v9874
  %10402 = vmatmul.mubr.bf16.gmra.mxu0 %v9825
  %v10403 = vpop.f32.mrf.mxu0
  %v10404 = vadd.f32 %v10243, %v10403
  %v10405 = vpop.f32.mrf.mxu0
  %v10406 = vpop.f32.mrf.mxu0
  %v10407 = vadd.f32 %v10246, %v10406
  %v10408 = vpop.f32.mrf.mxu0
  %10409 = vmatprep.mubr.bf16.mxu0 %v9875
  %10410 = vmatmul.mubr.bf16.gmra.mxu0 %v9826
  %v10411 = vpop.f32.mrf.mxu0
  %v10412 = vadd.f32 %v10251, %v10411
  %v10413 = vpop.f32.mrf.mxu0
  %v10414 = vpop.f32.mrf.mxu0
  %v10415 = vadd.f32 %v10254, %v10414
  %v10416 = vpop.f32.mrf.mxu0
  %10417 = vmatprep.mubr.bf16.mxu0 %v9876
  %10418 = vmatmul.mubr.bf16.gmra.mxu0 %v9827
  %v10419 = vpop.f32.mrf.mxu0
  %v10420 = vadd.f32 %v10259, %v10419
  %v10421 = vpop.f32.mrf.mxu0
  %v10422 = vpop.f32.mrf.mxu0
  %v10423 = vadd.f32 %v10262, %v10422
  %v10424 = vpop.f32.mrf.mxu0
  %10425 = vmatprep.mubr.bf16.mxu0 %v9877
  %10426 = vmatmul.mubr.bf16.gmra.mxu0 %v9828
  %v10427 = vpop.f32.mrf.mxu0
  %v10428 = vadd.f32 %v10267, %v10427
  %v10429 = vpop.f32.mrf.mxu0
  %v10430 = vpop.f32.mrf.mxu0
  %v10431 = vadd.f32 %v10270, %v10430
  %v10432 = vpop.f32.mrf.mxu0
  %10433 = vmatprep.mubr.bf16.mxu0 %v9878
  %10434 = vmatmul.mubr.bf16.gmra.mxu0 %v9829
  %v10435 = vpop.f32.mrf.mxu0
  %v10436 = vadd.f32 %v10275, %v10435
  %v10437 = vpop.f32.mrf.mxu0
  %v10438 = vpop.f32.mrf.mxu0
  %v10439 = vadd.f32 %v10278, %v10438
  %v10440 = vpop.f32.mrf.mxu0
  %10441 = vdwg.mxu0
  %10442 = vmatprep.subr.bf16.mxu0 0
  %10443 = vmatpush1.bf16.msra.mxu0 %v8743
  %10444 = vmatprep.subr.bf16.mxu0 0
  %10445 = vmatpush1.bf16.msra.mxu0 %v8742
  %10446 = vmatprep.subr.bf16.mxu0 0
  %10447 = vmatpush1.bf16.msra.mxu0 %v8741
  %10448 = vmatprep.subr.bf16.mxu0 0
  %10449 = vmatpush1.bf16.msra.mxu0 %v8740
  %10450 = vmatprep.subr.bf16.mxu0 0
  %10451 = vmatpush1.bf16.msra.mxu0 %v8739
  %10452 = vmatprep.subr.bf16.mxu0 0
  %10453 = vmatpush1.bf16.msra.mxu0 %v8738
  %10454 = vmatprep.subr.bf16.mxu0 0
  %10455 = vmatpush1.bf16.msra.mxu0 %v8737
  %10456 = vmatprep.subr.bf16.mxu0 0
  %10457 = vmatpush1.bf16.msra.mxu0 %v8736
  %10458 = vmatprep.subr.bf16.mxu0 0
  %10459 = vmatpush2.bf16.msra.mxu0 %v8751
  %10460 = vmatprep.subr.bf16.mxu0 0
  %10461 = vmatpush2.bf16.msra.mxu0 %v8750
  %10462 = vmatprep.subr.bf16.mxu0 0
  %10463 = vmatpush2.bf16.msra.mxu0 %v8749
  %10464 = vmatprep.subr.bf16.mxu0 0
  %10465 = vmatpush2.bf16.msra.mxu0 %v8748
  %10466 = vmatprep.subr.bf16.mxu0 0
  %10467 = vmatpush2.bf16.msra.mxu0 %v8747
  %10468 = vmatprep.subr.bf16.mxu0 0
  %10469 = vmatpush2.bf16.msra.mxu0 %v8746
  %10470 = vmatprep.subr.bf16.mxu0 0
  %10471 = vmatpush2.bf16.msra.mxu0 %v8745
  %10472 = vmatprep.subr.bf16.mxu0 0
  %10473 = vmatpush2.bf16.msra.mxu0 %v8744
  %10474 = vmatprep.mubr.bf16.mxu0 %v9959
  %10475 = vmatmul.mubr.bf16.gmra.mxu0 %v9911
  %v10476 = vpop.f32.mrf.mxu0
  %v10477 = vadd.f32 %v10316, %v10476
  %v10478 = vpop.f32.mrf.mxu0
  %v10479 = vpop.f32.mrf.mxu0
  %v10480 = vadd.f32 %v10319, %v10479
  %v10481 = vpop.f32.mrf.mxu0
  %10482 = vmatprep.mubr.bf16.mxu0 %v9960
  %10483 = vmatmul.mubr.bf16.gmra.mxu0 %v9912
  %v10484 = vpop.f32.mrf.mxu0
  %v10485 = vadd.f32 %v10324, %v10484
  %v10486 = vpop.f32.mrf.mxu0
  %v10487 = vpop.f32.mrf.mxu0
  %v10488 = vadd.f32 %v10327, %v10487
  %v10489 = vpop.f32.mrf.mxu0
  %10490 = vmatprep.mubr.bf16.mxu0 %v9961
  %10491 = vmatmul.mubr.bf16.gmra.mxu0 %v9913
  %v10492 = vpop.f32.mrf.mxu0
  %v10493 = vadd.f32 %v10332, %v10492
  %v10494 = vpop.f32.mrf.mxu0
  %v10495 = vpop.f32.mrf.mxu0
  %v10496 = vadd.f32 %v10335, %v10495
  %v10497 = vpop.f32.mrf.mxu0
  %10498 = vmatprep.mubr.bf16.mxu0 %v9962
  %10499 = vmatmul.mubr.bf16.gmra.mxu0 %v9914
  %v10500 = vpop.f32.mrf.mxu0
  %v10501 = vadd.f32 %v10340, %v10500
  %v10502 = vpop.f32.mrf.mxu0
  %v10503 = vpop.f32.mrf.mxu0
  %v10504 = vadd.f32 %v10343, %v10503
  %v10505 = vpop.f32.mrf.mxu0
  %10506 = vmatprep.mubr.bf16.mxu0 %v9963
  %10507 = vmatmul.mubr.bf16.gmra.mxu0 %v9915
  %v10508 = vpop.f32.mrf.mxu0
  %v10509 = vadd.f32 %v10348, %v10508
  %v10510 = vpop.f32.mrf.mxu0
  %v10511 = vpop.f32.mrf.mxu0
  %v10512 = vadd.f32 %v10351, %v10511
  %v10513 = vpop.f32.mrf.mxu0
  %10514 = vmatprep.mubr.bf16.mxu0 %v9964
  %10515 = vmatmul.mubr.bf16.gmra.mxu0 %v9916
  %v10516 = vpop.f32.mrf.mxu0
  %v10517 = vadd.f32 %v10356, %v10516
  %v10518 = vpop.f32.mrf.mxu0
  %v10519 = vpop.f32.mrf.mxu0
  %v10520 = vadd.f32 %v10359, %v10519
  %v10521 = vpop.f32.mrf.mxu0
  %10522 = vmatprep.mubr.bf16.mxu0 %v9965
  %10523 = vmatmul.mubr.bf16.gmra.mxu0 %v9917
  %v10524 = vpop.f32.mrf.mxu0
  %v10525 = vadd.f32 %v10364, %v10524
  %v10526 = vpop.f32.mrf.mxu0
  %v10527 = vpop.f32.mrf.mxu0
  %v10528 = vadd.f32 %v10367, %v10527
  %v10529 = vpop.f32.mrf.mxu0
  %10530 = vmatprep.mubr.bf16.mxu0 %v9966
  %10531 = vmatmul.mubr.bf16.gmra.mxu0 %v9918
  %v10532 = vpop.f32.mrf.mxu0
  %v10533 = vadd.f32 %v10372, %v10532
  %v10534 = vpop.f32.mrf.mxu0
  %v10535 = vpop.f32.mrf.mxu0
  %v10536 = vadd.f32 %v10375, %v10535
  %v10537 = vpop.f32.mrf.mxu0
  %10538 = vmatprep.mubr.bf16.mxu0 %v9967
  %10539 = vmatmul.mubr.bf16.gmra.mxu0 %v9919
  %v10540 = vpop.f32.mrf.mxu0
  %v10541 = vadd.f32 %v10380, %v10540
  %v10542 = vpop.f32.mrf.mxu0
  %v10543 = vpop.f32.mrf.mxu0
  %v10544 = vadd.f32 %v10383, %v10543
  %v10545 = vpop.f32.mrf.mxu0
  %10546 = vmatprep.mubr.bf16.mxu0 %v9968
  %10547 = vmatmul.mubr.bf16.gmra.mxu0 %v9920
  %v10548 = vpop.f32.mrf.mxu0
  %v10549 = vadd.f32 %v10388, %v10548
  %v10550 = vpop.f32.mrf.mxu0
  %v10551 = vpop.f32.mrf.mxu0
  %v10552 = vadd.f32 %v10391, %v10551
  %v10553 = vpop.f32.mrf.mxu0
  %10554 = vmatprep.mubr.bf16.mxu0 %v9969
  %10555 = vmatmul.mubr.bf16.gmra.mxu0 %v9921
  %v10556 = vpop.f32.mrf.mxu0
  %v10557 = vadd.f32 %v10396, %v10556
  %v10558 = vpop.f32.mrf.mxu0
  %v10559 = vpop.f32.mrf.mxu0
  %v10560 = vadd.f32 %v10399, %v10559
  %v10561 = vpop.f32.mrf.mxu0
  %10562 = vmatprep.mubr.bf16.mxu0 %v9970
  %10563 = vmatmul.mubr.bf16.gmra.mxu0 %v9922
  %v10564 = vpop.f32.mrf.mxu0
  %v10565 = vadd.f32 %v10404, %v10564
  %v10566 = vpop.f32.mrf.mxu0
  %v10567 = vpop.f32.mrf.mxu0
  %v10568 = vadd.f32 %v10407, %v10567
  %v10569 = vpop.f32.mrf.mxu0
  %10570 = vmatprep.mubr.bf16.mxu0 %v9971
  %10571 = vmatmul.mubr.bf16.gmra.mxu0 %v9923
  %v10572 = vpop.f32.mrf.mxu0
  %v10573 = vadd.f32 %v10412, %v10572
  %v10574 = vpop.f32.mrf.mxu0
  %v10575 = vpop.f32.mrf.mxu0
  %v10576 = vadd.f32 %v10415, %v10575
  %v10577 = vpop.f32.mrf.mxu0
  %10578 = vmatprep.mubr.bf16.mxu0 %v9972
  %10579 = vmatmul.mubr.bf16.gmra.mxu0 %v9924
  %v10580 = vpop.f32.mrf.mxu0
  %v10581 = vadd.f32 %v10420, %v10580
  %v10582 = vpop.f32.mrf.mxu0
  %v10583 = vpop.f32.mrf.mxu0
  %v10584 = vadd.f32 %v10423, %v10583
  %v10585 = vpop.f32.mrf.mxu0
  %10586 = vmatprep.mubr.bf16.mxu0 %v9973
  %10587 = vmatmul.mubr.bf16.gmra.mxu0 %v9925
  %v10588 = vpop.f32.mrf.mxu0
  %v10589 = vadd.f32 %v10428, %v10588
  %v10590 = vpop.f32.mrf.mxu0
  %v10591 = vpop.f32.mrf.mxu0
  %v10592 = vadd.f32 %v10431, %v10591
  %v10593 = vpop.f32.mrf.mxu0
  %10594 = vmatprep.mubr.bf16.mxu0 %v9974
  %10595 = vmatmul.mubr.bf16.gmra.mxu0 %v9926
  %v10596 = vpop.f32.mrf.mxu0
  %v10597 = vadd.f32 %v10436, %v10596
  %v10598 = vpop.f32.mrf.mxu0
  %v10599 = vpop.f32.mrf.mxu0
  %v10600 = vadd.f32 %v10439, %v10599
  %v10601 = vpop.f32.mrf.mxu0
  %10602 = vdwg.mxu0
  %10603 = vmatprep.subr.bf16.mxu0 0
  %10604 = vmatpush1.bf16.msra.mxu0 %v8759
  %10605 = vmatprep.subr.bf16.mxu0 0
  %10606 = vmatpush1.bf16.msra.mxu0 %v8758
  %10607 = vmatprep.subr.bf16.mxu0 0
  %10608 = vmatpush1.bf16.msra.mxu0 %v8757
  %10609 = vmatprep.subr.bf16.mxu0 0
  %10610 = vmatpush1.bf16.msra.mxu0 %v8756
  %10611 = vmatprep.subr.bf16.mxu0 0
  %10612 = vmatpush1.bf16.msra.mxu0 %v8755
  %10613 = vmatprep.subr.bf16.mxu0 0
  %10614 = vmatpush1.bf16.msra.mxu0 %v8754
  %10615 = vmatprep.subr.bf16.mxu0 0
  %10616 = vmatpush1.bf16.msra.mxu0 %v8753
  %10617 = vmatprep.subr.bf16.mxu0 0
  %10618 = vmatpush1.bf16.msra.mxu0 %v8752
  %10619 = vmatprep.subr.bf16.mxu0 0
  %10620 = vmatpush2.bf16.msra.mxu0 %v8767
  %10621 = vmatprep.subr.bf16.mxu0 0
  %10622 = vmatpush2.bf16.msra.mxu0 %v8766
  %10623 = vmatprep.subr.bf16.mxu0 0
  %10624 = vmatpush2.bf16.msra.mxu0 %v8765
  %10625 = vmatprep.subr.bf16.mxu0 0
  %10626 = vmatpush2.bf16.msra.mxu0 %v8764
  %10627 = vmatprep.subr.bf16.mxu0 0
  %10628 = vmatpush2.bf16.msra.mxu0 %v8763
  %10629 = vmatprep.subr.bf16.mxu0 0
  %10630 = vmatpush2.bf16.msra.mxu0 %v8762
  %10631 = vmatprep.subr.bf16.mxu0 0
  %10632 = vmatpush2.bf16.msra.mxu0 %v8761
  %10633 = vmatprep.subr.bf16.mxu0 0
  %10634 = vmatpush2.bf16.msra.mxu0 %v8760
  %10635 = vmatprep.mubr.bf16.mxu0 %v10056
  %10636 = vmatmul.mubr.bf16.gmra.mxu0 %v10008
  %v10637 = vpop.f32.mrf.mxu0
  %v10638 = vadd.f32 %v10477, %v10637
  %v10639 = vpop.f32.mrf.mxu0
  %v10640 = vpop.f32.mrf.mxu0
  %v10641 = vadd.f32 %v10480, %v10640
  %v10642 = vpop.f32.mrf.mxu0
  %10643 = vmatprep.mubr.bf16.mxu0 %v10057
  %10644 = vmatmul.mubr.bf16.gmra.mxu0 %v10009
  %v10645 = vpop.f32.mrf.mxu0
  %v10646 = vadd.f32 %v10485, %v10645
  %v10647 = vpop.f32.mrf.mxu0
  %v10648 = vpop.f32.mrf.mxu0
  %v10649 = vadd.f32 %v10488, %v10648
  %v10650 = vpop.f32.mrf.mxu0
  %10651 = vmatprep.mubr.bf16.mxu0 %v10058
  %10652 = vmatmul.mubr.bf16.gmra.mxu0 %v10010
  %v10653 = vpop.f32.mrf.mxu0
  %v10654 = vadd.f32 %v10493, %v10653
  %v10655 = vpop.f32.mrf.mxu0
  %v10656 = vpop.f32.mrf.mxu0
  %v10657 = vadd.f32 %v10496, %v10656
  %v10658 = vpop.f32.mrf.mxu0
  %10659 = vmatprep.mubr.bf16.mxu0 %v10059
  %10660 = vmatmul.mubr.bf16.gmra.mxu0 %v10011
  %v10661 = vpop.f32.mrf.mxu0
  %v10662 = vadd.f32 %v10501, %v10661
  %v10663 = vpop.f32.mrf.mxu0
  %v10664 = vpop.f32.mrf.mxu0
  %v10665 = vadd.f32 %v10504, %v10664
  %v10666 = vpop.f32.mrf.mxu0
  %10667 = vmatprep.mubr.bf16.mxu0 %v10060
  %10668 = vmatmul.mubr.bf16.gmra.mxu0 %v10012
  %v10669 = vpop.f32.mrf.mxu0
  %v10670 = vadd.f32 %v10509, %v10669
  %v10671 = vpop.f32.mrf.mxu0
  %v10672 = vpop.f32.mrf.mxu0
  %v10673 = vadd.f32 %v10512, %v10672
  %v10674 = vpop.f32.mrf.mxu0
  %10675 = vmatprep.mubr.bf16.mxu0 %v10061
  %10676 = vmatmul.mubr.bf16.gmra.mxu0 %v10013
  %v10677 = vpop.f32.mrf.mxu0
  %v10678 = vadd.f32 %v10517, %v10677
  %v10679 = vpop.f32.mrf.mxu0
  %v10680 = vpop.f32.mrf.mxu0
  %v10681 = vadd.f32 %v10520, %v10680
  %v10682 = vpop.f32.mrf.mxu0
  %10683 = vmatprep.mubr.bf16.mxu0 %v10062
  %10684 = vmatmul.mubr.bf16.gmra.mxu0 %v10014
  %v10685 = vpop.f32.mrf.mxu0
  %v10686 = vadd.f32 %v10525, %v10685
  %v10687 = vpop.f32.mrf.mxu0
  %v10688 = vpop.f32.mrf.mxu0
  %v10689 = vadd.f32 %v10528, %v10688
  %v10690 = vpop.f32.mrf.mxu0
  %10691 = vmatprep.mubr.bf16.mxu0 %v10063
  %10692 = vmatmul.mubr.bf16.gmra.mxu0 %v10015
  %v10693 = vpop.f32.mrf.mxu0
  %v10694 = vadd.f32 %v10533, %v10693
  %v10695 = vpop.f32.mrf.mxu0
  %v10696 = vpop.f32.mrf.mxu0
  %v10697 = vadd.f32 %v10536, %v10696
  %v10698 = vpop.f32.mrf.mxu0
  %10699 = vmatprep.mubr.bf16.mxu0 %v10064
  %10700 = vmatmul.mubr.bf16.gmra.mxu0 %v10016
  %v10701 = vpop.f32.mrf.mxu0
  %v10702 = vadd.f32 %v10541, %v10701
  %v10703 = vpop.f32.mrf.mxu0
  %v10704 = vpop.f32.mrf.mxu0
  %v10705 = vadd.f32 %v10544, %v10704
  %v10706 = vpop.f32.mrf.mxu0
  %10707 = vmatprep.mubr.bf16.mxu0 %v10065
  %10708 = vmatmul.mubr.bf16.gmra.mxu0 %v10017
  %v10709 = vpop.f32.mrf.mxu0
  %v10710 = vadd.f32 %v10549, %v10709
  %v10711 = vpop.f32.mrf.mxu0
  %v10712 = vpop.f32.mrf.mxu0
  %v10713 = vadd.f32 %v10552, %v10712
  %v10714 = vpop.f32.mrf.mxu0
  %10715 = vmatprep.mubr.bf16.mxu0 %v10066
  %10716 = vmatmul.mubr.bf16.gmra.mxu0 %v10018
  %v10717 = vpop.f32.mrf.mxu0
  %v10718 = vadd.f32 %v10557, %v10717
  %v10719 = vpop.f32.mrf.mxu0
  %v10720 = vpop.f32.mrf.mxu0
  %v10721 = vadd.f32 %v10560, %v10720
  %v10722 = vpop.f32.mrf.mxu0
  %10723 = vmatprep.mubr.bf16.mxu0 %v10067
  %10724 = vmatmul.mubr.bf16.gmra.mxu0 %v10019
  %v10725 = vpop.f32.mrf.mxu0
  %v10726 = vadd.f32 %v10565, %v10725
  %v10727 = vpop.f32.mrf.mxu0
  %v10728 = vpop.f32.mrf.mxu0
  %v10729 = vadd.f32 %v10568, %v10728
  %v10730 = vpop.f32.mrf.mxu0
  %10731 = vmatprep.mubr.bf16.mxu0 %v10068
  %10732 = vmatmul.mubr.bf16.gmra.mxu0 %v10020
  %v10733 = vpop.f32.mrf.mxu0
  %v10734 = vadd.f32 %v10573, %v10733
  %v10735 = vpop.f32.mrf.mxu0
  %v10736 = vpop.f32.mrf.mxu0
  %v10737 = vadd.f32 %v10576, %v10736
  %v10738 = vpop.f32.mrf.mxu0
  %10739 = vmatprep.mubr.bf16.mxu0 %v10069
  %10740 = vmatmul.mubr.bf16.gmra.mxu0 %v10021
  %v10741 = vpop.f32.mrf.mxu0
  %v10742 = vadd.f32 %v10581, %v10741
  %v10743 = vpop.f32.mrf.mxu0
  %v10744 = vpop.f32.mrf.mxu0
  %v10745 = vadd.f32 %v10584, %v10744
  %v10746 = vpop.f32.mrf.mxu0
  %10747 = vmatprep.mubr.bf16.mxu0 %v10070
  %10748 = vmatmul.mubr.bf16.gmra.mxu0 %v10022
  %v10749 = vpop.f32.mrf.mxu0
  %v10750 = vadd.f32 %v10589, %v10749
  %v10751 = vpop.f32.mrf.mxu0
  %v10752 = vpop.f32.mrf.mxu0
  %v10753 = vadd.f32 %v10592, %v10752
  %v10754 = vpop.f32.mrf.mxu0
  %10755 = vmatprep.mubr.bf16.mxu0 %v10071
  %10756 = vmatmul.mubr.bf16.gmra.mxu0 %v10023
  %v10757 = vpop.f32.mrf.mxu0
  %v10758 = vadd.f32 %v10597, %v10757
  %v10759 = vpop.f32.mrf.mxu0
  %v10760 = vpop.f32.mrf.mxu0
  %v10761 = vadd.f32 %v10600, %v10760
  %v10762 = vpop.f32.mrf.mxu0
  %10763 = vdwg.mxu0
  %10764 = vmatprep.subr.bf16.mxu0 0
  %10765 = vmatpush1.bf16.msra.mxu0 %v8775
  %10766 = vmatprep.subr.bf16.mxu0 0
  %10767 = vmatpush1.bf16.msra.mxu0 %v8774
  %10768 = vmatprep.subr.bf16.mxu0 0
  %10769 = vmatpush1.bf16.msra.mxu0 %v8773
  %10770 = vmatprep.subr.bf16.mxu0 0
  %10771 = vmatpush1.bf16.msra.mxu0 %v8772
  %10772 = vmatprep.subr.bf16.mxu0 0
  %10773 = vmatpush1.bf16.msra.mxu0 %v8771
  %10774 = vmatprep.subr.bf16.mxu0 0
  %10775 = vmatpush1.bf16.msra.mxu0 %v8770
  %10776 = vmatprep.subr.bf16.mxu0 0
  %10777 = vmatpush1.bf16.msra.mxu0 %v8769
  %10778 = vmatprep.subr.bf16.mxu0 0
  %10779 = vmatpush1.bf16.msra.mxu0 %v8768
  %10780 = vmatprep.subr.bf16.mxu0 0
  %10781 = vmatpush2.bf16.msra.mxu0 0
  %10782 = vmatprep.subr.bf16.mxu0 0
  %10783 = vmatpush2.bf16.msra.mxu0 0
  %10784 = vmatprep.subr.bf16.mxu0 0
  %10785 = vmatpush2.bf16.msra.mxu0 0
  %10786 = vmatprep.subr.bf16.mxu0 0
  %10787 = vmatpush2.bf16.msra.mxu0 0
  %10788 = vmatprep.subr.bf16.mxu0 0
  %10789 = vmatpush2.bf16.msra.mxu0 0
  %10790 = vmatprep.subr.bf16.mxu0 0
  %10791 = vmatpush2.bf16.msra.mxu0 0
  %10792 = vmatprep.subr.bf16.mxu0 0
  %10793 = vmatpush2.bf16.msra.mxu0 0
  %10794 = vmatprep.subr.bf16.mxu0 0
  %10795 = vmatpush2.bf16.msra.mxu0 0
  %10796 = vmatprep.mubr.bf16.mxu0 0
  %10797 = vmatmul.mubr.bf16.gmra.mxu0 %v10104
  %v10798 = vpop.f32.mrf.mxu0
  %v10799 = vadd.f32 %v10638, %v10798
  %v10800 = vpop.f32.mrf.mxu0
  %v10801 = vpop.f32.mrf.mxu0
  %v10802 = vadd.f32 %v10641, %v10801
  %v10803 = vpop.f32.mrf.mxu0
  %10804 = vmatprep.mubr.bf16.mxu0 0
  %10805 = vmatmul.mubr.bf16.gmra.mxu0 %v10105
  %v10806 = vpop.f32.mrf.mxu0
  %v10807 = vadd.f32 %v10646, %v10806
  %v10808 = vpop.f32.mrf.mxu0
  %v10809 = vpop.f32.mrf.mxu0
  %v10810 = vadd.f32 %v10649, %v10809
  %v10811 = vpop.f32.mrf.mxu0
  %10812 = vmatprep.mubr.bf16.mxu0 0
  %10813 = vmatmul.mubr.bf16.gmra.mxu0 %v10106
  %v10814 = vpop.f32.mrf.mxu0
  %v10815 = vadd.f32 %v10654, %v10814
  %v10816 = vpop.f32.mrf.mxu0
  %v10817 = vpop.f32.mrf.mxu0
  %v10818 = vadd.f32 %v10657, %v10817
  %v10819 = vpop.f32.mrf.mxu0
  %10820 = vmatprep.mubr.bf16.mxu0 0
  %10821 = vmatmul.mubr.bf16.gmra.mxu0 %v10107
  %v10822 = vpop.f32.mrf.mxu0
  %v10823 = vadd.f32 %v10662, %v10822
  %v10824 = vpop.f32.mrf.mxu0
  %v10825 = vpop.f32.mrf.mxu0
  %v10826 = vadd.f32 %v10665, %v10825
  %v10827 = vpop.f32.mrf.mxu0
  %10828 = vmatprep.mubr.bf16.mxu0 0
  %10829 = vmatmul.mubr.bf16.gmra.mxu0 %v10108
  %v10830 = vpop.f32.mrf.mxu0
  %v10831 = vadd.f32 %v10670, %v10830
  %v10832 = vpop.f32.mrf.mxu0
  %v10833 = vpop.f32.mrf.mxu0
  %v10834 = vadd.f32 %v10673, %v10833
  %v10835 = vpop.f32.mrf.mxu0
  %10836 = vmatprep.mubr.bf16.mxu0 0
  %10837 = vmatmul.mubr.bf16.gmra.mxu0 %v10109
  %v10838 = vpop.f32.mrf.mxu0
  %v10839 = vadd.f32 %v10678, %v10838
  %v10840 = vpop.f32.mrf.mxu0
  %v10841 = vpop.f32.mrf.mxu0
  %v10842 = vadd.f32 %v10681, %v10841
  %v10843 = vpop.f32.mrf.mxu0
  %10844 = vmatprep.mubr.bf16.mxu0 0
  %10845 = vmatmul.mubr.bf16.gmra.mxu0 %v10110
  %v10846 = vpop.f32.mrf.mxu0
  %v10847 = vadd.f32 %v10686, %v10846
  %v10848 = vpop.f32.mrf.mxu0
  %v10849 = vpop.f32.mrf.mxu0
  %v10850 = vadd.f32 %v10689, %v10849
  %v10851 = vpop.f32.mrf.mxu0
  %10852 = vmatprep.mubr.bf16.mxu0 0
  %10853 = vmatmul.mubr.bf16.gmra.mxu0 %v10111
  %v10854 = vpop.f32.mrf.mxu0
  %v10855 = vadd.f32 %v10694, %v10854
  %v10856 = vpop.f32.mrf.mxu0
  %v10857 = vpop.f32.mrf.mxu0
  %v10858 = vadd.f32 %v10697, %v10857
  %v10859 = vpop.f32.mrf.mxu0
  %10860 = vmatprep.mubr.bf16.mxu0 0
  %10861 = vmatmul.mubr.bf16.gmra.mxu0 %v10112
  %v10862 = vpop.f32.mrf.mxu0
  %v10863 = vadd.f32 %v10702, %v10862
  %v10864 = vpop.f32.mrf.mxu0
  %v10865 = vpop.f32.mrf.mxu0
  %v10866 = vadd.f32 %v10705, %v10865
  %v10867 = vpop.f32.mrf.mxu0
  %10868 = vmatprep.mubr.bf16.mxu0 0
  %10869 = vmatmul.mubr.bf16.gmra.mxu0 %v10113
  %v10870 = vpop.f32.mrf.mxu0
  %v10871 = vadd.f32 %v10710, %v10870
  %v10872 = vpop.f32.mrf.mxu0
  %v10873 = vpop.f32.mrf.mxu0
  %v10874 = vadd.f32 %v10713, %v10873
  %v10875 = vpop.f32.mrf.mxu0
  %10876 = vmatprep.mubr.bf16.mxu0 0
  %10877 = vmatmul.mubr.bf16.gmra.mxu0 %v10114
  %v10878 = vpop.f32.mrf.mxu0
  %v10879 = vadd.f32 %v10718, %v10878
  %v10880 = vpop.f32.mrf.mxu0
  %v10881 = vpop.f32.mrf.mxu0
  %v10882 = vadd.f32 %v10721, %v10881
  %v10883 = vpop.f32.mrf.mxu0
  %10884 = vmatprep.mubr.bf16.mxu0 0
  %10885 = vmatmul.mubr.bf16.gmra.mxu0 %v10115
  %v10886 = vpop.f32.mrf.mxu0
  %v10887 = vadd.f32 %v10726, %v10886
  %v10888 = vpop.f32.mrf.mxu0
  %v10889 = vpop.f32.mrf.mxu0
  %v10890 = vadd.f32 %v10729, %v10889
  %v10891 = vpop.f32.mrf.mxu0
  %10892 = vmatprep.mubr.bf16.mxu0 0
  %10893 = vmatmul.mubr.bf16.gmra.mxu0 %v10116
  %v10894 = vpop.f32.mrf.mxu0
  %v10895 = vadd.f32 %v10734, %v10894
  %v10896 = vpop.f32.mrf.mxu0
  %v10897 = vpop.f32.mrf.mxu0
  %v10898 = vadd.f32 %v10737, %v10897
  %v10899 = vpop.f32.mrf.mxu0
  %10900 = vmatprep.mubr.bf16.mxu0 0
  %10901 = vmatmul.mubr.bf16.gmra.mxu0 %v10117
  %v10902 = vpop.f32.mrf.mxu0
  %v10903 = vadd.f32 %v10742, %v10902
  %v10904 = vpop.f32.mrf.mxu0
  %v10905 = vpop.f32.mrf.mxu0
  %v10906 = vadd.f32 %v10745, %v10905
  %v10907 = vpop.f32.mrf.mxu0
  %10908 = vmatprep.mubr.bf16.mxu0 0
  %10909 = vmatmul.mubr.bf16.gmra.mxu0 %v10118
  %v10910 = vpop.f32.mrf.mxu0
  %v10911 = vadd.f32 %v10750, %v10910
  %v10912 = vpop.f32.mrf.mxu0
  %v10913 = vpop.f32.mrf.mxu0
  %v10914 = vadd.f32 %v10753, %v10913
  %v10915 = vpop.f32.mrf.mxu0
  %10916 = vmatprep.mubr.bf16.mxu0 0
  %10917 = vmatmul.mubr.bf16.gmra.mxu0 %v10119
  %v10918 = vpop.f32.mrf.mxu0
  %v10919 = vadd.f32 %v10758, %v10918
  %v10920 = vpop.f32.mrf.mxu0
  %v10921 = vpop.f32.mrf.mxu0
  %v10922 = vadd.f32 %v10761, %v10921
  %v10923 = vpop.f32.mrf.mxu0
  %10924 = vdwg.mxu0
  %10925 = vst [vmem:[#allocation2 + $0x100] sm:$0xff] %v10799
  %10926 = vst [vmem:[#allocation2 + $0x108] sm:$0xff] %v10802
  %10927 = vst [vmem:[#allocation2 + $0x110] sm:$0xff] %v10807
  %10928 = vst [vmem:[#allocation2 + $0x118] sm:$0xff] %v10810
  %10929 = vst [vmem:[#allocation2 + $0x120] sm:$0xff] %v10815
  %10930 = vst [vmem:[#allocation2 + $0x128] sm:$0xff] %v10818
  %10931 = vst [vmem:[#allocation2 + $0x130] sm:$0xff] %v10823
  %10932 = vst [vmem:[#allocation2 + $0x138] sm:$0xff] %v10826
  %10933 = vst [vmem:[#allocation2 + $0x140] sm:$0xff] %v10831
  %10934 = vst [vmem:[#allocation2 + $0x148] sm:$0xff] %v10834
  %10935 = vst [vmem:[#allocation2 + $0x150] sm:$0xff] %v10839
  %10936 = vst [vmem:[#allocation2 + $0x158] sm:$0xff] %v10842
  %10937 = vst [vmem:[#allocation2 + $0x160] sm:$0xff] %v10847
  %10938 = vst [vmem:[#allocation2 + $0x168] sm:$0xff] %v10850
  %10939 = vst [vmem:[#allocation2 + $0x170] sm:$0xff] %v10855
  %10940 = vst [vmem:[#allocation2 + $0x178] sm:$0xff] %v10858
  %10941 = vst [vmem:[#allocation2 + $0x180] sm:$0xff] %v10863
  %10942 = vst [vmem:[#allocation2 + $0x188] sm:$0xff] %v10866
  %10943 = vst [vmem:[#allocation2 + $0x190] sm:$0xff] %v10871
  %10944 = vst [vmem:[#allocation2 + $0x198] sm:$0xff] %v10874
  %10945 = vst [vmem:[#allocation2 + $0x1a0] sm:$0xff] %v10879
  %10946 = vst [vmem:[#allocation2 + $0x1a8] sm:$0xff] %v10882
  %10947 = vst [vmem:[#allocation2 + $0x1b0] sm:$0xff] %v10887
  %10948 = vst [vmem:[#allocation2 + $0x1b8] sm:$0xff] %v10890
  %10949 = vst [vmem:[#allocation2 + $0x1c0] sm:$0xff] %v10895
  %10950 = vst [vmem:[#allocation2 + $0x1c8] sm:$0xff] %v10898
  %10951 = vst [vmem:[#allocation2 + $0x1d0] sm:$0xff] %v10903
  %10952 = vst [vmem:[#allocation2 + $0x1d8] sm:$0xff] %v10906
  %10953 = vst [vmem:[#allocation2 + $0x1e0] sm:$0xff] %v10911
  %10954 = vst [vmem:[#allocation2 + $0x1e8] sm:$0xff] %v10914
  %10955 = vst [vmem:[#allocation2 + $0x1f0] sm:$0xff] %v10919
  %10956 = vst [vmem:[#allocation2 + $0x1f8] sm:$0xff] %v10922
  %v10957 = vld [vmem:[#allocation2] sm:$0xff]
  %v10958 = vld [vmem:[#allocation2 + $0x8] sm:$0xff]
  %v10959 = vld [vmem:[#allocation2 + $0x10] sm:$0xff]
  %v10960 = vld [vmem:[#allocation2 + $0x18] sm:$0xff]
  %v10961 = vld [vmem:[#allocation2 + $0x20] sm:$0xff]
  %v10962 = vld [vmem:[#allocation2 + $0x28] sm:$0xff]
  %v10963 = vld [vmem:[#allocation2 + $0x30] sm:$0xff]
  %v10964 = vld [vmem:[#allocation2 + $0x38] sm:$0xff]
  %v10965 = vld [vmem:[#allocation2 + $0x40] sm:$0xff]
  %v10966 = vld [vmem:[#allocation2 + $0x48] sm:$0xff]
  %v10967 = vld [vmem:[#allocation2 + $0x50] sm:$0xff]
  %v10968 = vld [vmem:[#allocation2 + $0x58] sm:$0xff]
  %v10969 = vld [vmem:[#allocation2 + $0x60] sm:$0xff]
  %v10970 = vld [vmem:[#allocation2 + $0x68] sm:$0xff]
  %v10971 = vld [vmem:[#allocation2 + $0x70] sm:$0xff]
  %v10972 = vld [vmem:[#allocation2 + $0x78] sm:$0xff]
  %v10973 = vld [vmem:[#allocation2 + $0x80] sm:$0xff]
  %v10974 = vld [vmem:[#allocation2 + $0x88] sm:$0xff]
  %v10975 = vld [vmem:[#allocation2 + $0x90] sm:$0xff]
  %v10976 = vld [vmem:[#allocation2 + $0x98] sm:$0xff]
  %v10977 = vld [vmem:[#allocation2 + $0xa0] sm:$0xff]
  %v10978 = vld [vmem:[#allocation2 + $0xa8] sm:$0xff]
  %v10979 = vld [vmem:[#allocation2 + $0xb0] sm:$0xff]
  %v10980 = vld [vmem:[#allocation2 + $0xb8] sm:$0xff]
  %v10981 = vld [vmem:[#allocation2 + $0xc0] sm:$0xff]
  %v10982 = vld [vmem:[#allocation2 + $0xc8] sm:$0xff]
  %v10983 = vld [vmem:[#allocation2 + $0xd0] sm:$0xff]
  %v10984 = vld [vmem:[#allocation2 + $0xd8] sm:$0xff]
  %v10985 = vld [vmem:[#allocation2 + $0xe0] sm:$0xff]
  %v10986 = vld [vmem:[#allocation2 + $0xe8] sm:$0xff]
  %v10987 = vld [vmem:[#allocation2 + $0xf0] sm:$0xff]
  %v10988 = vld [vmem:[#allocation2 + $0xf8] sm:$0xff]
  %v10989 = vld [vmem:[#allocation2 + $0x100] sm:$0xff]
  %v10990 = vld [vmem:[#allocation2 + $0x108] sm:$0xff]
  %v10991 = vld [vmem:[#allocation2 + $0x110] sm:$0xff]
  %v10992 = vld [vmem:[#allocation2 + $0x118] sm:$0xff]
  %v10993 = vld [vmem:[#allocation2 + $0x120] sm:$0xff]
  %v10994 = vld [vmem:[#allocation2 + $0x128] sm:$0xff]
  %v10995 = vld [vmem:[#allocation2 + $0x130] sm:$0xff]
  %v10996 = vld [vmem:[#allocation2 + $0x138] sm:$0xff]
  %v10997 = vld [vmem:[#allocation2 + $0x140] sm:$0xff]
  %v10998 = vld [vmem:[#allocation2 + $0x148] sm:$0xff]
  %v10999 = vld [vmem:[#allocation2 + $0x150] sm:$0xff]
  %v11000 = vld [vmem:[#allocation2 + $0x158] sm:$0xff]
  %v11001 = vld [vmem:[#allocation2 + $0x160] sm:$0xff]
  %v11002 = vld [vmem:[#allocation2 + $0x168] sm:$0xff]
  %v11003 = vld [vmem:[#allocation2 + $0x170] sm:$0xff]
  %v11004 = vld [vmem:[#allocation2 + $0x178] sm:$0xff]
  %v11005 = vld [vmem:[#allocation2 + $0x180] sm:$0xff]
  %v11006 = vld [vmem:[#allocation2 + $0x188] sm:$0xff]
  %v11007 = vld [vmem:[#allocation2 + $0x190] sm:$0xff]
  %v11008 = vld [vmem:[#allocation2 + $0x198] sm:$0xff]
  %v11009 = vld [vmem:[#allocation2 + $0x1a0] sm:$0xff]
  %v11010 = vld [vmem:[#allocation2 + $0x1a8] sm:$0xff]
  %v11011 = vld [vmem:[#allocation2 + $0x1b0] sm:$0xff]
  %v11012 = vld [vmem:[#allocation2 + $0x1b8] sm:$0xff]
  %v11013 = vld [vmem:[#allocation2 + $0x1c0] sm:$0xff]
  %v11014 = vld [vmem:[#allocation2 + $0x1c8] sm:$0xff]
  %v11015 = vld [vmem:[#allocation2 + $0x1d0] sm:$0xff]
  %v11016 = vld [vmem:[#allocation2 + $0x1d8] sm:$0xff]
  %v11017 = vld [vmem:[#allocation2 + $0x1e0] sm:$0xff]
  %v11018 = vld [vmem:[#allocation2 + $0x1e8] sm:$0xff]
  %v11019 = vld [vmem:[#allocation2 + $0x1f0] sm:$0xff]
  %v11020 = vld [vmem:[#allocation2 + $0x1f8] sm:$0xff]
  %v11021 = vld [vmem:[%s5] sm:$0x1]
  %v11022 = vld [vmem:[%s6] sm:$0x1]
  %v11023 = vadd.f32 %v10957, %v10958
  %v11024 = vadd.f32 %v11023, %v10959
  %v11025 = vadd.f32 %v11024, %v10960
  %v11026 = vadd.f32 %v11025, %v10961
  %v11027 = vadd.f32 %v11026, %v10962
  %v11028 = vadd.f32 %v11027, %v10963
  %v11029 = vadd.f32 %v11028, %v10964
  %v11030 = vadd.f32 %v11029, %v10965
  %v11031 = vadd.f32 %v11030, %v10966
  %v11032 = vadd.f32 %v11031, %v10967
  %v11033 = vadd.f32 %v11032, %v10968
  %v11034 = vadd.f32 %v11033, %v10969
  %v11035 = vadd.f32 %v11034, %v10970
  %v11036 = vadd.f32 %v11035, %v10971
  %v11037 = vadd.f32 %v11036, %v10972
  %v11038 = vadd.f32 %v11037, %v10973
  %v11039 = vadd.f32 %v11038, %v10974
  %v11040 = vadd.f32 %v11039, %v10975
  %v11041 = vadd.f32 %v11040, %v10976
  %v11042 = vadd.f32 %v11041, %v10977
  %v11043 = vadd.f32 %v11042, %v10978
  %v11044 = vadd.f32 %v11043, %v10979
  %v11045 = vadd.f32 %v11044, %v10980
  %v11046 = vadd.f32 %v11045, %v10981
  %v11047 = vadd.f32 %v11046, %v10982
  %v11048 = vadd.f32 %v11047, %v10983
  %v11049 = vadd.f32 %v11048, %v10984
  %v11050 = vadd.f32 %v11049, %v10985
  %v11051 = vadd.f32 %v11050, %v10986
  %v11052 = vadd.f32 %v11051, %v10987
  %v11053 = vadd.f32 %v11052, %v10988
  %v11054 = vadd.f32 %v11053, %v10989
  %v11055 = vadd.f32 %v11054, %v10990
  %v11056 = vadd.f32 %v11055, %v10991
  %v11057 = vadd.f32 %v11056, %v10992
  %v11058 = vadd.f32 %v11057, %v10993
  %v11059 = vadd.f32 %v11058, %v10994
  %v11060 = vadd.f32 %v11059, %v10995
  %v11061 = vadd.f32 %v11060, %v10996
  %v11062 = vadd.f32 %v11061, %v10997
  %v11063 = vadd.f32 %v11062, %v10998
  %v11064 = vadd.f32 %v11063, %v10999
  %v11065 = vadd.f32 %v11064, %v11000
  %v11066 = vadd.f32 %v11065, %v11001
  %v11067 = vadd.f32 %v11066, %v11002
  %v11068 = vadd.f32 %v11067, %v11003
  %v11069 = vadd.f32 %v11068, %v11004
  %v11070 = vadd.f32 %v11069, %v11005
  %v11071 = vadd.f32 %v11070, %v11006
  %v11072 = vadd.f32 %v11071, %v11007
  %v11073 = vadd.f32 %v11072, %v11008
  %v11074 = vadd.f32 %v11073, %v11009
  %v11075 = vadd.f32 %v11074, %v11010
  %v11076 = vadd.f32 %v11075, %v11011
  %v11077 = vadd.f32 %v11076, %v11012
  %v11078 = vadd.f32 %v11077, %v11013
  %v11079 = vadd.f32 %v11078, %v11014
  %v11080 = vadd.f32 %v11079, %v11015
  %v11081 = vadd.f32 %v11080, %v11016
  %v11082 = vadd.f32 %v11081, %v11017
  %v11083 = vadd.f32 %v11082, %v11018
  %v11084 = vadd.f32 %v11083, %v11019
  %v11085 = vadd.f32 %v11084, %v11020
  %v11086 = vrot.slane %v11085, 4
  %v11087 = vadd.f32 %v11085, %v11086
  %v11088 = vrot.slane %v11087, 2
  %v11089 = vadd.f32 %v11087, %v11088
  %v11090 = vrot.slane %v11089, 1
  %v11091 = vadd.f32 %v11089, %v11090
  %v11092 = vmul.f32 %v10957, %v10957
  %v11093 = vmul.f32 %v10958, %v10958
  %v11094 = vmul.f32 %v10959, %v10959
  %v11095 = vmul.f32 %v10960, %v10960
  %v11096 = vmul.f32 %v10961, %v10961
  %v11097 = vmul.f32 %v10962, %v10962
  %v11098 = vmul.f32 %v10963, %v10963
  %v11099 = vmul.f32 %v10964, %v10964
  %v11100 = vmul.f32 %v10965, %v10965
  %v11101 = vmul.f32 %v10966, %v10966
  %v11102 = vmul.f32 %v10967, %v10967
  %v11103 = vmul.f32 %v10968, %v10968
  %v11104 = vmul.f32 %v10969, %v10969
  %v11105 = vmul.f32 %v10970, %v10970
  %v11106 = vmul.f32 %v10971, %v10971
  %v11107 = vmul.f32 %v10972, %v10972
  %v11108 = vmul.f32 %v10973, %v10973
  %v11109 = vmul.f32 %v10974, %v10974
  %v11110 = vmul.f32 %v10975, %v10975
  %v11111 = vmul.f32 %v10976, %v10976
  %v11112 = vmul.f32 %v10977, %v10977
  %v11113 = vmul.f32 %v10978, %v10978
  %v11114 = vmul.f32 %v10979, %v10979
  %v11115 = vmul.f32 %v10980, %v10980
  %v11116 = vmul.f32 %v10981, %v10981
  %v11117 = vmul.f32 %v10982, %v10982
  %v11118 = vmul.f32 %v10983, %v10983
  %v11119 = vmul.f32 %v10984, %v10984
  %v11120 = vmul.f32 %v10985, %v10985
  %v11121 = vmul.f32 %v10986, %v10986
  %v11122 = vmul.f32 %v10987, %v10987
  %v11123 = vmul.f32 %v10988, %v10988
  %v11124 = vmul.f32 %v10989, %v10989
  %v11125 = vmul.f32 %v10990, %v10990
  %v11126 = vmul.f32 %v10991, %v10991
  %v11127 = vmul.f32 %v10992, %v10992
  %v11128 = vmul.f32 %v10993, %v10993
  %v11129 = vmul.f32 %v10994, %v10994
  %v11130 = vmul.f32 %v10995, %v10995
  %v11131 = vmul.f32 %v10996, %v10996
  %v11132 = vmul.f32 %v10997, %v10997
  %v11133 = vmul.f32 %v10998, %v10998
  %v11134 = vmul.f32 %v10999, %v10999
  %v11135 = vmul.f32 %v11000, %v11000
  %v11136 = vmul.f32 %v11001, %v11001
  %v11137 = vmul.f32 %v11002, %v11002
  %v11138 = vmul.f32 %v11003, %v11003
  %v11139 = vmul.f32 %v11004, %v11004
  %v11140 = vmul.f32 %v11005, %v11005
  %v11141 = vmul.f32 %v11006, %v11006
  %v11142 = vmul.f32 %v11007, %v11007
  %v11143 = vmul.f32 %v11008, %v11008
  %v11144 = vmul.f32 %v11009, %v11009
  %v11145 = vmul.f32 %v11010, %v11010
  %v11146 = vmul.f32 %v11011, %v11011
  %v11147 = vmul.f32 %v11012, %v11012
  %v11148 = vmul.f32 %v11013, %v11013
  %v11149 = vmul.f32 %v11014, %v11014
  %v11150 = vmul.f32 %v11015, %v11015
  %v11151 = vmul.f32 %v11016, %v11016
  %v11152 = vmul.f32 %v11017, %v11017
  %v11153 = vmul.f32 %v11018, %v11018
  %v11154 = vmul.f32 %v11019, %v11019
  %v11155 = vmul.f32 %v11020, %v11020
  %v11156 = vadd.f32 %v11092, %v11093
  %v11157 = vadd.f32 %v11156, %v11094
  %v11158 = vadd.f32 %v11157, %v11095
  %v11159 = vadd.f32 %v11158, %v11096
  %v11160 = vadd.f32 %v11159, %v11097
  %v11161 = vadd.f32 %v11160, %v11098
  %v11162 = vadd.f32 %v11161, %v11099
  %v11163 = vadd.f32 %v11162, %v11100
  %v11164 = vadd.f32 %v11163, %v11101
  %v11165 = vadd.f32 %v11164, %v11102
  %v11166 = vadd.f32 %v11165, %v11103
  %v11167 = vadd.f32 %v11166, %v11104
  %v11168 = vadd.f32 %v11167, %v11105
  %v11169 = vadd.f32 %v11168, %v11106
  %v11170 = vadd.f32 %v11169, %v11107
  %v11171 = vadd.f32 %v11170, %v11108
  %v11172 = vadd.f32 %v11171, %v11109
  %v11173 = vadd.f32 %v11172, %v11110
  %v11174 = vadd.f32 %v11173, %v11111
  %v11175 = vadd.f32 %v11174, %v11112
  %v11176 = vadd.f32 %v11175, %v11113
  %v11177 = vadd.f32 %v11176, %v11114
  %v11178 = vadd.f32 %v11177, %v11115
  %v11179 = vadd.f32 %v11178, %v11116
  %v11180 = vadd.f32 %v11179, %v11117
  %v11181 = vadd.f32 %v11180, %v11118
  %v11182 = vadd.f32 %v11181, %v11119
  %v11183 = vadd.f32 %v11182, %v11120
  %v11184 = vadd.f32 %v11183, %v11121
  %v11185 = vadd.f32 %v11184, %v11122
  %v11186 = vadd.f32 %v11185, %v11123
  %v11187 = vadd.f32 %v11186, %v11124
  %v11188 = vadd.f32 %v11187, %v11125
  %v11189 = vadd.f32 %v11188, %v11126
  %v11190 = vadd.f32 %v11189, %v11127
  %v11191 = vadd.f32 %v11190, %v11128
  %v11192 = vadd.f32 %v11191, %v11129
  %v11193 = vadd.f32 %v11192, %v11130
  %v11194 = vadd.f32 %v11193, %v11131
  %v11195 = vadd.f32 %v11194, %v11132
  %v11196 = vadd.f32 %v11195, %v11133
  %v11197 = vadd.f32 %v11196, %v11134
  %v11198 = vadd.f32 %v11197, %v11135
  %v11199 = vadd.f32 %v11198, %v11136
  %v11200 = vadd.f32 %v11199, %v11137
  %v11201 = vadd.f32 %v11200, %v11138
  %v11202 = vadd.f32 %v11201, %v11139
  %v11203 = vadd.f32 %v11202, %v11140
  %v11204 = vadd.f32 %v11203, %v11141
  %v11205 = vadd.f32 %v11204, %v11142
  %v11206 = vadd.f32 %v11205, %v11143
  %v11207 = vadd.f32 %v11206, %v11144
  %v11208 = vadd.f32 %v11207, %v11145
  %v11209 = vadd.f32 %v11208, %v11146
  %v11210 = vadd.f32 %v11209, %v11147
  %v11211 = vadd.f32 %v11210, %v11148
  %v11212 = vadd.f32 %v11211, %v11149
  %v11213 = vadd.f32 %v11212, %v11150
  %v11214 = vadd.f32 %v11213, %v11151
  %v11215 = vadd.f32 %v11214, %v11152
  %v11216 = vadd.f32 %v11215, %v11153
  %v11217 = vadd.f32 %v11216, %v11154
  %v11218 = vadd.f32 %v11217, %v11155
  %v11219 = vrot.slane %v11218, 4
  %v11220 = vadd.f32 %v11218, %v11219
  %v11221 = vrot.slane %v11220, 2
  %v11222 = vadd.f32 %v11220, %v11221
  %v11223 = vrot.slane %v11222, 1
  %v11224 = vadd.f32 %v11222, %v11223
  %v11225 = vmul.f32 %v11091, 0.001953125
  %v11226 = vmul.f32 %v11224, 0.001953125
  %v11227 = vmul.f32 %v11225, %v11225
  %v11228 = vsub.f32 %v11226, %v11227
  %v11229 = vmax.f32 %v11228, 0.0
  %v11230 = vadd.f32 %v11229, 1e-05
  %v11231 = vrsqrt.pop %v11230
  %v11232 = vmul.f32 %v11021, %v11231
  %v11233 = vmul.f32 %v11225, %v11232
  %v11234 = vsub.f32 %v11022, %v11233
  %v11236 = vlaneseq
  %v11237 = vshrl.u32 %v11236, 7
  %v11238 = vsub.s32 0, %v11237
  %v11239 = vrot.slane %v11232, %v11238
  %v11241 = vmul.f32 %v10957, %v11239
  %v11242 = vmul.f32 %v10958, %v11239
  %v11243 = vmul.f32 %v10959, %v11239
  %v11244 = vmul.f32 %v10960, %v11239
  %v11245 = vmul.f32 %v10961, %v11239
  %v11246 = vmul.f32 %v10962, %v11239
  %v11247 = vmul.f32 %v10963, %v11239
  %v11248 = vmul.f32 %v10964, %v11239
  %v11249 = vmul.f32 %v10965, %v11239
  %v11250 = vmul.f32 %v10966, %v11239
  %v11251 = vmul.f32 %v10967, %v11239
  %v11252 = vmul.f32 %v10968, %v11239
  %v11253 = vmul.f32 %v10969, %v11239
  %v11254 = vmul.f32 %v10970, %v11239
  %v11255 = vmul.f32 %v10971, %v11239
  %v11256 = vmul.f32 %v10972, %v11239
  %v11257 = vmul.f32 %v10973, %v11239
  %v11258 = vmul.f32 %v10974, %v11239
  %v11259 = vmul.f32 %v10975, %v11239
  %v11260 = vmul.f32 %v10976, %v11239
  %v11261 = vmul.f32 %v10977, %v11239
  %v11262 = vmul.f32 %v10978, %v11239
  %v11263 = vmul.f32 %v10979, %v11239
  %v11264 = vmul.f32 %v10980, %v11239
  %v11265 = vmul.f32 %v10981, %v11239
  %v11266 = vmul.f32 %v10982, %v11239
  %v11267 = vmul.f32 %v10983, %v11239
  %v11268 = vmul.f32 %v10984, %v11239
  %v11269 = vmul.f32 %v10985, %v11239
  %v11270 = vmul.f32 %v10986, %v11239
  %v11271 = vmul.f32 %v10987, %v11239
  %v11272 = vmul.f32 %v10988, %v11239
  %v11273 = vmul.f32 %v10989, %v11239
  %v11274 = vmul.f32 %v10990, %v11239
  %v11275 = vmul.f32 %v10991, %v11239
  %v11276 = vmul.f32 %v10992, %v11239
  %v11277 = vmul.f32 %v10993, %v11239
  %v11278 = vmul.f32 %v10994, %v11239
  %v11279 = vmul.f32 %v10995, %v11239
  %v11280 = vmul.f32 %v10996, %v11239
  %v11281 = vmul.f32 %v10997, %v11239
  %v11282 = vmul.f32 %v10998, %v11239
  %v11283 = vmul.f32 %v10999, %v11239
  %v11284 = vmul.f32 %v11000, %v11239
  %v11285 = vmul.f32 %v11001, %v11239
  %v11286 = vmul.f32 %v11002, %v11239
  %v11287 = vmul.f32 %v11003, %v11239
  %v11288 = vmul.f32 %v11004, %v11239
  %v11289 = vmul.f32 %v11005, %v11239
  %v11290 = vmul.f32 %v11006, %v11239
  %v11291 = vmul.f32 %v11007, %v11239
  %v11292 = vmul.f32 %v11008, %v11239
  %v11293 = vmul.f32 %v11009, %v11239
  %v11294 = vmul.f32 %v11010, %v11239
  %v11295 = vmul.f32 %v11011, %v11239
  %v11296 = vmul.f32 %v11012, %v11239
  %v11297 = vmul.f32 %v11013, %v11239
  %v11298 = vmul.f32 %v11014, %v11239
  %v11299 = vmul.f32 %v11015, %v11239
  %v11300 = vmul.f32 %v11016, %v11239
  %v11301 = vmul.f32 %v11017, %v11239
  %v11302 = vmul.f32 %v11018, %v11239
  %v11303 = vmul.f32 %v11019, %v11239
  %v11304 = vmul.f32 %v11020, %v11239
  %v11306 = vlaneseq
  %v11307 = vshrl.u32 %v11306, 7
  %v11308 = vsub.s32 0, %v11307
  %v11309 = vrot.slane %v11234, %v11308
  %v11311 = vadd.f32 %v11241, %v11309
  %v11312 = vadd.f32 %v11242, %v11309
  %v11313 = vadd.f32 %v11243, %v11309
  %v11314 = vadd.f32 %v11244, %v11309
  %v11315 = vadd.f32 %v11245, %v11309
  %v11316 = vadd.f32 %v11246, %v11309
  %v11317 = vadd.f32 %v11247, %v11309
  %v11318 = vadd.f32 %v11248, %v11309
  %v11319 = vadd.f32 %v11249, %v11309
  %v11320 = vadd.f32 %v11250, %v11309
  %v11321 = vadd.f32 %v11251, %v11309
  %v11322 = vadd.f32 %v11252, %v11309
  %v11323 = vadd.f32 %v11253, %v11309
  %v11324 = vadd.f32 %v11254, %v11309
  %v11325 = vadd.f32 %v11255, %v11309
  %v11326 = vadd.f32 %v11256, %v11309
  %v11327 = vadd.f32 %v11257, %v11309
  %v11328 = vadd.f32 %v11258, %v11309
  %v11329 = vadd.f32 %v11259, %v11309
  %v11330 = vadd.f32 %v11260, %v11309
  %v11331 = vadd.f32 %v11261, %v11309
  %v11332 = vadd.f32 %v11262, %v11309
  %v11333 = vadd.f32 %v11263, %v11309
  %v11334 = vadd.f32 %v11264, %v11309
  %v11335 = vadd.f32 %v11265, %v11309
  %v11336 = vadd.f32 %v11266, %v11309
  %v11337 = vadd.f32 %v11267, %v11309
  %v11338 = vadd.f32 %v11268, %v11309
  %v11339 = vadd.f32 %v11269, %v11309
  %v11340 = vadd.f32 %v11270, %v11309
  %v11341 = vadd.f32 %v11271, %v11309
  %v11342 = vadd.f32 %v11272, %v11309
  %v11343 = vadd.f32 %v11273, %v11309
  %v11344 = vadd.f32 %v11274, %v11309
  %v11345 = vadd.f32 %v11275, %v11309
  %v11346 = vadd.f32 %v11276, %v11309
  %v11347 = vadd.f32 %v11277, %v11309
  %v11348 = vadd.f32 %v11278, %v11309
  %v11349 = vadd.f32 %v11279, %v11309
  %v11350 = vadd.f32 %v11280, %v11309
  %v11351 = vadd.f32 %v11281, %v11309
  %v11352 = vadd.f32 %v11282, %v11309
  %v11353 = vadd.f32 %v11283, %v11309
  %v11354 = vadd.f32 %v11284, %v11309
  %v11355 = vadd.f32 %v11285, %v11309
  %v11356 = vadd.f32 %v11286, %v11309
  %v11357 = vadd.f32 %v11287, %v11309
  %v11358 = vadd.f32 %v11288, %v11309
  %v11359 = vadd.f32 %v11289, %v11309
  %v11360 = vadd.f32 %v11290, %v11309
  %v11361 = vadd.f32 %v11291, %v11309
  %v11362 = vadd.f32 %v11292, %v11309
  %v11363 = vadd.f32 %v11293, %v11309
  %v11364 = vadd.f32 %v11294, %v11309
  %v11365 = vadd.f32 %v11295, %v11309
  %v11366 = vadd.f32 %v11296, %v11309
  %v11367 = vadd.f32 %v11297, %v11309
  %v11368 = vadd.f32 %v11298, %v11309
  %v11369 = vadd.f32 %v11299, %v11309
  %v11370 = vadd.f32 %v11300, %v11309
  %v11371 = vadd.f32 %v11301, %v11309
  %v11372 = vadd.f32 %v11302, %v11309
  %v11373 = vadd.f32 %v11303, %v11309
  %v11374 = vadd.f32 %v11304, %v11309
  %v11375 = vmax.f32 %v11311, 0.0
  %v11376 = vmax.f32 %v11312, 0.0
  %v11377 = vmax.f32 %v11313, 0.0
  %v11378 = vmax.f32 %v11314, 0.0
  %v11379 = vmax.f32 %v11315, 0.0
  %v11380 = vmax.f32 %v11316, 0.0
  %v11381 = vmax.f32 %v11317, 0.0
  %v11382 = vmax.f32 %v11318, 0.0
  %v11383 = vmax.f32 %v11319, 0.0
  %v11384 = vmax.f32 %v11320, 0.0
  %v11385 = vmax.f32 %v11321, 0.0
  %v11386 = vmax.f32 %v11322, 0.0
  %v11387 = vmax.f32 %v11323, 0.0
  %v11388 = vmax.f32 %v11324, 0.0
  %v11389 = vmax.f32 %v11325, 0.0
  %v11390 = vmax.f32 %v11326, 0.0
  %v11391 = vmax.f32 %v11327, 0.0
  %v11392 = vmax.f32 %v11328, 0.0
  %v11393 = vmax.f32 %v11329, 0.0
  %v11394 = vmax.f32 %v11330, 0.0
  %v11395 = vmax.f32 %v11331, 0.0
  %v11396 = vmax.f32 %v11332, 0.0
  %v11397 = vmax.f32 %v11333, 0.0
  %v11398 = vmax.f32 %v11334, 0.0
  %v11399 = vmax.f32 %v11335, 0.0
  %v11400 = vmax.f32 %v11336, 0.0
  %v11401 = vmax.f32 %v11337, 0.0
  %v11402 = vmax.f32 %v11338, 0.0
  %v11403 = vmax.f32 %v11339, 0.0
  %v11404 = vmax.f32 %v11340, 0.0
  %v11405 = vmax.f32 %v11341, 0.0
  %v11406 = vmax.f32 %v11342, 0.0
  %v11407 = vmax.f32 %v11343, 0.0
  %v11408 = vmax.f32 %v11344, 0.0
  %v11409 = vmax.f32 %v11345, 0.0
  %v11410 = vmax.f32 %v11346, 0.0
  %v11411 = vmax.f32 %v11347, 0.0
  %v11412 = vmax.f32 %v11348, 0.0
  %v11413 = vmax.f32 %v11349, 0.0
  %v11414 = vmax.f32 %v11350, 0.0
  %v11415 = vmax.f32 %v11351, 0.0
  %v11416 = vmax.f32 %v11352, 0.0
  %v11417 = vmax.f32 %v11353, 0.0
  %v11418 = vmax.f32 %v11354, 0.0
  %v11419 = vmax.f32 %v11355, 0.0
  %v11420 = vmax.f32 %v11356, 0.0
  %v11421 = vmax.f32 %v11357, 0.0
  %v11422 = vmax.f32 %v11358, 0.0
  %v11423 = vmax.f32 %v11359, 0.0
  %v11424 = vmax.f32 %v11360, 0.0
  %v11425 = vmax.f32 %v11361, 0.0
  %v11426 = vmax.f32 %v11362, 0.0
  %v11427 = vmax.f32 %v11363, 0.0
  %v11428 = vmax.f32 %v11364, 0.0
  %v11429 = vmax.f32 %v11365, 0.0
  %v11430 = vmax.f32 %v11366, 0.0
  %v11431 = vmax.f32 %v11367, 0.0
  %v11432 = vmax.f32 %v11368, 0.0
  %v11433 = vmax.f32 %v11369, 0.0
  %v11434 = vmax.f32 %v11370, 0.0
  %v11435 = vmax.f32 %v11371, 0.0
  %v11436 = vmax.f32 %v11372, 0.0
  %v11437 = vmax.f32 %v11373, 0.0
  %v11438 = vmax.f32 %v11374, 0.0
  %11439 = vst [vmem:[%s7] sm:$0xff] %v11375
  %11440 = vst [vmem:[%s7 + $0x8] sm:$0xff] %v11376
  %11441 = vst [vmem:[%s7 + $0x10] sm:$0xff] %v11377
  %11442 = vst [vmem:[%s7 + $0x18] sm:$0xff] %v11378
  %11443 = vst [vmem:[%s7 + $0x20] sm:$0xff] %v11379
  %11444 = vst [vmem:[%s7 + $0x28] sm:$0xff] %v11380
  %11445 = vst [vmem:[%s7 + $0x30] sm:$0xff] %v11381
  %11446 = vst [vmem:[%s7 + $0x38] sm:$0xff] %v11382
  %11447 = vst [vmem:[%s7 + $0x40] sm:$0xff] %v11383
  %11448 = vst [vmem:[%s7 + $0x48] sm:$0xff] %v11384
  %11449 = vst [vmem:[%s7 + $0x50] sm:$0xff] %v11385
  %11450 = vst [vmem:[%s7 + $0x58] sm:$0xff] %v11386
  %11451 = vst [vmem:[%s7 + $0x60] sm:$0xff] %v11387
  %11452 = vst [vmem:[%s7 + $0x68] sm:$0xff] %v11388
  %11453 = vst [vmem:[%s7 + $0x70] sm:$0xff] %v11389
  %11454 = vst [vmem:[%s7 + $0x78] sm:$0xff] %v11390
  %11455 = vst [vmem:[%s7 + $0x80] sm:$0xff] %v11391
  %11456 = vst [vmem:[%s7 + $0x88] sm:$0xff] %v11392
  %11457 = vst [vmem:[%s7 + $0x90] sm:$0xff] %v11393
  %11458 = vst [vmem:[%s7 + $0x98] sm:$0xff] %v11394
  %11459 = vst [vmem:[%s7 + $0xa0] sm:$0xff] %v11395
  %11460 = vst [vmem:[%s7 + $0xa8] sm:$0xff] %v11396
  %11461 = vst [vmem:[%s7 + $0xb0] sm:$0xff] %v11397
  %11462 = vst [vmem:[%s7 + $0xb8] sm:$0xff] %v11398
  %11463 = vst [vmem:[%s7 + $0xc0] sm:$0xff] %v11399
  %11464 = vst [vmem:[%s7 + $0xc8] sm:$0xff] %v11400
  %11465 = vst [vmem:[%s7 + $0xd0] sm:$0xff] %v11401
  %11466 = vst [vmem:[%s7 + $0xd8] sm:$0xff] %v11402
  %11467 = vst [vmem:[%s7 + $0xe0] sm:$0xff] %v11403
  %11468 = vst [vmem:[%s7 + $0xe8] sm:$0xff] %v11404
  %11469 = vst [vmem:[%s7 + $0xf0] sm:$0xff] %v11405
  %11470 = vst [vmem:[%s7 + $0xf8] sm:$0xff] %v11406
  %11471 = vst [vmem:[%s7 + $0x100] sm:$0xff] %v11407
  %11472 = vst [vmem:[%s7 + $0x108] sm:$0xff] %v11408
  %11473 = vst [vmem:[%s7 + $0x110] sm:$0xff] %v11409
  %11474 = vst [vmem:[%s7 + $0x118] sm:$0xff] %v11410
  %11475 = vst [vmem:[%s7 + $0x120] sm:$0xff] %v11411
  %11476 = vst [vmem:[%s7 + $0x128] sm:$0xff] %v11412
  %11477 = vst [vmem:[%s7 + $0x130] sm:$0xff] %v11413
  %11478 = vst [vmem:[%s7 + $0x138] sm:$0xff] %v11414
  %11479 = vst [vmem:[%s7 + $0x140] sm:$0xff] %v11415
  %11480 = vst [vmem:[%s7 + $0x148] sm:$0xff] %v11416
  %11481 = vst [vmem:[%s7 + $0x150] sm:$0xff] %v11417
  %11482 = vst [vmem:[%s7 + $0x158] sm:$0xff] %v11418
  %11483 = vst [vmem:[%s7 + $0x160] sm:$0xff] %v11419
  %11484 = vst [vmem:[%s7 + $0x168] sm:$0xff] %v11420
  %11485 = vst [vmem:[%s7 + $0x170] sm:$0xff] %v11421
  %11486 = vst [vmem:[%s7 + $0x178] sm:$0xff] %v11422
  %11487 = vst [vmem:[%s7 + $0x180] sm:$0xff] %v11423
  %11488 = vst [vmem:[%s7 + $0x188] sm:$0xff] %v11424
  %11489 = vst [vmem:[%s7 + $0x190] sm:$0xff] %v11425
  %11490 = vst [vmem:[%s7 + $0x198] sm:$0xff] %v11426
  %11491 = vst [vmem:[%s7 + $0x1a0] sm:$0xff] %v11427
  %11492 = vst [vmem:[%s7 + $0x1a8] sm:$0xff] %v11428
  %11493 = vst [vmem:[%s7 + $0x1b0] sm:$0xff] %v11429
  %11494 = vst [vmem:[%s7 + $0x1b8] sm:$0xff] %v11430
  %11495 = vst [vmem:[%s7 + $0x1c0] sm:$0xff] %v11431
  %11496 = vst [vmem:[%s7 + $0x1c8] sm:$0xff] %v11432
  %11497 = vst [vmem:[%s7 + $0x1d0] sm:$0xff] %v11433
  %11498 = vst [vmem:[%s7 + $0x1d8] sm:$0xff] %v11434
  %11499 = vst [vmem:[%s7 + $0x1e0] sm:$0xff] %v11435
  %11500 = vst [vmem:[%s7 + $0x1e8] sm:$0xff] %v11436
  %11501 = vst [vmem:[%s7 + $0x1f0] sm:$0xff] %v11437
  %11502 = vst [vmem:[%s7 + $0x1f8] sm:$0xff] %v11438
  // Predicated region
  $region30: #{double_conv.1} parent=0 // pred_check
    _
  $region31: #{double_conv.1} parent=0 // pred_check_branch
    %11504 = sbr.rel (0) target = $region33
  $region32: #{double_conv.1} parent=0 // pred_region
    _
  $region33: #{double_conv.1} parent=0 // pred_fallthru
    _
  // Predicated region
  $region34: #{double_conv.1} parent=0 // pred_check
    _
  $region35: #{double_conv.1} parent=0 // pred_check_branch
    %11506 = sbr.rel (0) target = $region37
  $region36: #{double_conv.1} parent=0 // pred_region
    _
  $region37: #{double_conv.1} parent=0 // pred_fallthru
    _

</llo_original>
